<compile_context>
chip_gen: v6e
topology: v6e:2x2x1
jax: 0.10.0
libtpu: 0.0.40
codegen_flags: <defaults>
</compile_context>

<pallas_src>
import functools

import jax
import jax.numpy as jnp
from jax.experimental import pallas as pl
from jax.experimental.pallas import tpu as pltpu


_PARAM_ORDER = ("ws", "bs", "w1b", "b1b", "w2b", "b2b", "w2c", "b2c", "wl", "bl")


# ----------------------------------------------------------------------------
# Fused block35 kernel
# ----------------------------------------------------------------------------
def _block35_kernel(x_ref, ws_ref, bs_ref, w1b_ref, b1b_ref,
                    w2b_ref, b2b_ref, w2c_ref, b2c_ref, wl_ref, bl_ref,
                    o_ref,
                    pad12, pad2b, im1_ref, im2_ref, im3_ref, mix_ref,
                    *, BT, H, W, res_scale):
    bf16 = jnp.bfloat16
    M = BT * H * W
    C = 320

    x = x_ref[...].reshape(M, C)                       # (M, 320) f32 residual
    xb = x.astype(bf16)

    # ---- three 1x1 branch stems fused into one (320, 96) matmul ----
    stem = jnp.dot(xb, ws_ref[...], preferred_element_type=jnp.float32)
    stem = jnp.maximum(stem + bs_ref[...], 0.0)        # (M, 96) f32
    mix_ref[:, pl.ds(0, 32)] = stem[:, 0:32].astype(bf16)      # branch-0 out

    # ---- zero only the 1-wide halos of the padded scratch buffers ----
    zr12 = jnp.zeros((BT, 1, W + 2, 64), bf16)
    zc12 = jnp.zeros((BT, H, 1, 64), bf16)
    pad12[:, pl.ds(0, 1), :, :] = zr12
    pad12[:, pl.ds(H + 1, 1), :, :] = zr12
    pad12[:, pl.ds(1, H), pl.ds(0, 1), :] = zc12
    pad12[:, pl.ds(1, H), pl.ds(W + 1, 1), :] = zc12

    zr2b = jnp.zeros((BT, 1, W + 2, 48), bf16)
    zc2b = jnp.zeros((BT, H, 1, 48), bf16)
    pad2b[:, pl.ds(0, 1), :, :] = zr2b
    pad2b[:, pl.ds(H + 1, 1), :, :] = zr2b
    pad2b[:, pl.ds(1, H), pl.ds(0, 1), :] = zc2b
    pad2b[:, pl.ds(1, H), pl.ds(W + 1, 1), :] = zc2b

    # ---- branch-1 / branch-2a stem outputs share one 64-channel pad buffer --
    pad12[:, pl.ds(1, H), pl.ds(1, W), :] = (
        stem[:, 32:96].astype(bf16).reshape(BT, H, W, 64))

    # ---- im2col for both first 3x3 convs (shared spatial windows) ----
    for k in range(9):
        kh, kw = divmod(k, 3)
        w1 = pad12[:, pl.ds(kh, H), pl.ds(kw, W), pl.ds(0, 32)].reshape(M, 32)
        w2 = pad12[:, pl.ds(kh, H), pl.ds(kw, W), pl.ds(32, 32)].reshape(M, 32)
        im1_ref[:, pl.ds(k * 32, 32)] = w1
        im2_ref[:, pl.ds(k * 32, 32)] = w2

    # branch 1: 3x3 conv as a single K=288 matmul
    x1 = jnp.dot(im1_ref[...], w1b_ref[...], preferred_element_type=jnp.float32)
    x1 = jnp.maximum(x1 + b1b_ref[...], 0.0)           # (M, 32) f32
    mix_ref[:, pl.ds(32, 32)] = x1.astype(bf16)

    # branch 2: first 3x3 conv as a single K=288 matmul
    t = jnp.dot(im2_ref[...], w2b_ref[...], preferred_element_type=jnp.float32)
    t = jnp.maximum(t + b2b_ref[...], 0.0)             # (M, 48) f32

    pad2b[:, pl.ds(1, H), pl.ds(1, W), :] = t.astype(bf16).reshape(BT, H, W, 48)
    for k in range(9):
        kh, kw = divmod(k, 3)
        win = pad2b[:, pl.ds(kh, H), pl.ds(kw, W), :].reshape(M, 48)
        im3_ref[:, pl.ds(k * 48, 48)] = win

    # branch 2: second 3x3 conv as a single K=432 matmul
    x2 = jnp.dot(im3_ref[...], w2c_ref[...], preferred_element_type=jnp.float32)
    x2 = jnp.maximum(x2 + b2c_ref[...], 0.0)           # (M, 64) f32
    mix_ref[:, pl.ds(64, 64)] = x2.astype(bf16)

    # ---- final 1x1 conv over the materialized mixed concat (K = 128) ----
    r = jnp.dot(mix_ref[...], wl_ref[...], preferred_element_type=jnp.float32)
    r = r + bl_ref[...]                                 # folded conv bias + BN

    # residual add in f32; NO ReLU after the add (matches the reference module)
    out = x + res_scale * r
    o_ref[...] = out.reshape(BT, H, W, C)


def _pick_batch_tile(N, H, W):
    """Batch images per grid step so M = bt*H*W is a few hundred rows,
    while keeping the f32 in/out blocks (double-buffered) modest."""
    budget = 16 * 1024 * 1024
    best = 1
    for bt in range(1, N + 1):
        if N % bt:
            continue
        if bt * H * W * 320 * 4 * 4 > budget:
            break
        best = bt
        if bt * H * W >= 512:
            break
    return best


def block35_forward(x_nhwc, kp, res_scale):
    N, H, W, C = x_nhwc.shape
    assert C == 320, "InceptionResNetA expects 320 input channels"
    bt = _pick_batch_tile(N, H, W)
    M = bt * H * W

    kernel = functools.partial(_block35_kernel, BT=bt, H=H, W=W,
                               res_scale=float(res_scale))

    def wspec(arr):
        nd = arr.ndim
        return pl.BlockSpec(arr.shape, lambda n, _nd=nd: (0,) * _nd)

    return pl.pallas_call(
        kernel,
        out_shape=jax.ShapeDtypeStruct((N, H, W, C), jnp.float32),
        grid=(N // bt,),
        in_specs=[pl.BlockSpec((bt, H, W, C), lambda n: (n, 0, 0, 0))]
                 + [wspec(kp[k]) for k in _PARAM_ORDER],
        out_specs=pl.BlockSpec((bt, H, W, C), lambda n: (n, 0, 0, 0)),
        scratch_shapes=[
            pltpu.VMEM((bt, H + 2, W + 2, 64), jnp.bfloat16),   # b1a|b2a padded
            pltpu.VMEM((bt, H + 2, W + 2, 48), jnp.bfloat16),   # b2b padded
            pltpu.VMEM((M, 9 * 32), jnp.bfloat16),              # im2col branch1
            pltpu.VMEM((M, 9 * 32), jnp.bfloat16),              # im2col branch2a
            pltpu.VMEM((M, 9 * 48), jnp.bfloat16),              # im2col branch2b
            pltpu.VMEM((M, 128), jnp.bfloat16),                 # mixed concat
        ],
        compiler_params=pltpu.CompilerParams(
            dimension_semantics=("parallel",),
            vmem_limit_bytes=32 * 1024 * 1024,
        ),
    )(x_nhwc, *[kp[k] for k in _PARAM_ORDER])


# ----------------------------------------------------------------------------
# Parameter construction (deterministic, in-script). BN is inference-mode
# (running stats) and its scale is folded into the conv weights.
# ----------------------------------------------------------------------------
def fold_bn(gamma, beta, mean, var, conv_bias=None, eps=1e-3):
    s = gamma / jnp.sqrt(var + eps)
    b = beta - s * mean
    if conv_bias is not None:
        b = b + s * conv_bias
    return s, b


def make_bn(key, c):
    k1, k2, k3, k4 = jax.random.split(key, 4)
    gamma = 1.0 + 0.1 * jax.random.normal(k1, (c,), jnp.float32)
    beta = 0.1 * jax.random.normal(k2, (c,), jnp.float32)
    mean = 0.1 * jax.random.normal(k3, (c,), jnp.float32)
    var = 1.0 + 0.1 * jax.random.uniform(k4, (c,), jnp.float32)
    return gamma, beta, mean, var


def make_conv_bn(key, cin, cout, ksize, use_bias=False):
    """Returns (w_folded, bias) where w_folded already carries the BN scale."""
    kw_, kb, kbn = jax.random.split(key, 3)
    if ksize == 1:
        w = 0.05 * jax.random.normal(kw_, (cin, cout), jnp.float32)
    else:
        w = 0.05 * jax.random.normal(kw_, (ksize, ksize, cin, cout), jnp.float32)
    conv_bias = (0.05 * jax.random.normal(kb, (cout,), jnp.float32)
                 if use_bias else None)
    gamma, beta, mean, var = make_bn(kbn, cout)
    s, b = fold_bn(gamma, beta, mean, var, conv_bias)
    return w * s, b


def init_params(key):
    keys = jax.random.split(key, 7)
    p = {}
    p["b0"] = make_conv_bn(keys[0], 320, 32, 1)
    p["b1a"] = make_conv_bn(keys[1], 320, 32, 1)
    p["b1b"] = make_conv_bn(keys[2], 32, 32, 3)
    p["b2a"] = make_conv_bn(keys[3], 320, 32, 1)
    p["b2b"] = make_conv_bn(keys[4], 32, 48, 3)
    p["b2c"] = make_conv_bn(keys[5], 48, 64, 3)
    p["conv"] = make_conv_bn(keys[6], 128, 320, 1, use_bias=True)
    return p


def pack_kernel_params(p):
    """Fuse the three 1x1 stems, reshape 3x3 taps to im2col (9*Cin, Cout),
    cast matmul weights to bf16 (biases stay f32)."""
    bf = jnp.bfloat16
    w0, b0 = p["b0"]; w1a, b1a = p["b1a"]; w2a, b2a = p["b2a"]
    w1b, b1b = p["b1b"]; w2b, b2b = p["b2b"]; w2c, b2c = p["b2c"]
    wl, bl = p["conv"]
    return dict(
        ws=jnp.concatenate([w0, w1a, w2a], axis=1).astype(bf),      # (320, 96)
        bs=jnp.concatenate([b0, b1a, b2a]).reshape(1, 96),
        w1b=w1b.reshape(9 * 32, 32).astype(bf), b1b=b1b.reshape(1, 32),
        w2b=w2b.reshape(9 * 32, 48).astype(bf), b2b=b2b.reshape(1, 48),
        w2c=w2c.reshape(9 * 48, 64).astype(bf), b2c=b2c.reshape(1, 64),
        wl=wl.astype(bf),                       bl=bl.reshape(1, 320),
    )


# ----------------------------------------------------------------------------
# Public forward (NCHW in / NCHW out, like the PyTorch module)
# ----------------------------------------------------------------------------
def inception_resnet_a(x_nchw, params, scale=1.0):
    x = jnp.transpose(x_nchw, (0, 2, 3, 1)).astype(jnp.float32)   # NCHW -> NHWC
    kp = pack_kernel_params(params)
    out = block35_forward(x, kp, scale)
    return jnp.transpose(out, (0, 3, 1, 2))                       # NHWC -> NCHW


# ----------------------------------------------------------------------------
# Pure-JAX reference (same math: bf16 matmul inputs, f32 accumulation/epilogue)
# ----------------------------------------------------------------------------
def _ref_conv_bn(x, w, b, relu, ksize):
    if ksize == 1:
        w = w.reshape(1, 1, *w.shape)
    y = jax.lax.conv_general_dilated(
        x.astype(jnp.bfloat16), w.astype(jnp.bfloat16), (1, 1), "SAME",
        dimension_numbers=("NHWC", "HWIO", "NHWC"),
        preferred_element_type=jnp.float32)
    y = y + b
    if relu:
        y = jnp.maximum(y, 0.0)
    return y


def reference_forward(x_nchw, params, scale=1.0):
    x = jnp.transpose(x_nchw, (0, 2, 3, 1)).astype(jnp.float32)
    w, b = params["b0"];  x0 = _ref_conv_bn(x, w, b, True, 1)
    w, b = params["b1a"]; t = _ref_conv_bn(x, w, b, True, 1)
    w, b = params["b1b"]; x1 = _ref_conv_bn(t, w, b, True, 3)
    w, b = params["b2a"]; t = _ref_conv_bn(x, w, b, True, 1)
    w, b = params["b2b"]; t = _ref_conv_bn(t, w, b, True, 3)
    w, b = params["b2c"]; x2 = _ref_conv_bn(t, w, b, True, 3)
    mixed = jnp.concatenate([x0, x1, x2], axis=-1)
    w, b = params["conv"]; r = _ref_conv_bn(mixed, w, b, False, 1)
    out = x + scale * r
    return jnp.transpose(out, (0, 3, 1, 2))


# ----------------------------------------------------------------------------
if __name__ == "__main__":
    key = jax.random.PRNGKey(0)
    kx, kpkey = jax.random.split(key)

    # 320 in-channels is fixed by the architecture; keep batch/spatial small.
    N, C, H, W = 2, 320, 8, 8
    x = jax.random.normal(kx, (N, C, H, W), jnp.float32)
    params = init_params(kpkey)
    scale = 0.17

    fwd = jax.jit(lambda a: inception_resnet_a(a, params, scale))
    out = jax.block_until_ready(fwd(x))

    ref = jax.block_until_ready(reference_forward(x, params, scale))
    assert out.shape == (N, C, H, W)
    max_err = float(jnp.max(jnp.abs(out - ref)))
    assert jnp.allclose(out, ref, atol=2e-3, rtol=2e-3), max_err

    print("KERNEL_OK")
</pallas_src>

<mosaic_0001>
module attributes {stable_mosaic.version = 11 : i64} {
  func.func @_block35_kernel(%arg0: i32, %arg1: memref<2x8x8x320xf32, #tpu.memory_space<vmem>>, %arg2: memref<320x96xbf16, #tpu.memory_space<vmem>>, %arg3: memref<1x96xf32, #tpu.memory_space<vmem>>, %arg4: memref<288x32xbf16, #tpu.memory_space<vmem>>, %arg5: memref<1x32xf32, #tpu.memory_space<vmem>>, %arg6: memref<288x48xbf16, #tpu.memory_space<vmem>>, %arg7: memref<1x48xf32, #tpu.memory_space<vmem>>, %arg8: memref<432x64xbf16, #tpu.memory_space<vmem>>, %arg9: memref<1x64xf32, #tpu.memory_space<vmem>>, %arg10: memref<128x320xbf16, #tpu.memory_space<vmem>>, %arg11: memref<1x320xf32, #tpu.memory_space<vmem>>, %arg12: memref<2x8x8x320xf32, #tpu.memory_space<vmem>>, %arg13: memref<2x10x10x64xbf16, #tpu.memory_space<vmem>>, %arg14: memref<2x10x10x48xbf16, #tpu.memory_space<vmem>>, %arg15: memref<128x288xbf16, #tpu.memory_space<vmem>>, %arg16: memref<128x288xbf16, #tpu.memory_space<vmem>>, %arg17: memref<128x432xbf16, #tpu.memory_space<vmem>>, %arg18: memref<128x128xbf16, #tpu.memory_space<vmem>>) attributes {dimension_semantics = [#tpu.dimension_semantics<parallel>], iteration_bounds = array<i64: 1>, scalar_prefetch = 0 : i64, scratch_operands = 6 : i64, tpu.core_type = #tpu.core_type<tc>, window_params = [{transform_indices = @transform_0, window_bounds = array<i64: 2, 8, 8, 320>}, {pipeline_mode = #tpu.pipeline_mode<synchronous>, transform_indices = @transform_1, window_bounds = array<i64: 320, 96>}, {pipeline_mode = #tpu.pipeline_mode<synchronous>, transform_indices = @transform_2, window_bounds = array<i64: 1, 96>}, {pipeline_mode = #tpu.pipeline_mode<synchronous>, transform_indices = @transform_3, window_bounds = array<i64: 288, 32>}, {pipeline_mode = #tpu.pipeline_mode<synchronous>, transform_indices = @transform_4, window_bounds = array<i64: 1, 32>}, {pipeline_mode = #tpu.pipeline_mode<synchronous>, transform_indices = @transform_5, window_bounds = array<i64: 288, 48>}, {pipeline_mode = #tpu.pipeline_mode<synchronous>, transform_indices = @transform_6, window_bounds = array<i64: 1, 48>}, {pipeline_mode = #tpu.pipeline_mode<synchronous>, transform_indices = @transform_7, window_bounds = array<i64: 432, 64>}, {pipeline_mode = #tpu.pipeline_mode<synchronous>, transform_indices = @transform_8, window_bounds = array<i64: 1, 64>}, {pipeline_mode = #tpu.pipeline_mode<synchronous>, transform_indices = @transform_9, window_bounds = array<i64: 128, 320>}, {pipeline_mode = #tpu.pipeline_mode<synchronous>, transform_indices = @transform_10, window_bounds = array<i64: 1, 320>}, {transform_indices = @transform_11, window_bounds = array<i64: 2, 8, 8, 320>}]} {
    %c0 = arith.constant 0 : index
    %c0_0 = arith.constant 0 : index
    %c0_1 = arith.constant 0 : index
    %c0_2 = arith.constant 0 : index
    %0 = vector.load %arg1[%c0, %c0_0, %c0_1, %c0_2] : memref<2x8x8x320xf32, #tpu.memory_space<vmem>>, vector<2x8x8x320xf32>
    %1 = vector.shape_cast %0 : vector<2x8x8x320xf32> to vector<128x320xf32>
    %2 = arith.truncf %1 : vector<128x320xf32> to vector<128x320xbf16>
    %c0_3 = arith.constant 0 : index
    %c0_4 = arith.constant 0 : index
    %3 = vector.load %arg2[%c0_3, %c0_4] : memref<320x96xbf16, #tpu.memory_space<vmem>>, vector<320x96xbf16>
    %cst = arith.constant dense<0.000000e+00> : vector<128x96xf32>
    %4 = tpu.matmul %2, %3, %cst {dimension_numbers = #tpu.dot_dimension_numbers<[1], [0], [0], [1], [0, 0, 1, 1], [], []>} : vector<128x320xbf16>, vector<320x96xbf16>, vector<128x96xf32> -> vector<128x96xf32>
    %c0_5 = arith.constant 0 : index
    %c0_6 = arith.constant 0 : index
    %5 = vector.load %arg3[%c0_5, %c0_6] : memref<1x96xf32, #tpu.memory_space<vmem>>, vector<1x96xf32>
    %6 = vector.broadcast %5 : vector<1x96xf32> to vector<128x96xf32>
    %7 = arith.addf %4, %6 : vector<128x96xf32>
    %cst_7 = arith.constant 0.000000e+00 : f32
    %8 = vector.broadcast %cst_7 : f32 to vector<128x96xf32>
    %9 = arith.maximumf %7, %8 : vector<128x96xf32>
    %10 = vector.extract_strided_slice %9 {offsets = [0, 0], sizes = [128, 32], strides = [1, 1]} : vector<128x96xf32> to vector<128x32xf32>
    %11 = arith.truncf %10 : vector<128x32xf32> to vector<128x32xbf16>
    %c0_8 = arith.constant 0 : index
    %c0_9 = arith.constant 0 : index
    %12 = vector.load %arg18[%c0_8, %c0_9] : memref<128x128xbf16, #tpu.memory_space<vmem>>, vector<128x32xbf16>
    tpu.vector_store %arg18[%c0_8, %c0_9], %11 {strides = array<i32>} : memref<128x128xbf16, #tpu.memory_space<vmem>>, vector<128x32xbf16>,
    %cst_10 = arith.constant 0.000000e+00 : bf16
    %13 = vector.broadcast %cst_10 : bf16 to vector<2x1x10x64xbf16>
    %cst_11 = arith.constant 0.000000e+00 : bf16
    %14 = vector.broadcast %cst_11 : bf16 to vector<2x8x1x64xbf16>
    %c0_12 = arith.constant 0 : index
    %c0_13 = arith.constant 0 : index
    %c0_14 = arith.constant 0 : index
    %c0_15 = arith.constant 0 : index
    %15 = vector.load %arg13[%c0_12, %c0_13, %c0_14, %c0_15] : memref<2x10x10x64xbf16, #tpu.memory_space<vmem>>, vector<2x1x10x64xbf16>
    tpu.vector_store %arg13[%c0_12, %c0_13, %c0_14, %c0_15], %13 {strides = array<i32>} : memref<2x10x10x64xbf16, #tpu.memory_space<vmem>>, vector<2x1x10x64xbf16>,
    %c0_16 = arith.constant 0 : index
    %c9 = arith.constant 9 : index
    %c0_17 = arith.constant 0 : index
    %c0_18 = arith.constant 0 : index
    %16 = vector.load %arg13[%c0_16, %c9, %c0_17, %c0_18] : memref<2x10x10x64xbf16, #tpu.memory_space<vmem>>, vector<2x1x10x64xbf16>
    tpu.vector_store %arg13[%c0_16, %c9, %c0_17, %c0_18], %13 {strides = array<i32>} : memref<2x10x10x64xbf16, #tpu.memory_space<vmem>>, vector<2x1x10x64xbf16>,
    %c0_19 = arith.constant 0 : index
    %c1 = arith.constant 1 : index
    %c0_20 = arith.constant 0 : index
    %c0_21 = arith.constant 0 : index
    %17 = vector.load %arg13[%c0_19, %c1, %c0_20, %c0_21] : memref<2x10x10x64xbf16, #tpu.memory_space<vmem>>, vector<2x8x1x64xbf16>
    tpu.vector_store %arg13[%c0_19, %c1, %c0_20, %c0_21], %14 {strides = array<i32>} : memref<2x10x10x64xbf16, #tpu.memory_space<vmem>>, vector<2x8x1x64xbf16>,
    %c0_22 = arith.constant 0 : index
    %c1_23 = arith.constant 1 : index
    %c9_24 = arith.constant 9 : index
    %c0_25 = arith.constant 0 : index
    %18 = vector.load %arg13[%c0_22, %c1_23, %c9_24, %c0_25] : memref<2x10x10x64xbf16, #tpu.memory_space<vmem>>, vector<2x8x1x64xbf16>
    tpu.vector_store %arg13[%c0_22, %c1_23, %c9_24, %c0_25], %14 {strides = array<i32>} : memref<2x10x10x64xbf16, #tpu.memory_space<vmem>>, vector<2x8x1x64xbf16>,
    %cst_26 = arith.constant 0.000000e+00 : bf16
    %19 = vector.broadcast %cst_26 : bf16 to vector<2x1x10x48xbf16>
    %cst_27 = arith.constant 0.000000e+00 : bf16
    %20 = vector.broadcast %cst_27 : bf16 to vector<2x8x1x48xbf16>
    %c0_28 = arith.constant 0 : index
    %c0_29 = arith.constant 0 : index
    %c0_30 = arith.constant 0 : index
    %c0_31 = arith.constant 0 : index
    %21 = vector.load %arg14[%c0_28, %c0_29, %c0_30, %c0_31] : memref<2x10x10x48xbf16, #tpu.memory_space<vmem>>, vector<2x1x10x48xbf16>
    tpu.vector_store %arg14[%c0_28, %c0_29, %c0_30, %c0_31], %19 {strides = array<i32>} : memref<2x10x10x48xbf16, #tpu.memory_space<vmem>>, vector<2x1x10x48xbf16>,
    %c0_32 = arith.constant 0 : index
    %c9_33 = arith.constant 9 : index
    %c0_34 = arith.constant 0 : index
    %c0_35 = arith.constant 0 : index
    %22 = vector.load %arg14[%c0_32, %c9_33, %c0_34, %c0_35] : memref<2x10x10x48xbf16, #tpu.memory_space<vmem>>, vector<2x1x10x48xbf16>
    tpu.vector_store %arg14[%c0_32, %c9_33, %c0_34, %c0_35], %19 {strides = array<i32>} : memref<2x10x10x48xbf16, #tpu.memory_space<vmem>>, vector<2x1x10x48xbf16>,
    %c0_36 = arith.constant 0 : index
    %c1_37 = arith.constant 1 : index
    %c0_38 = arith.constant 0 : index
    %c0_39 = arith.constant 0 : index
    %23 = vector.load %arg14[%c0_36, %c1_37, %c0_38, %c0_39] : memref<2x10x10x48xbf16, #tpu.memory_space<vmem>>, vector<2x8x1x48xbf16>
    tpu.vector_store %arg14[%c0_36, %c1_37, %c0_38, %c0_39], %20 {strides = array<i32>} : memref<2x10x10x48xbf16, #tpu.memory_space<vmem>>, vector<2x8x1x48xbf16>,
    %c0_40 = arith.constant 0 : index
    %c1_41 = arith.constant 1 : index
    %c9_42 = arith.constant 9 : index
    %c0_43 = arith.constant 0 : index
    %24 = vector.load %arg14[%c0_40, %c1_41, %c9_42, %c0_43] : memref<2x10x10x48xbf16, #tpu.memory_space<vmem>>, vector<2x8x1x48xbf16>
    tpu.vector_store %arg14[%c0_40, %c1_41, %c9_42, %c0_43], %20 {strides = array<i32>} : memref<2x10x10x48xbf16, #tpu.memory_space<vmem>>, vector<2x8x1x48xbf16>,
    %25 = vector.extract_strided_slice %9 {offsets = [0, 32], sizes = [128, 64], strides = [1, 1]} : vector<128x96xf32> to vector<128x64xf32>
    %26 = arith.truncf %25 : vector<128x64xf32> to vector<128x64xbf16>
    %27 = vector.shape_cast %26 : vector<128x64xbf16> to vector<2x8x8x64xbf16>
    %c0_44 = arith.constant 0 : index
    %c1_45 = arith.constant 1 : index
    %c1_46 = arith.constant 1 : index
    %c0_47 = arith.constant 0 : index
    %28 = vector.load %arg13[%c0_44, %c1_45, %c1_46, %c0_47] : memref<2x10x10x64xbf16, #tpu.memory_space<vmem>>, vector<2x8x8x64xbf16>
    tpu.vector_store %arg13[%c0_44, %c1_45, %c1_46, %c0_47], %27 {strides = array<i32>} : memref<2x10x10x64xbf16, #tpu.memory_space<vmem>>, vector<2x8x8x64xbf16>,
    %c0_48 = arith.constant 0 : index
    %c0_49 = arith.constant 0 : index
    %c0_50 = arith.constant 0 : index
    %c0_51 = arith.constant 0 : index
    %29 = vector.load %arg13[%c0_48, %c0_49, %c0_50, %c0_51] : memref<2x10x10x64xbf16, #tpu.memory_space<vmem>>, vector<2x8x8x32xbf16>
    %30 = vector.shape_cast %29 : vector<2x8x8x32xbf16> to vector<128x32xbf16>
    %c0_52 = arith.constant 0 : index
    %c0_53 = arith.constant 0 : index
    %c0_54 = arith.constant 0 : index
    %c32 = arith.constant 32 : index
    %31 = vector.load %arg13[%c0_52, %c0_53, %c0_54, %c32] : memref<2x10x10x64xbf16, #tpu.memory_space<vmem>>, vector<2x8x8x32xbf16>
    %32 = vector.shape_cast %31 : vector<2x8x8x32xbf16> to vector<128x32xbf16>
    %c0_55 = arith.constant 0 : index
    %c0_56 = arith.constant 0 : index
    %33 = vector.load %arg15[%c0_55, %c0_56] : memref<128x288xbf16, #tpu.memory_space<vmem>>, vector<128x32xbf16>
    tpu.vector_store %arg15[%c0_55, %c0_56], %30 {strides = array<i32>} : memref<128x288xbf16, #tpu.memory_space<vmem>>, vector<128x32xbf16>,
    %c0_57 = arith.constant 0 : index
    %c0_58 = arith.constant 0 : index
    %34 = vector.load %arg16[%c0_57, %c0_58] : memref<128x288xbf16, #tpu.memory_space<vmem>>, vector<128x32xbf16>
    tpu.vector_store %arg16[%c0_57, %c0_58], %32 {strides = array<i32>} : memref<128x288xbf16, #tpu.memory_space<vmem>>, vector<128x32xbf16>,
    %c0_59 = arith.constant 0 : index
    %c0_60 = arith.constant 0 : index
    %c1_61 = arith.constant 1 : index
    %c0_62 = arith.constant 0 : index
    %35 = vector.load %arg13[%c0_59, %c0_60, %c1_61, %c0_62] : memref<2x10x10x64xbf16, #tpu.memory_space<vmem>>, vector<2x8x8x32xbf16>
    %36 = vector.shape_cast %35 : vector<2x8x8x32xbf16> to vector<128x32xbf16>
    %c0_63 = arith.constant 0 : index
    %c0_64 = arith.constant 0 : index
    %c1_65 = arith.constant 1 : index
    %c32_66 = arith.constant 32 : index
    %37 = vector.load %arg13[%c0_63, %c0_64, %c1_65, %c32_66] : memref<2x10x10x64xbf16, #tpu.memory_space<vmem>>, vector<2x8x8x32xbf16>
    %38 = vector.shape_cast %37 : vector<2x8x8x32xbf16> to vector<128x32xbf16>
    %c0_67 = arith.constant 0 : index
    %c32_68 = arith.constant 32 : index
    %39 = vector.load %arg15[%c0_67, %c32_68] : memref<128x288xbf16, #tpu.memory_space<vmem>>, vector<128x32xbf16>
    tpu.vector_store %arg15[%c0_67, %c32_68], %36 {strides = array<i32>} : memref<128x288xbf16, #tpu.memory_space<vmem>>, vector<128x32xbf16>,
    %c0_69 = arith.constant 0 : index
    %c32_70 = arith.constant 32 : index
    %40 = vector.load %arg16[%c0_69, %c32_70] : memref<128x288xbf16, #tpu.memory_space<vmem>>, vector<128x32xbf16>
    tpu.vector_store %arg16[%c0_69, %c32_70], %38 {strides = array<i32>} : memref<128x288xbf16, #tpu.memory_space<vmem>>, vector<128x32xbf16>,
    %c0_71 = arith.constant 0 : index
    %c0_72 = arith.constant 0 : index
    %c2 = arith.constant 2 : index
    %c0_73 = arith.constant 0 : index
    %41 = vector.load %arg13[%c0_71, %c0_72, %c2, %c0_73] : memref<2x10x10x64xbf16, #tpu.memory_space<vmem>>, vector<2x8x8x32xbf16>
    %42 = vector.shape_cast %41 : vector<2x8x8x32xbf16> to vector<128x32xbf16>
    %c0_74 = arith.constant 0 : index
    %c0_75 = arith.constant 0 : index
    %c2_76 = arith.constant 2 : index
    %c32_77 = arith.constant 32 : index
    %43 = vector.load %arg13[%c0_74, %c0_75, %c2_76, %c32_77] : memref<2x10x10x64xbf16, #tpu.memory_space<vmem>>, vector<2x8x8x32xbf16>
    %44 = vector.shape_cast %43 : vector<2x8x8x32xbf16> to vector<128x32xbf16>
    %c0_78 = arith.constant 0 : index
    %c64 = arith.constant 64 : index
    %45 = vector.load %arg15[%c0_78, %c64] : memref<128x288xbf16, #tpu.memory_space<vmem>>, vector<128x32xbf16>
    tpu.vector_store %arg15[%c0_78, %c64], %42 {strides = array<i32>} : memref<128x288xbf16, #tpu.memory_space<vmem>>, vector<128x32xbf16>,
    %c0_79 = arith.constant 0 : index
    %c64_80 = arith.constant 64 : index
    %46 = vector.load %arg16[%c0_79, %c64_80] : memref<128x288xbf16, #tpu.memory_space<vmem>>, vector<128x32xbf16>
    tpu.vector_store %arg16[%c0_79, %c64_80], %44 {strides = array<i32>} : memref<128x288xbf16, #tpu.memory_space<vmem>>, vector<128x32xbf16>,
    %c0_81 = arith.constant 0 : index
    %c1_82 = arith.constant 1 : index
    %c0_83 = arith.constant 0 : index
    %c0_84 = arith.constant 0 : index
    %47 = vector.load %arg13[%c0_81, %c1_82, %c0_83, %c0_84] : memref<2x10x10x64xbf16, #tpu.memory_space<vmem>>, vector<2x8x8x32xbf16>
    %48 = vector.shape_cast %47 : vector<2x8x8x32xbf16> to vector<128x32xbf16>
    %c0_85 = arith.constant 0 : index
    %c1_86 = arith.constant 1 : index
    %c0_87 = arith.constant 0 : index
    %c32_88 = arith.constant 32 : index
    %49 = vector.load %arg13[%c0_85, %c1_86, %c0_87, %c32_88] : memref<2x10x10x64xbf16, #tpu.memory_space<vmem>>, vector<2x8x8x32xbf16>
    %50 = vector.shape_cast %49 : vector<2x8x8x32xbf16> to vector<128x32xbf16>
    %c0_89 = arith.constant 0 : index
    %c96 = arith.constant 96 : index
    %51 = vector.load %arg15[%c0_89, %c96] : memref<128x288xbf16, #tpu.memory_space<vmem>>, vector<128x32xbf16>
    tpu.vector_store %arg15[%c0_89, %c96], %48 {strides = array<i32>} : memref<128x288xbf16, #tpu.memory_space<vmem>>, vector<128x32xbf16>,
    %c0_90 = arith.constant 0 : index
    %c96_91 = arith.constant 96 : index
    %52 = vector.load %arg16[%c0_90, %c96_91] : memref<128x288xbf16, #tpu.memory_space<vmem>>, vector<128x32xbf16>
    tpu.vector_store %arg16[%c0_90, %c96_91], %50 {strides = array<i32>} : memref<128x288xbf16, #tpu.memory_space<vmem>>, vector<128x32xbf16>,
    %c0_92 = arith.constant 0 : index
    %c1_93 = arith.constant 1 : index
    %c1_94 = arith.constant 1 : index
    %c0_95 = arith.constant 0 : index
    %53 = vector.load %arg13[%c0_92, %c1_93, %c1_94, %c0_95] : memref<2x10x10x64xbf16, #tpu.memory_space<vmem>>, vector<2x8x8x32xbf16>
    %54 = vector.shape_cast %53 : vector<2x8x8x32xbf16> to vector<128x32xbf16>
    %c0_96 = arith.constant 0 : index
    %c1_97 = arith.constant 1 : index
    %c1_98 = arith.constant 1 : index
    %c32_99 = arith.constant 32 : index
    %55 = vector.load %arg13[%c0_96, %c1_97, %c1_98, %c32_99] : memref<2x10x10x64xbf16, #tpu.memory_space<vmem>>, vector<2x8x8x32xbf16>
    %56 = vector.shape_cast %55 : vector<2x8x8x32xbf16> to vector<128x32xbf16>
    %c0_100 = arith.constant 0 : index
    %c128 = arith.constant 128 : index
    %57 = vector.load %arg15[%c0_100, %c128] : memref<128x288xbf16, #tpu.memory_space<vmem>>, vector<128x32xbf16>
    tpu.vector_store %arg15[%c0_100, %c128], %54 {strides = array<i32>} : memref<128x288xbf16, #tpu.memory_space<vmem>>, vector<128x32xbf16>,
    %c0_101 = arith.constant 0 : index
    %c128_102 = arith.constant 128 : index
    %58 = vector.load %arg16[%c0_101, %c128_102] : memref<128x288xbf16, #tpu.memory_space<vmem>>, vector<128x32xbf16>
    tpu.vector_store %arg16[%c0_101, %c128_102], %56 {strides = array<i32>} : memref<128x288xbf16, #tpu.memory_space<vmem>>, vector<128x32xbf16>,
    %c0_103 = arith.constant 0 : index
    %c1_104 = arith.constant 1 : index
    %c2_105 = arith.constant 2 : index
    %c0_106 = arith.constant 0 : index
    %59 = vector.load %arg13[%c0_103, %c1_104, %c2_105, %c0_106] : memref<2x10x10x64xbf16, #tpu.memory_space<vmem>>, vector<2x8x8x32xbf16>
    %60 = vector.shape_cast %59 : vector<2x8x8x32xbf16> to vector<128x32xbf16>
    %c0_107 = arith.constant 0 : index
    %c1_108 = arith.constant 1 : index
    %c2_109 = arith.constant 2 : index
    %c32_110 = arith.constant 32 : index
    %61 = vector.load %arg13[%c0_107, %c1_108, %c2_109, %c32_110] : memref<2x10x10x64xbf16, #tpu.memory_space<vmem>>, vector<2x8x8x32xbf16>
    %62 = vector.shape_cast %61 : vector<2x8x8x32xbf16> to vector<128x32xbf16>
    %c0_111 = arith.constant 0 : index
    %c160 = arith.constant 160 : index
    %63 = vector.load %arg15[%c0_111, %c160] : memref<128x288xbf16, #tpu.memory_space<vmem>>, vector<128x32xbf16>
    tpu.vector_store %arg15[%c0_111, %c160], %60 {strides = array<i32>} : memref<128x288xbf16, #tpu.memory_space<vmem>>, vector<128x32xbf16>,
    %c0_112 = arith.constant 0 : index
    %c160_113 = arith.constant 160 : index
    %64 = vector.load %arg16[%c0_112, %c160_113] : memref<128x288xbf16, #tpu.memory_space<vmem>>, vector<128x32xbf16>
    tpu.vector_store %arg16[%c0_112, %c160_113], %62 {strides = array<i32>} : memref<128x288xbf16, #tpu.memory_space<vmem>>, vector<128x32xbf16>,
    %c0_114 = arith.constant 0 : index
    %c2_115 = arith.constant 2 : index
    %c0_116 = arith.constant 0 : index
    %c0_117 = arith.constant 0 : index
    %65 = vector.load %arg13[%c0_114, %c2_115, %c0_116, %c0_117] : memref<2x10x10x64xbf16, #tpu.memory_space<vmem>>, vector<2x8x8x32xbf16>
    %66 = vector.shape_cast %65 : vector<2x8x8x32xbf16> to vector<128x32xbf16>
    %c0_118 = arith.constant 0 : index
    %c2_119 = arith.constant 2 : index
    %c0_120 = arith.constant 0 : index
    %c32_121 = arith.constant 32 : index
    %67 = vector.load %arg13[%c0_118, %c2_119, %c0_120, %c32_121] : memref<2x10x10x64xbf16, #tpu.memory_space<vmem>>, vector<2x8x8x32xbf16>
    %68 = vector.shape_cast %67 : vector<2x8x8x32xbf16> to vector<128x32xbf16>
    %c0_122 = arith.constant 0 : index
    %c192 = arith.constant 192 : index
    %69 = vector.load %arg15[%c0_122, %c192] : memref<128x288xbf16, #tpu.memory_space<vmem>>, vector<128x32xbf16>
    tpu.vector_store %arg15[%c0_122, %c192], %66 {strides = array<i32>} : memref<128x288xbf16, #tpu.memory_space<vmem>>, vector<128x32xbf16>,
    %c0_123 = arith.constant 0 : index
    %c192_124 = arith.constant 192 : index
    %70 = vector.load %arg16[%c0_123, %c192_124] : memref<128x288xbf16, #tpu.memory_space<vmem>>, vector<128x32xbf16>
    tpu.vector_store %arg16[%c0_123, %c192_124], %68 {strides = array<i32>} : memref<128x288xbf16, #tpu.memory_space<vmem>>, vector<128x32xbf16>,
    %c0_125 = arith.constant 0 : index
    %c2_126 = arith.constant 2 : index
    %c1_127 = arith.constant 1 : index
    %c0_128 = arith.constant 0 : index
    %71 = vector.load %arg13[%c0_125, %c2_126, %c1_127, %c0_128] : memref<2x10x10x64xbf16, #tpu.memory_space<vmem>>, vector<2x8x8x32xbf16>
    %72 = vector.shape_cast %71 : vector<2x8x8x32xbf16> to vector<128x32xbf16>
    %c0_129 = arith.constant 0 : index
    %c2_130 = arith.constant 2 : index
    %c1_131 = arith.constant 1 : index
    %c32_132 = arith.constant 32 : index
    %73 = vector.load %arg13[%c0_129, %c2_130, %c1_131, %c32_132] : memref<2x10x10x64xbf16, #tpu.memory_space<vmem>>, vector<2x8x8x32xbf16>
    %74 = vector.shape_cast %73 : vector<2x8x8x32xbf16> to vector<128x32xbf16>
    %c0_133 = arith.constant 0 : index
    %c224 = arith.constant 224 : index
    %75 = vector.load %arg15[%c0_133, %c224] : memref<128x288xbf16, #tpu.memory_space<vmem>>, vector<128x32xbf16>
    tpu.vector_store %arg15[%c0_133, %c224], %72 {strides = array<i32>} : memref<128x288xbf16, #tpu.memory_space<vmem>>, vector<128x32xbf16>,
    %c0_134 = arith.constant 0 : index
    %c224_135 = arith.constant 224 : index
    %76 = vector.load %arg16[%c0_134, %c224_135] : memref<128x288xbf16, #tpu.memory_space<vmem>>, vector<128x32xbf16>
    tpu.vector_store %arg16[%c0_134, %c224_135], %74 {strides = array<i32>} : memref<128x288xbf16, #tpu.memory_space<vmem>>, vector<128x32xbf16>,
    %c0_136 = arith.constant 0 : index
    %c2_137 = arith.constant 2 : index
    %c2_138 = arith.constant 2 : index
    %c0_139 = arith.constant 0 : index
    %77 = vector.load %arg13[%c0_136, %c2_137, %c2_138, %c0_139] : memref<2x10x10x64xbf16, #tpu.memory_space<vmem>>, vector<2x8x8x32xbf16>
    %78 = vector.shape_cast %77 : vector<2x8x8x32xbf16> to vector<128x32xbf16>
    %c0_140 = arith.constant 0 : index
    %c2_141 = arith.constant 2 : index
    %c2_142 = arith.constant 2 : index
    %c32_143 = arith.constant 32 : index
    %79 = vector.load %arg13[%c0_140, %c2_141, %c2_142, %c32_143] : memref<2x10x10x64xbf16, #tpu.memory_space<vmem>>, vector<2x8x8x32xbf16>
    %80 = vector.shape_cast %79 : vector<2x8x8x32xbf16> to vector<128x32xbf16>
    %c0_144 = arith.constant 0 : index
    %c256 = arith.constant 256 : index
    %81 = vector.load %arg15[%c0_144, %c256] : memref<128x288xbf16, #tpu.memory_space<vmem>>, vector<128x32xbf16>
    tpu.vector_store %arg15[%c0_144, %c256], %78 {strides = array<i32>} : memref<128x288xbf16, #tpu.memory_space<vmem>>, vector<128x32xbf16>,
    %c0_145 = arith.constant 0 : index
    %c256_146 = arith.constant 256 : index
    %82 = vector.load %arg16[%c0_145, %c256_146] : memref<128x288xbf16, #tpu.memory_space<vmem>>, vector<128x32xbf16>
    tpu.vector_store %arg16[%c0_145, %c256_146], %80 {strides = array<i32>} : memref<128x288xbf16, #tpu.memory_space<vmem>>, vector<128x32xbf16>,
    %c0_147 = arith.constant 0 : index
    %c0_148 = arith.constant 0 : index
    %83 = vector.load %arg15[%c0_147, %c0_148] : memref<128x288xbf16, #tpu.memory_space<vmem>>, vector<128x288xbf16>
    %c0_149 = arith.constant 0 : index
    %c0_150 = arith.constant 0 : index
    %84 = vector.load %arg4[%c0_149, %c0_150] : memref<288x32xbf16, #tpu.memory_space<vmem>>, vector<288x32xbf16>
    %cst_151 = arith.constant dense<0.000000e+00> : vector<128x32xf32>
    %85 = tpu.matmul %83, %84, %cst_151 {dimension_numbers = #tpu.dot_dimension_numbers<[1], [0], [0], [1], [0, 0, 1, 1], [], []>} : vector<128x288xbf16>, vector<288x32xbf16>, vector<128x32xf32> -> vector<128x32xf32>
    %c0_152 = arith.constant 0 : index
    %c0_153 = arith.constant 0 : index
    %86 = vector.load %arg5[%c0_152, %c0_153] : memref<1x32xf32, #tpu.memory_space<vmem>>, vector<1x32xf32>
    %87 = vector.broadcast %86 : vector<1x32xf32> to vector<128x32xf32>
    %88 = arith.addf %85, %87 : vector<128x32xf32>
    %cst_154 = arith.constant 0.000000e+00 : f32
    %89 = vector.broadcast %cst_154 : f32 to vector<128x32xf32>
    %90 = arith.maximumf %88, %89 : vector<128x32xf32>
    %91 = arith.truncf %90 : vector<128x32xf32> to vector<128x32xbf16>
    %c0_155 = arith.constant 0 : index
    %c32_156 = arith.constant 32 : index
    %92 = vector.load %arg18[%c0_155, %c32_156] : memref<128x128xbf16, #tpu.memory_space<vmem>>, vector<128x32xbf16>
    tpu.vector_store %arg18[%c0_155, %c32_156], %91 {strides = array<i32>} : memref<128x128xbf16, #tpu.memory_space<vmem>>, vector<128x32xbf16>,
    %c0_157 = arith.constant 0 : index
    %c0_158 = arith.constant 0 : index
    %93 = vector.load %arg16[%c0_157, %c0_158] : memref<128x288xbf16, #tpu.memory_space<vmem>>, vector<128x288xbf16>
    %c0_159 = arith.constant 0 : index
    %c0_160 = arith.constant 0 : index
    %94 = vector.load %arg6[%c0_159, %c0_160] : memref<288x48xbf16, #tpu.memory_space<vmem>>, vector<288x48xbf16>
    %cst_161 = arith.constant dense<0.000000e+00> : vector<128x48xf32>
    %95 = tpu.matmul %93, %94, %cst_161 {dimension_numbers = #tpu.dot_dimension_numbers<[1], [0], [0], [1], [0, 0, 1, 1], [], []>} : vector<128x288xbf16>, vector<288x48xbf16>, vector<128x48xf32> -> vector<128x48xf32>
    %c0_162 = arith.constant 0 : index
    %c0_163 = arith.constant 0 : index
    %96 = vector.load %arg7[%c0_162, %c0_163] : memref<1x48xf32, #tpu.memory_space<vmem>>, vector<1x48xf32>
    %97 = vector.broadcast %96 : vector<1x48xf32> to vector<128x48xf32>
    %98 = arith.addf %95, %97 : vector<128x48xf32>
    %cst_164 = arith.constant 0.000000e+00 : f32
    %99 = vector.broadcast %cst_164 : f32 to vector<128x48xf32>
    %100 = arith.maximumf %98, %99 : vector<128x48xf32>
    %101 = arith.truncf %100 : vector<128x48xf32> to vector<128x48xbf16>
    %102 = vector.shape_cast %101 : vector<128x48xbf16> to vector<2x8x8x48xbf16>
    %c0_165 = arith.constant 0 : index
    %c1_166 = arith.constant 1 : index
    %c1_167 = arith.constant 1 : index
    %c0_168 = arith.constant 0 : index
    %103 = vector.load %arg14[%c0_165, %c1_166, %c1_167, %c0_168] : memref<2x10x10x48xbf16, #tpu.memory_space<vmem>>, vector<2x8x8x48xbf16>
    tpu.vector_store %arg14[%c0_165, %c1_166, %c1_167, %c0_168], %102 {strides = array<i32>} : memref<2x10x10x48xbf16, #tpu.memory_space<vmem>>, vector<2x8x8x48xbf16>,
    %c0_169 = arith.constant 0 : index
    %c0_170 = arith.constant 0 : index
    %c0_171 = arith.constant 0 : index
    %c0_172 = arith.constant 0 : index
    %104 = vector.load %arg14[%c0_169, %c0_170, %c0_171, %c0_172] : memref<2x10x10x48xbf16, #tpu.memory_space<vmem>>, vector<2x8x8x48xbf16>
    %105 = vector.shape_cast %104 : vector<2x8x8x48xbf16> to vector<128x48xbf16>
    %c0_173 = arith.constant 0 : index
    %c0_174 = arith.constant 0 : index
    %106 = vector.load %arg17[%c0_173, %c0_174] : memref<128x432xbf16, #tpu.memory_space<vmem>>, vector<128x48xbf16>
    tpu.vector_store %arg17[%c0_173, %c0_174], %105 {strides = array<i32>} : memref<128x432xbf16, #tpu.memory_space<vmem>>, vector<128x48xbf16>,
    %c0_175 = arith.constant 0 : index
    %c0_176 = arith.constant 0 : index
    %c1_177 = arith.constant 1 : index
    %c0_178 = arith.constant 0 : index
    %107 = vector.load %arg14[%c0_175, %c0_176, %c1_177, %c0_178] : memref<2x10x10x48xbf16, #tpu.memory_space<vmem>>, vector<2x8x8x48xbf16>
    %108 = vector.shape_cast %107 : vector<2x8x8x48xbf16> to vector<128x48xbf16>
    %c0_179 = arith.constant 0 : index
    %c48 = arith.constant 48 : index
    %109 = vector.load %arg17[%c0_179, %c48] : memref<128x432xbf16, #tpu.memory_space<vmem>>, vector<128x48xbf16>
    tpu.vector_store %arg17[%c0_179, %c48], %108 {strides = array<i32>} : memref<128x432xbf16, #tpu.memory_space<vmem>>, vector<128x48xbf16>,
    %c0_180 = arith.constant 0 : index
    %c0_181 = arith.constant 0 : index
    %c2_182 = arith.constant 2 : index
    %c0_183 = arith.constant 0 : index
    %110 = vector.load %arg14[%c0_180, %c0_181, %c2_182, %c0_183] : memref<2x10x10x48xbf16, #tpu.memory_space<vmem>>, vector<2x8x8x48xbf16>
    %111 = vector.shape_cast %110 : vector<2x8x8x48xbf16> to vector<128x48xbf16>
    %c0_184 = arith.constant 0 : index
    %c96_185 = arith.constant 96 : index
    %112 = vector.load %arg17[%c0_184, %c96_185] : memref<128x432xbf16, #tpu.memory_space<vmem>>, vector<128x48xbf16>
    tpu.vector_store %arg17[%c0_184, %c96_185], %111 {strides = array<i32>} : memref<128x432xbf16, #tpu.memory_space<vmem>>, vector<128x48xbf16>,
    %c0_186 = arith.constant 0 : index
    %c1_187 = arith.constant 1 : index
    %c0_188 = arith.constant 0 : index
    %c0_189 = arith.constant 0 : index
    %113 = vector.load %arg14[%c0_186, %c1_187, %c0_188, %c0_189] : memref<2x10x10x48xbf16, #tpu.memory_space<vmem>>, vector<2x8x8x48xbf16>
    %114 = vector.shape_cast %113 : vector<2x8x8x48xbf16> to vector<128x48xbf16>
    %c0_190 = arith.constant 0 : index
    %c144 = arith.constant 144 : index
    %115 = vector.load %arg17[%c0_190, %c144] : memref<128x432xbf16, #tpu.memory_space<vmem>>, vector<128x48xbf16>
    tpu.vector_store %arg17[%c0_190, %c144], %114 {strides = array<i32>} : memref<128x432xbf16, #tpu.memory_space<vmem>>, vector<128x48xbf16>,
    %c0_191 = arith.constant 0 : index
    %c1_192 = arith.constant 1 : index
    %c1_193 = arith.constant 1 : index
    %c0_194 = arith.constant 0 : index
    %116 = vector.load %arg14[%c0_191, %c1_192, %c1_193, %c0_194] : memref<2x10x10x48xbf16, #tpu.memory_space<vmem>>, vector<2x8x8x48xbf16>
    %117 = vector.shape_cast %116 : vector<2x8x8x48xbf16> to vector<128x48xbf16>
    %c0_195 = arith.constant 0 : index
    %c192_196 = arith.constant 192 : index
    %118 = vector.load %arg17[%c0_195, %c192_196] : memref<128x432xbf16, #tpu.memory_space<vmem>>, vector<128x48xbf16>
    tpu.vector_store %arg17[%c0_195, %c192_196], %117 {strides = array<i32>} : memref<128x432xbf16, #tpu.memory_space<vmem>>, vector<128x48xbf16>,
    %c0_197 = arith.constant 0 : index
    %c1_198 = arith.constant 1 : index
    %c2_199 = arith.constant 2 : index
    %c0_200 = arith.constant 0 : index
    %119 = vector.load %arg14[%c0_197, %c1_198, %c2_199, %c0_200] : memref<2x10x10x48xbf16, #tpu.memory_space<vmem>>, vector<2x8x8x48xbf16>
    %120 = vector.shape_cast %119 : vector<2x8x8x48xbf16> to vector<128x48xbf16>
    %c0_201 = arith.constant 0 : index
    %c240 = arith.constant 240 : index
    %121 = vector.load %arg17[%c0_201, %c240] : memref<128x432xbf16, #tpu.memory_space<vmem>>, vector<128x48xbf16>
    tpu.vector_store %arg17[%c0_201, %c240], %120 {strides = array<i32>} : memref<128x432xbf16, #tpu.memory_space<vmem>>, vector<128x48xbf16>,
    %c0_202 = arith.constant 0 : index
    %c2_203 = arith.constant 2 : index
    %c0_204 = arith.constant 0 : index
    %c0_205 = arith.constant 0 : index
    %122 = vector.load %arg14[%c0_202, %c2_203, %c0_204, %c0_205] : memref<2x10x10x48xbf16, #tpu.memory_space<vmem>>, vector<2x8x8x48xbf16>
    %123 = vector.shape_cast %122 : vector<2x8x8x48xbf16> to vector<128x48xbf16>
    %c0_206 = arith.constant 0 : index
    %c288 = arith.constant 288 : index
    %124 = vector.load %arg17[%c0_206, %c288] : memref<128x432xbf16, #tpu.memory_space<vmem>>, vector<128x48xbf16>
    tpu.vector_store %arg17[%c0_206, %c288], %123 {strides = array<i32>} : memref<128x432xbf16, #tpu.memory_space<vmem>>, vector<128x48xbf16>,
    %c0_207 = arith.constant 0 : index
    %c2_208 = arith.constant 2 : index
    %c1_209 = arith.constant 1 : index
    %c0_210 = arith.constant 0 : index
    %125 = vector.load %arg14[%c0_207, %c2_208, %c1_209, %c0_210] : memref<2x10x10x48xbf16, #tpu.memory_space<vmem>>, vector<2x8x8x48xbf16>
    %126 = vector.shape_cast %125 : vector<2x8x8x48xbf16> to vector<128x48xbf16>
    %c0_211 = arith.constant 0 : index
    %c336 = arith.constant 336 : index
    %127 = vector.load %arg17[%c0_211, %c336] : memref<128x432xbf16, #tpu.memory_space<vmem>>, vector<128x48xbf16>
    tpu.vector_store %arg17[%c0_211, %c336], %126 {strides = array<i32>} : memref<128x432xbf16, #tpu.memory_space<vmem>>, vector<128x48xbf16>,
    %c0_212 = arith.constant 0 : index
    %c2_213 = arith.constant 2 : index
    %c2_214 = arith.constant 2 : index
    %c0_215 = arith.constant 0 : index
    %128 = vector.load %arg14[%c0_212, %c2_213, %c2_214, %c0_215] : memref<2x10x10x48xbf16, #tpu.memory_space<vmem>>, vector<2x8x8x48xbf16>
    %129 = vector.shape_cast %128 : vector<2x8x8x48xbf16> to vector<128x48xbf16>
    %c0_216 = arith.constant 0 : index
    %c384 = arith.constant 384 : index
    %130 = vector.load %arg17[%c0_216, %c384] : memref<128x432xbf16, #tpu.memory_space<vmem>>, vector<128x48xbf16>
    tpu.vector_store %arg17[%c0_216, %c384], %129 {strides = array<i32>} : memref<128x432xbf16, #tpu.memory_space<vmem>>, vector<128x48xbf16>,
    %c0_217 = arith.constant 0 : index
    %c0_218 = arith.constant 0 : index
    %131 = vector.load %arg17[%c0_217, %c0_218] : memref<128x432xbf16, #tpu.memory_space<vmem>>, vector<128x432xbf16>
    %c0_219 = arith.constant 0 : index
    %c0_220 = arith.constant 0 : index
    %132 = vector.load %arg8[%c0_219, %c0_220] : memref<432x64xbf16, #tpu.memory_space<vmem>>, vector<432x64xbf16>
    %cst_221 = arith.constant dense<0.000000e+00> : vector<128x64xf32>
    %133 = tpu.matmul %131, %132, %cst_221 {dimension_numbers = #tpu.dot_dimension_numbers<[1], [0], [0], [1], [0, 0, 1, 1], [], []>} : vector<128x432xbf16>, vector<432x64xbf16>, vector<128x64xf32> -> vector<128x64xf32>
    %c0_222 = arith.constant 0 : index
    %c0_223 = arith.constant 0 : index
    %134 = vector.load %arg9[%c0_222, %c0_223] : memref<1x64xf32, #tpu.memory_space<vmem>>, vector<1x64xf32>
    %135 = vector.broadcast %134 : vector<1x64xf32> to vector<128x64xf32>
    %136 = arith.addf %133, %135 : vector<128x64xf32>
    %cst_224 = arith.constant 0.000000e+00 : f32
    %137 = vector.broadcast %cst_224 : f32 to vector<128x64xf32>
    %138 = arith.maximumf %136, %137 : vector<128x64xf32>
    %139 = arith.truncf %138 : vector<128x64xf32> to vector<128x64xbf16>
    %c0_225 = arith.constant 0 : index
    %c64_226 = arith.constant 64 : index
    %140 = vector.load %arg18[%c0_225, %c64_226] : memref<128x128xbf16, #tpu.memory_space<vmem>>, vector<128x64xbf16>
    tpu.vector_store %arg18[%c0_225, %c64_226], %139 {strides = array<i32>} : memref<128x128xbf16, #tpu.memory_space<vmem>>, vector<128x64xbf16>,
    %c0_227 = arith.constant 0 : index
    %c0_228 = arith.constant 0 : index
    %141 = vector.load %arg18[%c0_227, %c0_228] : memref<128x128xbf16, #tpu.memory_space<vmem>>, vector<128x128xbf16>
    %c0_229 = arith.constant 0 : index
    %c0_230 = arith.constant 0 : index
    %142 = vector.load %arg10[%c0_229, %c0_230] : memref<128x320xbf16, #tpu.memory_space<vmem>>, vector<128x320xbf16>
    %cst_231 = arith.constant dense<0.000000e+00> : vector<128x320xf32>
    %143 = tpu.matmul %141, %142, %cst_231 {dimension_numbers = #tpu.dot_dimension_numbers<[1], [0], [0], [1], [0, 0, 1, 1], [], []>} : vector<128x128xbf16>, vector<128x320xbf16>, vector<128x320xf32> -> vector<128x320xf32>
    %c0_232 = arith.constant 0 : index
    %c0_233 = arith.constant 0 : index
    %144 = vector.load %arg11[%c0_232, %c0_233] : memref<1x320xf32, #tpu.memory_space<vmem>>, vector<1x320xf32>
    %145 = vector.broadcast %144 : vector<1x320xf32> to vector<128x320xf32>
    %146 = arith.addf %143, %145 : vector<128x320xf32>
    %cst_234 = arith.constant 1.700000e-01 : f32
    %147 = vector.broadcast %cst_234 : f32 to vector<128x320xf32>
    %148 = arith.mulf %147, %146 : vector<128x320xf32>
    %149 = arith.addf %1, %148 : vector<128x320xf32>
    %150 = vector.shape_cast %149 : vector<128x320xf32> to vector<2x8x8x320xf32>
    %c0_235 = arith.constant 0 : index
    %c0_236 = arith.constant 0 : index
    %c0_237 = arith.constant 0 : index
    %c0_238 = arith.constant 0 : index
    %151 = vector.load %arg12[%c0_235, %c0_236, %c0_237, %c0_238] : memref<2x8x8x320xf32, #tpu.memory_space<vmem>>, vector<2x8x8x320xf32>
    tpu.vector_store %arg12[%c0_235, %c0_236, %c0_237, %c0_238], %150 {strides = array<i32>} : memref<2x8x8x320xf32, #tpu.memory_space<vmem>>, vector<2x8x8x320xf32>,
    return
  }
  func.func @transform_0(%arg0: i32) -> (i32, i32, i32, i32) {
    %c0_i32 = arith.constant 0 : i32
    %c0_i32_0 = arith.constant 0 : i32
    %c0_i32_1 = arith.constant 0 : i32
    %c0_i32_2 = arith.constant 0 : i32
    return %arg0, %c0_i32, %c0_i32_0, %c0_i32_1 : i32, i32, i32, i32
  }
  func.func @transform_1(%arg0: i32) -> (i32, i32) {
    %c0_i32 = arith.constant 0 : i32
    %c0_i32_0 = arith.constant 0 : i32
    %c0_i32_1 = arith.constant 0 : i32
    return %c0_i32, %c0_i32_0 : i32, i32
  }
  func.func @transform_2(%arg0: i32) -> (i32, i32) {
    %c0_i32 = arith.constant 0 : i32
    %c0_i32_0 = arith.constant 0 : i32
    %c0_i32_1 = arith.constant 0 : i32
    return %c0_i32, %c0_i32_0 : i32, i32
  }
  func.func @transform_3(%arg0: i32) -> (i32, i32) {
    %c0_i32 = arith.constant 0 : i32
    %c0_i32_0 = arith.constant 0 : i32
    %c0_i32_1 = arith.constant 0 : i32
    return %c0_i32, %c0_i32_0 : i32, i32
  }
  func.func @transform_4(%arg0: i32) -> (i32, i32) {
    %c0_i32 = arith.constant 0 : i32
    %c0_i32_0 = arith.constant 0 : i32
    %c0_i32_1 = arith.constant 0 : i32
    return %c0_i32, %c0_i32_0 : i32, i32
  }
  func.func @transform_5(%arg0: i32) -> (i32, i32) {
    %c0_i32 = arith.constant 0 : i32
    %c0_i32_0 = arith.constant 0 : i32
    %c0_i32_1 = arith.constant 0 : i32
    return %c0_i32, %c0_i32_0 : i32, i32
  }
  func.func @transform_6(%arg0: i32) -> (i32, i32) {
    %c0_i32 = arith.constant 0 : i32
    %c0_i32_0 = arith.constant 0 : i32
    %c0_i32_1 = arith.constant 0 : i32
    return %c0_i32, %c0_i32_0 : i32, i32
  }
  func.func @transform_7(%arg0: i32) -> (i32, i32) {
    %c0_i32 = arith.constant 0 : i32
    %c0_i32_0 = arith.constant 0 : i32
    %c0_i32_1 = arith.constant 0 : i32
    return %c0_i32, %c0_i32_0 : i32, i32
  }
  func.func @transform_8(%arg0: i32) -> (i32, i32) {
    %c0_i32 = arith.constant 0 : i32
    %c0_i32_0 = arith.constant 0 : i32
    %c0_i32_1 = arith.constant 0 : i32
    return %c0_i32, %c0_i32_0 : i32, i32
  }
  func.func @transform_9(%arg0: i32) -> (i32, i32) {
    %c0_i32 = arith.constant 0 : i32
    %c0_i32_0 = arith.constant 0 : i32
    %c0_i32_1 = arith.constant 0 : i32
    return %c0_i32, %c0_i32_0 : i32, i32
  }
  func.func @transform_10(%arg0: i32) -> (i32, i32) {
    %c0_i32 = arith.constant 0 : i32
    %c0_i32_0 = arith.constant 0 : i32
    %c0_i32_1 = arith.constant 0 : i32
    return %c0_i32, %c0_i32_0 : i32, i32
  }
  func.func @transform_11(%arg0: i32) -> (i32, i32, i32, i32) {
    %c0_i32 = arith.constant 0 : i32
    %c0_i32_0 = arith.constant 0 : i32
    %c0_i32_1 = arith.constant 0 : i32
    %c0_i32_2 = arith.constant 0 : i32
    return %arg0, %c0_i32, %c0_i32_0, %c0_i32_1 : i32, i32, i32, i32
  }
}

</mosaic_0001>

<llo_original>
// kernel: _lambda_.1
$region0: #{_lambda_.1}
  #allocation0 [shape = 'u32[]', space=smem, size = 0x4, offset = 0x4, fixed_abs, tag = 'smem constant byte address 0x4 - core index']
  #allocation1 [shape = 'u32[144,128]{1,0:T(1,128)}', space=vmem, size = 0x12000, scoped, tag = 'internal scratch']
  #allocation2 [shape = 'bf16[2,10,10,64]{3,2,1,0:T(8,128)(2,1)}', space=vmem, size = 0x14000, scoped, tag = 'scratch operand']
  #allocation3 [shape = 'bf16[2,10,10,48]{3,2,1,0:T(8,128)(2,1)}', space=vmem, size = 0x14000, scoped, tag = 'scratch operand']
  #allocation4 [shape = 'bf16[128,288]{1,0:T(8,128)(2,1)}', space=vmem, size = 0x18000, scoped, tag = 'scratch operand']
  #allocation5 [shape = 'bf16[128,288]{1,0:T(8,128)(2,1)}', space=vmem, size = 0x18000, scoped, tag = 'scratch operand']
  #allocation6 [shape = 'bf16[128,432]{1,0:T(8,128)(2,1)}', space=vmem, size = 0x20000, scoped, tag = 'scratch operand']
  #allocation7 [shape = 'bf16[128,128]{1,0:T(8,128)(2,1)}', space=vmem, size = 0x8000, scoped, tag = 'scratch operand']
  %s0 = inlined_call_operand.hbm [shape: f32[2,8,8,320], index: 0, kind: input, shape index: {}]
  %s1 = inlined_call_operand.hbm [shape: bf16[320,96], index: 1, kind: input, shape index: {}]
  %s2 = inlined_call_operand.vmem [shape: f32[1,96], index: 2, kind: input, shape index: {}]
  %s3 = inlined_call_operand.hbm [shape: bf16[288,32], index: 3, kind: input, shape index: {}]
  %s4 = inlined_call_operand.vmem [shape: f32[1,32], index: 4, kind: input, shape index: {}]
  %s5 = inlined_call_operand.hbm [shape: bf16[288,48], index: 5, kind: input, shape index: {}]
  %s6 = inlined_call_operand.vmem [shape: f32[1,48], index: 6, kind: input, shape index: {}]
  %s7 = inlined_call_operand.hbm [shape: bf16[432,64], index: 7, kind: input, shape index: {}]
  %s8 = inlined_call_operand.vmem [shape: f32[1,64], index: 8, kind: input, shape index: {}]
  %s9 = inlined_call_operand.hbm [shape: bf16[128,320], index: 9, kind: input, shape index: {}]
  %s10 = inlined_call_operand.vmem [shape: f32[1,320], index: 10, kind: input, shape index: {}]
  %s11 = inlined_call_operand.hbm [shape: f32[2,8,8,320], index: 11, kind: output, shape index: {}]
  %s12 = sld [smem:[#allocation0]]
  $region78: #{_lambda_.1} parent=0
    _
  %s14 = ssub.s32 1, %s12
  %s15 = scalar_select 0, %s14, %s12
  $region1: #{_lambda_.1} parent=0
    #allocation8 [shape = 'u8[196608]{0}', space=vmem, size = 0x30000, scoped, tag = 'input window, operand 0, single buffered']
    #allocation9 [shape = 's32[1]{0}', space=sflag, size = 0x4, scoped, tag = 'scoped memory for _lambda_.1']
    #allocation10 [shape = 's32[1]{0}', space=sflag, size = 0x4, scoped, tag = 'scoped memory for _lambda_.1']
    #allocation11 [shape = 'u8[81920]{0}', space=vmem, size = 0x14000, scoped, tag = 'input window, operand 1, single buffered']
    #allocation12 [shape = 's32[1]{0}', space=sflag, size = 0x4, scoped, tag = 'scoped memory for _lambda_.1']
    #allocation13 [shape = 'u8[73728]{0}', space=vmem, size = 0x12000, scoped, tag = 'input window, operand 3, single buffered']
    #allocation14 [shape = 'u8[73728]{0}', space=vmem, size = 0x12000, scoped, tag = 'input window, operand 5, single buffered']
    #allocation15 [shape = 's32[1]{0}', space=sflag, size = 0x4, scoped, tag = 'scoped memory for _lambda_.1']
    #allocation16 [shape = 'u8[110592]{0}', space=vmem, size = 0x1b000, scoped, tag = 'input window, operand 7, single buffered']
    #allocation17 [shape = 'u8[98304]{0}', space=vmem, size = 0x18000, scoped, tag = 'input window, operand 9, single buffered']
    #allocation18 [shape = 's32[1]{0}', space=sflag, size = 0x4, scoped, tag = 'scoped memory for _lambda_.1']
    #allocation19 [shape = 'u8[196608]{0}', space=vmem, size = 0x30000, scoped, tag = 'output window, operand 0, single buffered']
    %16 = vsyncpa [#allocation9], 0
    %17 = vsyncpa [#allocation12], 0
    %18 = vsyncpa [#allocation15], 0
    %19 = vsyncpa [#allocation18], 0
    %20 = vsyncpa [#allocation10], 0
    // Predicated region
    $region2: #{_lambda_.1} parent=1 // pred_check
      _
    $region3: #{_lambda_.1} parent=1 // pred_check_branch
      %22 = sbr.rel (0) target = $region5
    $region4: #{_lambda_.1} parent=1 // pred_region
      %s24 = ssub.s32 6144, 6144
      %25 = vsyncadd [#allocation9], %s24
      %s26 = sshll.u32 [#allocation8], 4
      %s27 = int_to_ptr.vmem [resolvable:$true] %s26
      %32 = dma.hbm_to_vmem [thread:$0]  %s0, 6144, %s27, [#allocation9], 384, 384, 24
    $region5: #{_lambda_.1} parent=1 // pred_fallthru
      _
    // Predicated region
    $region6: #{_lambda_.1} parent=1 // pred_check
      _
    $region7: #{_lambda_.1} parent=1 // pred_check_branch
      %34 = sbr.rel (0) target = $region9
    $region8: #{_lambda_.1} parent=1 // pred_region
      %s36 = ssub.s32 2560, 2560
      %37 = vsyncadd [#allocation12], %s36
      %s38 = sshll.u32 [#allocation11], 4
      %s39 = int_to_ptr.vmem [resolvable:$true] %s38
      %44 = dma.hbm_to_vmem [thread:$0]  %s1, 2560, %s39, [#allocation12], 64, 64, 4
    $region9: #{_lambda_.1} parent=1 // pred_fallthru
      _
    // Predicated region
    $region10: #{_lambda_.1} parent=1 // pred_check
      _
    $region11: #{_lambda_.1} parent=1 // pred_check_branch
      %46 = sbr.rel (0) target = $region13
    $region12: #{_lambda_.1} parent=1 // pred_region
      _
    $region13: #{_lambda_.1} parent=1 // pred_fallthru
      _
    // Predicated region
    $region14: #{_lambda_.1} parent=1 // pred_check
      _
    $region15: #{_lambda_.1} parent=1 // pred_check_branch
      %48 = sbr.rel (0) target = $region17
    $region16: #{_lambda_.1} parent=1 // pred_region
      %s50 = ssub.s32 2304, 2304
      %51 = vsyncadd [#allocation12], %s50
      %s52 = sshll.u32 [#allocation13], 4
      %s53 = int_to_ptr.vmem [resolvable:$true] %s52
      %58 = dma.hbm_to_vmem [thread:$0]  %s3, 2304, %s53, [#allocation12], 64, 64, 4
    $region17: #{_lambda_.1} parent=1 // pred_fallthru
      _
    // Predicated region
    $region18: #{_lambda_.1} parent=1 // pred_check
      _
    $region19: #{_lambda_.1} parent=1 // pred_check_branch
      %60 = sbr.rel (0) target = $region21
    $region20: #{_lambda_.1} parent=1 // pred_region
      _
    $region21: #{_lambda_.1} parent=1 // pred_fallthru
      _
    // Predicated region
    $region22: #{_lambda_.1} parent=1 // pred_check
      _
    $region23: #{_lambda_.1} parent=1 // pred_check_branch
      %62 = sbr.rel (0) target = $region25
    $region24: #{_lambda_.1} parent=1 // pred_region
      %s64 = ssub.s32 2304, 2304
      %65 = vsyncadd [#allocation15], %s64
      %s66 = sshll.u32 [#allocation14], 4
      %s67 = int_to_ptr.vmem [resolvable:$true] %s66
      %72 = dma.hbm_to_vmem [thread:$0]  %s5, 2304, %s67, [#allocation15], 64, 64, 4
    $region25: #{_lambda_.1} parent=1 // pred_fallthru
      _
    // Predicated region
    $region26: #{_lambda_.1} parent=1 // pred_check
      _
    $region27: #{_lambda_.1} parent=1 // pred_check_branch
      %74 = sbr.rel (0) target = $region29
    $region28: #{_lambda_.1} parent=1 // pred_region
      _
    $region29: #{_lambda_.1} parent=1 // pred_fallthru
      _
    // Predicated region
    $region30: #{_lambda_.1} parent=1 // pred_check
      _
    $region31: #{_lambda_.1} parent=1 // pred_check_branch
      %76 = sbr.rel (0) target = $region33
    $region32: #{_lambda_.1} parent=1 // pred_region
      %s78 = ssub.s32 3456, 3456
      %79 = vsyncadd [#allocation15], %s78
      %s80 = sshll.u32 [#allocation16], 4
      %s81 = int_to_ptr.vmem [resolvable:$true] %s80
      %86 = dma.hbm_to_vmem [thread:$0]  %s7, 3456, %s81, [#allocation15], 64, 64, 4
    $region33: #{_lambda_.1} parent=1 // pred_fallthru
      _
    // Predicated region
    $region34: #{_lambda_.1} parent=1 // pred_check
      _
    $region35: #{_lambda_.1} parent=1 // pred_check_branch
      %88 = sbr.rel (0) target = $region37
    $region36: #{_lambda_.1} parent=1 // pred_region
      _
    $region37: #{_lambda_.1} parent=1 // pred_fallthru
      _
    // Predicated region
    $region38: #{_lambda_.1} parent=1 // pred_check
      _
    $region39: #{_lambda_.1} parent=1 // pred_check_branch
      %90 = sbr.rel (0) target = $region41
    $region40: #{_lambda_.1} parent=1 // pred_region
      %s92 = ssub.s32 3072, 3072
      %93 = vsyncadd [#allocation18], %s92
      %s94 = sshll.u32 [#allocation17], 4
      %s95 = int_to_ptr.vmem [resolvable:$true] %s94
      %100 = dma.hbm_to_vmem [thread:$0]  %s9, 3072, %s95, [#allocation18], 192, 192, 12
    $region41: #{_lambda_.1} parent=1 // pred_fallthru
      _
    // Predicated region
    $region42: #{_lambda_.1} parent=1 // pred_check
      _
    $region43: #{_lambda_.1} parent=1 // pred_check_branch
      %102 = sbr.rel (0) target = $region45
    $region44: #{_lambda_.1} parent=1 // pred_region
      _
    $region45: #{_lambda_.1} parent=1 // pred_fallthru
      _
    // Predicated region
    $region46: #{_lambda_.1} parent=1 // pred_check
      _
    $region47: #{_lambda_.1} parent=1 // pred_check_branch
      %104 = sbr.rel (0) target = $region49
    $region48: #{_lambda_.1} parent=1 // pred_region
      %105 = dma.done [#allocation9], 6144
    $region49: #{_lambda_.1} parent=1 // pred_fallthru
      _
    // Predicated region
    $region50: #{_lambda_.1} parent=1 // pred_check
      _
    $region51: #{_lambda_.1} parent=1 // pred_check_branch
      %107 = sbr.rel (0) target = $region53
    $region52: #{_lambda_.1} parent=1 // pred_region
      %108 = dma.done [#allocation12], 2560
    $region53: #{_lambda_.1} parent=1 // pred_fallthru
      _
    // Predicated region
    $region54: #{_lambda_.1} parent=1 // pred_check
      _
    $region55: #{_lambda_.1} parent=1 // pred_check_branch
      %110 = sbr.rel (0) target = $region57
    $region56: #{_lambda_.1} parent=1 // pred_region
      %111 = dma.done [#allocation12], 2304
    $region57: #{_lambda_.1} parent=1 // pred_fallthru
      _
    // Predicated region
    $region58: #{_lambda_.1} parent=1 // pred_check
      _
    $region59: #{_lambda_.1} parent=1 // pred_check_branch
      %113 = sbr.rel (0) target = $region61
    $region60: #{_lambda_.1} parent=1 // pred_region
      %114 = dma.done [#allocation15], 2304
    $region61: #{_lambda_.1} parent=1 // pred_fallthru
      _
    // Predicated region
    $region62: #{_lambda_.1} parent=1 // pred_check
      _
    $region63: #{_lambda_.1} parent=1 // pred_check_branch
      %116 = sbr.rel (0) target = $region65
    $region64: #{_lambda_.1} parent=1 // pred_region
      %117 = dma.done [#allocation15], 3456
    $region65: #{_lambda_.1} parent=1 // pred_fallthru
      _
    // Predicated region
    $region66: #{_lambda_.1} parent=1 // pred_check
      _
    $region67: #{_lambda_.1} parent=1 // pred_check_branch
      %119 = sbr.rel (0) target = $region69
    $region68: #{_lambda_.1} parent=1 // pred_region
      %120 = dma.done [#allocation18], 3072
    $region69: #{_lambda_.1} parent=1 // pred_fallthru
      _
    %v122 = vld [vmem:[#allocation8] sm:$0xff]
    %v123 = vld [vmem:[#allocation8 + $0x8] sm:$0xff]
    %v124 = vld [vmem:[#allocation8 + $0x10] sm:$0xff]
    %v125 = vld [vmem:[#allocation8 + $0x18] sm:$0xff]
    %v126 = vld [vmem:[#allocation8 + $0x20] sm:$0xff]
    %v127 = vld [vmem:[#allocation8 + $0x28] sm:$0xff]
    %v128 = vld [vmem:[#allocation8 + $0x30] sm:$0xff]
    %v129 = vld [vmem:[#allocation8 + $0x38] sm:$0xff]
    %v130 = vld [vmem:[#allocation8 + $0x40] sm:$0xff]
    %v131 = vld [vmem:[#allocation8 + $0x48] sm:$0xff]
    %v132 = vld [vmem:[#allocation8 + $0x50] sm:$0xff]
    %v133 = vld [vmem:[#allocation8 + $0x58] sm:$0xff]
    %v134 = vld [vmem:[#allocation8 + $0x60] sm:$0xff]
    %v135 = vld [vmem:[#allocation8 + $0x68] sm:$0xff]
    %v136 = vld [vmem:[#allocation8 + $0x70] sm:$0xff]
    %v137 = vld [vmem:[#allocation8 + $0x78] sm:$0xff]
    %v138 = vld [vmem:[#allocation8 + $0x80] sm:$0xff]
    %v139 = vld [vmem:[#allocation8 + $0x88] sm:$0xff]
    %v140 = vld [vmem:[#allocation8 + $0x90] sm:$0xff]
    %v141 = vld [vmem:[#allocation8 + $0x98] sm:$0xff]
    %v142 = vld [vmem:[#allocation8 + $0xa0] sm:$0xff]
    %v143 = vld [vmem:[#allocation8 + $0xa8] sm:$0xff]
    %v144 = vld [vmem:[#allocation8 + $0xb0] sm:$0xff]
    %v145 = vld [vmem:[#allocation8 + $0xb8] sm:$0xff]
    %v146 = vld [vmem:[#allocation8 + $0xc0] sm:$0xff]
    %v147 = vld [vmem:[#allocation8 + $0xc8] sm:$0xff]
    %v148 = vld [vmem:[#allocation8 + $0xd0] sm:$0xff]
    %v149 = vld [vmem:[#allocation8 + $0xd8] sm:$0xff]
    %v150 = vld [vmem:[#allocation8 + $0xe0] sm:$0xff]
    %v151 = vld [vmem:[#allocation8 + $0xe8] sm:$0xff]
    %v152 = vld [vmem:[#allocation8 + $0xf0] sm:$0xff]
    %v153 = vld [vmem:[#allocation8 + $0xf8] sm:$0xff]
    %v154 = vld [vmem:[#allocation8 + $0x100] sm:$0xff]
    %v155 = vld [vmem:[#allocation8 + $0x108] sm:$0xff]
    %v156 = vld [vmem:[#allocation8 + $0x110] sm:$0xff]
    %v157 = vld [vmem:[#allocation8 + $0x118] sm:$0xff]
    %v158 = vld [vmem:[#allocation8 + $0x120] sm:$0xff]
    %v159 = vld [vmem:[#allocation8 + $0x128] sm:$0xff]
    %v160 = vld [vmem:[#allocation8 + $0x130] sm:$0xff]
    %v161 = vld [vmem:[#allocation8 + $0x138] sm:$0xff]
    %v162 = vld [vmem:[#allocation8 + $0x140] sm:$0xff]
    %v163 = vld [vmem:[#allocation8 + $0x148] sm:$0xff]
    %v164 = vld [vmem:[#allocation8 + $0x150] sm:$0xff]
    %v165 = vld [vmem:[#allocation8 + $0x158] sm:$0xff]
    %v166 = vld [vmem:[#allocation8 + $0x160] sm:$0xff]
    %v167 = vld [vmem:[#allocation8 + $0x168] sm:$0xff]
    %v168 = vld [vmem:[#allocation8 + $0x170] sm:$0xff]
    %v169 = vld [vmem:[#allocation8 + $0x178] sm:$0xff]
    %v170 = vpack.c.bf16 %v125, %v122
    %v171 = vpack.c.bf16 %v126, %v123
    %v172 = vpack.c.bf16 %v127, %v124
    %v173 = vpack.c.bf16 %v131, %v128
    %v174 = vpack.c.bf16 %v132, %v129
    %v175 = vpack.c.bf16 %v133, %v130
    %v176 = vpack.c.bf16 %v137, %v134
    %v177 = vpack.c.bf16 %v138, %v135
    %v178 = vpack.c.bf16 %v139, %v136
    %v179 = vpack.c.bf16 %v143, %v140
    %v180 = vpack.c.bf16 %v144, %v141
    %v181 = vpack.c.bf16 %v145, %v142
    %v182 = vpack.c.bf16 %v149, %v146
    %v183 = vpack.c.bf16 %v150, %v147
    %v184 = vpack.c.bf16 %v151, %v148
    %v185 = vpack.c.bf16 %v155, %v152
    %v186 = vpack.c.bf16 %v156, %v153
    %v187 = vpack.c.bf16 %v157, %v154
    %v188 = vpack.c.bf16 %v161, %v158
    %v189 = vpack.c.bf16 %v162, %v159
    %v190 = vpack.c.bf16 %v163, %v160
    %v191 = vpack.c.bf16 %v167, %v164
    %v192 = vpack.c.bf16 %v168, %v165
    %v193 = vpack.c.bf16 %v169, %v166
    %v194 = vld [vmem:[#allocation11] sm:$0xf]
    %v195 = vld [vmem:[#allocation11 + $0x4] sm:$0xf]
    %v196 = vld [vmem:[#allocation11 + $0x8] sm:$0xf]
    %v197 = vld [vmem:[#allocation11 + $0xc] sm:$0xf]
    %v198 = vld [vmem:[#allocation11 + $0x10] sm:$0xf]
    %v199 = vld [vmem:[#allocation11 + $0x14] sm:$0xf]
    %v200 = vld [vmem:[#allocation11 + $0x18] sm:$0xf]
    %v201 = vld [vmem:[#allocation11 + $0x1c] sm:$0xf]
    %v202 = vld [vmem:[#allocation11 + $0x20] sm:$0xf]
    %v203 = vld [vmem:[#allocation11 + $0x24] sm:$0xf]
    %v204 = vld [vmem:[#allocation11 + $0x28] sm:$0xf]
    %v205 = vld [vmem:[#allocation11 + $0x2c] sm:$0xf]
    %v206 = vld [vmem:[#allocation11 + $0x30] sm:$0xf]
    %v207 = vld [vmem:[#allocation11 + $0x34] sm:$0xf]
    %v208 = vld [vmem:[#allocation11 + $0x38] sm:$0xf]
    %v209 = vld [vmem:[#allocation11 + $0x3c] sm:$0xf]
    %v210 = vld [vmem:[#allocation11 + $0x40] sm:$0xf]
    %v211 = vld [vmem:[#allocation11 + $0x44] sm:$0xf]
    %v212 = vld [vmem:[#allocation11 + $0x48] sm:$0xf]
    %v213 = vld [vmem:[#allocation11 + $0x4c] sm:$0xf]
    %v214 = vld [vmem:[#allocation11 + $0x50] sm:$0xf]
    %v215 = vld [vmem:[#allocation11 + $0x54] sm:$0xf]
    %v216 = vld [vmem:[#allocation11 + $0x58] sm:$0xf]
    %v217 = vld [vmem:[#allocation11 + $0x5c] sm:$0xf]
    %v218 = vld [vmem:[#allocation11 + $0x60] sm:$0xf]
    %v219 = vld [vmem:[#allocation11 + $0x64] sm:$0xf]
    %v220 = vld [vmem:[#allocation11 + $0x68] sm:$0xf]
    %v221 = vld [vmem:[#allocation11 + $0x6c] sm:$0xf]
    %v222 = vld [vmem:[#allocation11 + $0x70] sm:$0xf]
    %v223 = vld [vmem:[#allocation11 + $0x74] sm:$0xf]
    %v224 = vld [vmem:[#allocation11 + $0x78] sm:$0xf]
    %v225 = vld [vmem:[#allocation11 + $0x7c] sm:$0xf]
    %v226 = vld [vmem:[#allocation11 + $0x80] sm:$0xf]
    %v227 = vld [vmem:[#allocation11 + $0x84] sm:$0xf]
    %v228 = vld [vmem:[#allocation11 + $0x88] sm:$0xf]
    %v229 = vld [vmem:[#allocation11 + $0x8c] sm:$0xf]
    %v230 = vld [vmem:[#allocation11 + $0x90] sm:$0xf]
    %v231 = vld [vmem:[#allocation11 + $0x94] sm:$0xf]
    %v232 = vld [vmem:[#allocation11 + $0x98] sm:$0xf]
    %v233 = vld [vmem:[#allocation11 + $0x9c] sm:$0xf]
    %v234 = vld [vmem:[%s2] sm:$0x1]
    %v236 = vlaneseq
    %v237 = vshrl.u32 %v236, 7
    %v238 = vsub.s32 0, %v237
    %v239 = vrot.slane %v234, %v238
    %v281 = vunpack.c.l.b16 %v194
    %v282 = vunpack.c.l.b16 %v195
    %v283 = vunpack.c.l.b16 %v196
    %v284 = vunpack.c.l.b16 %v197
    %v285 = vunpack.c.l.b16 %v198
    %v286 = vunpack.c.l.b16 %v199
    %v287 = vunpack.c.l.b16 %v200
    %v288 = vunpack.c.l.b16 %v201
    %v289 = vunpack.c.l.b16 %v202
    %v290 = vunpack.c.l.b16 %v203
    %v291 = vunpack.c.l.b16 %v204
    %v292 = vunpack.c.l.b16 %v205
    %v293 = vunpack.c.l.b16 %v206
    %v294 = vunpack.c.l.b16 %v207
    %v295 = vunpack.c.l.b16 %v208
    %v296 = vunpack.c.l.b16 %v209
    %v297 = vunpack.c.l.b16 %v210
    %v298 = vunpack.c.l.b16 %v211
    %v299 = vunpack.c.l.b16 %v212
    %v300 = vunpack.c.l.b16 %v213
    %v301 = vunpack.c.l.b16 %v214
    %v302 = vunpack.c.l.b16 %v215
    %v303 = vunpack.c.l.b16 %v216
    %v304 = vunpack.c.l.b16 %v217
    %v305 = vunpack.c.l.b16 %v218
    %v306 = vunpack.c.l.b16 %v219
    %v307 = vunpack.c.l.b16 %v220
    %v308 = vunpack.c.l.b16 %v221
    %v309 = vunpack.c.l.b16 %v222
    %v310 = vunpack.c.l.b16 %v223
    %v311 = vunpack.c.l.b16 %v224
    %v312 = vunpack.c.l.b16 %v225
    %v313 = vunpack.c.l.b16 %v226
    %v314 = vunpack.c.l.b16 %v227
    %v315 = vunpack.c.l.b16 %v228
    %v316 = vunpack.c.l.b16 %v229
    %v317 = vunpack.c.l.b16 %v230
    %v318 = vunpack.c.l.b16 %v231
    %v319 = vunpack.c.l.b16 %v232
    %v320 = vunpack.c.l.b16 %v233
    %v321 = vpack.c.b16 %v282, %v281
    %v322 = vpack.c.b16 %v284, %v283
    %v323 = vpack.c.b16 %v286, %v285
    %v324 = vpack.c.b16 %v288, %v287
    %v325 = vpack.c.b16 %v290, %v289
    %v326 = vpack.c.b16 %v292, %v291
    %v327 = vpack.c.b16 %v294, %v293
    %v328 = vpack.c.b16 %v296, %v295
    %v329 = vpack.c.b16 %v298, %v297
    %v330 = vpack.c.b16 %v300, %v299
    %v331 = vpack.c.b16 %v302, %v301
    %v332 = vpack.c.b16 %v304, %v303
    %v333 = vpack.c.b16 %v306, %v305
    %v334 = vpack.c.b16 %v308, %v307
    %v335 = vpack.c.b16 %v310, %v309
    %v336 = vpack.c.b16 %v312, %v311
    %v337 = vpack.c.b16 %v314, %v313
    %v338 = vpack.c.b16 %v316, %v315
    %v339 = vpack.c.b16 %v318, %v317
    %v340 = vpack.c.b16 %v320, %v319
    %vm361 = vcmask 523264
    %v363 = vsel %vm361, %v172, 0
    %v366 = vsel %vm361, %v175, 0
    %v369 = vsel %vm361, %v178, 0
    %v372 = vsel %vm361, %v181, 0
    %v375 = vsel %vm361, %v184, 0
    %v378 = vsel %vm361, %v187, 0
    %v381 = vsel %vm361, %v190, 0
    %v384 = vsel %vm361, %v193, 0
    %386 = vmatprep.subr.bf16.mxu0 0
    %387 = vmatpush1.bf16.msra.mxu0 %v328
    %388 = vmatprep.subr.bf16.mxu0 0
    %389 = vmatpush1.bf16.msra.mxu0 %v327
    %390 = vmatprep.subr.bf16.mxu0 0
    %391 = vmatpush1.bf16.msra.mxu0 %v326
    %392 = vmatprep.subr.bf16.mxu0 0
    %393 = vmatpush1.bf16.msra.mxu0 %v325
    %394 = vmatprep.subr.bf16.mxu0 0
    %395 = vmatpush1.bf16.msra.mxu0 %v324
    %396 = vmatprep.subr.bf16.mxu0 0
    %397 = vmatpush1.bf16.msra.mxu0 %v323
    %398 = vmatprep.subr.bf16.mxu0 0
    %399 = vmatpush1.bf16.msra.mxu0 %v322
    %400 = vmatprep.subr.bf16.mxu0 0
    %401 = vmatpush1.bf16.msra.mxu0 %v321
    %402 = vmatprep.subr.bf16.mxu0 0
    %403 = vmatpush2.bf16.msra.mxu0 %v336
    %404 = vmatprep.subr.bf16.mxu0 0
    %405 = vmatpush2.bf16.msra.mxu0 %v335
    %406 = vmatprep.subr.bf16.mxu0 0
    %407 = vmatpush2.bf16.msra.mxu0 %v334
    %408 = vmatprep.subr.bf16.mxu0 0
    %409 = vmatpush2.bf16.msra.mxu0 %v333
    %410 = vmatprep.subr.bf16.mxu0 0
    %411 = vmatpush2.bf16.msra.mxu0 %v332
    %412 = vmatprep.subr.bf16.mxu0 0
    %413 = vmatpush2.bf16.msra.mxu0 %v331
    %414 = vmatprep.subr.bf16.mxu0 0
    %415 = vmatpush2.bf16.msra.mxu0 %v330
    %416 = vmatprep.subr.bf16.mxu0 0
    %417 = vmatpush2.bf16.msra.mxu0 %v329
    %418 = vmatprep.mubr.bf16.mxu0 %v171
    %419 = vmatmul.mubr.bf16.gmra.mxu0 %v170
    %v420 = vpop.f32.mrf.mxu0
    %v421 = vadd.f32 %v239, %v420
    %v422 = vpop.f32.mrf.mxu0
    %v423 = vpop.f32.mrf.mxu0
    %v424 = vadd.f32 %v239, %v423
    %v425 = vpop.f32.mrf.mxu0
    %426 = vmatprep.mubr.bf16.mxu0 %v174
    %427 = vmatmul.mubr.bf16.gmra.mxu0 %v173
    %v428 = vpop.f32.mrf.mxu0
    %v429 = vadd.f32 %v239, %v428
    %v430 = vpop.f32.mrf.mxu0
    %v431 = vpop.f32.mrf.mxu0
    %v432 = vadd.f32 %v239, %v431
    %v433 = vpop.f32.mrf.mxu0
    %434 = vmatprep.mubr.bf16.mxu0 %v177
    %435 = vmatmul.mubr.bf16.gmra.mxu0 %v176
    %v436 = vpop.f32.mrf.mxu0
    %v437 = vadd.f32 %v239, %v436
    %v438 = vpop.f32.mrf.mxu0
    %v439 = vpop.f32.mrf.mxu0
    %v440 = vadd.f32 %v239, %v439
    %v441 = vpop.f32.mrf.mxu0
    %442 = vmatprep.mubr.bf16.mxu0 %v180
    %443 = vmatmul.mubr.bf16.gmra.mxu0 %v179
    %v444 = vpop.f32.mrf.mxu0
    %v445 = vadd.f32 %v239, %v444
    %v446 = vpop.f32.mrf.mxu0
    %v447 = vpop.f32.mrf.mxu0
    %v448 = vadd.f32 %v239, %v447
    %v449 = vpop.f32.mrf.mxu0
    %450 = vmatprep.mubr.bf16.mxu0 %v183
    %451 = vmatmul.mubr.bf16.gmra.mxu0 %v182
    %v452 = vpop.f32.mrf.mxu0
    %v453 = vadd.f32 %v239, %v452
    %v454 = vpop.f32.mrf.mxu0
    %v455 = vpop.f32.mrf.mxu0
    %v456 = vadd.f32 %v239, %v455
    %v457 = vpop.f32.mrf.mxu0
    %458 = vmatprep.mubr.bf16.mxu0 %v186
    %459 = vmatmul.mubr.bf16.gmra.mxu0 %v185
    %v460 = vpop.f32.mrf.mxu0
    %v461 = vadd.f32 %v239, %v460
    %v462 = vpop.f32.mrf.mxu0
    %v463 = vpop.f32.mrf.mxu0
    %v464 = vadd.f32 %v239, %v463
    %v465 = vpop.f32.mrf.mxu0
    %466 = vmatprep.mubr.bf16.mxu0 %v189
    %467 = vmatmul.mubr.bf16.gmra.mxu0 %v188
    %v468 = vpop.f32.mrf.mxu0
    %v469 = vadd.f32 %v239, %v468
    %v470 = vpop.f32.mrf.mxu0
    %v471 = vpop.f32.mrf.mxu0
    %v472 = vadd.f32 %v239, %v471
    %v473 = vpop.f32.mrf.mxu0
    %474 = vmatprep.mubr.bf16.mxu0 %v192
    %475 = vmatmul.mubr.bf16.gmra.mxu0 %v191
    %v476 = vpop.f32.mrf.mxu0
    %v477 = vadd.f32 %v239, %v476
    %v478 = vpop.f32.mrf.mxu0
    %v479 = vpop.f32.mrf.mxu0
    %v480 = vadd.f32 %v239, %v479
    %v481 = vpop.f32.mrf.mxu0
    %482 = vdwg.mxu0
    %483 = vmatprep.subr.bf16.mxu0 0
    %484 = vmatpush1.bf16.msra.mxu0 0
    %485 = vmatprep.subr.bf16.mxu0 0
    %486 = vmatpush1.bf16.msra.mxu0 0
    %487 = vmatprep.subr.bf16.mxu0 0
    %488 = vmatpush1.bf16.msra.mxu0 0
    %489 = vmatprep.subr.bf16.mxu0 0
    %490 = vmatpush1.bf16.msra.mxu0 0
    %491 = vmatprep.subr.bf16.mxu0 0
    %492 = vmatpush1.bf16.msra.mxu0 %v340
    %493 = vmatprep.subr.bf16.mxu0 0
    %494 = vmatpush1.bf16.msra.mxu0 %v339
    %495 = vmatprep.subr.bf16.mxu0 0
    %496 = vmatpush1.bf16.msra.mxu0 %v338
    %497 = vmatprep.subr.bf16.mxu0 0
    %498 = vmatpush1.bf16.msra.mxu0 %v337
    %499 = vmatprep.subr.bf16.mxu0 0
    %500 = vmatpush2.bf16.msra.mxu0 0
    %501 = vmatprep.subr.bf16.mxu0 0
    %502 = vmatpush2.bf16.msra.mxu0 0
    %503 = vmatprep.subr.bf16.mxu0 0
    %504 = vmatpush2.bf16.msra.mxu0 0
    %505 = vmatprep.subr.bf16.mxu0 0
    %506 = vmatpush2.bf16.msra.mxu0 0
    %507 = vmatprep.subr.bf16.mxu0 0
    %508 = vmatpush2.bf16.msra.mxu0 0
    %509 = vmatprep.subr.bf16.mxu0 0
    %510 = vmatpush2.bf16.msra.mxu0 0
    %511 = vmatprep.subr.bf16.mxu0 0
    %512 = vmatpush2.bf16.msra.mxu0 0
    %513 = vmatprep.subr.bf16.mxu0 0
    %514 = vmatpush2.bf16.msra.mxu0 0
    %515 = vmatprep.mubr.bf16.mxu0 0
    %516 = vmatmul.mubr.bf16.gmra.mxu0 %v363
    %v517 = vpop.f32.mrf.mxu0
    %v518 = vadd.f32 %v421, %v517
    %v519 = vpop.f32.mrf.mxu0
    %v520 = vpop.f32.mrf.mxu0
    %v521 = vadd.f32 %v424, %v520
    %v522 = vpop.f32.mrf.mxu0
    %523 = vmatprep.mubr.bf16.mxu0 0
    %524 = vmatmul.mubr.bf16.gmra.mxu0 %v366
    %v525 = vpop.f32.mrf.mxu0
    %v526 = vadd.f32 %v429, %v525
    %v527 = vpop.f32.mrf.mxu0
    %v528 = vpop.f32.mrf.mxu0
    %v529 = vadd.f32 %v432, %v528
    %v530 = vpop.f32.mrf.mxu0
    %531 = vmatprep.mubr.bf16.mxu0 0
    %532 = vmatmul.mubr.bf16.gmra.mxu0 %v369
    %v533 = vpop.f32.mrf.mxu0
    %v534 = vadd.f32 %v437, %v533
    %v535 = vpop.f32.mrf.mxu0
    %v536 = vpop.f32.mrf.mxu0
    %v537 = vadd.f32 %v440, %v536
    %v538 = vpop.f32.mrf.mxu0
    %539 = vmatprep.mubr.bf16.mxu0 0
    %540 = vmatmul.mubr.bf16.gmra.mxu0 %v372
    %v541 = vpop.f32.mrf.mxu0
    %v542 = vadd.f32 %v445, %v541
    %v543 = vpop.f32.mrf.mxu0
    %v544 = vpop.f32.mrf.mxu0
    %v545 = vadd.f32 %v448, %v544
    %v546 = vpop.f32.mrf.mxu0
    %547 = vmatprep.mubr.bf16.mxu0 0
    %548 = vmatmul.mubr.bf16.gmra.mxu0 %v375
    %v549 = vpop.f32.mrf.mxu0
    %v550 = vadd.f32 %v453, %v549
    %v551 = vpop.f32.mrf.mxu0
    %v552 = vpop.f32.mrf.mxu0
    %v553 = vadd.f32 %v456, %v552
    %v554 = vpop.f32.mrf.mxu0
    %555 = vmatprep.mubr.bf16.mxu0 0
    %556 = vmatmul.mubr.bf16.gmra.mxu0 %v378
    %v557 = vpop.f32.mrf.mxu0
    %v558 = vadd.f32 %v461, %v557
    %v559 = vpop.f32.mrf.mxu0
    %v560 = vpop.f32.mrf.mxu0
    %v561 = vadd.f32 %v464, %v560
    %v562 = vpop.f32.mrf.mxu0
    %563 = vmatprep.mubr.bf16.mxu0 0
    %564 = vmatmul.mubr.bf16.gmra.mxu0 %v381
    %v565 = vpop.f32.mrf.mxu0
    %v566 = vadd.f32 %v469, %v565
    %v567 = vpop.f32.mrf.mxu0
    %v568 = vpop.f32.mrf.mxu0
    %v569 = vadd.f32 %v472, %v568
    %v570 = vpop.f32.mrf.mxu0
    %571 = vmatprep.mubr.bf16.mxu0 0
    %572 = vmatmul.mubr.bf16.gmra.mxu0 %v384
    %v573 = vpop.f32.mrf.mxu0
    %v574 = vadd.f32 %v477, %v573
    %v575 = vpop.f32.mrf.mxu0
    %v576 = vpop.f32.mrf.mxu0
    %v577 = vadd.f32 %v480, %v576
    %v578 = vpop.f32.mrf.mxu0
    %579 = vdwg.mxu0
    %v580 = vmax.f32 %v518, 0.0
    %v581 = vmax.f32 %v521, 0.0
    %v582 = vmax.f32 %v526, 0.0
    %v583 = vmax.f32 %v529, 0.0
    %v584 = vmax.f32 %v534, 0.0
    %v585 = vmax.f32 %v537, 0.0
    %v586 = vmax.f32 %v542, 0.0
    %v587 = vmax.f32 %v545, 0.0
    %v588 = vmax.f32 %v550, 0.0
    %v589 = vmax.f32 %v553, 0.0
    %v590 = vmax.f32 %v558, 0.0
    %v591 = vmax.f32 %v561, 0.0
    %v592 = vmax.f32 %v566, 0.0
    %v593 = vmax.f32 %v569, 0.0
    %v594 = vmax.f32 %v574, 0.0
    %v595 = vmax.f32 %v577, 0.0
    %v596 = vpack.c.bf16 %v581, %v580
    %v597 = vpack.c.bf16 %v583, %v582
    %v598 = vpack.c.bf16 %v585, %v584
    %v599 = vpack.c.bf16 %v587, %v586
    %v600 = vpack.c.bf16 %v589, %v588
    %v601 = vpack.c.bf16 %v591, %v590
    %v602 = vpack.c.bf16 %v593, %v592
    %v603 = vpack.c.bf16 %v595, %v594
    %v612 = vunpack.c.l.b16 %v596
    %v613 = vunpack.c.h.b16 %v596
    %v614 = vunpack.c.l.b16 %v597
    %v615 = vunpack.c.h.b16 %v597
    %v616 = vunpack.c.l.b16 %v598
    %v617 = vunpack.c.h.b16 %v598
    %v618 = vunpack.c.l.b16 %v599
    %v619 = vunpack.c.h.b16 %v599
    %v620 = vunpack.c.l.b16 %v600
    %v621 = vunpack.c.h.b16 %v600
    %v622 = vunpack.c.l.b16 %v601
    %v623 = vunpack.c.h.b16 %v601
    %v624 = vunpack.c.l.b16 %v602
    %v625 = vunpack.c.h.b16 %v602
    %v626 = vunpack.c.l.b16 %v603
    %v627 = vunpack.c.h.b16 %v603
    %v628 = vpack.c.b16 %v612, %v612
    %v629 = vpack.c.b16 %v613, %v613
    %v630 = vpack.c.b16 %v614, %v614
    %v631 = vpack.c.b16 %v615, %v615
    %v632 = vpack.c.b16 %v616, %v616
    %v633 = vpack.c.b16 %v617, %v617
    %v634 = vpack.c.b16 %v618, %v618
    %v635 = vpack.c.b16 %v619, %v619
    %v636 = vpack.c.b16 %v620, %v620
    %v637 = vpack.c.b16 %v621, %v621
    %v638 = vpack.c.b16 %v622, %v622
    %v639 = vpack.c.b16 %v623, %v623
    %v640 = vpack.c.b16 %v624, %v624
    %v641 = vpack.c.b16 %v625, %v625
    %v642 = vpack.c.b16 %v626, %v626
    %v643 = vpack.c.b16 %v627, %v627
    %vm660 = vcmask 257024
    %661 = vst.msk [vmem:[#allocation7] sm:$0xf] %vm660, %v628
    %662 = vst.msk [vmem:[#allocation7 + $0x4] sm:$0xf] %vm660, %v629
    %663 = vst.msk [vmem:[#allocation7 + $0x8] sm:$0xf] %vm660, %v630
    %664 = vst.msk [vmem:[#allocation7 + $0xc] sm:$0xf] %vm660, %v631
    %665 = vst.msk [vmem:[#allocation7 + $0x10] sm:$0xf] %vm660, %v632
    %666 = vst.msk [vmem:[#allocation7 + $0x14] sm:$0xf] %vm660, %v633
    %667 = vst.msk [vmem:[#allocation7 + $0x18] sm:$0xf] %vm660, %v634
    %668 = vst.msk [vmem:[#allocation7 + $0x1c] sm:$0xf] %vm660, %v635
    %669 = vst.msk [vmem:[#allocation7 + $0x20] sm:$0xf] %vm660, %v636
    %670 = vst.msk [vmem:[#allocation7 + $0x24] sm:$0xf] %vm660, %v637
    %671 = vst.msk [vmem:[#allocation7 + $0x28] sm:$0xf] %vm660, %v638
    %672 = vst.msk [vmem:[#allocation7 + $0x2c] sm:$0xf] %vm660, %v639
    %673 = vst.msk [vmem:[#allocation7 + $0x30] sm:$0xf] %vm660, %v640
    %674 = vst.msk [vmem:[#allocation7 + $0x34] sm:$0xf] %vm660, %v641
    %675 = vst.msk [vmem:[#allocation7 + $0x38] sm:$0xf] %vm660, %v642
    %676 = vst.msk [vmem:[#allocation7 + $0x3c] sm:$0xf] %vm660, %v643
    %vm677 = vcmask 519168
    %678 = vst.msk [vmem:[#allocation2] sm:$0xf] %vm677, 0
    %vm679 = vcmask 516096
    %680 = vst.msk [vmem:[#allocation2 + $0x4] sm:$0x1] %vm679, 0
    %681 = vst.msk [vmem:[#allocation2 + $0x50] sm:$0xf] %vm677, 0
    %682 = vst.msk [vmem:[#allocation2 + $0x54] sm:$0x1] %vm679, 0
    %s683 = scalar_lea.vmem [#allocation2], 72
    %684 = vst.msk [vmem:[%s683] sm:$0xf] %vm677, 0
    %685 = vst.msk [vmem:[%s683 + $0x4] sm:$0x1] %vm679, 0
    %686 = vst.msk [vmem:[%s683 + $0x50] sm:$0xf] %vm677, 0
    %687 = vst.msk [vmem:[%s683 + $0x54] sm:$0x1] %vm679, 0
    %s688 = scalar_lea.vmem [#allocation2], 8
    %vm689 = vcmask 516096
    %vm690 = vsmask.f32 256
    %vm691 = vmand %vm689, %vm690
    %v692 = vld [vmem:[%s688] sm:$0x1]
    %v693 = vsel %vm691, 0, %v692
    %694 = vst [vmem:[%s688] sm:$0x1] %v693
    %v695 = vld [vmem:[%s688 + $0x8] sm:$0x1]
    %v696 = vsel %vm691, 0, %v695
    %697 = vst [vmem:[%s688 + $0x8] sm:$0x1] %v696
    %v698 = vld [vmem:[%s688 + $0x10] sm:$0x1]
    %v699 = vsel %vm691, 0, %v698
    %700 = vst [vmem:[%s688 + $0x10] sm:$0x1] %v699
    %v701 = vld [vmem:[%s688 + $0x18] sm:$0x1]
    %v702 = vsel %vm691, 0, %v701
    %703 = vst [vmem:[%s688 + $0x18] sm:$0x1] %v702
    %v704 = vld [vmem:[%s688 + $0x20] sm:$0x1]
    %v705 = vsel %vm691, 0, %v704
    %706 = vst [vmem:[%s688 + $0x20] sm:$0x1] %v705
    %v707 = vld [vmem:[%s688 + $0x28] sm:$0x1]
    %v708 = vsel %vm691, 0, %v707
    %709 = vst [vmem:[%s688 + $0x28] sm:$0x1] %v708
    %v710 = vld [vmem:[%s688 + $0x30] sm:$0x1]
    %v711 = vsel %vm691, 0, %v710
    %712 = vst [vmem:[%s688 + $0x30] sm:$0x1] %v711
    %v713 = vld [vmem:[%s688 + $0x38] sm:$0x1]
    %v714 = vsel %vm691, 0, %v713
    %715 = vst [vmem:[%s688 + $0x38] sm:$0x1] %v714
    %v716 = vld [vmem:[%s688 + $0x50] sm:$0x1]
    %v717 = vsel %vm691, 0, %v716
    %718 = vst [vmem:[%s688 + $0x50] sm:$0x1] %v717
    %v719 = vld [vmem:[%s688 + $0x58] sm:$0x1]
    %v720 = vsel %vm691, 0, %v719
    %721 = vst [vmem:[%s688 + $0x58] sm:$0x1] %v720
    %v722 = vld [vmem:[%s688 + $0x60] sm:$0x1]
    %v723 = vsel %vm691, 0, %v722
    %724 = vst [vmem:[%s688 + $0x60] sm:$0x1] %v723
    %v725 = vld [vmem:[%s688 + $0x68] sm:$0x1]
    %v726 = vsel %vm691, 0, %v725
    %727 = vst [vmem:[%s688 + $0x68] sm:$0x1] %v726
    %v728 = vld [vmem:[%s688 + $0x70] sm:$0x1]
    %v729 = vsel %vm691, 0, %v728
    %730 = vst [vmem:[%s688 + $0x70] sm:$0x1] %v729
    %v731 = vld [vmem:[%s688 + $0x78] sm:$0x1]
    %v732 = vsel %vm691, 0, %v731
    %733 = vst [vmem:[%s688 + $0x78] sm:$0x1] %v732
    %v734 = vld [vmem:[%s688 + $0x80] sm:$0x1]
    %v735 = vsel %vm691, 0, %v734
    %736 = vst [vmem:[%s688 + $0x80] sm:$0x1] %v735
    %v737 = vld [vmem:[%s688 + $0x88] sm:$0x1]
    %v738 = vsel %vm691, 0, %v737
    %739 = vst [vmem:[%s688 + $0x88] sm:$0x1] %v738
    %vm740 = vsmask.f32 7938
    %vm741 = vmand %vm689, %vm740
    %v742 = vld [vmem:[%s688 + $0x4] sm:$0x1]
    %v743 = vsel %vm741, 0, %v742
    %744 = vst [vmem:[%s688 + $0x4] sm:$0x1] %v743
    %v745 = vld [vmem:[%s688 + $0xc] sm:$0x1]
    %v746 = vsel %vm741, 0, %v745
    %747 = vst [vmem:[%s688 + $0xc] sm:$0x1] %v746
    %v748 = vld [vmem:[%s688 + $0x14] sm:$0x1]
    %v749 = vsel %vm741, 0, %v748
    %750 = vst [vmem:[%s688 + $0x14] sm:$0x1] %v749
    %v751 = vld [vmem:[%s688 + $0x1c] sm:$0x1]
    %v752 = vsel %vm741, 0, %v751
    %753 = vst [vmem:[%s688 + $0x1c] sm:$0x1] %v752
    %v754 = vld [vmem:[%s688 + $0x24] sm:$0x1]
    %v755 = vsel %vm741, 0, %v754
    %756 = vst [vmem:[%s688 + $0x24] sm:$0x1] %v755
    %v757 = vld [vmem:[%s688 + $0x2c] sm:$0x1]
    %v758 = vsel %vm741, 0, %v757
    %759 = vst [vmem:[%s688 + $0x2c] sm:$0x1] %v758
    %v760 = vld [vmem:[%s688 + $0x34] sm:$0x1]
    %v761 = vsel %vm741, 0, %v760
    %762 = vst [vmem:[%s688 + $0x34] sm:$0x1] %v761
    %v763 = vld [vmem:[%s688 + $0x3c] sm:$0x1]
    %v764 = vsel %vm741, 0, %v763
    %765 = vst [vmem:[%s688 + $0x3c] sm:$0x1] %v764
    %v766 = vld [vmem:[%s688 + $0x54] sm:$0x1]
    %v767 = vsel %vm741, 0, %v766
    %768 = vst [vmem:[%s688 + $0x54] sm:$0x1] %v767
    %v769 = vld [vmem:[%s688 + $0x5c] sm:$0x1]
    %v770 = vsel %vm741, 0, %v769
    %771 = vst [vmem:[%s688 + $0x5c] sm:$0x1] %v770
    %v772 = vld [vmem:[%s688 + $0x64] sm:$0x1]
    %v773 = vsel %vm741, 0, %v772
    %774 = vst [vmem:[%s688 + $0x64] sm:$0x1] %v773
    %v775 = vld [vmem:[%s688 + $0x6c] sm:$0x1]
    %v776 = vsel %vm741, 0, %v775
    %777 = vst [vmem:[%s688 + $0x6c] sm:$0x1] %v776
    %v778 = vld [vmem:[%s688 + $0x74] sm:$0x1]
    %v779 = vsel %vm741, 0, %v778
    %780 = vst [vmem:[%s688 + $0x74] sm:$0x1] %v779
    %v781 = vld [vmem:[%s688 + $0x7c] sm:$0x1]
    %v782 = vsel %vm741, 0, %v781
    %783 = vst [vmem:[%s688 + $0x7c] sm:$0x1] %v782
    %v784 = vld [vmem:[%s688 + $0x84] sm:$0x1]
    %v785 = vsel %vm741, 0, %v784
    %786 = vst [vmem:[%s688 + $0x84] sm:$0x1] %v785
    %v787 = vld [vmem:[%s688 + $0x8c] sm:$0x1]
    %v788 = vsel %vm741, 0, %v787
    %789 = vst [vmem:[%s688 + $0x8c] sm:$0x1] %v788
    %vm790 = vcmask 388096
    %791 = vst.msk [vmem:[#allocation3] sm:$0xf] %vm790, 0
    %vm792 = vcmask 385024
    %793 = vst.msk [vmem:[#allocation3 + $0x4] sm:$0x1] %vm792, 0
    %794 = vst.msk [vmem:[#allocation3 + $0x50] sm:$0xf] %vm790, 0
    %795 = vst.msk [vmem:[#allocation3 + $0x54] sm:$0x1] %vm792, 0
    %s796 = scalar_lea.vmem [#allocation3], 72
    %797 = vst.msk [vmem:[%s796] sm:$0xf] %vm790, 0
    %798 = vst.msk [vmem:[%s796 + $0x4] sm:$0x1] %vm792, 0
    %799 = vst.msk [vmem:[%s796 + $0x50] sm:$0xf] %vm790, 0
    %800 = vst.msk [vmem:[%s796 + $0x54] sm:$0x1] %vm792, 0
    %s801 = scalar_lea.vmem [#allocation3], 8
    %vm802 = vcmask 385024
    %vm803 = vmand %vm802, %vm690
    %v804 = vld [vmem:[%s801] sm:$0x1]
    %v805 = vsel %vm803, 0, %v804
    %806 = vst [vmem:[%s801] sm:$0x1] %v805
    %v807 = vld [vmem:[%s801 + $0x8] sm:$0x1]
    %v808 = vsel %vm803, 0, %v807
    %809 = vst [vmem:[%s801 + $0x8] sm:$0x1] %v808
    %v810 = vld [vmem:[%s801 + $0x10] sm:$0x1]
    %v811 = vsel %vm803, 0, %v810
    %812 = vst [vmem:[%s801 + $0x10] sm:$0x1] %v811
    %v813 = vld [vmem:[%s801 + $0x18] sm:$0x1]
    %v814 = vsel %vm803, 0, %v813
    %815 = vst [vmem:[%s801 + $0x18] sm:$0x1] %v814
    %v816 = vld [vmem:[%s801 + $0x20] sm:$0x1]
    %v817 = vsel %vm803, 0, %v816
    %818 = vst [vmem:[%s801 + $0x20] sm:$0x1] %v817
    %v819 = vld [vmem:[%s801 + $0x28] sm:$0x1]
    %v820 = vsel %vm803, 0, %v819
    %821 = vst [vmem:[%s801 + $0x28] sm:$0x1] %v820
    %v822 = vld [vmem:[%s801 + $0x30] sm:$0x1]
    %v823 = vsel %vm803, 0, %v822
    %824 = vst [vmem:[%s801 + $0x30] sm:$0x1] %v823
    %v825 = vld [vmem:[%s801 + $0x38] sm:$0x1]
    %v826 = vsel %vm803, 0, %v825
    %827 = vst [vmem:[%s801 + $0x38] sm:$0x1] %v826
    %v828 = vld [vmem:[%s801 + $0x50] sm:$0x1]
    %v829 = vsel %vm803, 0, %v828
    %830 = vst [vmem:[%s801 + $0x50] sm:$0x1] %v829
    %v831 = vld [vmem:[%s801 + $0x58] sm:$0x1]
    %v832 = vsel %vm803, 0, %v831
    %833 = vst [vmem:[%s801 + $0x58] sm:$0x1] %v832
    %v834 = vld [vmem:[%s801 + $0x60] sm:$0x1]
    %v835 = vsel %vm803, 0, %v834
    %836 = vst [vmem:[%s801 + $0x60] sm:$0x1] %v835
    %v837 = vld [vmem:[%s801 + $0x68] sm:$0x1]
    %v838 = vsel %vm803, 0, %v837
    %839 = vst [vmem:[%s801 + $0x68] sm:$0x1] %v838
    %v840 = vld [vmem:[%s801 + $0x70] sm:$0x1]
    %v841 = vsel %vm803, 0, %v840
    %842 = vst [vmem:[%s801 + $0x70] sm:$0x1] %v841
    %v843 = vld [vmem:[%s801 + $0x78] sm:$0x1]
    %v844 = vsel %vm803, 0, %v843
    %845 = vst [vmem:[%s801 + $0x78] sm:$0x1] %v844
    %v846 = vld [vmem:[%s801 + $0x80] sm:$0x1]
    %v847 = vsel %vm803, 0, %v846
    %848 = vst [vmem:[%s801 + $0x80] sm:$0x1] %v847
    %v849 = vld [vmem:[%s801 + $0x88] sm:$0x1]
    %v850 = vsel %vm803, 0, %v849
    %851 = vst [vmem:[%s801 + $0x88] sm:$0x1] %v850
    %vm852 = vmand %vm802, %vm740
    %v853 = vld [vmem:[%s801 + $0x4] sm:$0x1]
    %v854 = vsel %vm852, 0, %v853
    %855 = vst [vmem:[%s801 + $0x4] sm:$0x1] %v854
    %v856 = vld [vmem:[%s801 + $0xc] sm:$0x1]
    %v857 = vsel %vm852, 0, %v856
    %858 = vst [vmem:[%s801 + $0xc] sm:$0x1] %v857
    %v859 = vld [vmem:[%s801 + $0x14] sm:$0x1]
    %v860 = vsel %vm852, 0, %v859
    %861 = vst [vmem:[%s801 + $0x14] sm:$0x1] %v860
    %v862 = vld [vmem:[%s801 + $0x1c] sm:$0x1]
    %v863 = vsel %vm852, 0, %v862
    %864 = vst [vmem:[%s801 + $0x1c] sm:$0x1] %v863
    %v865 = vld [vmem:[%s801 + $0x24] sm:$0x1]
    %v866 = vsel %vm852, 0, %v865
    %867 = vst [vmem:[%s801 + $0x24] sm:$0x1] %v866
    %v868 = vld [vmem:[%s801 + $0x2c] sm:$0x1]
    %v869 = vsel %vm852, 0, %v868
    %870 = vst [vmem:[%s801 + $0x2c] sm:$0x1] %v869
    %v871 = vld [vmem:[%s801 + $0x34] sm:$0x1]
    %v872 = vsel %vm852, 0, %v871
    %873 = vst [vmem:[%s801 + $0x34] sm:$0x1] %v872
    %v874 = vld [vmem:[%s801 + $0x3c] sm:$0x1]
    %v875 = vsel %vm852, 0, %v874
    %876 = vst [vmem:[%s801 + $0x3c] sm:$0x1] %v875
    %v877 = vld [vmem:[%s801 + $0x54] sm:$0x1]
    %v878 = vsel %vm852, 0, %v877
    %879 = vst [vmem:[%s801 + $0x54] sm:$0x1] %v878
    %v880 = vld [vmem:[%s801 + $0x5c] sm:$0x1]
    %v881 = vsel %vm852, 0, %v880
    %882 = vst [vmem:[%s801 + $0x5c] sm:$0x1] %v881
    %v883 = vld [vmem:[%s801 + $0x64] sm:$0x1]
    %v884 = vsel %vm852, 0, %v883
    %885 = vst [vmem:[%s801 + $0x64] sm:$0x1] %v884
    %v886 = vld [vmem:[%s801 + $0x6c] sm:$0x1]
    %v887 = vsel %vm852, 0, %v886
    %888 = vst [vmem:[%s801 + $0x6c] sm:$0x1] %v887
    %v889 = vld [vmem:[%s801 + $0x74] sm:$0x1]
    %v890 = vsel %vm852, 0, %v889
    %891 = vst [vmem:[%s801 + $0x74] sm:$0x1] %v890
    %v892 = vld [vmem:[%s801 + $0x7c] sm:$0x1]
    %v893 = vsel %vm852, 0, %v892
    %894 = vst [vmem:[%s801 + $0x7c] sm:$0x1] %v893
    %v895 = vld [vmem:[%s801 + $0x84] sm:$0x1]
    %v896 = vsel %vm852, 0, %v895
    %897 = vst [vmem:[%s801 + $0x84] sm:$0x1] %v896
    %v898 = vld [vmem:[%s801 + $0x8c] sm:$0x1]
    %v899 = vsel %vm852, 0, %v898
    %900 = vst [vmem:[%s801 + $0x8c] sm:$0x1] %v899
    %v902 = vshrl.u32 %v628, 16
    %v904 = vrot.slane %v902, 7
    %v905 = vshll.u32 %v628, 16
    %v907 = vor.u32 %v904, %v905
    %v908 = vrot.slane %v904, 4
    %v910 = vshrl.u32 %v629, 16
    %v912 = vrot.slane %v910, 7
    %v913 = vshll.u32 %v629, 16
    %v915 = vor.u32 %v912, %v913
    %v916 = vrot.slane %v912, 4
    %v918 = vshrl.u32 %v630, 16
    %v920 = vrot.slane %v918, 7
    %v921 = vshll.u32 %v630, 16
    %v923 = vor.u32 %v920, %v921
    %v924 = vrot.slane %v920, 4
    %v926 = vshrl.u32 %v631, 16
    %v928 = vrot.slane %v926, 7
    %v929 = vshll.u32 %v631, 16
    %v931 = vor.u32 %v928, %v929
    %v932 = vrot.slane %v928, 4
    %v934 = vshrl.u32 %v632, 16
    %v936 = vrot.slane %v934, 7
    %v937 = vshll.u32 %v632, 16
    %v939 = vor.u32 %v936, %v937
    %v940 = vrot.slane %v936, 4
    %v942 = vshrl.u32 %v633, 16
    %v944 = vrot.slane %v942, 7
    %v945 = vshll.u32 %v633, 16
    %v947 = vor.u32 %v944, %v945
    %v948 = vrot.slane %v944, 4
    %v950 = vshrl.u32 %v634, 16
    %v952 = vrot.slane %v950, 7
    %v953 = vshll.u32 %v634, 16
    %v955 = vor.u32 %v952, %v953
    %v956 = vrot.slane %v952, 4
    %v958 = vshrl.u32 %v635, 16
    %v960 = vrot.slane %v958, 7
    %v961 = vshll.u32 %v635, 16
    %v963 = vor.u32 %v960, %v961
    %v964 = vrot.slane %v960, 4
    %v966 = vshrl.u32 %v636, 16
    %v968 = vrot.slane %v966, 7
    %v969 = vshll.u32 %v636, 16
    %v971 = vor.u32 %v968, %v969
    %v972 = vrot.slane %v968, 4
    %v974 = vshrl.u32 %v637, 16
    %v976 = vrot.slane %v974, 7
    %v977 = vshll.u32 %v637, 16
    %v979 = vor.u32 %v976, %v977
    %v980 = vrot.slane %v976, 4
    %v982 = vshrl.u32 %v638, 16
    %v984 = vrot.slane %v982, 7
    %v985 = vshll.u32 %v638, 16
    %v987 = vor.u32 %v984, %v985
    %v988 = vrot.slane %v984, 4
    %v990 = vshrl.u32 %v639, 16
    %v992 = vrot.slane %v990, 7
    %v993 = vshll.u32 %v639, 16
    %v995 = vor.u32 %v992, %v993
    %v996 = vrot.slane %v992, 4
    %v998 = vshrl.u32 %v640, 16
    %v1000 = vrot.slane %v998, 7
    %v1001 = vshll.u32 %v640, 16
    %v1003 = vor.u32 %v1000, %v1001
    %v1004 = vrot.slane %v1000, 4
    %v1006 = vshrl.u32 %v641, 16
    %v1008 = vrot.slane %v1006, 7
    %v1009 = vshll.u32 %v641, 16
    %v1011 = vor.u32 %v1008, %v1009
    %v1012 = vrot.slane %v1008, 4
    %v1014 = vshrl.u32 %v642, 16
    %v1016 = vrot.slane %v1014, 7
    %v1017 = vshll.u32 %v642, 16
    %v1019 = vor.u32 %v1016, %v1017
    %v1020 = vrot.slane %v1016, 4
    %v1022 = vshrl.u32 %v643, 16
    %v1024 = vrot.slane %v1022, 7
    %v1025 = vshll.u32 %v643, 16
    %v1027 = vor.u32 %v1024, %v1025
    %v1028 = vrot.slane %v1024, 4
    %1029 = vrot.lane.b32.xlu0 %v907, 96
    %v1030 = vpop.permute.xlu0 %1029
    %1031 = vrot.lane.b32.xlu0 %v908, 96
    %v1032 = vpop.permute.xlu0 %1031
    %1033 = vrot.lane.b32.xlu0 %v915, 96
    %v1034 = vpop.permute.xlu0 %1033
    %1035 = vrot.lane.b32.xlu0 %v916, 96
    %v1036 = vpop.permute.xlu0 %1035
    %1037 = vrot.lane.b32.xlu0 %v923, 96
    %v1038 = vpop.permute.xlu0 %1037
    %1039 = vrot.lane.b32.xlu0 %v924, 96
    %v1040 = vpop.permute.xlu0 %1039
    %1041 = vrot.lane.b32.xlu0 %v931, 96
    %v1042 = vpop.permute.xlu0 %1041
    %1043 = vrot.lane.b32.xlu0 %v932, 96
    %v1044 = vpop.permute.xlu0 %1043
    %1045 = vrot.lane.b32.xlu0 %v939, 96
    %v1046 = vpop.permute.xlu0 %1045
    %1047 = vrot.lane.b32.xlu0 %v940, 96
    %v1048 = vpop.permute.xlu0 %1047
    %1049 = vrot.lane.b32.xlu0 %v947, 96
    %v1050 = vpop.permute.xlu0 %1049
    %1051 = vrot.lane.b32.xlu0 %v948, 96
    %v1052 = vpop.permute.xlu0 %1051
    %1053 = vrot.lane.b32.xlu0 %v955, 96
    %v1054 = vpop.permute.xlu0 %1053
    %1055 = vrot.lane.b32.xlu0 %v956, 96
    %v1056 = vpop.permute.xlu0 %1055
    %1057 = vrot.lane.b32.xlu0 %v963, 96
    %v1058 = vpop.permute.xlu0 %1057
    %1059 = vrot.lane.b32.xlu0 %v964, 96
    %v1060 = vpop.permute.xlu0 %1059
    %1061 = vrot.lane.b32.xlu0 %v971, 96
    %v1062 = vpop.permute.xlu0 %1061
    %1063 = vrot.lane.b32.xlu0 %v972, 96
    %v1064 = vpop.permute.xlu0 %1063
    %1065 = vrot.lane.b32.xlu0 %v979, 96
    %v1066 = vpop.permute.xlu0 %1065
    %1067 = vrot.lane.b32.xlu0 %v980, 96
    %v1068 = vpop.permute.xlu0 %1067
    %1069 = vrot.lane.b32.xlu0 %v987, 96
    %v1070 = vpop.permute.xlu0 %1069
    %1071 = vrot.lane.b32.xlu0 %v988, 96
    %v1072 = vpop.permute.xlu0 %1071
    %1073 = vrot.lane.b32.xlu0 %v995, 96
    %v1074 = vpop.permute.xlu0 %1073
    %1075 = vrot.lane.b32.xlu0 %v996, 96
    %v1076 = vpop.permute.xlu0 %1075
    %1077 = vrot.lane.b32.xlu0 %v1003, 96
    %v1078 = vpop.permute.xlu0 %1077
    %1079 = vrot.lane.b32.xlu0 %v1004, 96
    %v1080 = vpop.permute.xlu0 %1079
    %1081 = vrot.lane.b32.xlu0 %v1011, 96
    %v1082 = vpop.permute.xlu0 %1081
    %1083 = vrot.lane.b32.xlu0 %v1012, 96
    %v1084 = vpop.permute.xlu0 %1083
    %1085 = vrot.lane.b32.xlu0 %v1019, 96
    %v1086 = vpop.permute.xlu0 %1085
    %1087 = vrot.lane.b32.xlu0 %v1020, 96
    %v1088 = vpop.permute.xlu0 %1087
    %1089 = vrot.lane.b32.xlu0 %v1027, 96
    %v1090 = vpop.permute.xlu0 %1089
    %1091 = vrot.lane.b32.xlu0 %v1028, 96
    %v1092 = vpop.permute.xlu0 %1091
    %vm1125 = vcmask 519168
    %vm1126 = vmand %vm1125, %vm740
    %v1127 = vld [vmem:[%s688] sm:$0xf]
    %v1128 = vsel %vm1126, %v1030, %v1127
    %1129 = vst [vmem:[%s688] sm:$0xf] %v1128
    %v1130 = vld [vmem:[%s688 + $0x4] sm:$0x1]
    %v1131 = vsel %vm691, %v1032, %v1130
    %1132 = vst [vmem:[%s688 + $0x4] sm:$0x1] %v1131
    %v1133 = vld [vmem:[%s688 + $0x8] sm:$0xf]
    %v1134 = vsel %vm1126, %v1034, %v1133
    %1135 = vst [vmem:[%s688 + $0x8] sm:$0xf] %v1134
    %v1136 = vld [vmem:[%s688 + $0xc] sm:$0x1]
    %v1137 = vsel %vm691, %v1036, %v1136
    %1138 = vst [vmem:[%s688 + $0xc] sm:$0x1] %v1137
    %v1139 = vld [vmem:[%s688 + $0x10] sm:$0xf]
    %v1140 = vsel %vm1126, %v1038, %v1139
    %1141 = vst [vmem:[%s688 + $0x10] sm:$0xf] %v1140
    %v1142 = vld [vmem:[%s688 + $0x14] sm:$0x1]
    %v1143 = vsel %vm691, %v1040, %v1142
    %1144 = vst [vmem:[%s688 + $0x14] sm:$0x1] %v1143
    %v1145 = vld [vmem:[%s688 + $0x18] sm:$0xf]
    %v1146 = vsel %vm1126, %v1042, %v1145
    %1147 = vst [vmem:[%s688 + $0x18] sm:$0xf] %v1146
    %v1148 = vld [vmem:[%s688 + $0x1c] sm:$0x1]
    %v1149 = vsel %vm691, %v1044, %v1148
    %1150 = vst [vmem:[%s688 + $0x1c] sm:$0x1] %v1149
    %v1151 = vld [vmem:[%s688 + $0x20] sm:$0xf]
    %v1152 = vsel %vm1126, %v1046, %v1151
    %1153 = vst [vmem:[%s688 + $0x20] sm:$0xf] %v1152
    %v1154 = vld [vmem:[%s688 + $0x24] sm:$0x1]
    %v1155 = vsel %vm691, %v1048, %v1154
    %1156 = vst [vmem:[%s688 + $0x24] sm:$0x1] %v1155
    %v1157 = vld [vmem:[%s688 + $0x28] sm:$0xf]
    %v1158 = vsel %vm1126, %v1050, %v1157
    %1159 = vst [vmem:[%s688 + $0x28] sm:$0xf] %v1158
    %v1160 = vld [vmem:[%s688 + $0x2c] sm:$0x1]
    %v1161 = vsel %vm691, %v1052, %v1160
    %1162 = vst [vmem:[%s688 + $0x2c] sm:$0x1] %v1161
    %v1163 = vld [vmem:[%s688 + $0x30] sm:$0xf]
    %v1164 = vsel %vm1126, %v1054, %v1163
    %1165 = vst [vmem:[%s688 + $0x30] sm:$0xf] %v1164
    %v1166 = vld [vmem:[%s688 + $0x34] sm:$0x1]
    %v1167 = vsel %vm691, %v1056, %v1166
    %1168 = vst [vmem:[%s688 + $0x34] sm:$0x1] %v1167
    %v1169 = vld [vmem:[%s688 + $0x38] sm:$0xf]
    %v1170 = vsel %vm1126, %v1058, %v1169
    %1171 = vst [vmem:[%s688 + $0x38] sm:$0xf] %v1170
    %v1172 = vld [vmem:[%s688 + $0x3c] sm:$0x1]
    %v1173 = vsel %vm691, %v1060, %v1172
    %1174 = vst [vmem:[%s688 + $0x3c] sm:$0x1] %v1173
    %v1175 = vld [vmem:[%s688 + $0x50] sm:$0xf]
    %v1176 = vsel %vm1126, %v1062, %v1175
    %1177 = vst [vmem:[%s688 + $0x50] sm:$0xf] %v1176
    %v1178 = vld [vmem:[%s688 + $0x54] sm:$0x1]
    %v1179 = vsel %vm691, %v1064, %v1178
    %1180 = vst [vmem:[%s688 + $0x54] sm:$0x1] %v1179
    %v1181 = vld [vmem:[%s688 + $0x58] sm:$0xf]
    %v1182 = vsel %vm1126, %v1066, %v1181
    %1183 = vst [vmem:[%s688 + $0x58] sm:$0xf] %v1182
    %v1184 = vld [vmem:[%s688 + $0x5c] sm:$0x1]
    %v1185 = vsel %vm691, %v1068, %v1184
    %1186 = vst [vmem:[%s688 + $0x5c] sm:$0x1] %v1185
    %v1187 = vld [vmem:[%s688 + $0x60] sm:$0xf]
    %v1188 = vsel %vm1126, %v1070, %v1187
    %1189 = vst [vmem:[%s688 + $0x60] sm:$0xf] %v1188
    %v1190 = vld [vmem:[%s688 + $0x64] sm:$0x1]
    %v1191 = vsel %vm691, %v1072, %v1190
    %1192 = vst [vmem:[%s688 + $0x64] sm:$0x1] %v1191
    %v1193 = vld [vmem:[%s688 + $0x68] sm:$0xf]
    %v1194 = vsel %vm1126, %v1074, %v1193
    %1195 = vst [vmem:[%s688 + $0x68] sm:$0xf] %v1194
    %v1196 = vld [vmem:[%s688 + $0x6c] sm:$0x1]
    %v1197 = vsel %vm691, %v1076, %v1196
    %1198 = vst [vmem:[%s688 + $0x6c] sm:$0x1] %v1197
    %v1199 = vld [vmem:[%s688 + $0x70] sm:$0xf]
    %v1200 = vsel %vm1126, %v1078, %v1199
    %1201 = vst [vmem:[%s688 + $0x70] sm:$0xf] %v1200
    %v1202 = vld [vmem:[%s688 + $0x74] sm:$0x1]
    %v1203 = vsel %vm691, %v1080, %v1202
    %1204 = vst [vmem:[%s688 + $0x74] sm:$0x1] %v1203
    %v1205 = vld [vmem:[%s688 + $0x78] sm:$0xf]
    %v1206 = vsel %vm1126, %v1082, %v1205
    %1207 = vst [vmem:[%s688 + $0x78] sm:$0xf] %v1206
    %v1208 = vld [vmem:[%s688 + $0x7c] sm:$0x1]
    %v1209 = vsel %vm691, %v1084, %v1208
    %1210 = vst [vmem:[%s688 + $0x7c] sm:$0x1] %v1209
    %v1211 = vld [vmem:[%s688 + $0x80] sm:$0xf]
    %v1212 = vsel %vm1126, %v1086, %v1211
    %1213 = vst [vmem:[%s688 + $0x80] sm:$0xf] %v1212
    %v1214 = vld [vmem:[%s688 + $0x84] sm:$0x1]
    %v1215 = vsel %vm691, %v1088, %v1214
    %1216 = vst [vmem:[%s688 + $0x84] sm:$0x1] %v1215
    %v1217 = vld [vmem:[%s688 + $0x88] sm:$0xf]
    %v1218 = vsel %vm1126, %v1090, %v1217
    %1219 = vst [vmem:[%s688 + $0x88] sm:$0xf] %v1218
    %v1220 = vld [vmem:[%s688 + $0x8c] sm:$0x1]
    %v1221 = vsel %vm691, %v1092, %v1220
    %1222 = vst [vmem:[%s688 + $0x8c] sm:$0x1] %v1221
    %v1223 = vld [vmem:[#allocation2] sm:$0xf]
    %v1224 = vld [vmem:[#allocation2 + $0x8] sm:$0xf]
    %v1225 = vld [vmem:[#allocation2 + $0x10] sm:$0xf]
    %v1226 = vld [vmem:[#allocation2 + $0x18] sm:$0xf]
    %v1227 = vld [vmem:[#allocation2 + $0x20] sm:$0xf]
    %v1228 = vld [vmem:[#allocation2 + $0x28] sm:$0xf]
    %v1229 = vld [vmem:[#allocation2 + $0x30] sm:$0xf]
    %v1230 = vld [vmem:[#allocation2 + $0x38] sm:$0xf]
    %v1231 = vld [vmem:[#allocation2 + $0x50] sm:$0xf]
    %v1232 = vld [vmem:[#allocation2 + $0x58] sm:$0xf]
    %v1233 = vld [vmem:[#allocation2 + $0x60] sm:$0xf]
    %v1234 = vld [vmem:[#allocation2 + $0x68] sm:$0xf]
    %v1235 = vld [vmem:[#allocation2 + $0x70] sm:$0xf]
    %v1236 = vld [vmem:[#allocation2 + $0x78] sm:$0xf]
    %v1237 = vld [vmem:[#allocation2 + $0x80] sm:$0xf]
    %v1238 = vld [vmem:[#allocation2 + $0x88] sm:$0xf]
    %1239 = vst.msk [vmem:[#allocation4] sm:$0xf] %vm660, %v1223
    %1240 = vst.msk [vmem:[#allocation4 + $0xc] sm:$0xf] %vm660, %v1224
    %1241 = vst.msk [vmem:[#allocation4 + $0x18] sm:$0xf] %vm660, %v1225
    %1242 = vst.msk [vmem:[#allocation4 + $0x24] sm:$0xf] %vm660, %v1226
    %1243 = vst.msk [vmem:[#allocation4 + $0x30] sm:$0xf] %vm660, %v1227
    %1244 = vst.msk [vmem:[#allocation4 + $0x3c] sm:$0xf] %vm660, %v1228
    %1245 = vst.msk [vmem:[#allocation4 + $0x48] sm:$0xf] %vm660, %v1229
    %1246 = vst.msk [vmem:[#allocation4 + $0x54] sm:$0xf] %vm660, %v1230
    %1247 = vst.msk [vmem:[#allocation4 + $0x60] sm:$0xf] %vm660, %v1231
    %1248 = vst.msk [vmem:[#allocation4 + $0x6c] sm:$0xf] %vm660, %v1232
    %1249 = vst.msk [vmem:[#allocation4 + $0x78] sm:$0xf] %vm660, %v1233
    %1250 = vst.msk [vmem:[#allocation4 + $0x84] sm:$0xf] %vm660, %v1234
    %1251 = vst.msk [vmem:[#allocation4 + $0x90] sm:$0xf] %vm660, %v1235
    %1252 = vst.msk [vmem:[#allocation4 + $0x9c] sm:$0xf] %vm660, %v1236
    %1253 = vst.msk [vmem:[#allocation4 + $0xa8] sm:$0xf] %vm660, %v1237
    %1254 = vst.msk [vmem:[#allocation4 + $0xb4] sm:$0xf] %vm660, %v1238
    %1271 = vrot.lane.b32.xlu0 %v1223, 96
    %v1272 = vpop.permute.xlu0 %1271
    %1273 = vrot.lane.b32.xlu0 %v1224, 96
    %v1274 = vpop.permute.xlu0 %1273
    %1275 = vrot.lane.b32.xlu0 %v1225, 96
    %v1276 = vpop.permute.xlu0 %1275
    %1277 = vrot.lane.b32.xlu0 %v1226, 96
    %v1278 = vpop.permute.xlu0 %1277
    %1279 = vrot.lane.b32.xlu0 %v1227, 96
    %v1280 = vpop.permute.xlu0 %1279
    %1281 = vrot.lane.b32.xlu0 %v1228, 96
    %v1282 = vpop.permute.xlu0 %1281
    %1283 = vrot.lane.b32.xlu0 %v1229, 96
    %v1284 = vpop.permute.xlu0 %1283
    %1285 = vrot.lane.b32.xlu0 %v1230, 96
    %v1286 = vpop.permute.xlu0 %1285
    %1287 = vrot.lane.b32.xlu0 %v1231, 96
    %v1288 = vpop.permute.xlu0 %1287
    %1289 = vrot.lane.b32.xlu0 %v1232, 96
    %v1290 = vpop.permute.xlu0 %1289
    %1291 = vrot.lane.b32.xlu0 %v1233, 96
    %v1292 = vpop.permute.xlu0 %1291
    %1293 = vrot.lane.b32.xlu0 %v1234, 96
    %v1294 = vpop.permute.xlu0 %1293
    %1295 = vrot.lane.b32.xlu0 %v1235, 96
    %v1296 = vpop.permute.xlu0 %1295
    %1297 = vrot.lane.b32.xlu0 %v1236, 96
    %v1298 = vpop.permute.xlu0 %1297
    %1299 = vrot.lane.b32.xlu0 %v1237, 96
    %v1300 = vpop.permute.xlu0 %1299
    %1301 = vrot.lane.b32.xlu0 %v1238, 96
    %v1302 = vpop.permute.xlu0 %1301
    %1319 = vst.msk [vmem:[#allocation5] sm:$0xf] %vm660, %v1272
    %1320 = vst.msk [vmem:[#allocation5 + $0xc] sm:$0xf] %vm660, %v1274
    %1321 = vst.msk [vmem:[#allocation5 + $0x18] sm:$0xf] %vm660, %v1276
    %1322 = vst.msk [vmem:[#allocation5 + $0x24] sm:$0xf] %vm660, %v1278
    %1323 = vst.msk [vmem:[#allocation5 + $0x30] sm:$0xf] %vm660, %v1280
    %1324 = vst.msk [vmem:[#allocation5 + $0x3c] sm:$0xf] %vm660, %v1282
    %1325 = vst.msk [vmem:[#allocation5 + $0x48] sm:$0xf] %vm660, %v1284
    %1326 = vst.msk [vmem:[#allocation5 + $0x54] sm:$0xf] %vm660, %v1286
    %1327 = vst.msk [vmem:[#allocation5 + $0x60] sm:$0xf] %vm660, %v1288
    %1328 = vst.msk [vmem:[#allocation5 + $0x6c] sm:$0xf] %vm660, %v1290
    %1329 = vst.msk [vmem:[#allocation5 + $0x78] sm:$0xf] %vm660, %v1292
    %1330 = vst.msk [vmem:[#allocation5 + $0x84] sm:$0xf] %vm660, %v1294
    %1331 = vst.msk [vmem:[#allocation5 + $0x90] sm:$0xf] %vm660, %v1296
    %1332 = vst.msk [vmem:[#allocation5 + $0x9c] sm:$0xf] %vm660, %v1298
    %1333 = vst.msk [vmem:[#allocation5 + $0xa8] sm:$0xf] %vm660, %v1300
    %1334 = vst.msk [vmem:[#allocation5 + $0xb4] sm:$0xf] %vm660, %v1302
    %v1335 = vld [vmem:[#allocation2] sm:$0xf]
    %v1336 = vld [vmem:[#allocation2 + $0x4] sm:$0x1]
    %v1337 = vld [vmem:[#allocation2 + $0x8] sm:$0xf]
    %v1338 = vld [vmem:[#allocation2 + $0xc] sm:$0x1]
    %v1339 = vld [vmem:[#allocation2 + $0x10] sm:$0xf]
    %v1340 = vld [vmem:[#allocation2 + $0x14] sm:$0x1]
    %v1341 = vld [vmem:[#allocation2 + $0x18] sm:$0xf]
    %v1342 = vld [vmem:[#allocation2 + $0x1c] sm:$0x1]
    %v1343 = vld [vmem:[#allocation2 + $0x20] sm:$0xf]
    %v1344 = vld [vmem:[#allocation2 + $0x24] sm:$0x1]
    %v1345 = vld [vmem:[#allocation2 + $0x28] sm:$0xf]
    %v1346 = vld [vmem:[#allocation2 + $0x2c] sm:$0x1]
    %v1347 = vld [vmem:[#allocation2 + $0x30] sm:$0xf]
    %v1348 = vld [vmem:[#allocation2 + $0x34] sm:$0x1]
    %v1349 = vld [vmem:[#allocation2 + $0x38] sm:$0xf]
    %v1350 = vld [vmem:[#allocation2 + $0x3c] sm:$0x1]
    %v1351 = vld [vmem:[#allocation2 + $0x50] sm:$0xf]
    %v1352 = vld [vmem:[#allocation2 + $0x54] sm:$0x1]
    %v1353 = vld [vmem:[#allocation2 + $0x58] sm:$0xf]
    %v1354 = vld [vmem:[#allocation2 + $0x5c] sm:$0x1]
    %v1355 = vld [vmem:[#allocation2 + $0x60] sm:$0xf]
    %v1356 = vld [vmem:[#allocation2 + $0x64] sm:$0x1]
    %v1357 = vld [vmem:[#allocation2 + $0x68] sm:$0xf]
    %v1358 = vld [vmem:[#allocation2 + $0x6c] sm:$0x1]
    %v1359 = vld [vmem:[#allocation2 + $0x70] sm:$0xf]
    %v1360 = vld [vmem:[#allocation2 + $0x74] sm:$0x1]
    %v1361 = vld [vmem:[#allocation2 + $0x78] sm:$0xf]
    %v1362 = vld [vmem:[#allocation2 + $0x7c] sm:$0x1]
    %v1363 = vld [vmem:[#allocation2 + $0x80] sm:$0xf]
    %v1364 = vld [vmem:[#allocation2 + $0x84] sm:$0x1]
    %v1365 = vld [vmem:[#allocation2 + $0x88] sm:$0xf]
    %v1366 = vld [vmem:[#allocation2 + $0x8c] sm:$0x1]
    %vm1367 = vsmask.f32 3328
    %vm1368 = vsmask.f32 7440
    %vm1369 = vmor %vm1367, %vm1368
    %v1371 = vshrl.u32 %v1335, 16
    %v1373 = vrot.slane %v1371, 4
    %v1374 = vshll.u32 %v1335, 16
    %v1376 = vrot.slane %v1374, 5
    %v1377 = vor.u32 %v1373, %v1376
    %v1378 = vrot.slane %v1377, 4
    %v1380 = vshll.u32 %v1336, 16
    %v1382 = vrot.slane %v1380, 5
    %v1383 = vsel %vm1369, %v1378, %v1382
    %v1385 = vshrl.u32 %v1337, 16
    %v1387 = vrot.slane %v1385, 4
    %v1388 = vshll.u32 %v1337, 16
    %v1390 = vrot.slane %v1388, 5
    %v1391 = vor.u32 %v1387, %v1390
    %v1392 = vrot.slane %v1391, 4
    %v1394 = vshll.u32 %v1338, 16
    %v1396 = vrot.slane %v1394, 5
    %v1397 = vsel %vm1369, %v1392, %v1396
    %v1399 = vshrl.u32 %v1339, 16
    %v1401 = vrot.slane %v1399, 4
    %v1402 = vshll.u32 %v1339, 16
    %v1404 = vrot.slane %v1402, 5
    %v1405 = vor.u32 %v1401, %v1404
    %v1406 = vrot.slane %v1405, 4
    %v1408 = vshll.u32 %v1340, 16
    %v1410 = vrot.slane %v1408, 5
    %v1411 = vsel %vm1369, %v1406, %v1410
    %v1413 = vshrl.u32 %v1341, 16
    %v1415 = vrot.slane %v1413, 4
    %v1416 = vshll.u32 %v1341, 16
    %v1418 = vrot.slane %v1416, 5
    %v1419 = vor.u32 %v1415, %v1418
    %v1420 = vrot.slane %v1419, 4
    %v1422 = vshll.u32 %v1342, 16
    %v1424 = vrot.slane %v1422, 5
    %v1425 = vsel %vm1369, %v1420, %v1424
    %v1427 = vshrl.u32 %v1343, 16
    %v1429 = vrot.slane %v1427, 4
    %v1430 = vshll.u32 %v1343, 16
    %v1432 = vrot.slane %v1430, 5
    %v1433 = vor.u32 %v1429, %v1432
    %v1434 = vrot.slane %v1433, 4
    %v1436 = vshll.u32 %v1344, 16
    %v1438 = vrot.slane %v1436, 5
    %v1439 = vsel %vm1369, %v1434, %v1438
    %v1441 = vshrl.u32 %v1345, 16
    %v1443 = vrot.slane %v1441, 4
    %v1444 = vshll.u32 %v1345, 16
    %v1446 = vrot.slane %v1444, 5
    %v1447 = vor.u32 %v1443, %v1446
    %v1448 = vrot.slane %v1447, 4
    %v1450 = vshll.u32 %v1346, 16
    %v1452 = vrot.slane %v1450, 5
    %v1453 = vsel %vm1369, %v1448, %v1452
    %v1455 = vshrl.u32 %v1347, 16
    %v1457 = vrot.slane %v1455, 4
    %v1458 = vshll.u32 %v1347, 16
    %v1460 = vrot.slane %v1458, 5
    %v1461 = vor.u32 %v1457, %v1460
    %v1462 = vrot.slane %v1461, 4
    %v1464 = vshll.u32 %v1348, 16
    %v1466 = vrot.slane %v1464, 5
    %v1467 = vsel %vm1369, %v1462, %v1466
    %v1469 = vshrl.u32 %v1349, 16
    %v1471 = vrot.slane %v1469, 4
    %v1472 = vshll.u32 %v1349, 16
    %v1474 = vrot.slane %v1472, 5
    %v1475 = vor.u32 %v1471, %v1474
    %v1476 = vrot.slane %v1475, 4
    %v1478 = vshll.u32 %v1350, 16
    %v1480 = vrot.slane %v1478, 5
    %v1481 = vsel %vm1369, %v1476, %v1480
    %v1483 = vshrl.u32 %v1351, 16
    %v1485 = vrot.slane %v1483, 4
    %v1486 = vshll.u32 %v1351, 16
    %v1488 = vrot.slane %v1486, 5
    %v1489 = vor.u32 %v1485, %v1488
    %v1490 = vrot.slane %v1489, 4
    %v1492 = vshll.u32 %v1352, 16
    %v1494 = vrot.slane %v1492, 5
    %v1495 = vsel %vm1369, %v1490, %v1494
    %v1497 = vshrl.u32 %v1353, 16
    %v1499 = vrot.slane %v1497, 4
    %v1500 = vshll.u32 %v1353, 16
    %v1502 = vrot.slane %v1500, 5
    %v1503 = vor.u32 %v1499, %v1502
    %v1504 = vrot.slane %v1503, 4
    %v1506 = vshll.u32 %v1354, 16
    %v1508 = vrot.slane %v1506, 5
    %v1509 = vsel %vm1369, %v1504, %v1508
    %v1511 = vshrl.u32 %v1355, 16
    %v1513 = vrot.slane %v1511, 4
    %v1514 = vshll.u32 %v1355, 16
    %v1516 = vrot.slane %v1514, 5
    %v1517 = vor.u32 %v1513, %v1516
    %v1518 = vrot.slane %v1517, 4
    %v1520 = vshll.u32 %v1356, 16
    %v1522 = vrot.slane %v1520, 5
    %v1523 = vsel %vm1369, %v1518, %v1522
    %v1525 = vshrl.u32 %v1357, 16
    %v1527 = vrot.slane %v1525, 4
    %v1528 = vshll.u32 %v1357, 16
    %v1530 = vrot.slane %v1528, 5
    %v1531 = vor.u32 %v1527, %v1530
    %v1532 = vrot.slane %v1531, 4
    %v1534 = vshll.u32 %v1358, 16
    %v1536 = vrot.slane %v1534, 5
    %v1537 = vsel %vm1369, %v1532, %v1536
    %v1539 = vshrl.u32 %v1359, 16
    %v1541 = vrot.slane %v1539, 4
    %v1542 = vshll.u32 %v1359, 16
    %v1544 = vrot.slane %v1542, 5
    %v1545 = vor.u32 %v1541, %v1544
    %v1546 = vrot.slane %v1545, 4
    %v1548 = vshll.u32 %v1360, 16
    %v1550 = vrot.slane %v1548, 5
    %v1551 = vsel %vm1369, %v1546, %v1550
    %v1553 = vshrl.u32 %v1361, 16
    %v1555 = vrot.slane %v1553, 4
    %v1556 = vshll.u32 %v1361, 16
    %v1558 = vrot.slane %v1556, 5
    %v1559 = vor.u32 %v1555, %v1558
    %v1560 = vrot.slane %v1559, 4
    %v1562 = vshll.u32 %v1362, 16
    %v1564 = vrot.slane %v1562, 5
    %v1565 = vsel %vm1369, %v1560, %v1564
    %v1567 = vshrl.u32 %v1363, 16
    %v1569 = vrot.slane %v1567, 4
    %v1570 = vshll.u32 %v1363, 16
    %v1572 = vrot.slane %v1570, 5
    %v1573 = vor.u32 %v1569, %v1572
    %v1574 = vrot.slane %v1573, 4
    %v1576 = vshll.u32 %v1364, 16
    %v1578 = vrot.slane %v1576, 5
    %v1579 = vsel %vm1369, %v1574, %v1578
    %v1581 = vshrl.u32 %v1365, 16
    %v1583 = vrot.slane %v1581, 4
    %v1584 = vshll.u32 %v1365, 16
    %v1586 = vrot.slane %v1584, 5
    %v1587 = vor.u32 %v1583, %v1586
    %v1588 = vrot.slane %v1587, 4
    %v1590 = vshll.u32 %v1366, 16
    %v1592 = vrot.slane %v1590, 5
    %v1593 = vsel %vm1369, %v1588, %v1592
    %1610 = vrot.lane.b32.xlu0 %v1383, 32
    %v1611 = vpop.permute.xlu0 %1610
    %1612 = vrot.lane.b32.xlu0 %v1397, 32
    %v1613 = vpop.permute.xlu0 %1612
    %1614 = vrot.lane.b32.xlu0 %v1411, 32
    %v1615 = vpop.permute.xlu0 %1614
    %1616 = vrot.lane.b32.xlu0 %v1425, 32
    %v1617 = vpop.permute.xlu0 %1616
    %1618 = vrot.lane.b32.xlu0 %v1439, 32
    %v1619 = vpop.permute.xlu0 %1618
    %1620 = vrot.lane.b32.xlu0 %v1453, 32
    %v1621 = vpop.permute.xlu0 %1620
    %1622 = vrot.lane.b32.xlu0 %v1467, 32
    %v1623 = vpop.permute.xlu0 %1622
    %1624 = vrot.lane.b32.xlu0 %v1481, 32
    %v1625 = vpop.permute.xlu0 %1624
    %1626 = vrot.lane.b32.xlu0 %v1495, 32
    %v1627 = vpop.permute.xlu0 %1626
    %1628 = vrot.lane.b32.xlu0 %v1509, 32
    %v1629 = vpop.permute.xlu0 %1628
    %1630 = vrot.lane.b32.xlu0 %v1523, 32
    %v1631 = vpop.permute.xlu0 %1630
    %1632 = vrot.lane.b32.xlu0 %v1537, 32
    %v1633 = vpop.permute.xlu0 %1632
    %1634 = vrot.lane.b32.xlu0 %v1551, 32
    %v1635 = vpop.permute.xlu0 %1634
    %1636 = vrot.lane.b32.xlu0 %v1565, 32
    %v1637 = vpop.permute.xlu0 %1636
    %1638 = vrot.lane.b32.xlu0 %v1579, 32
    %v1639 = vpop.permute.xlu0 %1638
    %1640 = vrot.lane.b32.xlu0 %v1593, 32
    %v1641 = vpop.permute.xlu0 %1640
    %vm1658 = vcmask 519424
    %1659 = vst.msk [vmem:[#allocation4] sm:$0xf] %vm1658, %v1611
    %1660 = vst.msk [vmem:[#allocation4 + $0xc] sm:$0xf] %vm1658, %v1613
    %1661 = vst.msk [vmem:[#allocation4 + $0x18] sm:$0xf] %vm1658, %v1615
    %1662 = vst.msk [vmem:[#allocation4 + $0x24] sm:$0xf] %vm1658, %v1617
    %1663 = vst.msk [vmem:[#allocation4 + $0x30] sm:$0xf] %vm1658, %v1619
    %1664 = vst.msk [vmem:[#allocation4 + $0x3c] sm:$0xf] %vm1658, %v1621
    %1665 = vst.msk [vmem:[#allocation4 + $0x48] sm:$0xf] %vm1658, %v1623
    %1666 = vst.msk [vmem:[#allocation4 + $0x54] sm:$0xf] %vm1658, %v1625
    %1667 = vst.msk [vmem:[#allocation4 + $0x60] sm:$0xf] %vm1658, %v1627
    %1668 = vst.msk [vmem:[#allocation4 + $0x6c] sm:$0xf] %vm1658, %v1629
    %1669 = vst.msk [vmem:[#allocation4 + $0x78] sm:$0xf] %vm1658, %v1631
    %1670 = vst.msk [vmem:[#allocation4 + $0x84] sm:$0xf] %vm1658, %v1633
    %1671 = vst.msk [vmem:[#allocation4 + $0x90] sm:$0xf] %vm1658, %v1635
    %1672 = vst.msk [vmem:[#allocation4 + $0x9c] sm:$0xf] %vm1658, %v1637
    %1673 = vst.msk [vmem:[#allocation4 + $0xa8] sm:$0xf] %vm1658, %v1639
    %1674 = vst.msk [vmem:[#allocation4 + $0xb4] sm:$0xf] %vm1658, %v1641
    %1675 = vst.msk [vmem:[#allocation5] sm:$0xf] %vm1658, %v1383
    %1676 = vst.msk [vmem:[#allocation5 + $0xc] sm:$0xf] %vm1658, %v1397
    %1677 = vst.msk [vmem:[#allocation5 + $0x18] sm:$0xf] %vm1658, %v1411
    %1678 = vst.msk [vmem:[#allocation5 + $0x24] sm:$0xf] %vm1658, %v1425
    %1679 = vst.msk [vmem:[#allocation5 + $0x30] sm:$0xf] %vm1658, %v1439
    %1680 = vst.msk [vmem:[#allocation5 + $0x3c] sm:$0xf] %vm1658, %v1453
    %1681 = vst.msk [vmem:[#allocation5 + $0x48] sm:$0xf] %vm1658, %v1467
    %1682 = vst.msk [vmem:[#allocation5 + $0x54] sm:$0xf] %vm1658, %v1481
    %1683 = vst.msk [vmem:[#allocation5 + $0x60] sm:$0xf] %vm1658, %v1495
    %1684 = vst.msk [vmem:[#allocation5 + $0x6c] sm:$0xf] %vm1658, %v1509
    %1685 = vst.msk [vmem:[#allocation5 + $0x78] sm:$0xf] %vm1658, %v1523
    %1686 = vst.msk [vmem:[#allocation5 + $0x84] sm:$0xf] %vm1658, %v1537
    %1687 = vst.msk [vmem:[#allocation5 + $0x90] sm:$0xf] %vm1658, %v1551
    %1688 = vst.msk [vmem:[#allocation5 + $0x9c] sm:$0xf] %vm1658, %v1565
    %1689 = vst.msk [vmem:[#allocation5 + $0xa8] sm:$0xf] %vm1658, %v1579
    %1690 = vst.msk [vmem:[#allocation5 + $0xb4] sm:$0xf] %vm1658, %v1593
    %v1691 = vld [vmem:[#allocation2] sm:$0xe]
    %v1692 = vld [vmem:[#allocation2 + $0x4] sm:$0x1]
    %v1693 = vld [vmem:[#allocation2 + $0x8] sm:$0xe]
    %v1694 = vld [vmem:[#allocation2 + $0xc] sm:$0x1]
    %v1695 = vld [vmem:[#allocation2 + $0x10] sm:$0xe]
    %v1696 = vld [vmem:[#allocation2 + $0x14] sm:$0x1]
    %v1697 = vld [vmem:[#allocation2 + $0x18] sm:$0xe]
    %v1698 = vld [vmem:[#allocation2 + $0x1c] sm:$0x1]
    %v1699 = vld [vmem:[#allocation2 + $0x20] sm:$0xe]
    %v1700 = vld [vmem:[#allocation2 + $0x24] sm:$0x1]
    %v1701 = vld [vmem:[#allocation2 + $0x28] sm:$0xe]
    %v1702 = vld [vmem:[#allocation2 + $0x2c] sm:$0x1]
    %v1703 = vld [vmem:[#allocation2 + $0x30] sm:$0xe]
    %v1704 = vld [vmem:[#allocation2 + $0x34] sm:$0x1]
    %v1705 = vld [vmem:[#allocation2 + $0x38] sm:$0xe]
    %v1706 = vld [vmem:[#allocation2 + $0x3c] sm:$0x1]
    %v1707 = vld [vmem:[#allocation2 + $0x50] sm:$0xe]
    %v1708 = vld [vmem:[#allocation2 + $0x54] sm:$0x1]
    %v1709 = vld [vmem:[#allocation2 + $0x58] sm:$0xe]
    %v1710 = vld [vmem:[#allocation2 + $0x5c] sm:$0x1]
    %v1711 = vld [vmem:[#allocation2 + $0x60] sm:$0xe]
    %v1712 = vld [vmem:[#allocation2 + $0x64] sm:$0x1]
    %v1713 = vld [vmem:[#allocation2 + $0x68] sm:$0xe]
    %v1714 = vld [vmem:[#allocation2 + $0x6c] sm:$0x1]
    %v1715 = vld [vmem:[#allocation2 + $0x70] sm:$0xe]
    %v1716 = vld [vmem:[#allocation2 + $0x74] sm:$0x1]
    %v1717 = vld [vmem:[#allocation2 + $0x78] sm:$0xe]
    %v1718 = vld [vmem:[#allocation2 + $0x7c] sm:$0x1]
    %v1719 = vld [vmem:[#allocation2 + $0x80] sm:$0xe]
    %v1720 = vld [vmem:[#allocation2 + $0x84] sm:$0x1]
    %v1721 = vld [vmem:[#allocation2 + $0x88] sm:$0xe]
    %v1722 = vld [vmem:[#allocation2 + $0x8c] sm:$0x1]
    %vm1755 = vcmask 1042432
    %vm1756 = vcmask 1046532
    %vm1757 = vmor %vm1755, %vm1756
    %v1758 = vrot.slane %v1691, 5
    %v1759 = vrot.slane %v1758, 4
    %v1760 = vrot.slane %v1692, 5
    %v1761 = vsel %vm1757, %v1759, %v1760
    %v1762 = vrot.slane %v1693, 5
    %v1763 = vrot.slane %v1762, 4
    %v1764 = vrot.slane %v1694, 5
    %v1765 = vsel %vm1757, %v1763, %v1764
    %v1766 = vrot.slane %v1695, 5
    %v1767 = vrot.slane %v1766, 4
    %v1768 = vrot.slane %v1696, 5
    %v1769 = vsel %vm1757, %v1767, %v1768
    %v1770 = vrot.slane %v1697, 5
    %v1771 = vrot.slane %v1770, 4
    %v1772 = vrot.slane %v1698, 5
    %v1773 = vsel %vm1757, %v1771, %v1772
    %v1774 = vrot.slane %v1699, 5
    %v1775 = vrot.slane %v1774, 4
    %v1776 = vrot.slane %v1700, 5
    %v1777 = vsel %vm1757, %v1775, %v1776
    %v1778 = vrot.slane %v1701, 5
    %v1779 = vrot.slane %v1778, 4
    %v1780 = vrot.slane %v1702, 5
    %v1781 = vsel %vm1757, %v1779, %v1780
    %v1782 = vrot.slane %v1703, 5
    %v1783 = vrot.slane %v1782, 4
    %v1784 = vrot.slane %v1704, 5
    %v1785 = vsel %vm1757, %v1783, %v1784
    %v1786 = vrot.slane %v1705, 5
    %v1787 = vrot.slane %v1786, 4
    %v1788 = vrot.slane %v1706, 5
    %v1789 = vsel %vm1757, %v1787, %v1788
    %v1790 = vrot.slane %v1707, 5
    %v1791 = vrot.slane %v1790, 4
    %v1792 = vrot.slane %v1708, 5
    %v1793 = vsel %vm1757, %v1791, %v1792
    %v1794 = vrot.slane %v1709, 5
    %v1795 = vrot.slane %v1794, 4
    %v1796 = vrot.slane %v1710, 5
    %v1797 = vsel %vm1757, %v1795, %v1796
    %v1798 = vrot.slane %v1711, 5
    %v1799 = vrot.slane %v1798, 4
    %v1800 = vrot.slane %v1712, 5
    %v1801 = vsel %vm1757, %v1799, %v1800
    %v1802 = vrot.slane %v1713, 5
    %v1803 = vrot.slane %v1802, 4
    %v1804 = vrot.slane %v1714, 5
    %v1805 = vsel %vm1757, %v1803, %v1804
    %v1806 = vrot.slane %v1715, 5
    %v1807 = vrot.slane %v1806, 4
    %v1808 = vrot.slane %v1716, 5
    %v1809 = vsel %vm1757, %v1807, %v1808
    %v1810 = vrot.slane %v1717, 5
    %v1811 = vrot.slane %v1810, 4
    %v1812 = vrot.slane %v1718, 5
    %v1813 = vsel %vm1757, %v1811, %v1812
    %v1814 = vrot.slane %v1719, 5
    %v1815 = vrot.slane %v1814, 4
    %v1816 = vrot.slane %v1720, 5
    %v1817 = vsel %vm1757, %v1815, %v1816
    %v1818 = vrot.slane %v1721, 5
    %v1819 = vrot.slane %v1818, 4
    %v1820 = vrot.slane %v1722, 5
    %v1821 = vsel %vm1757, %v1819, %v1820
    %1822 = vrot.lane.b32.xlu0 %v1761, 64
    %v1823 = vpop.permute.xlu0 %1822
    %1824 = vrot.lane.b32.xlu0 %v1765, 64
    %v1825 = vpop.permute.xlu0 %1824
    %1826 = vrot.lane.b32.xlu0 %v1769, 64
    %v1827 = vpop.permute.xlu0 %1826
    %1828 = vrot.lane.b32.xlu0 %v1773, 64
    %v1829 = vpop.permute.xlu0 %1828
    %1830 = vrot.lane.b32.xlu0 %v1777, 64
    %v1831 = vpop.permute.xlu0 %1830
    %1832 = vrot.lane.b32.xlu0 %v1781, 64
    %v1833 = vpop.permute.xlu0 %1832
    %1834 = vrot.lane.b32.xlu0 %v1785, 64
    %v1835 = vpop.permute.xlu0 %1834
    %1836 = vrot.lane.b32.xlu0 %v1789, 64
    %v1837 = vpop.permute.xlu0 %1836
    %1838 = vrot.lane.b32.xlu0 %v1793, 64
    %v1839 = vpop.permute.xlu0 %1838
    %1840 = vrot.lane.b32.xlu0 %v1797, 64
    %v1841 = vpop.permute.xlu0 %1840
    %1842 = vrot.lane.b32.xlu0 %v1801, 64
    %v1843 = vpop.permute.xlu0 %1842
    %1844 = vrot.lane.b32.xlu0 %v1805, 64
    %v1845 = vpop.permute.xlu0 %1844
    %1846 = vrot.lane.b32.xlu0 %v1809, 64
    %v1847 = vpop.permute.xlu0 %1846
    %1848 = vrot.lane.b32.xlu0 %v1813, 64
    %v1849 = vpop.permute.xlu0 %1848
    %1850 = vrot.lane.b32.xlu0 %v1817, 64
    %v1851 = vpop.permute.xlu0 %1850
    %1852 = vrot.lane.b32.xlu0 %v1821, 64
    %v1853 = vpop.permute.xlu0 %1852
    %vm1870 = vcmask 781824
    %1871 = vst.msk [vmem:[#allocation4] sm:$0xf] %vm1870, %v1823
    %1872 = vst.msk [vmem:[#allocation4 + $0xc] sm:$0xf] %vm1870, %v1825
    %1873 = vst.msk [vmem:[#allocation4 + $0x18] sm:$0xf] %vm1870, %v1827
    %1874 = vst.msk [vmem:[#allocation4 + $0x24] sm:$0xf] %vm1870, %v1829
    %1875 = vst.msk [vmem:[#allocation4 + $0x30] sm:$0xf] %vm1870, %v1831
    %1876 = vst.msk [vmem:[#allocation4 + $0x3c] sm:$0xf] %vm1870, %v1833
    %1877 = vst.msk [vmem:[#allocation4 + $0x48] sm:$0xf] %vm1870, %v1835
    %1878 = vst.msk [vmem:[#allocation4 + $0x54] sm:$0xf] %vm1870, %v1837
    %1879 = vst.msk [vmem:[#allocation4 + $0x60] sm:$0xf] %vm1870, %v1839
    %1880 = vst.msk [vmem:[#allocation4 + $0x6c] sm:$0xf] %vm1870, %v1841
    %1881 = vst.msk [vmem:[#allocation4 + $0x78] sm:$0xf] %vm1870, %v1843
    %1882 = vst.msk [vmem:[#allocation4 + $0x84] sm:$0xf] %vm1870, %v1845
    %1883 = vst.msk [vmem:[#allocation4 + $0x90] sm:$0xf] %vm1870, %v1847
    %1884 = vst.msk [vmem:[#allocation4 + $0x9c] sm:$0xf] %vm1870, %v1849
    %1885 = vst.msk [vmem:[#allocation4 + $0xa8] sm:$0xf] %vm1870, %v1851
    %1886 = vst.msk [vmem:[#allocation4 + $0xb4] sm:$0xf] %vm1870, %v1853
    %1887 = vrot.lane.b32.xlu0 %v1761, 32
    %v1888 = vpop.permute.xlu0 %1887
    %1889 = vrot.lane.b32.xlu0 %v1765, 32
    %v1890 = vpop.permute.xlu0 %1889
    %1891 = vrot.lane.b32.xlu0 %v1769, 32
    %v1892 = vpop.permute.xlu0 %1891
    %1893 = vrot.lane.b32.xlu0 %v1773, 32
    %v1894 = vpop.permute.xlu0 %1893
    %1895 = vrot.lane.b32.xlu0 %v1777, 32
    %v1896 = vpop.permute.xlu0 %1895
    %1897 = vrot.lane.b32.xlu0 %v1781, 32
    %v1898 = vpop.permute.xlu0 %1897
    %1899 = vrot.lane.b32.xlu0 %v1785, 32
    %v1900 = vpop.permute.xlu0 %1899
    %1901 = vrot.lane.b32.xlu0 %v1789, 32
    %v1902 = vpop.permute.xlu0 %1901
    %1903 = vrot.lane.b32.xlu0 %v1793, 32
    %v1904 = vpop.permute.xlu0 %1903
    %1905 = vrot.lane.b32.xlu0 %v1797, 32
    %v1906 = vpop.permute.xlu0 %1905
    %1907 = vrot.lane.b32.xlu0 %v1801, 32
    %v1908 = vpop.permute.xlu0 %1907
    %1909 = vrot.lane.b32.xlu0 %v1805, 32
    %v1910 = vpop.permute.xlu0 %1909
    %1911 = vrot.lane.b32.xlu0 %v1809, 32
    %v1912 = vpop.permute.xlu0 %1911
    %1913 = vrot.lane.b32.xlu0 %v1813, 32
    %v1914 = vpop.permute.xlu0 %1913
    %1915 = vrot.lane.b32.xlu0 %v1817, 32
    %v1916 = vpop.permute.xlu0 %1915
    %1917 = vrot.lane.b32.xlu0 %v1821, 32
    %v1918 = vpop.permute.xlu0 %1917
    %1935 = vst.msk [vmem:[#allocation5] sm:$0xf] %vm1870, %v1888
    %1936 = vst.msk [vmem:[#allocation5 + $0xc] sm:$0xf] %vm1870, %v1890
    %1937 = vst.msk [vmem:[#allocation5 + $0x18] sm:$0xf] %vm1870, %v1892
    %1938 = vst.msk [vmem:[#allocation5 + $0x24] sm:$0xf] %vm1870, %v1894
    %1939 = vst.msk [vmem:[#allocation5 + $0x30] sm:$0xf] %vm1870, %v1896
    %1940 = vst.msk [vmem:[#allocation5 + $0x3c] sm:$0xf] %vm1870, %v1898
    %1941 = vst.msk [vmem:[#allocation5 + $0x48] sm:$0xf] %vm1870, %v1900
    %1942 = vst.msk [vmem:[#allocation5 + $0x54] sm:$0xf] %vm1870, %v1902
    %1943 = vst.msk [vmem:[#allocation5 + $0x60] sm:$0xf] %vm1870, %v1904
    %1944 = vst.msk [vmem:[#allocation5 + $0x6c] sm:$0xf] %vm1870, %v1906
    %1945 = vst.msk [vmem:[#allocation5 + $0x78] sm:$0xf] %vm1870, %v1908
    %1946 = vst.msk [vmem:[#allocation5 + $0x84] sm:$0xf] %vm1870, %v1910
    %1947 = vst.msk [vmem:[#allocation5 + $0x90] sm:$0xf] %vm1870, %v1912
    %1948 = vst.msk [vmem:[#allocation5 + $0x9c] sm:$0xf] %vm1870, %v1914
    %1949 = vst.msk [vmem:[#allocation5 + $0xa8] sm:$0xf] %vm1870, %v1916
    %1950 = vst.msk [vmem:[#allocation5 + $0xb4] sm:$0xf] %vm1870, %v1918
    %v1951 = vld [vmem:[%s688] sm:$0xf]
    %v1952 = vld [vmem:[%s688 + $0x8] sm:$0xf]
    %v1953 = vld [vmem:[%s688 + $0x10] sm:$0xf]
    %v1954 = vld [vmem:[%s688 + $0x18] sm:$0xf]
    %v1955 = vld [vmem:[%s688 + $0x20] sm:$0xf]
    %v1956 = vld [vmem:[%s688 + $0x28] sm:$0xf]
    %v1957 = vld [vmem:[%s688 + $0x30] sm:$0xf]
    %v1958 = vld [vmem:[%s688 + $0x38] sm:$0xf]
    %v1959 = vld [vmem:[%s688 + $0x50] sm:$0xf]
    %v1960 = vld [vmem:[%s688 + $0x58] sm:$0xf]
    %v1961 = vld [vmem:[%s688 + $0x60] sm:$0xf]
    %v1962 = vld [vmem:[%s688 + $0x68] sm:$0xf]
    %v1963 = vld [vmem:[%s688 + $0x70] sm:$0xf]
    %v1964 = vld [vmem:[%s688 + $0x78] sm:$0xf]
    %v1965 = vld [vmem:[%s688 + $0x80] sm:$0xf]
    %v1966 = vld [vmem:[%s688 + $0x88] sm:$0xf]
    %1983 = vrot.lane.b32.xlu0 %v1951, 96
    %v1984 = vpop.permute.xlu0 %1983
    %1985 = vrot.lane.b32.xlu0 %v1952, 96
    %v1986 = vpop.permute.xlu0 %1985
    %1987 = vrot.lane.b32.xlu0 %v1953, 96
    %v1988 = vpop.permute.xlu0 %1987
    %1989 = vrot.lane.b32.xlu0 %v1954, 96
    %v1990 = vpop.permute.xlu0 %1989
    %1991 = vrot.lane.b32.xlu0 %v1955, 96
    %v1992 = vpop.permute.xlu0 %1991
    %1993 = vrot.lane.b32.xlu0 %v1956, 96
    %v1994 = vpop.permute.xlu0 %1993
    %1995 = vrot.lane.b32.xlu0 %v1957, 96
    %v1996 = vpop.permute.xlu0 %1995
    %1997 = vrot.lane.b32.xlu0 %v1958, 96
    %v1998 = vpop.permute.xlu0 %1997
    %1999 = vrot.lane.b32.xlu0 %v1959, 96
    %v2000 = vpop.permute.xlu0 %1999
    %2001 = vrot.lane.b32.xlu0 %v1960, 96
    %v2002 = vpop.permute.xlu0 %2001
    %2003 = vrot.lane.b32.xlu0 %v1961, 96
    %v2004 = vpop.permute.xlu0 %2003
    %2005 = vrot.lane.b32.xlu0 %v1962, 96
    %v2006 = vpop.permute.xlu0 %2005
    %2007 = vrot.lane.b32.xlu0 %v1963, 96
    %v2008 = vpop.permute.xlu0 %2007
    %2009 = vrot.lane.b32.xlu0 %v1964, 96
    %v2010 = vpop.permute.xlu0 %2009
    %2011 = vrot.lane.b32.xlu0 %v1965, 96
    %v2012 = vpop.permute.xlu0 %2011
    %2013 = vrot.lane.b32.xlu0 %v1966, 96
    %v2014 = vpop.permute.xlu0 %2013
    %vm2031 = vcmask 1044224
    %2032 = vst.msk [vmem:[#allocation4] sm:$0xf] %vm2031, %v1984
    %2033 = vst.msk [vmem:[#allocation4 + $0xc] sm:$0xf] %vm2031, %v1986
    %2034 = vst.msk [vmem:[#allocation4 + $0x18] sm:$0xf] %vm2031, %v1988
    %2035 = vst.msk [vmem:[#allocation4 + $0x24] sm:$0xf] %vm2031, %v1990
    %2036 = vst.msk [vmem:[#allocation4 + $0x30] sm:$0xf] %vm2031, %v1992
    %2037 = vst.msk [vmem:[#allocation4 + $0x3c] sm:$0xf] %vm2031, %v1994
    %2038 = vst.msk [vmem:[#allocation4 + $0x48] sm:$0xf] %vm2031, %v1996
    %2039 = vst.msk [vmem:[#allocation4 + $0x54] sm:$0xf] %vm2031, %v1998
    %2040 = vst.msk [vmem:[#allocation4 + $0x60] sm:$0xf] %vm2031, %v2000
    %2041 = vst.msk [vmem:[#allocation4 + $0x6c] sm:$0xf] %vm2031, %v2002
    %2042 = vst.msk [vmem:[#allocation4 + $0x78] sm:$0xf] %vm2031, %v2004
    %2043 = vst.msk [vmem:[#allocation4 + $0x84] sm:$0xf] %vm2031, %v2006
    %2044 = vst.msk [vmem:[#allocation4 + $0x90] sm:$0xf] %vm2031, %v2008
    %2045 = vst.msk [vmem:[#allocation4 + $0x9c] sm:$0xf] %vm2031, %v2010
    %2046 = vst.msk [vmem:[#allocation4 + $0xa8] sm:$0xf] %vm2031, %v2012
    %2047 = vst.msk [vmem:[#allocation4 + $0xb4] sm:$0xf] %vm2031, %v2014
    %2048 = vrot.lane.b32.xlu0 %v1951, 64
    %v2049 = vpop.permute.xlu0 %2048
    %2050 = vrot.lane.b32.xlu0 %v1952, 64
    %v2051 = vpop.permute.xlu0 %2050
    %2052 = vrot.lane.b32.xlu0 %v1953, 64
    %v2053 = vpop.permute.xlu0 %2052
    %2054 = vrot.lane.b32.xlu0 %v1954, 64
    %v2055 = vpop.permute.xlu0 %2054
    %2056 = vrot.lane.b32.xlu0 %v1955, 64
    %v2057 = vpop.permute.xlu0 %2056
    %2058 = vrot.lane.b32.xlu0 %v1956, 64
    %v2059 = vpop.permute.xlu0 %2058
    %2060 = vrot.lane.b32.xlu0 %v1957, 64
    %v2061 = vpop.permute.xlu0 %2060
    %2062 = vrot.lane.b32.xlu0 %v1958, 64
    %v2063 = vpop.permute.xlu0 %2062
    %2064 = vrot.lane.b32.xlu0 %v1959, 64
    %v2065 = vpop.permute.xlu0 %2064
    %2066 = vrot.lane.b32.xlu0 %v1960, 64
    %v2067 = vpop.permute.xlu0 %2066
    %2068 = vrot.lane.b32.xlu0 %v1961, 64
    %v2069 = vpop.permute.xlu0 %2068
    %2070 = vrot.lane.b32.xlu0 %v1962, 64
    %v2071 = vpop.permute.xlu0 %2070
    %2072 = vrot.lane.b32.xlu0 %v1963, 64
    %v2073 = vpop.permute.xlu0 %2072
    %2074 = vrot.lane.b32.xlu0 %v1964, 64
    %v2075 = vpop.permute.xlu0 %2074
    %2076 = vrot.lane.b32.xlu0 %v1965, 64
    %v2077 = vpop.permute.xlu0 %2076
    %2078 = vrot.lane.b32.xlu0 %v1966, 64
    %v2079 = vpop.permute.xlu0 %2078
    %2096 = vst.msk [vmem:[#allocation5] sm:$0xf] %vm2031, %v2049
    %2097 = vst.msk [vmem:[#allocation5 + $0xc] sm:$0xf] %vm2031, %v2051
    %2098 = vst.msk [vmem:[#allocation5 + $0x18] sm:$0xf] %vm2031, %v2053
    %2099 = vst.msk [vmem:[#allocation5 + $0x24] sm:$0xf] %vm2031, %v2055
    %2100 = vst.msk [vmem:[#allocation5 + $0x30] sm:$0xf] %vm2031, %v2057
    %2101 = vst.msk [vmem:[#allocation5 + $0x3c] sm:$0xf] %vm2031, %v2059
    %2102 = vst.msk [vmem:[#allocation5 + $0x48] sm:$0xf] %vm2031, %v2061
    %2103 = vst.msk [vmem:[#allocation5 + $0x54] sm:$0xf] %vm2031, %v2063
    %2104 = vst.msk [vmem:[#allocation5 + $0x60] sm:$0xf] %vm2031, %v2065
    %2105 = vst.msk [vmem:[#allocation5 + $0x6c] sm:$0xf] %vm2031, %v2067
    %2106 = vst.msk [vmem:[#allocation5 + $0x78] sm:$0xf] %vm2031, %v2069
    %2107 = vst.msk [vmem:[#allocation5 + $0x84] sm:$0xf] %vm2031, %v2071
    %2108 = vst.msk [vmem:[#allocation5 + $0x90] sm:$0xf] %vm2031, %v2073
    %2109 = vst.msk [vmem:[#allocation5 + $0x9c] sm:$0xf] %vm2031, %v2075
    %2110 = vst.msk [vmem:[#allocation5 + $0xa8] sm:$0xf] %vm2031, %v2077
    %2111 = vst.msk [vmem:[#allocation5 + $0xb4] sm:$0xf] %vm2031, %v2079
    %v2112 = vld [vmem:[%s688] sm:$0xf]
    %v2113 = vld [vmem:[%s688 + $0x4] sm:$0x1]
    %v2114 = vld [vmem:[%s688 + $0x8] sm:$0xf]
    %v2115 = vld [vmem:[%s688 + $0xc] sm:$0x1]
    %v2116 = vld [vmem:[%s688 + $0x10] sm:$0xf]
    %v2117 = vld [vmem:[%s688 + $0x14] sm:$0x1]
    %v2118 = vld [vmem:[%s688 + $0x18] sm:$0xf]
    %v2119 = vld [vmem:[%s688 + $0x1c] sm:$0x1]
    %v2120 = vld [vmem:[%s688 + $0x20] sm:$0xf]
    %v2121 = vld [vmem:[%s688 + $0x24] sm:$0x1]
    %v2122 = vld [vmem:[%s688 + $0x28] sm:$0xf]
    %v2123 = vld [vmem:[%s688 + $0x2c] sm:$0x1]
    %v2124 = vld [vmem:[%s688 + $0x30] sm:$0xf]
    %v2125 = vld [vmem:[%s688 + $0x34] sm:$0x1]
    %v2126 = vld [vmem:[%s688 + $0x38] sm:$0xf]
    %v2127 = vld [vmem:[%s688 + $0x3c] sm:$0x1]
    %v2128 = vld [vmem:[%s688 + $0x50] sm:$0xf]
    %v2129 = vld [vmem:[%s688 + $0x54] sm:$0x1]
    %v2130 = vld [vmem:[%s688 + $0x58] sm:$0xf]
    %v2131 = vld [vmem:[%s688 + $0x5c] sm:$0x1]
    %v2132 = vld [vmem:[%s688 + $0x60] sm:$0xf]
    %v2133 = vld [vmem:[%s688 + $0x64] sm:$0x1]
    %v2134 = vld [vmem:[%s688 + $0x68] sm:$0xf]
    %v2135 = vld [vmem:[%s688 + $0x6c] sm:$0x1]
    %v2136 = vld [vmem:[%s688 + $0x70] sm:$0xf]
    %v2137 = vld [vmem:[%s688 + $0x74] sm:$0x1]
    %v2138 = vld [vmem:[%s688 + $0x78] sm:$0xf]
    %v2139 = vld [vmem:[%s688 + $0x7c] sm:$0x1]
    %v2140 = vld [vmem:[%s688 + $0x80] sm:$0xf]
    %v2141 = vld [vmem:[%s688 + $0x84] sm:$0x1]
    %v2142 = vld [vmem:[%s688 + $0x88] sm:$0xf]
    %v2143 = vld [vmem:[%s688 + $0x8c] sm:$0x1]
    %v2145 = vshrl.u32 %v2112, 16
    %v2147 = vrot.slane %v2145, 4
    %v2148 = vshll.u32 %v2112, 16
    %v2150 = vrot.slane %v2148, 5
    %v2151 = vor.u32 %v2147, %v2150
    %v2152 = vrot.slane %v2151, 4
    %v2154 = vshll.u32 %v2113, 16
    %v2156 = vrot.slane %v2154, 5
    %v2157 = vsel %vm1369, %v2152, %v2156
    %v2159 = vshrl.u32 %v2114, 16
    %v2161 = vrot.slane %v2159, 4
    %v2162 = vshll.u32 %v2114, 16
    %v2164 = vrot.slane %v2162, 5
    %v2165 = vor.u32 %v2161, %v2164
    %v2166 = vrot.slane %v2165, 4
    %v2168 = vshll.u32 %v2115, 16
    %v2170 = vrot.slane %v2168, 5
    %v2171 = vsel %vm1369, %v2166, %v2170
    %v2173 = vshrl.u32 %v2116, 16
    %v2175 = vrot.slane %v2173, 4
    %v2176 = vshll.u32 %v2116, 16
    %v2178 = vrot.slane %v2176, 5
    %v2179 = vor.u32 %v2175, %v2178
    %v2180 = vrot.slane %v2179, 4
    %v2182 = vshll.u32 %v2117, 16
    %v2184 = vrot.slane %v2182, 5
    %v2185 = vsel %vm1369, %v2180, %v2184
    %v2187 = vshrl.u32 %v2118, 16
    %v2189 = vrot.slane %v2187, 4
    %v2190 = vshll.u32 %v2118, 16
    %v2192 = vrot.slane %v2190, 5
    %v2193 = vor.u32 %v2189, %v2192
    %v2194 = vrot.slane %v2193, 4
    %v2196 = vshll.u32 %v2119, 16
    %v2198 = vrot.slane %v2196, 5
    %v2199 = vsel %vm1369, %v2194, %v2198
    %v2201 = vshrl.u32 %v2120, 16
    %v2203 = vrot.slane %v2201, 4
    %v2204 = vshll.u32 %v2120, 16
    %v2206 = vrot.slane %v2204, 5
    %v2207 = vor.u32 %v2203, %v2206
    %v2208 = vrot.slane %v2207, 4
    %v2210 = vshll.u32 %v2121, 16
    %v2212 = vrot.slane %v2210, 5
    %v2213 = vsel %vm1369, %v2208, %v2212
    %v2215 = vshrl.u32 %v2122, 16
    %v2217 = vrot.slane %v2215, 4
    %v2218 = vshll.u32 %v2122, 16
    %v2220 = vrot.slane %v2218, 5
    %v2221 = vor.u32 %v2217, %v2220
    %v2222 = vrot.slane %v2221, 4
    %v2224 = vshll.u32 %v2123, 16
    %v2226 = vrot.slane %v2224, 5
    %v2227 = vsel %vm1369, %v2222, %v2226
    %v2229 = vshrl.u32 %v2124, 16
    %v2231 = vrot.slane %v2229, 4
    %v2232 = vshll.u32 %v2124, 16
    %v2234 = vrot.slane %v2232, 5
    %v2235 = vor.u32 %v2231, %v2234
    %v2236 = vrot.slane %v2235, 4
    %v2238 = vshll.u32 %v2125, 16
    %v2240 = vrot.slane %v2238, 5
    %v2241 = vsel %vm1369, %v2236, %v2240
    %v2243 = vshrl.u32 %v2126, 16
    %v2245 = vrot.slane %v2243, 4
    %v2246 = vshll.u32 %v2126, 16
    %v2248 = vrot.slane %v2246, 5
    %v2249 = vor.u32 %v2245, %v2248
    %v2250 = vrot.slane %v2249, 4
    %v2252 = vshll.u32 %v2127, 16
    %v2254 = vrot.slane %v2252, 5
    %v2255 = vsel %vm1369, %v2250, %v2254
    %v2257 = vshrl.u32 %v2128, 16
    %v2259 = vrot.slane %v2257, 4
    %v2260 = vshll.u32 %v2128, 16
    %v2262 = vrot.slane %v2260, 5
    %v2263 = vor.u32 %v2259, %v2262
    %v2264 = vrot.slane %v2263, 4
    %v2266 = vshll.u32 %v2129, 16
    %v2268 = vrot.slane %v2266, 5
    %v2269 = vsel %vm1369, %v2264, %v2268
    %v2271 = vshrl.u32 %v2130, 16
    %v2273 = vrot.slane %v2271, 4
    %v2274 = vshll.u32 %v2130, 16
    %v2276 = vrot.slane %v2274, 5
    %v2277 = vor.u32 %v2273, %v2276
    %v2278 = vrot.slane %v2277, 4
    %v2280 = vshll.u32 %v2131, 16
    %v2282 = vrot.slane %v2280, 5
    %v2283 = vsel %vm1369, %v2278, %v2282
    %v2285 = vshrl.u32 %v2132, 16
    %v2287 = vrot.slane %v2285, 4
    %v2288 = vshll.u32 %v2132, 16
    %v2290 = vrot.slane %v2288, 5
    %v2291 = vor.u32 %v2287, %v2290
    %v2292 = vrot.slane %v2291, 4
    %v2294 = vshll.u32 %v2133, 16
    %v2296 = vrot.slane %v2294, 5
    %v2297 = vsel %vm1369, %v2292, %v2296
    %v2299 = vshrl.u32 %v2134, 16
    %v2301 = vrot.slane %v2299, 4
    %v2302 = vshll.u32 %v2134, 16
    %v2304 = vrot.slane %v2302, 5
    %v2305 = vor.u32 %v2301, %v2304
    %v2306 = vrot.slane %v2305, 4
    %v2308 = vshll.u32 %v2135, 16
    %v2310 = vrot.slane %v2308, 5
    %v2311 = vsel %vm1369, %v2306, %v2310
    %v2313 = vshrl.u32 %v2136, 16
    %v2315 = vrot.slane %v2313, 4
    %v2316 = vshll.u32 %v2136, 16
    %v2318 = vrot.slane %v2316, 5
    %v2319 = vor.u32 %v2315, %v2318
    %v2320 = vrot.slane %v2319, 4
    %v2322 = vshll.u32 %v2137, 16
    %v2324 = vrot.slane %v2322, 5
    %v2325 = vsel %vm1369, %v2320, %v2324
    %v2327 = vshrl.u32 %v2138, 16
    %v2329 = vrot.slane %v2327, 4
    %v2330 = vshll.u32 %v2138, 16
    %v2332 = vrot.slane %v2330, 5
    %v2333 = vor.u32 %v2329, %v2332
    %v2334 = vrot.slane %v2333, 4
    %v2336 = vshll.u32 %v2139, 16
    %v2338 = vrot.slane %v2336, 5
    %v2339 = vsel %vm1369, %v2334, %v2338
    %v2341 = vshrl.u32 %v2140, 16
    %v2343 = vrot.slane %v2341, 4
    %v2344 = vshll.u32 %v2140, 16
    %v2346 = vrot.slane %v2344, 5
    %v2347 = vor.u32 %v2343, %v2346
    %v2348 = vrot.slane %v2347, 4
    %v2350 = vshll.u32 %v2141, 16
    %v2352 = vrot.slane %v2350, 5
    %v2353 = vsel %vm1369, %v2348, %v2352
    %v2355 = vshrl.u32 %v2142, 16
    %v2357 = vrot.slane %v2355, 4
    %v2358 = vshll.u32 %v2142, 16
    %v2360 = vrot.slane %v2358, 5
    %v2361 = vor.u32 %v2357, %v2360
    %v2362 = vrot.slane %v2361, 4
    %v2364 = vshll.u32 %v2143, 16
    %v2366 = vrot.slane %v2364, 5
    %v2367 = vsel %vm1369, %v2362, %v2366
    %2384 = vst.msk [vmem:[#allocation4 + $0x4] sm:$0xf] %vm660, %v2157
    %2385 = vst.msk [vmem:[#allocation4 + $0x10] sm:$0xf] %vm660, %v2171
    %2386 = vst.msk [vmem:[#allocation4 + $0x1c] sm:$0xf] %vm660, %v2185
    %2387 = vst.msk [vmem:[#allocation4 + $0x28] sm:$0xf] %vm660, %v2199
    %2388 = vst.msk [vmem:[#allocation4 + $0x34] sm:$0xf] %vm660, %v2213
    %2389 = vst.msk [vmem:[#allocation4 + $0x40] sm:$0xf] %vm660, %v2227
    %2390 = vst.msk [vmem:[#allocation4 + $0x4c] sm:$0xf] %vm660, %v2241
    %2391 = vst.msk [vmem:[#allocation4 + $0x58] sm:$0xf] %vm660, %v2255
    %2392 = vst.msk [vmem:[#allocation4 + $0x64] sm:$0xf] %vm660, %v2269
    %2393 = vst.msk [vmem:[#allocation4 + $0x70] sm:$0xf] %vm660, %v2283
    %2394 = vst.msk [vmem:[#allocation4 + $0x7c] sm:$0xf] %vm660, %v2297
    %2395 = vst.msk [vmem:[#allocation4 + $0x88] sm:$0xf] %vm660, %v2311
    %2396 = vst.msk [vmem:[#allocation4 + $0x94] sm:$0xf] %vm660, %v2325
    %2397 = vst.msk [vmem:[#allocation4 + $0xa0] sm:$0xf] %vm660, %v2339
    %2398 = vst.msk [vmem:[#allocation4 + $0xac] sm:$0xf] %vm660, %v2353
    %2399 = vst.msk [vmem:[#allocation4 + $0xb8] sm:$0xf] %vm660, %v2367
    %2400 = vrot.lane.b32.xlu0 %v2157, 96
    %v2401 = vpop.permute.xlu0 %2400
    %2402 = vrot.lane.b32.xlu0 %v2171, 96
    %v2403 = vpop.permute.xlu0 %2402
    %2404 = vrot.lane.b32.xlu0 %v2185, 96
    %v2405 = vpop.permute.xlu0 %2404
    %2406 = vrot.lane.b32.xlu0 %v2199, 96
    %v2407 = vpop.permute.xlu0 %2406
    %2408 = vrot.lane.b32.xlu0 %v2213, 96
    %v2409 = vpop.permute.xlu0 %2408
    %2410 = vrot.lane.b32.xlu0 %v2227, 96
    %v2411 = vpop.permute.xlu0 %2410
    %2412 = vrot.lane.b32.xlu0 %v2241, 96
    %v2413 = vpop.permute.xlu0 %2412
    %2414 = vrot.lane.b32.xlu0 %v2255, 96
    %v2415 = vpop.permute.xlu0 %2414
    %2416 = vrot.lane.b32.xlu0 %v2269, 96
    %v2417 = vpop.permute.xlu0 %2416
    %2418 = vrot.lane.b32.xlu0 %v2283, 96
    %v2419 = vpop.permute.xlu0 %2418
    %2420 = vrot.lane.b32.xlu0 %v2297, 96
    %v2421 = vpop.permute.xlu0 %2420
    %2422 = vrot.lane.b32.xlu0 %v2311, 96
    %v2423 = vpop.permute.xlu0 %2422
    %2424 = vrot.lane.b32.xlu0 %v2325, 96
    %v2425 = vpop.permute.xlu0 %2424
    %2426 = vrot.lane.b32.xlu0 %v2339, 96
    %v2427 = vpop.permute.xlu0 %2426
    %2428 = vrot.lane.b32.xlu0 %v2353, 96
    %v2429 = vpop.permute.xlu0 %2428
    %2430 = vrot.lane.b32.xlu0 %v2367, 96
    %v2431 = vpop.permute.xlu0 %2430
    %2448 = vst.msk [vmem:[#allocation5 + $0x4] sm:$0xf] %vm660, %v2401
    %2449 = vst.msk [vmem:[#allocation5 + $0x10] sm:$0xf] %vm660, %v2403
    %2450 = vst.msk [vmem:[#allocation5 + $0x1c] sm:$0xf] %vm660, %v2405
    %2451 = vst.msk [vmem:[#allocation5 + $0x28] sm:$0xf] %vm660, %v2407
    %2452 = vst.msk [vmem:[#allocation5 + $0x34] sm:$0xf] %vm660, %v2409
    %2453 = vst.msk [vmem:[#allocation5 + $0x40] sm:$0xf] %vm660, %v2411
    %2454 = vst.msk [vmem:[#allocation5 + $0x4c] sm:$0xf] %vm660, %v2413
    %2455 = vst.msk [vmem:[#allocation5 + $0x58] sm:$0xf] %vm660, %v2415
    %2456 = vst.msk [vmem:[#allocation5 + $0x64] sm:$0xf] %vm660, %v2417
    %2457 = vst.msk [vmem:[#allocation5 + $0x70] sm:$0xf] %vm660, %v2419
    %2458 = vst.msk [vmem:[#allocation5 + $0x7c] sm:$0xf] %vm660, %v2421
    %2459 = vst.msk [vmem:[#allocation5 + $0x88] sm:$0xf] %vm660, %v2423
    %2460 = vst.msk [vmem:[#allocation5 + $0x94] sm:$0xf] %vm660, %v2425
    %2461 = vst.msk [vmem:[#allocation5 + $0xa0] sm:$0xf] %vm660, %v2427
    %2462 = vst.msk [vmem:[#allocation5 + $0xac] sm:$0xf] %vm660, %v2429
    %2463 = vst.msk [vmem:[#allocation5 + $0xb8] sm:$0xf] %vm660, %v2431
    %v2464 = vld [vmem:[%s688] sm:$0xe]
    %v2465 = vld [vmem:[%s688 + $0x4] sm:$0x1]
    %v2466 = vld [vmem:[%s688 + $0x8] sm:$0xe]
    %v2467 = vld [vmem:[%s688 + $0xc] sm:$0x1]
    %v2468 = vld [vmem:[%s688 + $0x10] sm:$0xe]
    %v2469 = vld [vmem:[%s688 + $0x14] sm:$0x1]
    %v2470 = vld [vmem:[%s688 + $0x18] sm:$0xe]
    %v2471 = vld [vmem:[%s688 + $0x1c] sm:$0x1]
    %v2472 = vld [vmem:[%s688 + $0x20] sm:$0xe]
    %v2473 = vld [vmem:[%s688 + $0x24] sm:$0x1]
    %v2474 = vld [vmem:[%s688 + $0x28] sm:$0xe]
    %v2475 = vld [vmem:[%s688 + $0x2c] sm:$0x1]
    %v2476 = vld [vmem:[%s688 + $0x30] sm:$0xe]
    %v2477 = vld [vmem:[%s688 + $0x34] sm:$0x1]
    %v2478 = vld [vmem:[%s688 + $0x38] sm:$0xe]
    %v2479 = vld [vmem:[%s688 + $0x3c] sm:$0x1]
    %v2480 = vld [vmem:[%s688 + $0x50] sm:$0xe]
    %v2481 = vld [vmem:[%s688 + $0x54] sm:$0x1]
    %v2482 = vld [vmem:[%s688 + $0x58] sm:$0xe]
    %v2483 = vld [vmem:[%s688 + $0x5c] sm:$0x1]
    %v2484 = vld [vmem:[%s688 + $0x60] sm:$0xe]
    %v2485 = vld [vmem:[%s688 + $0x64] sm:$0x1]
    %v2486 = vld [vmem:[%s688 + $0x68] sm:$0xe]
    %v2487 = vld [vmem:[%s688 + $0x6c] sm:$0x1]
    %v2488 = vld [vmem:[%s688 + $0x70] sm:$0xe]
    %v2489 = vld [vmem:[%s688 + $0x74] sm:$0x1]
    %v2490 = vld [vmem:[%s688 + $0x78] sm:$0xe]
    %v2491 = vld [vmem:[%s688 + $0x7c] sm:$0x1]
    %v2492 = vld [vmem:[%s688 + $0x80] sm:$0xe]
    %v2493 = vld [vmem:[%s688 + $0x84] sm:$0x1]
    %v2494 = vld [vmem:[%s688 + $0x88] sm:$0xe]
    %v2495 = vld [vmem:[%s688 + $0x8c] sm:$0x1]
    %v2528 = vrot.slane %v2464, 5
    %v2529 = vrot.slane %v2528, 4
    %v2530 = vrot.slane %v2465, 5
    %v2531 = vsel %vm1757, %v2529, %v2530
    %v2532 = vrot.slane %v2466, 5
    %v2533 = vrot.slane %v2532, 4
    %v2534 = vrot.slane %v2467, 5
    %v2535 = vsel %vm1757, %v2533, %v2534
    %v2536 = vrot.slane %v2468, 5
    %v2537 = vrot.slane %v2536, 4
    %v2538 = vrot.slane %v2469, 5
    %v2539 = vsel %vm1757, %v2537, %v2538
    %v2540 = vrot.slane %v2470, 5
    %v2541 = vrot.slane %v2540, 4
    %v2542 = vrot.slane %v2471, 5
    %v2543 = vsel %vm1757, %v2541, %v2542
    %v2544 = vrot.slane %v2472, 5
    %v2545 = vrot.slane %v2544, 4
    %v2546 = vrot.slane %v2473, 5
    %v2547 = vsel %vm1757, %v2545, %v2546
    %v2548 = vrot.slane %v2474, 5
    %v2549 = vrot.slane %v2548, 4
    %v2550 = vrot.slane %v2475, 5
    %v2551 = vsel %vm1757, %v2549, %v2550
    %v2552 = vrot.slane %v2476, 5
    %v2553 = vrot.slane %v2552, 4
    %v2554 = vrot.slane %v2477, 5
    %v2555 = vsel %vm1757, %v2553, %v2554
    %v2556 = vrot.slane %v2478, 5
    %v2557 = vrot.slane %v2556, 4
    %v2558 = vrot.slane %v2479, 5
    %v2559 = vsel %vm1757, %v2557, %v2558
    %v2560 = vrot.slane %v2480, 5
    %v2561 = vrot.slane %v2560, 4
    %v2562 = vrot.slane %v2481, 5
    %v2563 = vsel %vm1757, %v2561, %v2562
    %v2564 = vrot.slane %v2482, 5
    %v2565 = vrot.slane %v2564, 4
    %v2566 = vrot.slane %v2483, 5
    %v2567 = vsel %vm1757, %v2565, %v2566
    %v2568 = vrot.slane %v2484, 5
    %v2569 = vrot.slane %v2568, 4
    %v2570 = vrot.slane %v2485, 5
    %v2571 = vsel %vm1757, %v2569, %v2570
    %v2572 = vrot.slane %v2486, 5
    %v2573 = vrot.slane %v2572, 4
    %v2574 = vrot.slane %v2487, 5
    %v2575 = vsel %vm1757, %v2573, %v2574
    %v2576 = vrot.slane %v2488, 5
    %v2577 = vrot.slane %v2576, 4
    %v2578 = vrot.slane %v2489, 5
    %v2579 = vsel %vm1757, %v2577, %v2578
    %v2580 = vrot.slane %v2490, 5
    %v2581 = vrot.slane %v2580, 4
    %v2582 = vrot.slane %v2491, 5
    %v2583 = vsel %vm1757, %v2581, %v2582
    %v2584 = vrot.slane %v2492, 5
    %v2585 = vrot.slane %v2584, 4
    %v2586 = vrot.slane %v2493, 5
    %v2587 = vsel %vm1757, %v2585, %v2586
    %v2588 = vrot.slane %v2494, 5
    %v2589 = vrot.slane %v2588, 4
    %v2590 = vrot.slane %v2495, 5
    %v2591 = vsel %vm1757, %v2589, %v2590
    %2608 = vrot.lane.b32.xlu0 %v2531, 32
    %v2609 = vpop.permute.xlu0 %2608
    %2610 = vrot.lane.b32.xlu0 %v2535, 32
    %v2611 = vpop.permute.xlu0 %2610
    %2612 = vrot.lane.b32.xlu0 %v2539, 32
    %v2613 = vpop.permute.xlu0 %2612
    %2614 = vrot.lane.b32.xlu0 %v2543, 32
    %v2615 = vpop.permute.xlu0 %2614
    %2616 = vrot.lane.b32.xlu0 %v2547, 32
    %v2617 = vpop.permute.xlu0 %2616
    %2618 = vrot.lane.b32.xlu0 %v2551, 32
    %v2619 = vpop.permute.xlu0 %2618
    %2620 = vrot.lane.b32.xlu0 %v2555, 32
    %v2621 = vpop.permute.xlu0 %2620
    %2622 = vrot.lane.b32.xlu0 %v2559, 32
    %v2623 = vpop.permute.xlu0 %2622
    %2624 = vrot.lane.b32.xlu0 %v2563, 32
    %v2625 = vpop.permute.xlu0 %2624
    %2626 = vrot.lane.b32.xlu0 %v2567, 32
    %v2627 = vpop.permute.xlu0 %2626
    %2628 = vrot.lane.b32.xlu0 %v2571, 32
    %v2629 = vpop.permute.xlu0 %2628
    %2630 = vrot.lane.b32.xlu0 %v2575, 32
    %v2631 = vpop.permute.xlu0 %2630
    %2632 = vrot.lane.b32.xlu0 %v2579, 32
    %v2633 = vpop.permute.xlu0 %2632
    %2634 = vrot.lane.b32.xlu0 %v2583, 32
    %v2635 = vpop.permute.xlu0 %2634
    %2636 = vrot.lane.b32.xlu0 %v2587, 32
    %v2637 = vpop.permute.xlu0 %2636
    %2638 = vrot.lane.b32.xlu0 %v2591, 32
    %v2639 = vpop.permute.xlu0 %2638
    %2656 = vst.msk [vmem:[#allocation4 + $0x4] sm:$0xf] %vm1658, %v2609
    %2657 = vst.msk [vmem:[#allocation4 + $0x10] sm:$0xf] %vm1658, %v2611
    %2658 = vst.msk [vmem:[#allocation4 + $0x1c] sm:$0xf] %vm1658, %v2613
    %2659 = vst.msk [vmem:[#allocation4 + $0x28] sm:$0xf] %vm1658, %v2615
    %2660 = vst.msk [vmem:[#allocation4 + $0x34] sm:$0xf] %vm1658, %v2617
    %2661 = vst.msk [vmem:[#allocation4 + $0x40] sm:$0xf] %vm1658, %v2619
    %2662 = vst.msk [vmem:[#allocation4 + $0x4c] sm:$0xf] %vm1658, %v2621
    %2663 = vst.msk [vmem:[#allocation4 + $0x58] sm:$0xf] %vm1658, %v2623
    %2664 = vst.msk [vmem:[#allocation4 + $0x64] sm:$0xf] %vm1658, %v2625
    %2665 = vst.msk [vmem:[#allocation4 + $0x70] sm:$0xf] %vm1658, %v2627
    %2666 = vst.msk [vmem:[#allocation4 + $0x7c] sm:$0xf] %vm1658, %v2629
    %2667 = vst.msk [vmem:[#allocation4 + $0x88] sm:$0xf] %vm1658, %v2631
    %2668 = vst.msk [vmem:[#allocation4 + $0x94] sm:$0xf] %vm1658, %v2633
    %2669 = vst.msk [vmem:[#allocation4 + $0xa0] sm:$0xf] %vm1658, %v2635
    %2670 = vst.msk [vmem:[#allocation4 + $0xac] sm:$0xf] %vm1658, %v2637
    %2671 = vst.msk [vmem:[#allocation4 + $0xb8] sm:$0xf] %vm1658, %v2639
    %2672 = vst.msk [vmem:[#allocation5 + $0x4] sm:$0xf] %vm1658, %v2531
    %2673 = vst.msk [vmem:[#allocation5 + $0x10] sm:$0xf] %vm1658, %v2535
    %2674 = vst.msk [vmem:[#allocation5 + $0x1c] sm:$0xf] %vm1658, %v2539
    %2675 = vst.msk [vmem:[#allocation5 + $0x28] sm:$0xf] %vm1658, %v2543
    %2676 = vst.msk [vmem:[#allocation5 + $0x34] sm:$0xf] %vm1658, %v2547
    %2677 = vst.msk [vmem:[#allocation5 + $0x40] sm:$0xf] %vm1658, %v2551
    %2678 = vst.msk [vmem:[#allocation5 + $0x4c] sm:$0xf] %vm1658, %v2555
    %2679 = vst.msk [vmem:[#allocation5 + $0x58] sm:$0xf] %vm1658, %v2559
    %2680 = vst.msk [vmem:[#allocation5 + $0x64] sm:$0xf] %vm1658, %v2563
    %2681 = vst.msk [vmem:[#allocation5 + $0x70] sm:$0xf] %vm1658, %v2567
    %2682 = vst.msk [vmem:[#allocation5 + $0x7c] sm:$0xf] %vm1658, %v2571
    %2683 = vst.msk [vmem:[#allocation5 + $0x88] sm:$0xf] %vm1658, %v2575
    %2684 = vst.msk [vmem:[#allocation5 + $0x94] sm:$0xf] %vm1658, %v2579
    %2685 = vst.msk [vmem:[#allocation5 + $0xa0] sm:$0xf] %vm1658, %v2583
    %2686 = vst.msk [vmem:[#allocation5 + $0xac] sm:$0xf] %vm1658, %v2587
    %2687 = vst.msk [vmem:[#allocation5 + $0xb8] sm:$0xf] %vm1658, %v2591
    %s2688 = scalar_lea.vmem [#allocation2], 16
    %v2689 = vld [vmem:[%s2688] sm:$0xf]
    %v2690 = vld [vmem:[%s2688 + $0x8] sm:$0xf]
    %v2691 = vld [vmem:[%s2688 + $0x10] sm:$0xf]
    %v2692 = vld [vmem:[%s2688 + $0x18] sm:$0xf]
    %v2693 = vld [vmem:[%s2688 + $0x20] sm:$0xf]
    %v2694 = vld [vmem:[%s2688 + $0x28] sm:$0xf]
    %v2695 = vld [vmem:[%s2688 + $0x30] sm:$0xf]
    %v2696 = vld [vmem:[%s2688 + $0x38] sm:$0xf]
    %v2697 = vld [vmem:[%s2688 + $0x50] sm:$0xf]
    %v2698 = vld [vmem:[%s2688 + $0x58] sm:$0xf]
    %v2699 = vld [vmem:[%s2688 + $0x60] sm:$0xf]
    %v2700 = vld [vmem:[%s2688 + $0x68] sm:$0xf]
    %v2701 = vld [vmem:[%s2688 + $0x70] sm:$0xf]
    %v2702 = vld [vmem:[%s2688 + $0x78] sm:$0xf]
    %v2703 = vld [vmem:[%s2688 + $0x80] sm:$0xf]
    %v2704 = vld [vmem:[%s2688 + $0x88] sm:$0xf]
    %2721 = vrot.lane.b32.xlu0 %v2689, 64
    %v2722 = vpop.permute.xlu0 %2721
    %2723 = vrot.lane.b32.xlu0 %v2690, 64
    %v2724 = vpop.permute.xlu0 %2723
    %2725 = vrot.lane.b32.xlu0 %v2691, 64
    %v2726 = vpop.permute.xlu0 %2725
    %2727 = vrot.lane.b32.xlu0 %v2692, 64
    %v2728 = vpop.permute.xlu0 %2727
    %2729 = vrot.lane.b32.xlu0 %v2693, 64
    %v2730 = vpop.permute.xlu0 %2729
    %2731 = vrot.lane.b32.xlu0 %v2694, 64
    %v2732 = vpop.permute.xlu0 %2731
    %2733 = vrot.lane.b32.xlu0 %v2695, 64
    %v2734 = vpop.permute.xlu0 %2733
    %2735 = vrot.lane.b32.xlu0 %v2696, 64
    %v2736 = vpop.permute.xlu0 %2735
    %2737 = vrot.lane.b32.xlu0 %v2697, 64
    %v2738 = vpop.permute.xlu0 %2737
    %2739 = vrot.lane.b32.xlu0 %v2698, 64
    %v2740 = vpop.permute.xlu0 %2739
    %2741 = vrot.lane.b32.xlu0 %v2699, 64
    %v2742 = vpop.permute.xlu0 %2741
    %2743 = vrot.lane.b32.xlu0 %v2700, 64
    %v2744 = vpop.permute.xlu0 %2743
    %2745 = vrot.lane.b32.xlu0 %v2701, 64
    %v2746 = vpop.permute.xlu0 %2745
    %2747 = vrot.lane.b32.xlu0 %v2702, 64
    %v2748 = vpop.permute.xlu0 %2747
    %2749 = vrot.lane.b32.xlu0 %v2703, 64
    %v2750 = vpop.permute.xlu0 %2749
    %2751 = vrot.lane.b32.xlu0 %v2704, 64
    %v2752 = vpop.permute.xlu0 %2751
    %2769 = vst.msk [vmem:[#allocation4 + $0x4] sm:$0xf] %vm1870, %v2722
    %2770 = vst.msk [vmem:[#allocation4 + $0x10] sm:$0xf] %vm1870, %v2724
    %2771 = vst.msk [vmem:[#allocation4 + $0x1c] sm:$0xf] %vm1870, %v2726
    %2772 = vst.msk [vmem:[#allocation4 + $0x28] sm:$0xf] %vm1870, %v2728
    %2773 = vst.msk [vmem:[#allocation4 + $0x34] sm:$0xf] %vm1870, %v2730
    %2774 = vst.msk [vmem:[#allocation4 + $0x40] sm:$0xf] %vm1870, %v2732
    %2775 = vst.msk [vmem:[#allocation4 + $0x4c] sm:$0xf] %vm1870, %v2734
    %2776 = vst.msk [vmem:[#allocation4 + $0x58] sm:$0xf] %vm1870, %v2736
    %2777 = vst.msk [vmem:[#allocation4 + $0x64] sm:$0xf] %vm1870, %v2738
    %2778 = vst.msk [vmem:[#allocation4 + $0x70] sm:$0xf] %vm1870, %v2740
    %2779 = vst.msk [vmem:[#allocation4 + $0x7c] sm:$0xf] %vm1870, %v2742
    %2780 = vst.msk [vmem:[#allocation4 + $0x88] sm:$0xf] %vm1870, %v2744
    %2781 = vst.msk [vmem:[#allocation4 + $0x94] sm:$0xf] %vm1870, %v2746
    %2782 = vst.msk [vmem:[#allocation4 + $0xa0] sm:$0xf] %vm1870, %v2748
    %2783 = vst.msk [vmem:[#allocation4 + $0xac] sm:$0xf] %vm1870, %v2750
    %2784 = vst.msk [vmem:[#allocation4 + $0xb8] sm:$0xf] %vm1870, %v2752
    %2785 = vrot.lane.b32.xlu0 %v2689, 32
    %v2786 = vpop.permute.xlu0 %2785
    %2787 = vrot.lane.b32.xlu0 %v2690, 32
    %v2788 = vpop.permute.xlu0 %2787
    %2789 = vrot.lane.b32.xlu0 %v2691, 32
    %v2790 = vpop.permute.xlu0 %2789
    %2791 = vrot.lane.b32.xlu0 %v2692, 32
    %v2792 = vpop.permute.xlu0 %2791
    %2793 = vrot.lane.b32.xlu0 %v2693, 32
    %v2794 = vpop.permute.xlu0 %2793
    %2795 = vrot.lane.b32.xlu0 %v2694, 32
    %v2796 = vpop.permute.xlu0 %2795
    %2797 = vrot.lane.b32.xlu0 %v2695, 32
    %v2798 = vpop.permute.xlu0 %2797
    %2799 = vrot.lane.b32.xlu0 %v2696, 32
    %v2800 = vpop.permute.xlu0 %2799
    %2801 = vrot.lane.b32.xlu0 %v2697, 32
    %v2802 = vpop.permute.xlu0 %2801
    %2803 = vrot.lane.b32.xlu0 %v2698, 32
    %v2804 = vpop.permute.xlu0 %2803
    %2805 = vrot.lane.b32.xlu0 %v2699, 32
    %v2806 = vpop.permute.xlu0 %2805
    %2807 = vrot.lane.b32.xlu0 %v2700, 32
    %v2808 = vpop.permute.xlu0 %2807
    %2809 = vrot.lane.b32.xlu0 %v2701, 32
    %v2810 = vpop.permute.xlu0 %2809
    %2811 = vrot.lane.b32.xlu0 %v2702, 32
    %v2812 = vpop.permute.xlu0 %2811
    %2813 = vrot.lane.b32.xlu0 %v2703, 32
    %v2814 = vpop.permute.xlu0 %2813
    %2815 = vrot.lane.b32.xlu0 %v2704, 32
    %v2816 = vpop.permute.xlu0 %2815
    %2833 = vst.msk [vmem:[#allocation5 + $0x4] sm:$0xf] %vm1870, %v2786
    %2834 = vst.msk [vmem:[#allocation5 + $0x10] sm:$0xf] %vm1870, %v2788
    %2835 = vst.msk [vmem:[#allocation5 + $0x1c] sm:$0xf] %vm1870, %v2790
    %2836 = vst.msk [vmem:[#allocation5 + $0x28] sm:$0xf] %vm1870, %v2792
    %2837 = vst.msk [vmem:[#allocation5 + $0x34] sm:$0xf] %vm1870, %v2794
    %2838 = vst.msk [vmem:[#allocation5 + $0x40] sm:$0xf] %vm1870, %v2796
    %2839 = vst.msk [vmem:[#allocation5 + $0x4c] sm:$0xf] %vm1870, %v2798
    %2840 = vst.msk [vmem:[#allocation5 + $0x58] sm:$0xf] %vm1870, %v2800
    %2841 = vst.msk [vmem:[#allocation5 + $0x64] sm:$0xf] %vm1870, %v2802
    %2842 = vst.msk [vmem:[#allocation5 + $0x70] sm:$0xf] %vm1870, %v2804
    %2843 = vst.msk [vmem:[#allocation5 + $0x7c] sm:$0xf] %vm1870, %v2806
    %2844 = vst.msk [vmem:[#allocation5 + $0x88] sm:$0xf] %vm1870, %v2808
    %2845 = vst.msk [vmem:[#allocation5 + $0x94] sm:$0xf] %vm1870, %v2810
    %2846 = vst.msk [vmem:[#allocation5 + $0xa0] sm:$0xf] %vm1870, %v2812
    %2847 = vst.msk [vmem:[#allocation5 + $0xac] sm:$0xf] %vm1870, %v2814
    %2848 = vst.msk [vmem:[#allocation5 + $0xb8] sm:$0xf] %vm1870, %v2816
    %v2849 = vld [vmem:[%s2688] sm:$0xf]
    %v2850 = vld [vmem:[%s2688 + $0x4] sm:$0x1]
    %v2851 = vld [vmem:[%s2688 + $0x8] sm:$0xf]
    %v2852 = vld [vmem:[%s2688 + $0xc] sm:$0x1]
    %v2853 = vld [vmem:[%s2688 + $0x10] sm:$0xf]
    %v2854 = vld [vmem:[%s2688 + $0x14] sm:$0x1]
    %v2855 = vld [vmem:[%s2688 + $0x18] sm:$0xf]
    %v2856 = vld [vmem:[%s2688 + $0x1c] sm:$0x1]
    %v2857 = vld [vmem:[%s2688 + $0x20] sm:$0xf]
    %v2858 = vld [vmem:[%s2688 + $0x24] sm:$0x1]
    %v2859 = vld [vmem:[%s2688 + $0x28] sm:$0xf]
    %v2860 = vld [vmem:[%s2688 + $0x2c] sm:$0x1]
    %v2861 = vld [vmem:[%s2688 + $0x30] sm:$0xf]
    %v2862 = vld [vmem:[%s2688 + $0x34] sm:$0x1]
    %v2863 = vld [vmem:[%s2688 + $0x38] sm:$0xf]
    %v2864 = vld [vmem:[%s2688 + $0x3c] sm:$0x1]
    %v2865 = vld [vmem:[%s2688 + $0x50] sm:$0xf]
    %v2866 = vld [vmem:[%s2688 + $0x54] sm:$0x1]
    %v2867 = vld [vmem:[%s2688 + $0x58] sm:$0xf]
    %v2868 = vld [vmem:[%s2688 + $0x5c] sm:$0x1]
    %v2869 = vld [vmem:[%s2688 + $0x60] sm:$0xf]
    %v2870 = vld [vmem:[%s2688 + $0x64] sm:$0x1]
    %v2871 = vld [vmem:[%s2688 + $0x68] sm:$0xf]
    %v2872 = vld [vmem:[%s2688 + $0x6c] sm:$0x1]
    %v2873 = vld [vmem:[%s2688 + $0x70] sm:$0xf]
    %v2874 = vld [vmem:[%s2688 + $0x74] sm:$0x1]
    %v2875 = vld [vmem:[%s2688 + $0x78] sm:$0xf]
    %v2876 = vld [vmem:[%s2688 + $0x7c] sm:$0x1]
    %v2877 = vld [vmem:[%s2688 + $0x80] sm:$0xf]
    %v2878 = vld [vmem:[%s2688 + $0x84] sm:$0x1]
    %v2879 = vld [vmem:[%s2688 + $0x88] sm:$0xf]
    %v2880 = vld [vmem:[%s2688 + $0x8c] sm:$0x1]
    %v2882 = vshrl.u32 %v2849, 16
    %v2884 = vrot.slane %v2882, 4
    %v2885 = vshll.u32 %v2849, 16
    %v2887 = vrot.slane %v2885, 5
    %v2888 = vor.u32 %v2884, %v2887
    %v2889 = vrot.slane %v2888, 4
    %v2891 = vshll.u32 %v2850, 16
    %v2893 = vrot.slane %v2891, 5
    %v2894 = vsel %vm1369, %v2889, %v2893
    %v2896 = vshrl.u32 %v2851, 16
    %v2898 = vrot.slane %v2896, 4
    %v2899 = vshll.u32 %v2851, 16
    %v2901 = vrot.slane %v2899, 5
    %v2902 = vor.u32 %v2898, %v2901
    %v2903 = vrot.slane %v2902, 4
    %v2905 = vshll.u32 %v2852, 16
    %v2907 = vrot.slane %v2905, 5
    %v2908 = vsel %vm1369, %v2903, %v2907
    %v2910 = vshrl.u32 %v2853, 16
    %v2912 = vrot.slane %v2910, 4
    %v2913 = vshll.u32 %v2853, 16
    %v2915 = vrot.slane %v2913, 5
    %v2916 = vor.u32 %v2912, %v2915
    %v2917 = vrot.slane %v2916, 4
    %v2919 = vshll.u32 %v2854, 16
    %v2921 = vrot.slane %v2919, 5
    %v2922 = vsel %vm1369, %v2917, %v2921
    %v2924 = vshrl.u32 %v2855, 16
    %v2926 = vrot.slane %v2924, 4
    %v2927 = vshll.u32 %v2855, 16
    %v2929 = vrot.slane %v2927, 5
    %v2930 = vor.u32 %v2926, %v2929
    %v2931 = vrot.slane %v2930, 4
    %v2933 = vshll.u32 %v2856, 16
    %v2935 = vrot.slane %v2933, 5
    %v2936 = vsel %vm1369, %v2931, %v2935
    %v2938 = vshrl.u32 %v2857, 16
    %v2940 = vrot.slane %v2938, 4
    %v2941 = vshll.u32 %v2857, 16
    %v2943 = vrot.slane %v2941, 5
    %v2944 = vor.u32 %v2940, %v2943
    %v2945 = vrot.slane %v2944, 4
    %v2947 = vshll.u32 %v2858, 16
    %v2949 = vrot.slane %v2947, 5
    %v2950 = vsel %vm1369, %v2945, %v2949
    %v2952 = vshrl.u32 %v2859, 16
    %v2954 = vrot.slane %v2952, 4
    %v2955 = vshll.u32 %v2859, 16
    %v2957 = vrot.slane %v2955, 5
    %v2958 = vor.u32 %v2954, %v2957
    %v2959 = vrot.slane %v2958, 4
    %v2961 = vshll.u32 %v2860, 16
    %v2963 = vrot.slane %v2961, 5
    %v2964 = vsel %vm1369, %v2959, %v2963
    %v2966 = vshrl.u32 %v2861, 16
    %v2968 = vrot.slane %v2966, 4
    %v2969 = vshll.u32 %v2861, 16
    %v2971 = vrot.slane %v2969, 5
    %v2972 = vor.u32 %v2968, %v2971
    %v2973 = vrot.slane %v2972, 4
    %v2975 = vshll.u32 %v2862, 16
    %v2977 = vrot.slane %v2975, 5
    %v2978 = vsel %vm1369, %v2973, %v2977
    %v2980 = vshrl.u32 %v2863, 16
    %v2982 = vrot.slane %v2980, 4
    %v2983 = vshll.u32 %v2863, 16
    %v2985 = vrot.slane %v2983, 5
    %v2986 = vor.u32 %v2982, %v2985
    %v2987 = vrot.slane %v2986, 4
    %v2989 = vshll.u32 %v2864, 16
    %v2991 = vrot.slane %v2989, 5
    %v2992 = vsel %vm1369, %v2987, %v2991
    %v2994 = vshrl.u32 %v2865, 16
    %v2996 = vrot.slane %v2994, 4
    %v2997 = vshll.u32 %v2865, 16
    %v2999 = vrot.slane %v2997, 5
    %v3000 = vor.u32 %v2996, %v2999
    %v3001 = vrot.slane %v3000, 4
    %v3003 = vshll.u32 %v2866, 16
    %v3005 = vrot.slane %v3003, 5
    %v3006 = vsel %vm1369, %v3001, %v3005
    %v3008 = vshrl.u32 %v2867, 16
    %v3010 = vrot.slane %v3008, 4
    %v3011 = vshll.u32 %v2867, 16
    %v3013 = vrot.slane %v3011, 5
    %v3014 = vor.u32 %v3010, %v3013
    %v3015 = vrot.slane %v3014, 4
    %v3017 = vshll.u32 %v2868, 16
    %v3019 = vrot.slane %v3017, 5
    %v3020 = vsel %vm1369, %v3015, %v3019
    %v3022 = vshrl.u32 %v2869, 16
    %v3024 = vrot.slane %v3022, 4
    %v3025 = vshll.u32 %v2869, 16
    %v3027 = vrot.slane %v3025, 5
    %v3028 = vor.u32 %v3024, %v3027
    %v3029 = vrot.slane %v3028, 4
    %v3031 = vshll.u32 %v2870, 16
    %v3033 = vrot.slane %v3031, 5
    %v3034 = vsel %vm1369, %v3029, %v3033
    %v3036 = vshrl.u32 %v2871, 16
    %v3038 = vrot.slane %v3036, 4
    %v3039 = vshll.u32 %v2871, 16
    %v3041 = vrot.slane %v3039, 5
    %v3042 = vor.u32 %v3038, %v3041
    %v3043 = vrot.slane %v3042, 4
    %v3045 = vshll.u32 %v2872, 16
    %v3047 = vrot.slane %v3045, 5
    %v3048 = vsel %vm1369, %v3043, %v3047
    %v3050 = vshrl.u32 %v2873, 16
    %v3052 = vrot.slane %v3050, 4
    %v3053 = vshll.u32 %v2873, 16
    %v3055 = vrot.slane %v3053, 5
    %v3056 = vor.u32 %v3052, %v3055
    %v3057 = vrot.slane %v3056, 4
    %v3059 = vshll.u32 %v2874, 16
    %v3061 = vrot.slane %v3059, 5
    %v3062 = vsel %vm1369, %v3057, %v3061
    %v3064 = vshrl.u32 %v2875, 16
    %v3066 = vrot.slane %v3064, 4
    %v3067 = vshll.u32 %v2875, 16
    %v3069 = vrot.slane %v3067, 5
    %v3070 = vor.u32 %v3066, %v3069
    %v3071 = vrot.slane %v3070, 4
    %v3073 = vshll.u32 %v2876, 16
    %v3075 = vrot.slane %v3073, 5
    %v3076 = vsel %vm1369, %v3071, %v3075
    %v3078 = vshrl.u32 %v2877, 16
    %v3080 = vrot.slane %v3078, 4
    %v3081 = vshll.u32 %v2877, 16
    %v3083 = vrot.slane %v3081, 5
    %v3084 = vor.u32 %v3080, %v3083
    %v3085 = vrot.slane %v3084, 4
    %v3087 = vshll.u32 %v2878, 16
    %v3089 = vrot.slane %v3087, 5
    %v3090 = vsel %vm1369, %v3085, %v3089
    %v3092 = vshrl.u32 %v2879, 16
    %v3094 = vrot.slane %v3092, 4
    %v3095 = vshll.u32 %v2879, 16
    %v3097 = vrot.slane %v3095, 5
    %v3098 = vor.u32 %v3094, %v3097
    %v3099 = vrot.slane %v3098, 4
    %v3101 = vshll.u32 %v2880, 16
    %v3103 = vrot.slane %v3101, 5
    %v3104 = vsel %vm1369, %v3099, %v3103
    %3105 = vrot.lane.b32.xlu0 %v2894, 96
    %v3106 = vpop.permute.xlu0 %3105
    %3107 = vrot.lane.b32.xlu0 %v2908, 96
    %v3108 = vpop.permute.xlu0 %3107
    %3109 = vrot.lane.b32.xlu0 %v2922, 96
    %v3110 = vpop.permute.xlu0 %3109
    %3111 = vrot.lane.b32.xlu0 %v2936, 96
    %v3112 = vpop.permute.xlu0 %3111
    %3113 = vrot.lane.b32.xlu0 %v2950, 96
    %v3114 = vpop.permute.xlu0 %3113
    %3115 = vrot.lane.b32.xlu0 %v2964, 96
    %v3116 = vpop.permute.xlu0 %3115
    %3117 = vrot.lane.b32.xlu0 %v2978, 96
    %v3118 = vpop.permute.xlu0 %3117
    %3119 = vrot.lane.b32.xlu0 %v2992, 96
    %v3120 = vpop.permute.xlu0 %3119
    %3121 = vrot.lane.b32.xlu0 %v3006, 96
    %v3122 = vpop.permute.xlu0 %3121
    %3123 = vrot.lane.b32.xlu0 %v3020, 96
    %v3124 = vpop.permute.xlu0 %3123
    %3125 = vrot.lane.b32.xlu0 %v3034, 96
    %v3126 = vpop.permute.xlu0 %3125
    %3127 = vrot.lane.b32.xlu0 %v3048, 96
    %v3128 = vpop.permute.xlu0 %3127
    %3129 = vrot.lane.b32.xlu0 %v3062, 96
    %v3130 = vpop.permute.xlu0 %3129
    %3131 = vrot.lane.b32.xlu0 %v3076, 96
    %v3132 = vpop.permute.xlu0 %3131
    %3133 = vrot.lane.b32.xlu0 %v3090, 96
    %v3134 = vpop.permute.xlu0 %3133
    %3135 = vrot.lane.b32.xlu0 %v3104, 96
    %v3136 = vpop.permute.xlu0 %3135
    %3153 = vst.msk [vmem:[#allocation4 + $0x4] sm:$0xf] %vm2031, %v3106
    %3154 = vst.msk [vmem:[#allocation4 + $0x10] sm:$0xf] %vm2031, %v3108
    %3155 = vst.msk [vmem:[#allocation4 + $0x1c] sm:$0xf] %vm2031, %v3110
    %3156 = vst.msk [vmem:[#allocation4 + $0x28] sm:$0xf] %vm2031, %v3112
    %3157 = vst.msk [vmem:[#allocation4 + $0x34] sm:$0xf] %vm2031, %v3114
    %3158 = vst.msk [vmem:[#allocation4 + $0x40] sm:$0xf] %vm2031, %v3116
    %3159 = vst.msk [vmem:[#allocation4 + $0x4c] sm:$0xf] %vm2031, %v3118
    %3160 = vst.msk [vmem:[#allocation4 + $0x58] sm:$0xf] %vm2031, %v3120
    %3161 = vst.msk [vmem:[#allocation4 + $0x64] sm:$0xf] %vm2031, %v3122
    %3162 = vst.msk [vmem:[#allocation4 + $0x70] sm:$0xf] %vm2031, %v3124
    %3163 = vst.msk [vmem:[#allocation4 + $0x7c] sm:$0xf] %vm2031, %v3126
    %3164 = vst.msk [vmem:[#allocation4 + $0x88] sm:$0xf] %vm2031, %v3128
    %3165 = vst.msk [vmem:[#allocation4 + $0x94] sm:$0xf] %vm2031, %v3130
    %3166 = vst.msk [vmem:[#allocation4 + $0xa0] sm:$0xf] %vm2031, %v3132
    %3167 = vst.msk [vmem:[#allocation4 + $0xac] sm:$0xf] %vm2031, %v3134
    %3168 = vst.msk [vmem:[#allocation4 + $0xb8] sm:$0xf] %vm2031, %v3136
    %3169 = vrot.lane.b32.xlu0 %v2894, 64
    %v3170 = vpop.permute.xlu0 %3169
    %3171 = vrot.lane.b32.xlu0 %v2908, 64
    %v3172 = vpop.permute.xlu0 %3171
    %3173 = vrot.lane.b32.xlu0 %v2922, 64
    %v3174 = vpop.permute.xlu0 %3173
    %3175 = vrot.lane.b32.xlu0 %v2936, 64
    %v3176 = vpop.permute.xlu0 %3175
    %3177 = vrot.lane.b32.xlu0 %v2950, 64
    %v3178 = vpop.permute.xlu0 %3177
    %3179 = vrot.lane.b32.xlu0 %v2964, 64
    %v3180 = vpop.permute.xlu0 %3179
    %3181 = vrot.lane.b32.xlu0 %v2978, 64
    %v3182 = vpop.permute.xlu0 %3181
    %3183 = vrot.lane.b32.xlu0 %v2992, 64
    %v3184 = vpop.permute.xlu0 %3183
    %3185 = vrot.lane.b32.xlu0 %v3006, 64
    %v3186 = vpop.permute.xlu0 %3185
    %3187 = vrot.lane.b32.xlu0 %v3020, 64
    %v3188 = vpop.permute.xlu0 %3187
    %3189 = vrot.lane.b32.xlu0 %v3034, 64
    %v3190 = vpop.permute.xlu0 %3189
    %3191 = vrot.lane.b32.xlu0 %v3048, 64
    %v3192 = vpop.permute.xlu0 %3191
    %3193 = vrot.lane.b32.xlu0 %v3062, 64
    %v3194 = vpop.permute.xlu0 %3193
    %3195 = vrot.lane.b32.xlu0 %v3076, 64
    %v3196 = vpop.permute.xlu0 %3195
    %3197 = vrot.lane.b32.xlu0 %v3090, 64
    %v3198 = vpop.permute.xlu0 %3197
    %3199 = vrot.lane.b32.xlu0 %v3104, 64
    %v3200 = vpop.permute.xlu0 %3199
    %3217 = vst.msk [vmem:[#allocation5 + $0x4] sm:$0xf] %vm2031, %v3170
    %3218 = vst.msk [vmem:[#allocation5 + $0x10] sm:$0xf] %vm2031, %v3172
    %3219 = vst.msk [vmem:[#allocation5 + $0x1c] sm:$0xf] %vm2031, %v3174
    %3220 = vst.msk [vmem:[#allocation5 + $0x28] sm:$0xf] %vm2031, %v3176
    %3221 = vst.msk [vmem:[#allocation5 + $0x34] sm:$0xf] %vm2031, %v3178
    %3222 = vst.msk [vmem:[#allocation5 + $0x40] sm:$0xf] %vm2031, %v3180
    %3223 = vst.msk [vmem:[#allocation5 + $0x4c] sm:$0xf] %vm2031, %v3182
    %3224 = vst.msk [vmem:[#allocation5 + $0x58] sm:$0xf] %vm2031, %v3184
    %3225 = vst.msk [vmem:[#allocation5 + $0x64] sm:$0xf] %vm2031, %v3186
    %3226 = vst.msk [vmem:[#allocation5 + $0x70] sm:$0xf] %vm2031, %v3188
    %3227 = vst.msk [vmem:[#allocation5 + $0x7c] sm:$0xf] %vm2031, %v3190
    %3228 = vst.msk [vmem:[#allocation5 + $0x88] sm:$0xf] %vm2031, %v3192
    %3229 = vst.msk [vmem:[#allocation5 + $0x94] sm:$0xf] %vm2031, %v3194
    %3230 = vst.msk [vmem:[#allocation5 + $0xa0] sm:$0xf] %vm2031, %v3196
    %3231 = vst.msk [vmem:[#allocation5 + $0xac] sm:$0xf] %vm2031, %v3198
    %3232 = vst.msk [vmem:[#allocation5 + $0xb8] sm:$0xf] %vm2031, %v3200
    %v3233 = vld [vmem:[%s2688] sm:$0xe]
    %v3234 = vld [vmem:[%s2688 + $0x4] sm:$0x1]
    %v3235 = vld [vmem:[%s2688 + $0x8] sm:$0xe]
    %v3236 = vld [vmem:[%s2688 + $0xc] sm:$0x1]
    %v3237 = vld [vmem:[%s2688 + $0x10] sm:$0xe]
    %v3238 = vld [vmem:[%s2688 + $0x14] sm:$0x1]
    %v3239 = vld [vmem:[%s2688 + $0x18] sm:$0xe]
    %v3240 = vld [vmem:[%s2688 + $0x1c] sm:$0x1]
    %v3241 = vld [vmem:[%s2688 + $0x20] sm:$0xe]
    %v3242 = vld [vmem:[%s2688 + $0x24] sm:$0x1]
    %v3243 = vld [vmem:[%s2688 + $0x28] sm:$0xe]
    %v3244 = vld [vmem:[%s2688 + $0x2c] sm:$0x1]
    %v3245 = vld [vmem:[%s2688 + $0x30] sm:$0xe]
    %v3246 = vld [vmem:[%s2688 + $0x34] sm:$0x1]
    %v3247 = vld [vmem:[%s2688 + $0x38] sm:$0xe]
    %v3248 = vld [vmem:[%s2688 + $0x3c] sm:$0x1]
    %v3249 = vld [vmem:[%s2688 + $0x50] sm:$0xe]
    %v3250 = vld [vmem:[%s2688 + $0x54] sm:$0x1]
    %v3251 = vld [vmem:[%s2688 + $0x58] sm:$0xe]
    %v3252 = vld [vmem:[%s2688 + $0x5c] sm:$0x1]
    %v3253 = vld [vmem:[%s2688 + $0x60] sm:$0xe]
    %v3254 = vld [vmem:[%s2688 + $0x64] sm:$0x1]
    %v3255 = vld [vmem:[%s2688 + $0x68] sm:$0xe]
    %v3256 = vld [vmem:[%s2688 + $0x6c] sm:$0x1]
    %v3257 = vld [vmem:[%s2688 + $0x70] sm:$0xe]
    %v3258 = vld [vmem:[%s2688 + $0x74] sm:$0x1]
    %v3259 = vld [vmem:[%s2688 + $0x78] sm:$0xe]
    %v3260 = vld [vmem:[%s2688 + $0x7c] sm:$0x1]
    %v3261 = vld [vmem:[%s2688 + $0x80] sm:$0xe]
    %v3262 = vld [vmem:[%s2688 + $0x84] sm:$0x1]
    %v3263 = vld [vmem:[%s2688 + $0x88] sm:$0xe]
    %v3264 = vld [vmem:[%s2688 + $0x8c] sm:$0x1]
    %v3297 = vrot.slane %v3233, 5
    %v3298 = vrot.slane %v3297, 4
    %v3299 = vrot.slane %v3234, 5
    %v3300 = vsel %vm1757, %v3298, %v3299
    %v3301 = vrot.slane %v3235, 5
    %v3302 = vrot.slane %v3301, 4
    %v3303 = vrot.slane %v3236, 5
    %v3304 = vsel %vm1757, %v3302, %v3303
    %v3305 = vrot.slane %v3237, 5
    %v3306 = vrot.slane %v3305, 4
    %v3307 = vrot.slane %v3238, 5
    %v3308 = vsel %vm1757, %v3306, %v3307
    %v3309 = vrot.slane %v3239, 5
    %v3310 = vrot.slane %v3309, 4
    %v3311 = vrot.slane %v3240, 5
    %v3312 = vsel %vm1757, %v3310, %v3311
    %v3313 = vrot.slane %v3241, 5
    %v3314 = vrot.slane %v3313, 4
    %v3315 = vrot.slane %v3242, 5
    %v3316 = vsel %vm1757, %v3314, %v3315
    %v3317 = vrot.slane %v3243, 5
    %v3318 = vrot.slane %v3317, 4
    %v3319 = vrot.slane %v3244, 5
    %v3320 = vsel %vm1757, %v3318, %v3319
    %v3321 = vrot.slane %v3245, 5
    %v3322 = vrot.slane %v3321, 4
    %v3323 = vrot.slane %v3246, 5
    %v3324 = vsel %vm1757, %v3322, %v3323
    %v3325 = vrot.slane %v3247, 5
    %v3326 = vrot.slane %v3325, 4
    %v3327 = vrot.slane %v3248, 5
    %v3328 = vsel %vm1757, %v3326, %v3327
    %v3329 = vrot.slane %v3249, 5
    %v3330 = vrot.slane %v3329, 4
    %v3331 = vrot.slane %v3250, 5
    %v3332 = vsel %vm1757, %v3330, %v3331
    %v3333 = vrot.slane %v3251, 5
    %v3334 = vrot.slane %v3333, 4
    %v3335 = vrot.slane %v3252, 5
    %v3336 = vsel %vm1757, %v3334, %v3335
    %v3337 = vrot.slane %v3253, 5
    %v3338 = vrot.slane %v3337, 4
    %v3339 = vrot.slane %v3254, 5
    %v3340 = vsel %vm1757, %v3338, %v3339
    %v3341 = vrot.slane %v3255, 5
    %v3342 = vrot.slane %v3341, 4
    %v3343 = vrot.slane %v3256, 5
    %v3344 = vsel %vm1757, %v3342, %v3343
    %v3345 = vrot.slane %v3257, 5
    %v3346 = vrot.slane %v3345, 4
    %v3347 = vrot.slane %v3258, 5
    %v3348 = vsel %vm1757, %v3346, %v3347
    %v3349 = vrot.slane %v3259, 5
    %v3350 = vrot.slane %v3349, 4
    %v3351 = vrot.slane %v3260, 5
    %v3352 = vsel %vm1757, %v3350, %v3351
    %v3353 = vrot.slane %v3261, 5
    %v3354 = vrot.slane %v3353, 4
    %v3355 = vrot.slane %v3262, 5
    %v3356 = vsel %vm1757, %v3354, %v3355
    %v3357 = vrot.slane %v3263, 5
    %v3358 = vrot.slane %v3357, 4
    %v3359 = vrot.slane %v3264, 5
    %v3360 = vsel %vm1757, %v3358, %v3359
    %3377 = vst.msk [vmem:[#allocation4 + $0x8] sm:$0xf] %vm660, %v3300
    %3378 = vst.msk [vmem:[#allocation4 + $0x14] sm:$0xf] %vm660, %v3304
    %3379 = vst.msk [vmem:[#allocation4 + $0x20] sm:$0xf] %vm660, %v3308
    %3380 = vst.msk [vmem:[#allocation4 + $0x2c] sm:$0xf] %vm660, %v3312
    %3381 = vst.msk [vmem:[#allocation4 + $0x38] sm:$0xf] %vm660, %v3316
    %3382 = vst.msk [vmem:[#allocation4 + $0x44] sm:$0xf] %vm660, %v3320
    %3383 = vst.msk [vmem:[#allocation4 + $0x50] sm:$0xf] %vm660, %v3324
    %3384 = vst.msk [vmem:[#allocation4 + $0x5c] sm:$0xf] %vm660, %v3328
    %3385 = vst.msk [vmem:[#allocation4 + $0x68] sm:$0xf] %vm660, %v3332
    %3386 = vst.msk [vmem:[#allocation4 + $0x74] sm:$0xf] %vm660, %v3336
    %3387 = vst.msk [vmem:[#allocation4 + $0x80] sm:$0xf] %vm660, %v3340
    %3388 = vst.msk [vmem:[#allocation4 + $0x8c] sm:$0xf] %vm660, %v3344
    %3389 = vst.msk [vmem:[#allocation4 + $0x98] sm:$0xf] %vm660, %v3348
    %3390 = vst.msk [vmem:[#allocation4 + $0xa4] sm:$0xf] %vm660, %v3352
    %3391 = vst.msk [vmem:[#allocation4 + $0xb0] sm:$0xf] %vm660, %v3356
    %3392 = vst.msk [vmem:[#allocation4 + $0xbc] sm:$0xf] %vm660, %v3360
    %3393 = vrot.lane.b32.xlu0 %v3300, 96
    %v3394 = vpop.permute.xlu0 %3393
    %3395 = vrot.lane.b32.xlu0 %v3304, 96
    %v3396 = vpop.permute.xlu0 %3395
    %3397 = vrot.lane.b32.xlu0 %v3308, 96
    %v3398 = vpop.permute.xlu0 %3397
    %3399 = vrot.lane.b32.xlu0 %v3312, 96
    %v3400 = vpop.permute.xlu0 %3399
    %3401 = vrot.lane.b32.xlu0 %v3316, 96
    %v3402 = vpop.permute.xlu0 %3401
    %3403 = vrot.lane.b32.xlu0 %v3320, 96
    %v3404 = vpop.permute.xlu0 %3403
    %3405 = vrot.lane.b32.xlu0 %v3324, 96
    %v3406 = vpop.permute.xlu0 %3405
    %3407 = vrot.lane.b32.xlu0 %v3328, 96
    %v3408 = vpop.permute.xlu0 %3407
    %3409 = vrot.lane.b32.xlu0 %v3332, 96
    %v3410 = vpop.permute.xlu0 %3409
    %3411 = vrot.lane.b32.xlu0 %v3336, 96
    %v3412 = vpop.permute.xlu0 %3411
    %3413 = vrot.lane.b32.xlu0 %v3340, 96
    %v3414 = vpop.permute.xlu0 %3413
    %3415 = vrot.lane.b32.xlu0 %v3344, 96
    %v3416 = vpop.permute.xlu0 %3415
    %3417 = vrot.lane.b32.xlu0 %v3348, 96
    %v3418 = vpop.permute.xlu0 %3417
    %3419 = vrot.lane.b32.xlu0 %v3352, 96
    %v3420 = vpop.permute.xlu0 %3419
    %3421 = vrot.lane.b32.xlu0 %v3356, 96
    %v3422 = vpop.permute.xlu0 %3421
    %3423 = vrot.lane.b32.xlu0 %v3360, 96
    %v3424 = vpop.permute.xlu0 %3423
    %3441 = vst.msk [vmem:[#allocation5 + $0x8] sm:$0xf] %vm660, %v3394
    %3442 = vst.msk [vmem:[#allocation5 + $0x14] sm:$0xf] %vm660, %v3396
    %3443 = vst.msk [vmem:[#allocation5 + $0x20] sm:$0xf] %vm660, %v3398
    %3444 = vst.msk [vmem:[#allocation5 + $0x2c] sm:$0xf] %vm660, %v3400
    %3445 = vst.msk [vmem:[#allocation5 + $0x38] sm:$0xf] %vm660, %v3402
    %3446 = vst.msk [vmem:[#allocation5 + $0x44] sm:$0xf] %vm660, %v3404
    %3447 = vst.msk [vmem:[#allocation5 + $0x50] sm:$0xf] %vm660, %v3406
    %3448 = vst.msk [vmem:[#allocation5 + $0x5c] sm:$0xf] %vm660, %v3408
    %3449 = vst.msk [vmem:[#allocation5 + $0x68] sm:$0xf] %vm660, %v3410
    %3450 = vst.msk [vmem:[#allocation5 + $0x74] sm:$0xf] %vm660, %v3412
    %3451 = vst.msk [vmem:[#allocation5 + $0x80] sm:$0xf] %vm660, %v3414
    %3452 = vst.msk [vmem:[#allocation5 + $0x8c] sm:$0xf] %vm660, %v3416
    %3453 = vst.msk [vmem:[#allocation5 + $0x98] sm:$0xf] %vm660, %v3418
    %3454 = vst.msk [vmem:[#allocation5 + $0xa4] sm:$0xf] %vm660, %v3420
    %3455 = vst.msk [vmem:[#allocation5 + $0xb0] sm:$0xf] %vm660, %v3422
    %3456 = vst.msk [vmem:[#allocation5 + $0xbc] sm:$0xf] %vm660, %v3424
    %v3457 = vld [vmem:[#allocation4] sm:$0xff]
    %v3458 = vld [vmem:[#allocation4 + $0x8] sm:$0xf]
    %v3459 = vld [vmem:[#allocation4 + $0xc] sm:$0xff]
    %v3460 = vld [vmem:[#allocation4 + $0x14] sm:$0xf]
    %v3461 = vld [vmem:[#allocation4 + $0x18] sm:$0xff]
    %v3462 = vld [vmem:[#allocation4 + $0x20] sm:$0xf]
    %v3463 = vld [vmem:[#allocation4 + $0x24] sm:$0xff]
    %v3464 = vld [vmem:[#allocation4 + $0x2c] sm:$0xf]
    %v3465 = vld [vmem:[#allocation4 + $0x30] sm:$0xff]
    %v3466 = vld [vmem:[#allocation4 + $0x38] sm:$0xf]
    %v3467 = vld [vmem:[#allocation4 + $0x3c] sm:$0xff]
    %v3468 = vld [vmem:[#allocation4 + $0x44] sm:$0xf]
    %v3469 = vld [vmem:[#allocation4 + $0x48] sm:$0xff]
    %v3470 = vld [vmem:[#allocation4 + $0x50] sm:$0xf]
    %v3471 = vld [vmem:[#allocation4 + $0x54] sm:$0xff]
    %v3472 = vld [vmem:[#allocation4 + $0x5c] sm:$0xf]
    %v3473 = vld [vmem:[#allocation4 + $0x60] sm:$0xff]
    %v3474 = vld [vmem:[#allocation4 + $0x68] sm:$0xf]
    %v3475 = vld [vmem:[#allocation4 + $0x6c] sm:$0xff]
    %v3476 = vld [vmem:[#allocation4 + $0x74] sm:$0xf]
    %v3477 = vld [vmem:[#allocation4 + $0x78] sm:$0xff]
    %v3478 = vld [vmem:[#allocation4 + $0x80] sm:$0xf]
    %v3479 = vld [vmem:[#allocation4 + $0x84] sm:$0xff]
    %v3480 = vld [vmem:[#allocation4 + $0x8c] sm:$0xf]
    %v3481 = vld [vmem:[#allocation4 + $0x90] sm:$0xff]
    %v3482 = vld [vmem:[#allocation4 + $0x98] sm:$0xf]
    %v3483 = vld [vmem:[#allocation4 + $0x9c] sm:$0xff]
    %v3484 = vld [vmem:[#allocation4 + $0xa4] sm:$0xf]
    %v3485 = vld [vmem:[#allocation4 + $0xa8] sm:$0xff]
    %v3486 = vld [vmem:[#allocation4 + $0xb0] sm:$0xf]
    %v3487 = vld [vmem:[#allocation4 + $0xb4] sm:$0xff]
    %v3488 = vld [vmem:[#allocation4 + $0xbc] sm:$0xf]
    %v3489 = vld [vmem:[#allocation13] sm:$0xf]
    %v3490 = vld [vmem:[#allocation13 + $0x4] sm:$0xf]
    %v3491 = vld [vmem:[#allocation13 + $0x8] sm:$0xf]
    %v3492 = vld [vmem:[#allocation13 + $0xc] sm:$0xf]
    %v3493 = vld [vmem:[#allocation13 + $0x10] sm:$0xf]
    %v3494 = vld [vmem:[#allocation13 + $0x14] sm:$0xf]
    %v3495 = vld [vmem:[#allocation13 + $0x18] sm:$0xf]
    %v3496 = vld [vmem:[#allocation13 + $0x1c] sm:$0xf]
    %v3497 = vld [vmem:[#allocation13 + $0x20] sm:$0xf]
    %v3498 = vld [vmem:[#allocation13 + $0x24] sm:$0xf]
    %v3499 = vld [vmem:[#allocation13 + $0x28] sm:$0xf]
    %v3500 = vld [vmem:[#allocation13 + $0x2c] sm:$0xf]
    %v3501 = vld [vmem:[#allocation13 + $0x30] sm:$0xf]
    %v3502 = vld [vmem:[#allocation13 + $0x34] sm:$0xf]
    %v3503 = vld [vmem:[#allocation13 + $0x38] sm:$0xf]
    %v3504 = vld [vmem:[#allocation13 + $0x3c] sm:$0xf]
    %v3505 = vld [vmem:[#allocation13 + $0x40] sm:$0xf]
    %v3506 = vld [vmem:[#allocation13 + $0x44] sm:$0xf]
    %v3507 = vld [vmem:[#allocation13 + $0x48] sm:$0xf]
    %v3508 = vld [vmem:[#allocation13 + $0x4c] sm:$0xf]
    %v3509 = vld [vmem:[#allocation13 + $0x50] sm:$0xf]
    %v3510 = vld [vmem:[#allocation13 + $0x54] sm:$0xf]
    %v3511 = vld [vmem:[#allocation13 + $0x58] sm:$0xf]
    %v3512 = vld [vmem:[#allocation13 + $0x5c] sm:$0xf]
    %v3513 = vld [vmem:[#allocation13 + $0x60] sm:$0xf]
    %v3514 = vld [vmem:[#allocation13 + $0x64] sm:$0xf]
    %v3515 = vld [vmem:[#allocation13 + $0x68] sm:$0xf]
    %v3516 = vld [vmem:[#allocation13 + $0x6c] sm:$0xf]
    %v3517 = vld [vmem:[#allocation13 + $0x70] sm:$0xf]
    %v3518 = vld [vmem:[#allocation13 + $0x74] sm:$0xf]
    %v3519 = vld [vmem:[#allocation13 + $0x78] sm:$0xf]
    %v3520 = vld [vmem:[#allocation13 + $0x7c] sm:$0xf]
    %v3521 = vld [vmem:[#allocation13 + $0x80] sm:$0xf]
    %v3522 = vld [vmem:[#allocation13 + $0x84] sm:$0xf]
    %v3523 = vld [vmem:[#allocation13 + $0x88] sm:$0xf]
    %v3524 = vld [vmem:[#allocation13 + $0x8c] sm:$0xf]
    %v3525 = vld [vmem:[%s4] sm:$0x1]
    %v3527 = vlaneseq
    %v3528 = vshrl.u32 %v3527, 7
    %v3529 = vsub.s32 0, %v3528
    %v3530 = vrot.slane %v3525, %v3529
    %v3564 = vunpack.c.l.b16 %v3457
    %v3565 = vunpack.c.h.b16 %v3457
    %v3566 = vunpack.c.l.b16 %v3458
    %v3567 = vunpack.c.l.b16 %v3459
    %v3568 = vunpack.c.h.b16 %v3459
    %v3569 = vunpack.c.l.b16 %v3460
    %v3570 = vunpack.c.l.b16 %v3461
    %v3571 = vunpack.c.h.b16 %v3461
    %v3572 = vunpack.c.l.b16 %v3462
    %v3573 = vunpack.c.l.b16 %v3463
    %v3574 = vunpack.c.h.b16 %v3463
    %v3575 = vunpack.c.l.b16 %v3464
    %v3576 = vunpack.c.l.b16 %v3465
    %v3577 = vunpack.c.h.b16 %v3465
    %v3578 = vunpack.c.l.b16 %v3466
    %v3579 = vunpack.c.l.b16 %v3467
    %v3580 = vunpack.c.h.b16 %v3467
    %v3581 = vunpack.c.l.b16 %v3468
    %v3582 = vunpack.c.l.b16 %v3469
    %v3583 = vunpack.c.h.b16 %v3469
    %v3584 = vunpack.c.l.b16 %v3470
    %v3585 = vunpack.c.l.b16 %v3471
    %v3586 = vunpack.c.h.b16 %v3471
    %v3587 = vunpack.c.l.b16 %v3472
    %v3588 = vunpack.c.l.b16 %v3473
    %v3589 = vunpack.c.h.b16 %v3473
    %v3590 = vunpack.c.l.b16 %v3474
    %v3591 = vunpack.c.l.b16 %v3475
    %v3592 = vunpack.c.h.b16 %v3475
    %v3593 = vunpack.c.l.b16 %v3476
    %v3594 = vunpack.c.l.b16 %v3477
    %v3595 = vunpack.c.h.b16 %v3477
    %v3596 = vunpack.c.l.b16 %v3478
    %v3597 = vunpack.c.l.b16 %v3479
    %v3598 = vunpack.c.h.b16 %v3479
    %v3599 = vunpack.c.l.b16 %v3480
    %v3600 = vunpack.c.l.b16 %v3481
    %v3601 = vunpack.c.h.b16 %v3481
    %v3602 = vunpack.c.l.b16 %v3482
    %v3603 = vunpack.c.l.b16 %v3483
    %v3604 = vunpack.c.h.b16 %v3483
    %v3605 = vunpack.c.l.b16 %v3484
    %v3606 = vunpack.c.l.b16 %v3485
    %v3607 = vunpack.c.h.b16 %v3485
    %v3608 = vunpack.c.l.b16 %v3486
    %v3609 = vunpack.c.l.b16 %v3487
    %v3610 = vunpack.c.h.b16 %v3487
    %v3611 = vunpack.c.l.b16 %v3488
    %v3612 = vpack.c.b16 %v3567, %v3564
    %v3613 = vpack.c.b16 %v3568, %v3565
    %v3614 = vpack.c.b16 %v3569, %v3566
    %v3615 = vpack.c.b16 %v3573, %v3570
    %v3616 = vpack.c.b16 %v3574, %v3571
    %v3617 = vpack.c.b16 %v3575, %v3572
    %v3618 = vpack.c.b16 %v3579, %v3576
    %v3619 = vpack.c.b16 %v3580, %v3577
    %v3620 = vpack.c.b16 %v3581, %v3578
    %v3621 = vpack.c.b16 %v3585, %v3582
    %v3622 = vpack.c.b16 %v3586, %v3583
    %v3623 = vpack.c.b16 %v3587, %v3584
    %v3624 = vpack.c.b16 %v3591, %v3588
    %v3625 = vpack.c.b16 %v3592, %v3589
    %v3626 = vpack.c.b16 %v3593, %v3590
    %v3627 = vpack.c.b16 %v3597, %v3594
    %v3628 = vpack.c.b16 %v3598, %v3595
    %v3629 = vpack.c.b16 %v3599, %v3596
    %v3630 = vpack.c.b16 %v3603, %v3600
    %v3631 = vpack.c.b16 %v3604, %v3601
    %v3632 = vpack.c.b16 %v3605, %v3602
    %v3633 = vpack.c.b16 %v3609, %v3606
    %v3634 = vpack.c.b16 %v3610, %v3607
    %v3635 = vpack.c.b16 %v3611, %v3608
    %v3688 = vunpack.c.l.b16 %v3489
    %v3689 = vunpack.c.l.b16 %v3490
    %v3690 = vunpack.c.l.b16 %v3491
    %v3691 = vunpack.c.l.b16 %v3492
    %v3692 = vunpack.c.l.b16 %v3493
    %v3693 = vunpack.c.l.b16 %v3494
    %v3694 = vunpack.c.l.b16 %v3495
    %v3695 = vunpack.c.l.b16 %v3496
    %v3696 = vunpack.c.l.b16 %v3497
    %v3697 = vunpack.c.l.b16 %v3498
    %v3698 = vunpack.c.l.b16 %v3499
    %v3699 = vunpack.c.l.b16 %v3500
    %v3700 = vunpack.c.l.b16 %v3501
    %v3701 = vunpack.c.l.b16 %v3502
    %v3702 = vunpack.c.l.b16 %v3503
    %v3703 = vunpack.c.l.b16 %v3504
    %v3704 = vunpack.c.l.b16 %v3505
    %v3705 = vunpack.c.l.b16 %v3506
    %v3706 = vunpack.c.l.b16 %v3507
    %v3707 = vunpack.c.l.b16 %v3508
    %v3708 = vunpack.c.l.b16 %v3509
    %v3709 = vunpack.c.l.b16 %v3510
    %v3710 = vunpack.c.l.b16 %v3511
    %v3711 = vunpack.c.l.b16 %v3512
    %v3712 = vunpack.c.l.b16 %v3513
    %v3713 = vunpack.c.l.b16 %v3514
    %v3714 = vunpack.c.l.b16 %v3515
    %v3715 = vunpack.c.l.b16 %v3516
    %v3716 = vunpack.c.l.b16 %v3517
    %v3717 = vunpack.c.l.b16 %v3518
    %v3718 = vunpack.c.l.b16 %v3519
    %v3719 = vunpack.c.l.b16 %v3520
    %v3720 = vunpack.c.l.b16 %v3521
    %v3721 = vunpack.c.l.b16 %v3522
    %v3722 = vunpack.c.l.b16 %v3523
    %v3723 = vunpack.c.l.b16 %v3524
    %v3724 = vpack.c.b16 %v3689, %v3688
    %v3725 = vpack.c.b16 %v3691, %v3690
    %v3726 = vpack.c.b16 %v3693, %v3692
    %v3727 = vpack.c.b16 %v3695, %v3694
    %v3728 = vpack.c.b16 %v3697, %v3696
    %v3729 = vpack.c.b16 %v3699, %v3698
    %v3730 = vpack.c.b16 %v3701, %v3700
    %v3731 = vpack.c.b16 %v3703, %v3702
    %v3732 = vpack.c.b16 %v3705, %v3704
    %v3733 = vpack.c.b16 %v3707, %v3706
    %v3734 = vpack.c.b16 %v3709, %v3708
    %v3735 = vpack.c.b16 %v3711, %v3710
    %v3736 = vpack.c.b16 %v3713, %v3712
    %v3737 = vpack.c.b16 %v3715, %v3714
    %v3738 = vpack.c.b16 %v3717, %v3716
    %v3739 = vpack.c.b16 %v3719, %v3718
    %v3740 = vpack.c.b16 %v3721, %v3720
    %v3741 = vpack.c.b16 %v3723, %v3722
    %vm3760 = vcmask 261120
    %v3762 = vsel %vm3760, %v3614, 0
    %v3765 = vsel %vm3760, %v3617, 0
    %v3768 = vsel %vm3760, %v3620, 0
    %v3771 = vsel %vm3760, %v3623, 0
    %v3774 = vsel %vm3760, %v3626, 0
    %v3777 = vsel %vm3760, %v3629, 0
    %v3780 = vsel %vm3760, %v3632, 0
    %v3783 = vsel %vm3760, %v3635, 0
    %3785 = vmatprep.subr.bf16.mxu0 0
    %3786 = vmatpush1.bf16.msra.mxu0 %v3731
    %3787 = vmatprep.subr.bf16.mxu0 0
    %3788 = vmatpush1.bf16.msra.mxu0 %v3730
    %3789 = vmatprep.subr.bf16.mxu0 0
    %3790 = vmatpush1.bf16.msra.mxu0 %v3729
    %3791 = vmatprep.subr.bf16.mxu0 0
    %3792 = vmatpush1.bf16.msra.mxu0 %v3728
    %3793 = vmatprep.subr.bf16.mxu0 0
    %3794 = vmatpush1.bf16.msra.mxu0 %v3727
    %3795 = vmatprep.subr.bf16.mxu0 0
    %3796 = vmatpush1.bf16.msra.mxu0 %v3726
    %3797 = vmatprep.subr.bf16.mxu0 0
    %3798 = vmatpush1.bf16.msra.mxu0 %v3725
    %3799 = vmatprep.subr.bf16.mxu0 0
    %3800 = vmatpush1.bf16.msra.mxu0 %v3724
    %3801 = vmatprep.subr.bf16.mxu0 0
    %3802 = vmatpush2.bf16.msra.mxu0 %v3739
    %3803 = vmatprep.subr.bf16.mxu0 0
    %3804 = vmatpush2.bf16.msra.mxu0 %v3738
    %3805 = vmatprep.subr.bf16.mxu0 0
    %3806 = vmatpush2.bf16.msra.mxu0 %v3737
    %3807 = vmatprep.subr.bf16.mxu0 0
    %3808 = vmatpush2.bf16.msra.mxu0 %v3736
    %3809 = vmatprep.subr.bf16.mxu0 0
    %3810 = vmatpush2.bf16.msra.mxu0 %v3735
    %3811 = vmatprep.subr.bf16.mxu0 0
    %3812 = vmatpush2.bf16.msra.mxu0 %v3734
    %3813 = vmatprep.subr.bf16.mxu0 0
    %3814 = vmatpush2.bf16.msra.mxu0 %v3733
    %3815 = vmatprep.subr.bf16.mxu0 0
    %3816 = vmatpush2.bf16.msra.mxu0 %v3732
    %3817 = vmatprep.mubr.bf16.mxu0 %v3613
    %3818 = vmatmul.mubr.bf16.gmra.mxu0 %v3612
    %v3819 = vpop.f32.mrf.mxu0
    %v3820 = vadd.f32 %v3530, %v3819
    %v3821 = vpop.f32.mrf.mxu0
    %v3822 = vpop.f32.mrf.mxu0
    %v3823 = vadd.f32 %v3530, %v3822
    %v3824 = vpop.f32.mrf.mxu0
    %3825 = vmatprep.mubr.bf16.mxu0 %v3616
    %3826 = vmatmul.mubr.bf16.gmra.mxu0 %v3615
    %v3827 = vpop.f32.mrf.mxu0
    %v3828 = vadd.f32 %v3530, %v3827
    %v3829 = vpop.f32.mrf.mxu0
    %v3830 = vpop.f32.mrf.mxu0
    %v3831 = vadd.f32 %v3530, %v3830
    %v3832 = vpop.f32.mrf.mxu0
    %3833 = vmatprep.mubr.bf16.mxu0 %v3619
    %3834 = vmatmul.mubr.bf16.gmra.mxu0 %v3618
    %v3835 = vpop.f32.mrf.mxu0
    %v3836 = vadd.f32 %v3530, %v3835
    %v3837 = vpop.f32.mrf.mxu0
    %v3838 = vpop.f32.mrf.mxu0
    %v3839 = vadd.f32 %v3530, %v3838
    %v3840 = vpop.f32.mrf.mxu0
    %3841 = vmatprep.mubr.bf16.mxu0 %v3622
    %3842 = vmatmul.mubr.bf16.gmra.mxu0 %v3621
    %v3843 = vpop.f32.mrf.mxu0
    %v3844 = vadd.f32 %v3530, %v3843
    %v3845 = vpop.f32.mrf.mxu0
    %v3846 = vpop.f32.mrf.mxu0
    %v3847 = vadd.f32 %v3530, %v3846
    %v3848 = vpop.f32.mrf.mxu0
    %3849 = vmatprep.mubr.bf16.mxu0 %v3625
    %3850 = vmatmul.mubr.bf16.gmra.mxu0 %v3624
    %v3851 = vpop.f32.mrf.mxu0
    %v3852 = vadd.f32 %v3530, %v3851
    %v3853 = vpop.f32.mrf.mxu0
    %v3854 = vpop.f32.mrf.mxu0
    %v3855 = vadd.f32 %v3530, %v3854
    %v3856 = vpop.f32.mrf.mxu0
    %3857 = vmatprep.mubr.bf16.mxu0 %v3628
    %3858 = vmatmul.mubr.bf16.gmra.mxu0 %v3627
    %v3859 = vpop.f32.mrf.mxu0
    %v3860 = vadd.f32 %v3530, %v3859
    %v3861 = vpop.f32.mrf.mxu0
    %v3862 = vpop.f32.mrf.mxu0
    %v3863 = vadd.f32 %v3530, %v3862
    %v3864 = vpop.f32.mrf.mxu0
    %3865 = vmatprep.mubr.bf16.mxu0 %v3631
    %3866 = vmatmul.mubr.bf16.gmra.mxu0 %v3630
    %v3867 = vpop.f32.mrf.mxu0
    %v3868 = vadd.f32 %v3530, %v3867
    %v3869 = vpop.f32.mrf.mxu0
    %v3870 = vpop.f32.mrf.mxu0
    %v3871 = vadd.f32 %v3530, %v3870
    %v3872 = vpop.f32.mrf.mxu0
    %3873 = vmatprep.mubr.bf16.mxu0 %v3634
    %3874 = vmatmul.mubr.bf16.gmra.mxu0 %v3633
    %v3875 = vpop.f32.mrf.mxu0
    %v3876 = vadd.f32 %v3530, %v3875
    %v3877 = vpop.f32.mrf.mxu0
    %v3878 = vpop.f32.mrf.mxu0
    %v3879 = vadd.f32 %v3530, %v3878
    %v3880 = vpop.f32.mrf.mxu0
    %3881 = vdwg.mxu0
    %3882 = vmatprep.subr.bf16.mxu0 0
    %3883 = vmatpush1.bf16.msra.mxu0 0
    %3884 = vmatprep.subr.bf16.mxu0 0
    %3885 = vmatpush1.bf16.msra.mxu0 0
    %3886 = vmatprep.subr.bf16.mxu0 0
    %3887 = vmatpush1.bf16.msra.mxu0 0
    %3888 = vmatprep.subr.bf16.mxu0 0
    %3889 = vmatpush1.bf16.msra.mxu0 0
    %3890 = vmatprep.subr.bf16.mxu0 0
    %3891 = vmatpush1.bf16.msra.mxu0 0
    %3892 = vmatprep.subr.bf16.mxu0 0
    %3893 = vmatpush1.bf16.msra.mxu0 0
    %3894 = vmatprep.subr.bf16.mxu0 0
    %3895 = vmatpush1.bf16.msra.mxu0 %v3741
    %3896 = vmatprep.subr.bf16.mxu0 0
    %3897 = vmatpush1.bf16.msra.mxu0 %v3740
    %3898 = vmatprep.subr.bf16.mxu0 0
    %3899 = vmatpush2.bf16.msra.mxu0 0
    %3900 = vmatprep.subr.bf16.mxu0 0
    %3901 = vmatpush2.bf16.msra.mxu0 0
    %3902 = vmatprep.subr.bf16.mxu0 0
    %3903 = vmatpush2.bf16.msra.mxu0 0
    %3904 = vmatprep.subr.bf16.mxu0 0
    %3905 = vmatpush2.bf16.msra.mxu0 0
    %3906 = vmatprep.subr.bf16.mxu0 0
    %3907 = vmatpush2.bf16.msra.mxu0 0
    %3908 = vmatprep.subr.bf16.mxu0 0
    %3909 = vmatpush2.bf16.msra.mxu0 0
    %3910 = vmatprep.subr.bf16.mxu0 0
    %3911 = vmatpush2.bf16.msra.mxu0 0
    %3912 = vmatprep.subr.bf16.mxu0 0
    %3913 = vmatpush2.bf16.msra.mxu0 0
    %3914 = vmatprep.mubr.bf16.mxu0 0
    %3915 = vmatmul.mubr.bf16.gmra.mxu0 %v3762
    %v3916 = vpop.f32.mrf.mxu0
    %v3917 = vadd.f32 %v3820, %v3916
    %v3918 = vpop.f32.mrf.mxu0
    %v3919 = vpop.f32.mrf.mxu0
    %v3920 = vadd.f32 %v3823, %v3919
    %v3921 = vpop.f32.mrf.mxu0
    %3922 = vmatprep.mubr.bf16.mxu0 0
    %3923 = vmatmul.mubr.bf16.gmra.mxu0 %v3765
    %v3924 = vpop.f32.mrf.mxu0
    %v3925 = vadd.f32 %v3828, %v3924
    %v3926 = vpop.f32.mrf.mxu0
    %v3927 = vpop.f32.mrf.mxu0
    %v3928 = vadd.f32 %v3831, %v3927
    %v3929 = vpop.f32.mrf.mxu0
    %3930 = vmatprep.mubr.bf16.mxu0 0
    %3931 = vmatmul.mubr.bf16.gmra.mxu0 %v3768
    %v3932 = vpop.f32.mrf.mxu0
    %v3933 = vadd.f32 %v3836, %v3932
    %v3934 = vpop.f32.mrf.mxu0
    %v3935 = vpop.f32.mrf.mxu0
    %v3936 = vadd.f32 %v3839, %v3935
    %v3937 = vpop.f32.mrf.mxu0
    %3938 = vmatprep.mubr.bf16.mxu0 0
    %3939 = vmatmul.mubr.bf16.gmra.mxu0 %v3771
    %v3940 = vpop.f32.mrf.mxu0
    %v3941 = vadd.f32 %v3844, %v3940
    %v3942 = vpop.f32.mrf.mxu0
    %v3943 = vpop.f32.mrf.mxu0
    %v3944 = vadd.f32 %v3847, %v3943
    %v3945 = vpop.f32.mrf.mxu0
    %3946 = vmatprep.mubr.bf16.mxu0 0
    %3947 = vmatmul.mubr.bf16.gmra.mxu0 %v3774
    %v3948 = vpop.f32.mrf.mxu0
    %v3949 = vadd.f32 %v3852, %v3948
    %v3950 = vpop.f32.mrf.mxu0
    %v3951 = vpop.f32.mrf.mxu0
    %v3952 = vadd.f32 %v3855, %v3951
    %v3953 = vpop.f32.mrf.mxu0
    %3954 = vmatprep.mubr.bf16.mxu0 0
    %3955 = vmatmul.mubr.bf16.gmra.mxu0 %v3777
    %v3956 = vpop.f32.mrf.mxu0
    %v3957 = vadd.f32 %v3860, %v3956
    %v3958 = vpop.f32.mrf.mxu0
    %v3959 = vpop.f32.mrf.mxu0
    %v3960 = vadd.f32 %v3863, %v3959
    %v3961 = vpop.f32.mrf.mxu0
    %3962 = vmatprep.mubr.bf16.mxu0 0
    %3963 = vmatmul.mubr.bf16.gmra.mxu0 %v3780
    %v3964 = vpop.f32.mrf.mxu0
    %v3965 = vadd.f32 %v3868, %v3964
    %v3966 = vpop.f32.mrf.mxu0
    %v3967 = vpop.f32.mrf.mxu0
    %v3968 = vadd.f32 %v3871, %v3967
    %v3969 = vpop.f32.mrf.mxu0
    %3970 = vmatprep.mubr.bf16.mxu0 0
    %3971 = vmatmul.mubr.bf16.gmra.mxu0 %v3783
    %v3972 = vpop.f32.mrf.mxu0
    %v3973 = vadd.f32 %v3876, %v3972
    %v3974 = vpop.f32.mrf.mxu0
    %v3975 = vpop.f32.mrf.mxu0
    %v3976 = vadd.f32 %v3879, %v3975
    %v3977 = vpop.f32.mrf.mxu0
    %3978 = vdwg.mxu0
    %v3979 = vmax.f32 %v3917, 0.0
    %v3980 = vmax.f32 %v3920, 0.0
    %v3981 = vmax.f32 %v3925, 0.0
    %v3982 = vmax.f32 %v3928, 0.0
    %v3983 = vmax.f32 %v3933, 0.0
    %v3984 = vmax.f32 %v3936, 0.0
    %v3985 = vmax.f32 %v3941, 0.0
    %v3986 = vmax.f32 %v3944, 0.0
    %v3987 = vmax.f32 %v3949, 0.0
    %v3988 = vmax.f32 %v3952, 0.0
    %v3989 = vmax.f32 %v3957, 0.0
    %v3990 = vmax.f32 %v3960, 0.0
    %v3991 = vmax.f32 %v3965, 0.0
    %v3992 = vmax.f32 %v3968, 0.0
    %v3993 = vmax.f32 %v3973, 0.0
    %v3994 = vmax.f32 %v3976, 0.0
    %v3995 = vpack.c.bf16 %v3980, %v3979
    %v3996 = vpack.c.bf16 %v3982, %v3981
    %v3997 = vpack.c.bf16 %v3984, %v3983
    %v3998 = vpack.c.bf16 %v3986, %v3985
    %v3999 = vpack.c.bf16 %v3988, %v3987
    %v4000 = vpack.c.bf16 %v3990, %v3989
    %v4001 = vpack.c.bf16 %v3992, %v3991
    %v4002 = vpack.c.bf16 %v3994, %v3993
    %v4011 = vunpack.c.l.b16 %v3995
    %v4012 = vunpack.c.h.b16 %v3995
    %v4013 = vunpack.c.l.b16 %v3996
    %v4014 = vunpack.c.h.b16 %v3996
    %v4015 = vunpack.c.l.b16 %v3997
    %v4016 = vunpack.c.h.b16 %v3997
    %v4017 = vunpack.c.l.b16 %v3998
    %v4018 = vunpack.c.h.b16 %v3998
    %v4019 = vunpack.c.l.b16 %v3999
    %v4020 = vunpack.c.h.b16 %v3999
    %v4021 = vunpack.c.l.b16 %v4000
    %v4022 = vunpack.c.h.b16 %v4000
    %v4023 = vunpack.c.l.b16 %v4001
    %v4024 = vunpack.c.h.b16 %v4001
    %v4025 = vunpack.c.l.b16 %v4002
    %v4026 = vunpack.c.h.b16 %v4002
    %v4027 = vpack.c.b16 %v4011, %v4011
    %v4028 = vpack.c.b16 %v4012, %v4012
    %v4029 = vpack.c.b16 %v4013, %v4013
    %v4030 = vpack.c.b16 %v4014, %v4014
    %v4031 = vpack.c.b16 %v4015, %v4015
    %v4032 = vpack.c.b16 %v4016, %v4016
    %v4033 = vpack.c.b16 %v4017, %v4017
    %v4034 = vpack.c.b16 %v4018, %v4018
    %v4035 = vpack.c.b16 %v4019, %v4019
    %v4036 = vpack.c.b16 %v4020, %v4020
    %v4037 = vpack.c.b16 %v4021, %v4021
    %v4038 = vpack.c.b16 %v4022, %v4022
    %v4039 = vpack.c.b16 %v4023, %v4023
    %v4040 = vpack.c.b16 %v4024, %v4024
    %v4041 = vpack.c.b16 %v4025, %v4025
    %v4042 = vpack.c.b16 %v4026, %v4026
    %4043 = vrot.lane.b32.xlu0 %v4027, 32
    %v4044 = vpop.permute.xlu0 %4043
    %4045 = vrot.lane.b32.xlu0 %v4028, 32
    %v4046 = vpop.permute.xlu0 %4045
    %4047 = vrot.lane.b32.xlu0 %v4029, 32
    %v4048 = vpop.permute.xlu0 %4047
    %4049 = vrot.lane.b32.xlu0 %v4030, 32
    %v4050 = vpop.permute.xlu0 %4049
    %4051 = vrot.lane.b32.xlu0 %v4031, 32
    %v4052 = vpop.permute.xlu0 %4051
    %4053 = vrot.lane.b32.xlu0 %v4032, 32
    %v4054 = vpop.permute.xlu0 %4053
    %4055 = vrot.lane.b32.xlu0 %v4033, 32
    %v4056 = vpop.permute.xlu0 %4055
    %4057 = vrot.lane.b32.xlu0 %v4034, 32
    %v4058 = vpop.permute.xlu0 %4057
    %4059 = vrot.lane.b32.xlu0 %v4035, 32
    %v4060 = vpop.permute.xlu0 %4059
    %4061 = vrot.lane.b32.xlu0 %v4036, 32
    %v4062 = vpop.permute.xlu0 %4061
    %4063 = vrot.lane.b32.xlu0 %v4037, 32
    %v4064 = vpop.permute.xlu0 %4063
    %4065 = vrot.lane.b32.xlu0 %v4038, 32
    %v4066 = vpop.permute.xlu0 %4065
    %4067 = vrot.lane.b32.xlu0 %v4039, 32
    %v4068 = vpop.permute.xlu0 %4067
    %4069 = vrot.lane.b32.xlu0 %v4040, 32
    %v4070 = vpop.permute.xlu0 %4069
    %4071 = vrot.lane.b32.xlu0 %v4041, 32
    %v4072 = vpop.permute.xlu0 %4071
    %4073 = vrot.lane.b32.xlu0 %v4042, 32
    %v4074 = vpop.permute.xlu0 %4073
    %4091 = vst.msk [vmem:[#allocation7] sm:$0xf] %vm1658, %v4044
    %4092 = vst.msk [vmem:[#allocation7 + $0x4] sm:$0xf] %vm1658, %v4046
    %4093 = vst.msk [vmem:[#allocation7 + $0x8] sm:$0xf] %vm1658, %v4048
    %4094 = vst.msk [vmem:[#allocation7 + $0xc] sm:$0xf] %vm1658, %v4050
    %4095 = vst.msk [vmem:[#allocation7 + $0x10] sm:$0xf] %vm1658, %v4052
    %4096 = vst.msk [vmem:[#allocation7 + $0x14] sm:$0xf] %vm1658, %v4054
    %4097 = vst.msk [vmem:[#allocation7 + $0x18] sm:$0xf] %vm1658, %v4056
    %4098 = vst.msk [vmem:[#allocation7 + $0x1c] sm:$0xf] %vm1658, %v4058
    %4099 = vst.msk [vmem:[#allocation7 + $0x20] sm:$0xf] %vm1658, %v4060
    %4100 = vst.msk [vmem:[#allocation7 + $0x24] sm:$0xf] %vm1658, %v4062
    %4101 = vst.msk [vmem:[#allocation7 + $0x28] sm:$0xf] %vm1658, %v4064
    %4102 = vst.msk [vmem:[#allocation7 + $0x2c] sm:$0xf] %vm1658, %v4066
    %4103 = vst.msk [vmem:[#allocation7 + $0x30] sm:$0xf] %vm1658, %v4068
    %4104 = vst.msk [vmem:[#allocation7 + $0x34] sm:$0xf] %vm1658, %v4070
    %4105 = vst.msk [vmem:[#allocation7 + $0x38] sm:$0xf] %vm1658, %v4072
    %4106 = vst.msk [vmem:[#allocation7 + $0x3c] sm:$0xf] %vm1658, %v4074
    %v4107 = vld [vmem:[#allocation5] sm:$0xff]
    %v4108 = vld [vmem:[#allocation5 + $0x8] sm:$0xf]
    %v4109 = vld [vmem:[#allocation5 + $0xc] sm:$0xff]
    %v4110 = vld [vmem:[#allocation5 + $0x14] sm:$0xf]
    %v4111 = vld [vmem:[#allocation5 + $0x18] sm:$0xff]
    %v4112 = vld [vmem:[#allocation5 + $0x20] sm:$0xf]
    %v4113 = vld [vmem:[#allocation5 + $0x24] sm:$0xff]
    %v4114 = vld [vmem:[#allocation5 + $0x2c] sm:$0xf]
    %v4115 = vld [vmem:[#allocation5 + $0x30] sm:$0xff]
    %v4116 = vld [vmem:[#allocation5 + $0x38] sm:$0xf]
    %v4117 = vld [vmem:[#allocation5 + $0x3c] sm:$0xff]
    %v4118 = vld [vmem:[#allocation5 + $0x44] sm:$0xf]
    %v4119 = vld [vmem:[#allocation5 + $0x48] sm:$0xff]
    %v4120 = vld [vmem:[#allocation5 + $0x50] sm:$0xf]
    %v4121 = vld [vmem:[#allocation5 + $0x54] sm:$0xff]
    %v4122 = vld [vmem:[#allocation5 + $0x5c] sm:$0xf]
    %v4123 = vld [vmem:[#allocation5 + $0x60] sm:$0xff]
    %v4124 = vld [vmem:[#allocation5 + $0x68] sm:$0xf]
    %v4125 = vld [vmem:[#allocation5 + $0x6c] sm:$0xff]
    %v4126 = vld [vmem:[#allocation5 + $0x74] sm:$0xf]
    %v4127 = vld [vmem:[#allocation5 + $0x78] sm:$0xff]
    %v4128 = vld [vmem:[#allocation5 + $0x80] sm:$0xf]
    %v4129 = vld [vmem:[#allocation5 + $0x84] sm:$0xff]
    %v4130 = vld [vmem:[#allocation5 + $0x8c] sm:$0xf]
    %v4131 = vld [vmem:[#allocation5 + $0x90] sm:$0xff]
    %v4132 = vld [vmem:[#allocation5 + $0x98] sm:$0xf]
    %v4133 = vld [vmem:[#allocation5 + $0x9c] sm:$0xff]
    %v4134 = vld [vmem:[#allocation5 + $0xa4] sm:$0xf]
    %v4135 = vld [vmem:[#allocation5 + $0xa8] sm:$0xff]
    %v4136 = vld [vmem:[#allocation5 + $0xb0] sm:$0xf]
    %v4137 = vld [vmem:[#allocation5 + $0xb4] sm:$0xff]
    %v4138 = vld [vmem:[#allocation5 + $0xbc] sm:$0xf]
    %v4139 = vld [vmem:[#allocation14] sm:$0xf]
    %v4140 = vld [vmem:[#allocation14 + $0x4] sm:$0xf]
    %v4141 = vld [vmem:[#allocation14 + $0x8] sm:$0xf]
    %v4142 = vld [vmem:[#allocation14 + $0xc] sm:$0xf]
    %v4143 = vld [vmem:[#allocation14 + $0x10] sm:$0xf]
    %v4144 = vld [vmem:[#allocation14 + $0x14] sm:$0xf]
    %v4145 = vld [vmem:[#allocation14 + $0x18] sm:$0xf]
    %v4146 = vld [vmem:[#allocation14 + $0x1c] sm:$0xf]
    %v4147 = vld [vmem:[#allocation14 + $0x20] sm:$0xf]
    %v4148 = vld [vmem:[#allocation14 + $0x24] sm:$0xf]
    %v4149 = vld [vmem:[#allocation14 + $0x28] sm:$0xf]
    %v4150 = vld [vmem:[#allocation14 + $0x2c] sm:$0xf]
    %v4151 = vld [vmem:[#allocation14 + $0x30] sm:$0xf]
    %v4152 = vld [vmem:[#allocation14 + $0x34] sm:$0xf]
    %v4153 = vld [vmem:[#allocation14 + $0x38] sm:$0xf]
    %v4154 = vld [vmem:[#allocation14 + $0x3c] sm:$0xf]
    %v4155 = vld [vmem:[#allocation14 + $0x40] sm:$0xf]
    %v4156 = vld [vmem:[#allocation14 + $0x44] sm:$0xf]
    %v4157 = vld [vmem:[#allocation14 + $0x48] sm:$0xf]
    %v4158 = vld [vmem:[#allocation14 + $0x4c] sm:$0xf]
    %v4159 = vld [vmem:[#allocation14 + $0x50] sm:$0xf]
    %v4160 = vld [vmem:[#allocation14 + $0x54] sm:$0xf]
    %v4161 = vld [vmem:[#allocation14 + $0x58] sm:$0xf]
    %v4162 = vld [vmem:[#allocation14 + $0x5c] sm:$0xf]
    %v4163 = vld [vmem:[#allocation14 + $0x60] sm:$0xf]
    %v4164 = vld [vmem:[#allocation14 + $0x64] sm:$0xf]
    %v4165 = vld [vmem:[#allocation14 + $0x68] sm:$0xf]
    %v4166 = vld [vmem:[#allocation14 + $0x6c] sm:$0xf]
    %v4167 = vld [vmem:[#allocation14 + $0x70] sm:$0xf]
    %v4168 = vld [vmem:[#allocation14 + $0x74] sm:$0xf]
    %v4169 = vld [vmem:[#allocation14 + $0x78] sm:$0xf]
    %v4170 = vld [vmem:[#allocation14 + $0x7c] sm:$0xf]
    %v4171 = vld [vmem:[#allocation14 + $0x80] sm:$0xf]
    %v4172 = vld [vmem:[#allocation14 + $0x84] sm:$0xf]
    %v4173 = vld [vmem:[#allocation14 + $0x88] sm:$0xf]
    %v4174 = vld [vmem:[#allocation14 + $0x8c] sm:$0xf]
    %v4175 = vld [vmem:[%s6] sm:$0x1]
    %v4177 = vlaneseq
    %v4178 = vshrl.u32 %v4177, 7
    %v4179 = vsub.s32 0, %v4178
    %v4180 = vrot.slane %v4175, %v4179
    %v4214 = vunpack.c.l.b16 %v4107
    %v4215 = vunpack.c.h.b16 %v4107
    %v4216 = vunpack.c.l.b16 %v4108
    %v4217 = vunpack.c.l.b16 %v4109
    %v4218 = vunpack.c.h.b16 %v4109
    %v4219 = vunpack.c.l.b16 %v4110
    %v4220 = vunpack.c.l.b16 %v4111
    %v4221 = vunpack.c.h.b16 %v4111
    %v4222 = vunpack.c.l.b16 %v4112
    %v4223 = vunpack.c.l.b16 %v4113
    %v4224 = vunpack.c.h.b16 %v4113
    %v4225 = vunpack.c.l.b16 %v4114
    %v4226 = vunpack.c.l.b16 %v4115
    %v4227 = vunpack.c.h.b16 %v4115
    %v4228 = vunpack.c.l.b16 %v4116
    %v4229 = vunpack.c.l.b16 %v4117
    %v4230 = vunpack.c.h.b16 %v4117
    %v4231 = vunpack.c.l.b16 %v4118
    %v4232 = vunpack.c.l.b16 %v4119
    %v4233 = vunpack.c.h.b16 %v4119
    %v4234 = vunpack.c.l.b16 %v4120
    %v4235 = vunpack.c.l.b16 %v4121
    %v4236 = vunpack.c.h.b16 %v4121
    %v4237 = vunpack.c.l.b16 %v4122
    %v4238 = vunpack.c.l.b16 %v4123
    %v4239 = vunpack.c.h.b16 %v4123
    %v4240 = vunpack.c.l.b16 %v4124
    %v4241 = vunpack.c.l.b16 %v4125
    %v4242 = vunpack.c.h.b16 %v4125
    %v4243 = vunpack.c.l.b16 %v4126
    %v4244 = vunpack.c.l.b16 %v4127
    %v4245 = vunpack.c.h.b16 %v4127
    %v4246 = vunpack.c.l.b16 %v4128
    %v4247 = vunpack.c.l.b16 %v4129
    %v4248 = vunpack.c.h.b16 %v4129
    %v4249 = vunpack.c.l.b16 %v4130
    %v4250 = vunpack.c.l.b16 %v4131
    %v4251 = vunpack.c.h.b16 %v4131
    %v4252 = vunpack.c.l.b16 %v4132
    %v4253 = vunpack.c.l.b16 %v4133
    %v4254 = vunpack.c.h.b16 %v4133
    %v4255 = vunpack.c.l.b16 %v4134
    %v4256 = vunpack.c.l.b16 %v4135
    %v4257 = vunpack.c.h.b16 %v4135
    %v4258 = vunpack.c.l.b16 %v4136
    %v4259 = vunpack.c.l.b16 %v4137
    %v4260 = vunpack.c.h.b16 %v4137
    %v4261 = vunpack.c.l.b16 %v4138
    %v4262 = vpack.c.b16 %v4217, %v4214
    %v4263 = vpack.c.b16 %v4218, %v4215
    %v4264 = vpack.c.b16 %v4219, %v4216
    %v4265 = vpack.c.b16 %v4223, %v4220
    %v4266 = vpack.c.b16 %v4224, %v4221
    %v4267 = vpack.c.b16 %v4225, %v4222
    %v4268 = vpack.c.b16 %v4229, %v4226
    %v4269 = vpack.c.b16 %v4230, %v4227
    %v4270 = vpack.c.b16 %v4231, %v4228
    %v4271 = vpack.c.b16 %v4235, %v4232
    %v4272 = vpack.c.b16 %v4236, %v4233
    %v4273 = vpack.c.b16 %v4237, %v4234
    %v4274 = vpack.c.b16 %v4241, %v4238
    %v4275 = vpack.c.b16 %v4242, %v4239
    %v4276 = vpack.c.b16 %v4243, %v4240
    %v4277 = vpack.c.b16 %v4247, %v4244
    %v4278 = vpack.c.b16 %v4248, %v4245
    %v4279 = vpack.c.b16 %v4249, %v4246
    %v4280 = vpack.c.b16 %v4253, %v4250
    %v4281 = vpack.c.b16 %v4254, %v4251
    %v4282 = vpack.c.b16 %v4255, %v4252
    %v4283 = vpack.c.b16 %v4259, %v4256
    %v4284 = vpack.c.b16 %v4260, %v4257
    %v4285 = vpack.c.b16 %v4261, %v4258
    %v4338 = vunpack.c.l.b16 %v4139
    %v4339 = vunpack.c.l.b16 %v4140
    %v4340 = vunpack.c.l.b16 %v4141
    %v4341 = vunpack.c.l.b16 %v4142
    %v4342 = vunpack.c.l.b16 %v4143
    %v4343 = vunpack.c.l.b16 %v4144
    %v4344 = vunpack.c.l.b16 %v4145
    %v4345 = vunpack.c.l.b16 %v4146
    %v4346 = vunpack.c.l.b16 %v4147
    %v4347 = vunpack.c.l.b16 %v4148
    %v4348 = vunpack.c.l.b16 %v4149
    %v4349 = vunpack.c.l.b16 %v4150
    %v4350 = vunpack.c.l.b16 %v4151
    %v4351 = vunpack.c.l.b16 %v4152
    %v4352 = vunpack.c.l.b16 %v4153
    %v4353 = vunpack.c.l.b16 %v4154
    %v4354 = vunpack.c.l.b16 %v4155
    %v4355 = vunpack.c.l.b16 %v4156
    %v4356 = vunpack.c.l.b16 %v4157
    %v4357 = vunpack.c.l.b16 %v4158
    %v4358 = vunpack.c.l.b16 %v4159
    %v4359 = vunpack.c.l.b16 %v4160
    %v4360 = vunpack.c.l.b16 %v4161
    %v4361 = vunpack.c.l.b16 %v4162
    %v4362 = vunpack.c.l.b16 %v4163
    %v4363 = vunpack.c.l.b16 %v4164
    %v4364 = vunpack.c.l.b16 %v4165
    %v4365 = vunpack.c.l.b16 %v4166
    %v4366 = vunpack.c.l.b16 %v4167
    %v4367 = vunpack.c.l.b16 %v4168
    %v4368 = vunpack.c.l.b16 %v4169
    %v4369 = vunpack.c.l.b16 %v4170
    %v4370 = vunpack.c.l.b16 %v4171
    %v4371 = vunpack.c.l.b16 %v4172
    %v4372 = vunpack.c.l.b16 %v4173
    %v4373 = vunpack.c.l.b16 %v4174
    %v4374 = vpack.c.b16 %v4339, %v4338
    %v4375 = vpack.c.b16 %v4341, %v4340
    %v4376 = vpack.c.b16 %v4343, %v4342
    %v4377 = vpack.c.b16 %v4345, %v4344
    %v4378 = vpack.c.b16 %v4347, %v4346
    %v4379 = vpack.c.b16 %v4349, %v4348
    %v4380 = vpack.c.b16 %v4351, %v4350
    %v4381 = vpack.c.b16 %v4353, %v4352
    %v4382 = vpack.c.b16 %v4355, %v4354
    %v4383 = vpack.c.b16 %v4357, %v4356
    %v4384 = vpack.c.b16 %v4359, %v4358
    %v4385 = vpack.c.b16 %v4361, %v4360
    %v4386 = vpack.c.b16 %v4363, %v4362
    %v4387 = vpack.c.b16 %v4365, %v4364
    %v4388 = vpack.c.b16 %v4367, %v4366
    %v4389 = vpack.c.b16 %v4369, %v4368
    %v4390 = vpack.c.b16 %v4371, %v4370
    %v4391 = vpack.c.b16 %v4373, %v4372
    %v4411 = vsel %vm3760, %v4264, 0
    %v4414 = vsel %vm3760, %v4267, 0
    %v4417 = vsel %vm3760, %v4270, 0
    %v4420 = vsel %vm3760, %v4273, 0
    %v4423 = vsel %vm3760, %v4276, 0
    %v4426 = vsel %vm3760, %v4279, 0
    %v4429 = vsel %vm3760, %v4282, 0
    %v4432 = vsel %vm3760, %v4285, 0
    %4434 = vmatprep.subr.bf16.mxu0 0
    %4435 = vmatpush1.bf16.msra.mxu0 %v4381
    %4436 = vmatprep.subr.bf16.mxu0 0
    %4437 = vmatpush1.bf16.msra.mxu0 %v4380
    %4438 = vmatprep.subr.bf16.mxu0 0
    %4439 = vmatpush1.bf16.msra.mxu0 %v4379
    %4440 = vmatprep.subr.bf16.mxu0 0
    %4441 = vmatpush1.bf16.msra.mxu0 %v4378
    %4442 = vmatprep.subr.bf16.mxu0 0
    %4443 = vmatpush1.bf16.msra.mxu0 %v4377
    %4444 = vmatprep.subr.bf16.mxu0 0
    %4445 = vmatpush1.bf16.msra.mxu0 %v4376
    %4446 = vmatprep.subr.bf16.mxu0 0
    %4447 = vmatpush1.bf16.msra.mxu0 %v4375
    %4448 = vmatprep.subr.bf16.mxu0 0
    %4449 = vmatpush1.bf16.msra.mxu0 %v4374
    %4450 = vmatprep.subr.bf16.mxu0 0
    %4451 = vmatpush2.bf16.msra.mxu0 %v4389
    %4452 = vmatprep.subr.bf16.mxu0 0
    %4453 = vmatpush2.bf16.msra.mxu0 %v4388
    %4454 = vmatprep.subr.bf16.mxu0 0
    %4455 = vmatpush2.bf16.msra.mxu0 %v4387
    %4456 = vmatprep.subr.bf16.mxu0 0
    %4457 = vmatpush2.bf16.msra.mxu0 %v4386
    %4458 = vmatprep.subr.bf16.mxu0 0
    %4459 = vmatpush2.bf16.msra.mxu0 %v4385
    %4460 = vmatprep.subr.bf16.mxu0 0
    %4461 = vmatpush2.bf16.msra.mxu0 %v4384
    %4462 = vmatprep.subr.bf16.mxu0 0
    %4463 = vmatpush2.bf16.msra.mxu0 %v4383
    %4464 = vmatprep.subr.bf16.mxu0 0
    %4465 = vmatpush2.bf16.msra.mxu0 %v4382
    %4466 = vmatprep.mubr.bf16.mxu0 %v4263
    %4467 = vmatmul.mubr.bf16.gmra.mxu0 %v4262
    %v4468 = vpop.f32.mrf.mxu0
    %v4469 = vadd.f32 %v4180, %v4468
    %v4470 = vpop.f32.mrf.mxu0
    %v4471 = vpop.f32.mrf.mxu0
    %v4472 = vadd.f32 %v4180, %v4471
    %v4473 = vpop.f32.mrf.mxu0
    %4474 = vmatprep.mubr.bf16.mxu0 %v4266
    %4475 = vmatmul.mubr.bf16.gmra.mxu0 %v4265
    %v4476 = vpop.f32.mrf.mxu0
    %v4477 = vadd.f32 %v4180, %v4476
    %v4478 = vpop.f32.mrf.mxu0
    %v4479 = vpop.f32.mrf.mxu0
    %v4480 = vadd.f32 %v4180, %v4479
    %v4481 = vpop.f32.mrf.mxu0
    %4482 = vmatprep.mubr.bf16.mxu0 %v4269
    %4483 = vmatmul.mubr.bf16.gmra.mxu0 %v4268
    %v4484 = vpop.f32.mrf.mxu0
    %v4485 = vadd.f32 %v4180, %v4484
    %v4486 = vpop.f32.mrf.mxu0
    %v4487 = vpop.f32.mrf.mxu0
    %v4488 = vadd.f32 %v4180, %v4487
    %v4489 = vpop.f32.mrf.mxu0
    %4490 = vmatprep.mubr.bf16.mxu0 %v4272
    %4491 = vmatmul.mubr.bf16.gmra.mxu0 %v4271
    %v4492 = vpop.f32.mrf.mxu0
    %v4493 = vadd.f32 %v4180, %v4492
    %v4494 = vpop.f32.mrf.mxu0
    %v4495 = vpop.f32.mrf.mxu0
    %v4496 = vadd.f32 %v4180, %v4495
    %v4497 = vpop.f32.mrf.mxu0
    %4498 = vmatprep.mubr.bf16.mxu0 %v4275
    %4499 = vmatmul.mubr.bf16.gmra.mxu0 %v4274
    %v4500 = vpop.f32.mrf.mxu0
    %v4501 = vadd.f32 %v4180, %v4500
    %v4502 = vpop.f32.mrf.mxu0
    %v4503 = vpop.f32.mrf.mxu0
    %v4504 = vadd.f32 %v4180, %v4503
    %v4505 = vpop.f32.mrf.mxu0
    %4506 = vmatprep.mubr.bf16.mxu0 %v4278
    %4507 = vmatmul.mubr.bf16.gmra.mxu0 %v4277
    %v4508 = vpop.f32.mrf.mxu0
    %v4509 = vadd.f32 %v4180, %v4508
    %v4510 = vpop.f32.mrf.mxu0
    %v4511 = vpop.f32.mrf.mxu0
    %v4512 = vadd.f32 %v4180, %v4511
    %v4513 = vpop.f32.mrf.mxu0
    %4514 = vmatprep.mubr.bf16.mxu0 %v4281
    %4515 = vmatmul.mubr.bf16.gmra.mxu0 %v4280
    %v4516 = vpop.f32.mrf.mxu0
    %v4517 = vadd.f32 %v4180, %v4516
    %v4518 = vpop.f32.mrf.mxu0
    %v4519 = vpop.f32.mrf.mxu0
    %v4520 = vadd.f32 %v4180, %v4519
    %v4521 = vpop.f32.mrf.mxu0
    %4522 = vmatprep.mubr.bf16.mxu0 %v4284
    %4523 = vmatmul.mubr.bf16.gmra.mxu0 %v4283
    %v4524 = vpop.f32.mrf.mxu0
    %v4525 = vadd.f32 %v4180, %v4524
    %v4526 = vpop.f32.mrf.mxu0
    %v4527 = vpop.f32.mrf.mxu0
    %v4528 = vadd.f32 %v4180, %v4527
    %v4529 = vpop.f32.mrf.mxu0
    %4530 = vdwg.mxu0
    %4531 = vmatprep.subr.bf16.mxu0 0
    %4532 = vmatpush1.bf16.msra.mxu0 0
    %4533 = vmatprep.subr.bf16.mxu0 0
    %4534 = vmatpush1.bf16.msra.mxu0 0
    %4535 = vmatprep.subr.bf16.mxu0 0
    %4536 = vmatpush1.bf16.msra.mxu0 0
    %4537 = vmatprep.subr.bf16.mxu0 0
    %4538 = vmatpush1.bf16.msra.mxu0 0
    %4539 = vmatprep.subr.bf16.mxu0 0
    %4540 = vmatpush1.bf16.msra.mxu0 0
    %4541 = vmatprep.subr.bf16.mxu0 0
    %4542 = vmatpush1.bf16.msra.mxu0 0
    %4543 = vmatprep.subr.bf16.mxu0 0
    %4544 = vmatpush1.bf16.msra.mxu0 %v4391
    %4545 = vmatprep.subr.bf16.mxu0 0
    %4546 = vmatpush1.bf16.msra.mxu0 %v4390
    %4547 = vmatprep.subr.bf16.mxu0 0
    %4548 = vmatpush2.bf16.msra.mxu0 0
    %4549 = vmatprep.subr.bf16.mxu0 0
    %4550 = vmatpush2.bf16.msra.mxu0 0
    %4551 = vmatprep.subr.bf16.mxu0 0
    %4552 = vmatpush2.bf16.msra.mxu0 0
    %4553 = vmatprep.subr.bf16.mxu0 0
    %4554 = vmatpush2.bf16.msra.mxu0 0
    %4555 = vmatprep.subr.bf16.mxu0 0
    %4556 = vmatpush2.bf16.msra.mxu0 0
    %4557 = vmatprep.subr.bf16.mxu0 0
    %4558 = vmatpush2.bf16.msra.mxu0 0
    %4559 = vmatprep.subr.bf16.mxu0 0
    %4560 = vmatpush2.bf16.msra.mxu0 0
    %4561 = vmatprep.subr.bf16.mxu0 0
    %4562 = vmatpush2.bf16.msra.mxu0 0
    %4563 = vmatprep.mubr.bf16.mxu0 0
    %4564 = vmatmul.mubr.bf16.gmra.mxu0 %v4411
    %v4565 = vpop.f32.mrf.mxu0
    %v4566 = vadd.f32 %v4469, %v4565
    %v4567 = vpop.f32.mrf.mxu0
    %v4568 = vpop.f32.mrf.mxu0
    %v4569 = vadd.f32 %v4472, %v4568
    %v4570 = vpop.f32.mrf.mxu0
    %4571 = vmatprep.mubr.bf16.mxu0 0
    %4572 = vmatmul.mubr.bf16.gmra.mxu0 %v4414
    %v4573 = vpop.f32.mrf.mxu0
    %v4574 = vadd.f32 %v4477, %v4573
    %v4575 = vpop.f32.mrf.mxu0
    %v4576 = vpop.f32.mrf.mxu0
    %v4577 = vadd.f32 %v4480, %v4576
    %v4578 = vpop.f32.mrf.mxu0
    %4579 = vmatprep.mubr.bf16.mxu0 0
    %4580 = vmatmul.mubr.bf16.gmra.mxu0 %v4417
    %v4581 = vpop.f32.mrf.mxu0
    %v4582 = vadd.f32 %v4485, %v4581
    %v4583 = vpop.f32.mrf.mxu0
    %v4584 = vpop.f32.mrf.mxu0
    %v4585 = vadd.f32 %v4488, %v4584
    %v4586 = vpop.f32.mrf.mxu0
    %4587 = vmatprep.mubr.bf16.mxu0 0
    %4588 = vmatmul.mubr.bf16.gmra.mxu0 %v4420
    %v4589 = vpop.f32.mrf.mxu0
    %v4590 = vadd.f32 %v4493, %v4589
    %v4591 = vpop.f32.mrf.mxu0
    %v4592 = vpop.f32.mrf.mxu0
    %v4593 = vadd.f32 %v4496, %v4592
    %v4594 = vpop.f32.mrf.mxu0
    %4595 = vmatprep.mubr.bf16.mxu0 0
    %4596 = vmatmul.mubr.bf16.gmra.mxu0 %v4423
    %v4597 = vpop.f32.mrf.mxu0
    %v4598 = vadd.f32 %v4501, %v4597
    %v4599 = vpop.f32.mrf.mxu0
    %v4600 = vpop.f32.mrf.mxu0
    %v4601 = vadd.f32 %v4504, %v4600
    %v4602 = vpop.f32.mrf.mxu0
    %4603 = vmatprep.mubr.bf16.mxu0 0
    %4604 = vmatmul.mubr.bf16.gmra.mxu0 %v4426
    %v4605 = vpop.f32.mrf.mxu0
    %v4606 = vadd.f32 %v4509, %v4605
    %v4607 = vpop.f32.mrf.mxu0
    %v4608 = vpop.f32.mrf.mxu0
    %v4609 = vadd.f32 %v4512, %v4608
    %v4610 = vpop.f32.mrf.mxu0
    %4611 = vmatprep.mubr.bf16.mxu0 0
    %4612 = vmatmul.mubr.bf16.gmra.mxu0 %v4429
    %v4613 = vpop.f32.mrf.mxu0
    %v4614 = vadd.f32 %v4517, %v4613
    %v4615 = vpop.f32.mrf.mxu0
    %v4616 = vpop.f32.mrf.mxu0
    %v4617 = vadd.f32 %v4520, %v4616
    %v4618 = vpop.f32.mrf.mxu0
    %4619 = vmatprep.mubr.bf16.mxu0 0
    %4620 = vmatmul.mubr.bf16.gmra.mxu0 %v4432
    %v4621 = vpop.f32.mrf.mxu0
    %v4622 = vadd.f32 %v4525, %v4621
    %v4623 = vpop.f32.mrf.mxu0
    %v4624 = vpop.f32.mrf.mxu0
    %v4625 = vadd.f32 %v4528, %v4624
    %v4626 = vpop.f32.mrf.mxu0
    %4627 = vdwg.mxu0
    %v4628 = vmax.f32 %v4566, 0.0
    %v4629 = vmax.f32 %v4569, 0.0
    %v4630 = vmax.f32 %v4574, 0.0
    %v4631 = vmax.f32 %v4577, 0.0
    %v4632 = vmax.f32 %v4582, 0.0
    %v4633 = vmax.f32 %v4585, 0.0
    %v4634 = vmax.f32 %v4590, 0.0
    %v4635 = vmax.f32 %v4593, 0.0
    %v4636 = vmax.f32 %v4598, 0.0
    %v4637 = vmax.f32 %v4601, 0.0
    %v4638 = vmax.f32 %v4606, 0.0
    %v4639 = vmax.f32 %v4609, 0.0
    %v4640 = vmax.f32 %v4614, 0.0
    %v4641 = vmax.f32 %v4617, 0.0
    %v4642 = vmax.f32 %v4622, 0.0
    %v4643 = vmax.f32 %v4625, 0.0
    %v4644 = vpack.c.bf16 %v4629, %v4628
    %v4645 = vpack.c.bf16 %v4631, %v4630
    %v4646 = vpack.c.bf16 %v4633, %v4632
    %v4647 = vpack.c.bf16 %v4635, %v4634
    %v4648 = vpack.c.bf16 %v4637, %v4636
    %v4649 = vpack.c.bf16 %v4639, %v4638
    %v4650 = vpack.c.bf16 %v4641, %v4640
    %v4651 = vpack.c.bf16 %v4643, %v4642
    %v4660 = vunpack.c.l.b16 %v4644
    %v4661 = vunpack.c.h.b16 %v4644
    %v4662 = vunpack.c.l.b16 %v4645
    %v4663 = vunpack.c.h.b16 %v4645
    %v4664 = vunpack.c.l.b16 %v4646
    %v4665 = vunpack.c.h.b16 %v4646
    %v4666 = vunpack.c.l.b16 %v4647
    %v4667 = vunpack.c.h.b16 %v4647
    %v4668 = vunpack.c.l.b16 %v4648
    %v4669 = vunpack.c.h.b16 %v4648
    %v4670 = vunpack.c.l.b16 %v4649
    %v4671 = vunpack.c.h.b16 %v4649
    %v4672 = vunpack.c.l.b16 %v4650
    %v4673 = vunpack.c.h.b16 %v4650
    %v4674 = vunpack.c.l.b16 %v4651
    %v4675 = vunpack.c.h.b16 %v4651
    %v4676 = vpack.c.b16 %v4660, %v4660
    %v4677 = vpack.c.b16 %v4661, %v4661
    %v4678 = vpack.c.b16 %v4662, %v4662
    %v4679 = vpack.c.b16 %v4663, %v4663
    %v4680 = vpack.c.b16 %v4664, %v4664
    %v4681 = vpack.c.b16 %v4665, %v4665
    %v4682 = vpack.c.b16 %v4666, %v4666
    %v4683 = vpack.c.b16 %v4667, %v4667
    %v4684 = vpack.c.b16 %v4668, %v4668
    %v4685 = vpack.c.b16 %v4669, %v4669
    %v4686 = vpack.c.b16 %v4670, %v4670
    %v4687 = vpack.c.b16 %v4671, %v4671
    %v4688 = vpack.c.b16 %v4672, %v4672
    %v4689 = vpack.c.b16 %v4673, %v4673
    %v4690 = vpack.c.b16 %v4674, %v4674
    %v4691 = vpack.c.b16 %v4675, %v4675
    %v4693 = vshrl.u32 %v4676, 16
    %v4695 = vrot.slane %v4693, 7
    %v4696 = vshll.u32 %v4676, 16
    %v4698 = vor.u32 %v4695, %v4696
    %v4699 = vrot.slane %v4695, 4
    %v4701 = vshrl.u32 %v4677, 16
    %v4703 = vrot.slane %v4701, 7
    %v4704 = vshll.u32 %v4677, 16
    %v4706 = vor.u32 %v4703, %v4704
    %v4707 = vrot.slane %v4703, 4
    %v4709 = vshrl.u32 %v4678, 16
    %v4711 = vrot.slane %v4709, 7
    %v4712 = vshll.u32 %v4678, 16
    %v4714 = vor.u32 %v4711, %v4712
    %v4715 = vrot.slane %v4711, 4
    %v4717 = vshrl.u32 %v4679, 16
    %v4719 = vrot.slane %v4717, 7
    %v4720 = vshll.u32 %v4679, 16
    %v4722 = vor.u32 %v4719, %v4720
    %v4723 = vrot.slane %v4719, 4
    %v4725 = vshrl.u32 %v4680, 16
    %v4727 = vrot.slane %v4725, 7
    %v4728 = vshll.u32 %v4680, 16
    %v4730 = vor.u32 %v4727, %v4728
    %v4731 = vrot.slane %v4727, 4
    %v4733 = vshrl.u32 %v4681, 16
    %v4735 = vrot.slane %v4733, 7
    %v4736 = vshll.u32 %v4681, 16
    %v4738 = vor.u32 %v4735, %v4736
    %v4739 = vrot.slane %v4735, 4
    %v4741 = vshrl.u32 %v4682, 16
    %v4743 = vrot.slane %v4741, 7
    %v4744 = vshll.u32 %v4682, 16
    %v4746 = vor.u32 %v4743, %v4744
    %v4747 = vrot.slane %v4743, 4
    %v4749 = vshrl.u32 %v4683, 16
    %v4751 = vrot.slane %v4749, 7
    %v4752 = vshll.u32 %v4683, 16
    %v4754 = vor.u32 %v4751, %v4752
    %v4755 = vrot.slane %v4751, 4
    %v4757 = vshrl.u32 %v4684, 16
    %v4759 = vrot.slane %v4757, 7
    %v4760 = vshll.u32 %v4684, 16
    %v4762 = vor.u32 %v4759, %v4760
    %v4763 = vrot.slane %v4759, 4
    %v4765 = vshrl.u32 %v4685, 16
    %v4767 = vrot.slane %v4765, 7
    %v4768 = vshll.u32 %v4685, 16
    %v4770 = vor.u32 %v4767, %v4768
    %v4771 = vrot.slane %v4767, 4
    %v4773 = vshrl.u32 %v4686, 16
    %v4775 = vrot.slane %v4773, 7
    %v4776 = vshll.u32 %v4686, 16
    %v4778 = vor.u32 %v4775, %v4776
    %v4779 = vrot.slane %v4775, 4
    %v4781 = vshrl.u32 %v4687, 16
    %v4783 = vrot.slane %v4781, 7
    %v4784 = vshll.u32 %v4687, 16
    %v4786 = vor.u32 %v4783, %v4784
    %v4787 = vrot.slane %v4783, 4
    %v4789 = vshrl.u32 %v4688, 16
    %v4791 = vrot.slane %v4789, 7
    %v4792 = vshll.u32 %v4688, 16
    %v4794 = vor.u32 %v4791, %v4792
    %v4795 = vrot.slane %v4791, 4
    %v4797 = vshrl.u32 %v4689, 16
    %v4799 = vrot.slane %v4797, 7
    %v4800 = vshll.u32 %v4689, 16
    %v4802 = vor.u32 %v4799, %v4800
    %v4803 = vrot.slane %v4799, 4
    %v4805 = vshrl.u32 %v4690, 16
    %v4807 = vrot.slane %v4805, 7
    %v4808 = vshll.u32 %v4690, 16
    %v4810 = vor.u32 %v4807, %v4808
    %v4811 = vrot.slane %v4807, 4
    %v4813 = vshrl.u32 %v4691, 16
    %v4815 = vrot.slane %v4813, 7
    %v4816 = vshll.u32 %v4691, 16
    %v4818 = vor.u32 %v4815, %v4816
    %v4819 = vrot.slane %v4815, 4
    %vm4852 = vcmask 388096
    %vm4853 = vmand %vm4852, %vm740
    %v4854 = vld [vmem:[%s801] sm:$0xf]
    %v4855 = vsel %vm4853, %v4698, %v4854
    %4856 = vst [vmem:[%s801] sm:$0xf] %v4855
    %v4857 = vld [vmem:[%s801 + $0x4] sm:$0x1]
    %v4858 = vsel %vm803, %v4699, %v4857
    %4859 = vst [vmem:[%s801 + $0x4] sm:$0x1] %v4858
    %v4860 = vld [vmem:[%s801 + $0x8] sm:$0xf]
    %v4861 = vsel %vm4853, %v4706, %v4860
    %4862 = vst [vmem:[%s801 + $0x8] sm:$0xf] %v4861
    %v4863 = vld [vmem:[%s801 + $0xc] sm:$0x1]
    %v4864 = vsel %vm803, %v4707, %v4863
    %4865 = vst [vmem:[%s801 + $0xc] sm:$0x1] %v4864
    %v4866 = vld [vmem:[%s801 + $0x10] sm:$0xf]
    %v4867 = vsel %vm4853, %v4714, %v4866
    %4868 = vst [vmem:[%s801 + $0x10] sm:$0xf] %v4867
    %v4869 = vld [vmem:[%s801 + $0x14] sm:$0x1]
    %v4870 = vsel %vm803, %v4715, %v4869
    %4871 = vst [vmem:[%s801 + $0x14] sm:$0x1] %v4870
    %v4872 = vld [vmem:[%s801 + $0x18] sm:$0xf]
    %v4873 = vsel %vm4853, %v4722, %v4872
    %4874 = vst [vmem:[%s801 + $0x18] sm:$0xf] %v4873
    %v4875 = vld [vmem:[%s801 + $0x1c] sm:$0x1]
    %v4876 = vsel %vm803, %v4723, %v4875
    %4877 = vst [vmem:[%s801 + $0x1c] sm:$0x1] %v4876
    %v4878 = vld [vmem:[%s801 + $0x20] sm:$0xf]
    %v4879 = vsel %vm4853, %v4730, %v4878
    %4880 = vst [vmem:[%s801 + $0x20] sm:$0xf] %v4879
    %v4881 = vld [vmem:[%s801 + $0x24] sm:$0x1]
    %v4882 = vsel %vm803, %v4731, %v4881
    %4883 = vst [vmem:[%s801 + $0x24] sm:$0x1] %v4882
    %v4884 = vld [vmem:[%s801 + $0x28] sm:$0xf]
    %v4885 = vsel %vm4853, %v4738, %v4884
    %4886 = vst [vmem:[%s801 + $0x28] sm:$0xf] %v4885
    %v4887 = vld [vmem:[%s801 + $0x2c] sm:$0x1]
    %v4888 = vsel %vm803, %v4739, %v4887
    %4889 = vst [vmem:[%s801 + $0x2c] sm:$0x1] %v4888
    %v4890 = vld [vmem:[%s801 + $0x30] sm:$0xf]
    %v4891 = vsel %vm4853, %v4746, %v4890
    %4892 = vst [vmem:[%s801 + $0x30] sm:$0xf] %v4891
    %v4893 = vld [vmem:[%s801 + $0x34] sm:$0x1]
    %v4894 = vsel %vm803, %v4747, %v4893
    %4895 = vst [vmem:[%s801 + $0x34] sm:$0x1] %v4894
    %v4896 = vld [vmem:[%s801 + $0x38] sm:$0xf]
    %v4897 = vsel %vm4853, %v4754, %v4896
    %4898 = vst [vmem:[%s801 + $0x38] sm:$0xf] %v4897
    %v4899 = vld [vmem:[%s801 + $0x3c] sm:$0x1]
    %v4900 = vsel %vm803, %v4755, %v4899
    %4901 = vst [vmem:[%s801 + $0x3c] sm:$0x1] %v4900
    %v4902 = vld [vmem:[%s801 + $0x50] sm:$0xf]
    %v4903 = vsel %vm4853, %v4762, %v4902
    %4904 = vst [vmem:[%s801 + $0x50] sm:$0xf] %v4903
    %v4905 = vld [vmem:[%s801 + $0x54] sm:$0x1]
    %v4906 = vsel %vm803, %v4763, %v4905
    %4907 = vst [vmem:[%s801 + $0x54] sm:$0x1] %v4906
    %v4908 = vld [vmem:[%s801 + $0x58] sm:$0xf]
    %v4909 = vsel %vm4853, %v4770, %v4908
    %4910 = vst [vmem:[%s801 + $0x58] sm:$0xf] %v4909
    %v4911 = vld [vmem:[%s801 + $0x5c] sm:$0x1]
    %v4912 = vsel %vm803, %v4771, %v4911
    %4913 = vst [vmem:[%s801 + $0x5c] sm:$0x1] %v4912
    %v4914 = vld [vmem:[%s801 + $0x60] sm:$0xf]
    %v4915 = vsel %vm4853, %v4778, %v4914
    %4916 = vst [vmem:[%s801 + $0x60] sm:$0xf] %v4915
    %v4917 = vld [vmem:[%s801 + $0x64] sm:$0x1]
    %v4918 = vsel %vm803, %v4779, %v4917
    %4919 = vst [vmem:[%s801 + $0x64] sm:$0x1] %v4918
    %v4920 = vld [vmem:[%s801 + $0x68] sm:$0xf]
    %v4921 = vsel %vm4853, %v4786, %v4920
    %4922 = vst [vmem:[%s801 + $0x68] sm:$0xf] %v4921
    %v4923 = vld [vmem:[%s801 + $0x6c] sm:$0x1]
    %v4924 = vsel %vm803, %v4787, %v4923
    %4925 = vst [vmem:[%s801 + $0x6c] sm:$0x1] %v4924
    %v4926 = vld [vmem:[%s801 + $0x70] sm:$0xf]
    %v4927 = vsel %vm4853, %v4794, %v4926
    %4928 = vst [vmem:[%s801 + $0x70] sm:$0xf] %v4927
    %v4929 = vld [vmem:[%s801 + $0x74] sm:$0x1]
    %v4930 = vsel %vm803, %v4795, %v4929
    %4931 = vst [vmem:[%s801 + $0x74] sm:$0x1] %v4930
    %v4932 = vld [vmem:[%s801 + $0x78] sm:$0xf]
    %v4933 = vsel %vm4853, %v4802, %v4932
    %4934 = vst [vmem:[%s801 + $0x78] sm:$0xf] %v4933
    %v4935 = vld [vmem:[%s801 + $0x7c] sm:$0x1]
    %v4936 = vsel %vm803, %v4803, %v4935
    %4937 = vst [vmem:[%s801 + $0x7c] sm:$0x1] %v4936
    %v4938 = vld [vmem:[%s801 + $0x80] sm:$0xf]
    %v4939 = vsel %vm4853, %v4810, %v4938
    %4940 = vst [vmem:[%s801 + $0x80] sm:$0xf] %v4939
    %v4941 = vld [vmem:[%s801 + $0x84] sm:$0x1]
    %v4942 = vsel %vm803, %v4811, %v4941
    %4943 = vst [vmem:[%s801 + $0x84] sm:$0x1] %v4942
    %v4944 = vld [vmem:[%s801 + $0x88] sm:$0xf]
    %v4945 = vsel %vm4853, %v4818, %v4944
    %4946 = vst [vmem:[%s801 + $0x88] sm:$0xf] %v4945
    %v4947 = vld [vmem:[%s801 + $0x8c] sm:$0x1]
    %v4948 = vsel %vm803, %v4819, %v4947
    %4949 = vst [vmem:[%s801 + $0x8c] sm:$0x1] %v4948
    %v4950 = vld [vmem:[#allocation3] sm:$0xf]
    %v4951 = vld [vmem:[#allocation3 + $0x8] sm:$0xf]
    %v4952 = vld [vmem:[#allocation3 + $0x10] sm:$0xf]
    %v4953 = vld [vmem:[#allocation3 + $0x18] sm:$0xf]
    %v4954 = vld [vmem:[#allocation3 + $0x20] sm:$0xf]
    %v4955 = vld [vmem:[#allocation3 + $0x28] sm:$0xf]
    %v4956 = vld [vmem:[#allocation3 + $0x30] sm:$0xf]
    %v4957 = vld [vmem:[#allocation3 + $0x38] sm:$0xf]
    %v4958 = vld [vmem:[#allocation3 + $0x50] sm:$0xf]
    %v4959 = vld [vmem:[#allocation3 + $0x58] sm:$0xf]
    %v4960 = vld [vmem:[#allocation3 + $0x60] sm:$0xf]
    %v4961 = vld [vmem:[#allocation3 + $0x68] sm:$0xf]
    %v4962 = vld [vmem:[#allocation3 + $0x70] sm:$0xf]
    %v4963 = vld [vmem:[#allocation3 + $0x78] sm:$0xf]
    %v4964 = vld [vmem:[#allocation3 + $0x80] sm:$0xf]
    %v4965 = vld [vmem:[#allocation3 + $0x88] sm:$0xf]
    %4966 = vst.msk [vmem:[#allocation6] sm:$0xf] %vm790, %v4950
    %4967 = vst.msk [vmem:[#allocation6 + $0x10] sm:$0xf] %vm790, %v4951
    %4968 = vst.msk [vmem:[#allocation6 + $0x20] sm:$0xf] %vm790, %v4952
    %4969 = vst.msk [vmem:[#allocation6 + $0x30] sm:$0xf] %vm790, %v4953
    %4970 = vst.msk [vmem:[#allocation6 + $0x40] sm:$0xf] %vm790, %v4954
    %4971 = vst.msk [vmem:[#allocation6 + $0x50] sm:$0xf] %vm790, %v4955
    %4972 = vst.msk [vmem:[#allocation6 + $0x60] sm:$0xf] %vm790, %v4956
    %4973 = vst.msk [vmem:[#allocation6 + $0x70] sm:$0xf] %vm790, %v4957
    %4974 = vst.msk [vmem:[#allocation6 + $0x80] sm:$0xf] %vm790, %v4958
    %4975 = vst.msk [vmem:[#allocation6 + $0x90] sm:$0xf] %vm790, %v4959
    %4976 = vst.msk [vmem:[#allocation6 + $0xa0] sm:$0xf] %vm790, %v4960
    %4977 = vst.msk [vmem:[#allocation6 + $0xb0] sm:$0xf] %vm790, %v4961
    %4978 = vst.msk [vmem:[#allocation6 + $0xc0] sm:$0xf] %vm790, %v4962
    %4979 = vst.msk [vmem:[#allocation6 + $0xd0] sm:$0xf] %vm790, %v4963
    %4980 = vst.msk [vmem:[#allocation6 + $0xe0] sm:$0xf] %vm790, %v4964
    %4981 = vst.msk [vmem:[#allocation6 + $0xf0] sm:$0xf] %vm790, %v4965
    %v4982 = vld [vmem:[#allocation3] sm:$0xf]
    %v4983 = vld [vmem:[#allocation3 + $0x4] sm:$0x1]
    %v4984 = vld [vmem:[#allocation3 + $0x8] sm:$0xf]
    %v4985 = vld [vmem:[#allocation3 + $0xc] sm:$0x1]
    %v4986 = vld [vmem:[#allocation3 + $0x10] sm:$0xf]
    %v4987 = vld [vmem:[#allocation3 + $0x14] sm:$0x1]
    %v4988 = vld [vmem:[#allocation3 + $0x18] sm:$0xf]
    %v4989 = vld [vmem:[#allocation3 + $0x1c] sm:$0x1]
    %v4990 = vld [vmem:[#allocation3 + $0x20] sm:$0xf]
    %v4991 = vld [vmem:[#allocation3 + $0x24] sm:$0x1]
    %v4992 = vld [vmem:[#allocation3 + $0x28] sm:$0xf]
    %v4993 = vld [vmem:[#allocation3 + $0x2c] sm:$0x1]
    %v4994 = vld [vmem:[#allocation3 + $0x30] sm:$0xf]
    %v4995 = vld [vmem:[#allocation3 + $0x34] sm:$0x1]
    %v4996 = vld [vmem:[#allocation3 + $0x38] sm:$0xf]
    %v4997 = vld [vmem:[#allocation3 + $0x3c] sm:$0x1]
    %v4998 = vld [vmem:[#allocation3 + $0x50] sm:$0xf]
    %v4999 = vld [vmem:[#allocation3 + $0x54] sm:$0x1]
    %v5000 = vld [vmem:[#allocation3 + $0x58] sm:$0xf]
    %v5001 = vld [vmem:[#allocation3 + $0x5c] sm:$0x1]
    %v5002 = vld [vmem:[#allocation3 + $0x60] sm:$0xf]
    %v5003 = vld [vmem:[#allocation3 + $0x64] sm:$0x1]
    %v5004 = vld [vmem:[#allocation3 + $0x68] sm:$0xf]
    %v5005 = vld [vmem:[#allocation3 + $0x6c] sm:$0x1]
    %v5006 = vld [vmem:[#allocation3 + $0x70] sm:$0xf]
    %v5007 = vld [vmem:[#allocation3 + $0x74] sm:$0x1]
    %v5008 = vld [vmem:[#allocation3 + $0x78] sm:$0xf]
    %v5009 = vld [vmem:[#allocation3 + $0x7c] sm:$0x1]
    %v5010 = vld [vmem:[#allocation3 + $0x80] sm:$0xf]
    %v5011 = vld [vmem:[#allocation3 + $0x84] sm:$0x1]
    %v5012 = vld [vmem:[#allocation3 + $0x88] sm:$0xf]
    %v5013 = vld [vmem:[#allocation3 + $0x8c] sm:$0x1]
    %v5015 = vshrl.u32 %v4982, 16
    %v5017 = vrot.slane %v5015, 4
    %v5018 = vshll.u32 %v4982, 16
    %v5020 = vrot.slane %v5018, 5
    %v5021 = vor.u32 %v5017, %v5020
    %v5022 = vrot.slane %v5021, 4
    %v5024 = vshll.u32 %v4983, 16
    %v5026 = vrot.slane %v5024, 5
    %v5027 = vsel %vm1369, %v5022, %v5026
    %v5029 = vshrl.u32 %v4984, 16
    %v5031 = vrot.slane %v5029, 4
    %v5032 = vshll.u32 %v4984, 16
    %v5034 = vrot.slane %v5032, 5
    %v5035 = vor.u32 %v5031, %v5034
    %v5036 = vrot.slane %v5035, 4
    %v5038 = vshll.u32 %v4985, 16
    %v5040 = vrot.slane %v5038, 5
    %v5041 = vsel %vm1369, %v5036, %v5040
    %v5043 = vshrl.u32 %v4986, 16
    %v5045 = vrot.slane %v5043, 4
    %v5046 = vshll.u32 %v4986, 16
    %v5048 = vrot.slane %v5046, 5
    %v5049 = vor.u32 %v5045, %v5048
    %v5050 = vrot.slane %v5049, 4
    %v5052 = vshll.u32 %v4987, 16
    %v5054 = vrot.slane %v5052, 5
    %v5055 = vsel %vm1369, %v5050, %v5054
    %v5057 = vshrl.u32 %v4988, 16
    %v5059 = vrot.slane %v5057, 4
    %v5060 = vshll.u32 %v4988, 16
    %v5062 = vrot.slane %v5060, 5
    %v5063 = vor.u32 %v5059, %v5062
    %v5064 = vrot.slane %v5063, 4
    %v5066 = vshll.u32 %v4989, 16
    %v5068 = vrot.slane %v5066, 5
    %v5069 = vsel %vm1369, %v5064, %v5068
    %v5071 = vshrl.u32 %v4990, 16
    %v5073 = vrot.slane %v5071, 4
    %v5074 = vshll.u32 %v4990, 16
    %v5076 = vrot.slane %v5074, 5
    %v5077 = vor.u32 %v5073, %v5076
    %v5078 = vrot.slane %v5077, 4
    %v5080 = vshll.u32 %v4991, 16
    %v5082 = vrot.slane %v5080, 5
    %v5083 = vsel %vm1369, %v5078, %v5082
    %v5085 = vshrl.u32 %v4992, 16
    %v5087 = vrot.slane %v5085, 4
    %v5088 = vshll.u32 %v4992, 16
    %v5090 = vrot.slane %v5088, 5
    %v5091 = vor.u32 %v5087, %v5090
    %v5092 = vrot.slane %v5091, 4
    %v5094 = vshll.u32 %v4993, 16
    %v5096 = vrot.slane %v5094, 5
    %v5097 = vsel %vm1369, %v5092, %v5096
    %v5099 = vshrl.u32 %v4994, 16
    %v5101 = vrot.slane %v5099, 4
    %v5102 = vshll.u32 %v4994, 16
    %v5104 = vrot.slane %v5102, 5
    %v5105 = vor.u32 %v5101, %v5104
    %v5106 = vrot.slane %v5105, 4
    %v5108 = vshll.u32 %v4995, 16
    %v5110 = vrot.slane %v5108, 5
    %v5111 = vsel %vm1369, %v5106, %v5110
    %v5113 = vshrl.u32 %v4996, 16
    %v5115 = vrot.slane %v5113, 4
    %v5116 = vshll.u32 %v4996, 16
    %v5118 = vrot.slane %v5116, 5
    %v5119 = vor.u32 %v5115, %v5118
    %v5120 = vrot.slane %v5119, 4
    %v5122 = vshll.u32 %v4997, 16
    %v5124 = vrot.slane %v5122, 5
    %v5125 = vsel %vm1369, %v5120, %v5124
    %v5127 = vshrl.u32 %v4998, 16
    %v5129 = vrot.slane %v5127, 4
    %v5130 = vshll.u32 %v4998, 16
    %v5132 = vrot.slane %v5130, 5
    %v5133 = vor.u32 %v5129, %v5132
    %v5134 = vrot.slane %v5133, 4
    %v5136 = vshll.u32 %v4999, 16
    %v5138 = vrot.slane %v5136, 5
    %v5139 = vsel %vm1369, %v5134, %v5138
    %v5141 = vshrl.u32 %v5000, 16
    %v5143 = vrot.slane %v5141, 4
    %v5144 = vshll.u32 %v5000, 16
    %v5146 = vrot.slane %v5144, 5
    %v5147 = vor.u32 %v5143, %v5146
    %v5148 = vrot.slane %v5147, 4
    %v5150 = vshll.u32 %v5001, 16
    %v5152 = vrot.slane %v5150, 5
    %v5153 = vsel %vm1369, %v5148, %v5152
    %v5155 = vshrl.u32 %v5002, 16
    %v5157 = vrot.slane %v5155, 4
    %v5158 = vshll.u32 %v5002, 16
    %v5160 = vrot.slane %v5158, 5
    %v5161 = vor.u32 %v5157, %v5160
    %v5162 = vrot.slane %v5161, 4
    %v5164 = vshll.u32 %v5003, 16
    %v5166 = vrot.slane %v5164, 5
    %v5167 = vsel %vm1369, %v5162, %v5166
    %v5169 = vshrl.u32 %v5004, 16
    %v5171 = vrot.slane %v5169, 4
    %v5172 = vshll.u32 %v5004, 16
    %v5174 = vrot.slane %v5172, 5
    %v5175 = vor.u32 %v5171, %v5174
    %v5176 = vrot.slane %v5175, 4
    %v5178 = vshll.u32 %v5005, 16
    %v5180 = vrot.slane %v5178, 5
    %v5181 = vsel %vm1369, %v5176, %v5180
    %v5183 = vshrl.u32 %v5006, 16
    %v5185 = vrot.slane %v5183, 4
    %v5186 = vshll.u32 %v5006, 16
    %v5188 = vrot.slane %v5186, 5
    %v5189 = vor.u32 %v5185, %v5188
    %v5190 = vrot.slane %v5189, 4
    %v5192 = vshll.u32 %v5007, 16
    %v5194 = vrot.slane %v5192, 5
    %v5195 = vsel %vm1369, %v5190, %v5194
    %v5197 = vshrl.u32 %v5008, 16
    %v5199 = vrot.slane %v5197, 4
    %v5200 = vshll.u32 %v5008, 16
    %v5202 = vrot.slane %v5200, 5
    %v5203 = vor.u32 %v5199, %v5202
    %v5204 = vrot.slane %v5203, 4
    %v5206 = vshll.u32 %v5009, 16
    %v5208 = vrot.slane %v5206, 5
    %v5209 = vsel %vm1369, %v5204, %v5208
    %v5211 = vshrl.u32 %v5010, 16
    %v5213 = vrot.slane %v5211, 4
    %v5214 = vshll.u32 %v5010, 16
    %v5216 = vrot.slane %v5214, 5
    %v5217 = vor.u32 %v5213, %v5216
    %v5218 = vrot.slane %v5217, 4
    %v5220 = vshll.u32 %v5011, 16
    %v5222 = vrot.slane %v5220, 5
    %v5223 = vsel %vm1369, %v5218, %v5222
    %v5225 = vshrl.u32 %v5012, 16
    %v5227 = vrot.slane %v5225, 4
    %v5228 = vshll.u32 %v5012, 16
    %v5230 = vrot.slane %v5228, 5
    %v5231 = vor.u32 %v5227, %v5230
    %v5232 = vrot.slane %v5231, 4
    %v5234 = vshll.u32 %v5013, 16
    %v5236 = vrot.slane %v5234, 5
    %v5237 = vsel %vm1369, %v5232, %v5236
    %5238 = vrot.lane.b32.xlu0 %v5027, 48
    %v5239 = vpop.permute.xlu0 %5238
    %5240 = vrot.lane.b32.xlu0 %v5041, 48
    %v5241 = vpop.permute.xlu0 %5240
    %5242 = vrot.lane.b32.xlu0 %v5055, 48
    %v5243 = vpop.permute.xlu0 %5242
    %5244 = vrot.lane.b32.xlu0 %v5069, 48
    %v5245 = vpop.permute.xlu0 %5244
    %5246 = vrot.lane.b32.xlu0 %v5083, 48
    %v5247 = vpop.permute.xlu0 %5246
    %5248 = vrot.lane.b32.xlu0 %v5097, 48
    %v5249 = vpop.permute.xlu0 %5248
    %5250 = vrot.lane.b32.xlu0 %v5111, 48
    %v5251 = vpop.permute.xlu0 %5250
    %5252 = vrot.lane.b32.xlu0 %v5125, 48
    %v5253 = vpop.permute.xlu0 %5252
    %5254 = vrot.lane.b32.xlu0 %v5139, 48
    %v5255 = vpop.permute.xlu0 %5254
    %5256 = vrot.lane.b32.xlu0 %v5153, 48
    %v5257 = vpop.permute.xlu0 %5256
    %5258 = vrot.lane.b32.xlu0 %v5167, 48
    %v5259 = vpop.permute.xlu0 %5258
    %5260 = vrot.lane.b32.xlu0 %v5181, 48
    %v5261 = vpop.permute.xlu0 %5260
    %5262 = vrot.lane.b32.xlu0 %v5195, 48
    %v5263 = vpop.permute.xlu0 %5262
    %5264 = vrot.lane.b32.xlu0 %v5209, 48
    %v5265 = vpop.permute.xlu0 %5264
    %5266 = vrot.lane.b32.xlu0 %v5223, 48
    %v5267 = vpop.permute.xlu0 %5266
    %5268 = vrot.lane.b32.xlu0 %v5237, 48
    %v5269 = vpop.permute.xlu0 %5268
    %vm5286 = vcmask 781696
    %5287 = vst.msk [vmem:[#allocation6] sm:$0xf] %vm5286, %v5239
    %5288 = vst.msk [vmem:[#allocation6 + $0x10] sm:$0xf] %vm5286, %v5241
    %5289 = vst.msk [vmem:[#allocation6 + $0x20] sm:$0xf] %vm5286, %v5243
    %5290 = vst.msk [vmem:[#allocation6 + $0x30] sm:$0xf] %vm5286, %v5245
    %5291 = vst.msk [vmem:[#allocation6 + $0x40] sm:$0xf] %vm5286, %v5247
    %5292 = vst.msk [vmem:[#allocation6 + $0x50] sm:$0xf] %vm5286, %v5249
    %5293 = vst.msk [vmem:[#allocation6 + $0x60] sm:$0xf] %vm5286, %v5251
    %5294 = vst.msk [vmem:[#allocation6 + $0x70] sm:$0xf] %vm5286, %v5253
    %5295 = vst.msk [vmem:[#allocation6 + $0x80] sm:$0xf] %vm5286, %v5255
    %5296 = vst.msk [vmem:[#allocation6 + $0x90] sm:$0xf] %vm5286, %v5257
    %5297 = vst.msk [vmem:[#allocation6 + $0xa0] sm:$0xf] %vm5286, %v5259
    %5298 = vst.msk [vmem:[#allocation6 + $0xb0] sm:$0xf] %vm5286, %v5261
    %5299 = vst.msk [vmem:[#allocation6 + $0xc0] sm:$0xf] %vm5286, %v5263
    %5300 = vst.msk [vmem:[#allocation6 + $0xd0] sm:$0xf] %vm5286, %v5265
    %5301 = vst.msk [vmem:[#allocation6 + $0xe0] sm:$0xf] %vm5286, %v5267
    %5302 = vst.msk [vmem:[#allocation6 + $0xf0] sm:$0xf] %vm5286, %v5269
    %v5303 = vld [vmem:[#allocation3] sm:$0xe]
    %v5304 = vld [vmem:[#allocation3 + $0x4] sm:$0x1]
    %v5305 = vld [vmem:[#allocation3 + $0x8] sm:$0xe]
    %v5306 = vld [vmem:[#allocation3 + $0xc] sm:$0x1]
    %v5307 = vld [vmem:[#allocation3 + $0x10] sm:$0xe]
    %v5308 = vld [vmem:[#allocation3 + $0x14] sm:$0x1]
    %v5309 = vld [vmem:[#allocation3 + $0x18] sm:$0xe]
    %v5310 = vld [vmem:[#allocation3 + $0x1c] sm:$0x1]
    %v5311 = vld [vmem:[#allocation3 + $0x20] sm:$0xe]
    %v5312 = vld [vmem:[#allocation3 + $0x24] sm:$0x1]
    %v5313 = vld [vmem:[#allocation3 + $0x28] sm:$0xe]
    %v5314 = vld [vmem:[#allocation3 + $0x2c] sm:$0x1]
    %v5315 = vld [vmem:[#allocation3 + $0x30] sm:$0xe]
    %v5316 = vld [vmem:[#allocation3 + $0x34] sm:$0x1]
    %v5317 = vld [vmem:[#allocation3 + $0x38] sm:$0xe]
    %v5318 = vld [vmem:[#allocation3 + $0x3c] sm:$0x1]
    %v5319 = vld [vmem:[#allocation3 + $0x50] sm:$0xe]
    %v5320 = vld [vmem:[#allocation3 + $0x54] sm:$0x1]
    %v5321 = vld [vmem:[#allocation3 + $0x58] sm:$0xe]
    %v5322 = vld [vmem:[#allocation3 + $0x5c] sm:$0x1]
    %v5323 = vld [vmem:[#allocation3 + $0x60] sm:$0xe]
    %v5324 = vld [vmem:[#allocation3 + $0x64] sm:$0x1]
    %v5325 = vld [vmem:[#allocation3 + $0x68] sm:$0xe]
    %v5326 = vld [vmem:[#allocation3 + $0x6c] sm:$0x1]
    %v5327 = vld [vmem:[#allocation3 + $0x70] sm:$0xe]
    %v5328 = vld [vmem:[#allocation3 + $0x74] sm:$0x1]
    %v5329 = vld [vmem:[#allocation3 + $0x78] sm:$0xe]
    %v5330 = vld [vmem:[#allocation3 + $0x7c] sm:$0x1]
    %v5331 = vld [vmem:[#allocation3 + $0x80] sm:$0xe]
    %v5332 = vld [vmem:[#allocation3 + $0x84] sm:$0x1]
    %v5333 = vld [vmem:[#allocation3 + $0x88] sm:$0xe]
    %v5334 = vld [vmem:[#allocation3 + $0x8c] sm:$0x1]
    %v5367 = vrot.slane %v5303, 5
    %v5368 = vrot.slane %v5367, 4
    %v5369 = vrot.slane %v5304, 5
    %v5370 = vsel %vm1757, %v5368, %v5369
    %v5371 = vrot.slane %v5305, 5
    %v5372 = vrot.slane %v5371, 4
    %v5373 = vrot.slane %v5306, 5
    %v5374 = vsel %vm1757, %v5372, %v5373
    %v5375 = vrot.slane %v5307, 5
    %v5376 = vrot.slane %v5375, 4
    %v5377 = vrot.slane %v5308, 5
    %v5378 = vsel %vm1757, %v5376, %v5377
    %v5379 = vrot.slane %v5309, 5
    %v5380 = vrot.slane %v5379, 4
    %v5381 = vrot.slane %v5310, 5
    %v5382 = vsel %vm1757, %v5380, %v5381
    %v5383 = vrot.slane %v5311, 5
    %v5384 = vrot.slane %v5383, 4
    %v5385 = vrot.slane %v5312, 5
    %v5386 = vsel %vm1757, %v5384, %v5385
    %v5387 = vrot.slane %v5313, 5
    %v5388 = vrot.slane %v5387, 4
    %v5389 = vrot.slane %v5314, 5
    %v5390 = vsel %vm1757, %v5388, %v5389
    %v5391 = vrot.slane %v5315, 5
    %v5392 = vrot.slane %v5391, 4
    %v5393 = vrot.slane %v5316, 5
    %v5394 = vsel %vm1757, %v5392, %v5393
    %v5395 = vrot.slane %v5317, 5
    %v5396 = vrot.slane %v5395, 4
    %v5397 = vrot.slane %v5318, 5
    %v5398 = vsel %vm1757, %v5396, %v5397
    %v5399 = vrot.slane %v5319, 5
    %v5400 = vrot.slane %v5399, 4
    %v5401 = vrot.slane %v5320, 5
    %v5402 = vsel %vm1757, %v5400, %v5401
    %v5403 = vrot.slane %v5321, 5
    %v5404 = vrot.slane %v5403, 4
    %v5405 = vrot.slane %v5322, 5
    %v5406 = vsel %vm1757, %v5404, %v5405
    %v5407 = vrot.slane %v5323, 5
    %v5408 = vrot.slane %v5407, 4
    %v5409 = vrot.slane %v5324, 5
    %v5410 = vsel %vm1757, %v5408, %v5409
    %v5411 = vrot.slane %v5325, 5
    %v5412 = vrot.slane %v5411, 4
    %v5413 = vrot.slane %v5326, 5
    %v5414 = vsel %vm1757, %v5412, %v5413
    %v5415 = vrot.slane %v5327, 5
    %v5416 = vrot.slane %v5415, 4
    %v5417 = vrot.slane %v5328, 5
    %v5418 = vsel %vm1757, %v5416, %v5417
    %v5419 = vrot.slane %v5329, 5
    %v5420 = vrot.slane %v5419, 4
    %v5421 = vrot.slane %v5330, 5
    %v5422 = vsel %vm1757, %v5420, %v5421
    %v5423 = vrot.slane %v5331, 5
    %v5424 = vrot.slane %v5423, 4
    %v5425 = vrot.slane %v5332, 5
    %v5426 = vsel %vm1757, %v5424, %v5425
    %v5427 = vrot.slane %v5333, 5
    %v5428 = vrot.slane %v5427, 4
    %v5429 = vrot.slane %v5334, 5
    %v5430 = vsel %vm1757, %v5428, %v5429
    %5431 = vrot.lane.b32.xlu0 %v5370, 96
    %v5432 = vpop.permute.xlu0 %5431
    %5433 = vrot.lane.b32.xlu0 %v5374, 96
    %v5434 = vpop.permute.xlu0 %5433
    %5435 = vrot.lane.b32.xlu0 %v5378, 96
    %v5436 = vpop.permute.xlu0 %5435
    %5437 = vrot.lane.b32.xlu0 %v5382, 96
    %v5438 = vpop.permute.xlu0 %5437
    %5439 = vrot.lane.b32.xlu0 %v5386, 96
    %v5440 = vpop.permute.xlu0 %5439
    %5441 = vrot.lane.b32.xlu0 %v5390, 96
    %v5442 = vpop.permute.xlu0 %5441
    %5443 = vrot.lane.b32.xlu0 %v5394, 96
    %v5444 = vpop.permute.xlu0 %5443
    %5445 = vrot.lane.b32.xlu0 %v5398, 96
    %v5446 = vpop.permute.xlu0 %5445
    %5447 = vrot.lane.b32.xlu0 %v5402, 96
    %v5448 = vpop.permute.xlu0 %5447
    %5449 = vrot.lane.b32.xlu0 %v5406, 96
    %v5450 = vpop.permute.xlu0 %5449
    %5451 = vrot.lane.b32.xlu0 %v5410, 96
    %v5452 = vpop.permute.xlu0 %5451
    %5453 = vrot.lane.b32.xlu0 %v5414, 96
    %v5454 = vpop.permute.xlu0 %5453
    %5455 = vrot.lane.b32.xlu0 %v5418, 96
    %v5456 = vpop.permute.xlu0 %5455
    %5457 = vrot.lane.b32.xlu0 %v5422, 96
    %v5458 = vpop.permute.xlu0 %5457
    %5459 = vrot.lane.b32.xlu0 %v5426, 96
    %v5460 = vpop.permute.xlu0 %5459
    %5461 = vrot.lane.b32.xlu0 %v5430, 96
    %v5462 = vpop.permute.xlu0 %5461
    %v5463 = vrot.slane %v5432, 4
    %v5464 = vrot.slane %v5434, 4
    %v5465 = vrot.slane %v5436, 4
    %v5466 = vrot.slane %v5438, 4
    %v5467 = vrot.slane %v5440, 4
    %v5468 = vrot.slane %v5442, 4
    %v5469 = vrot.slane %v5444, 4
    %v5470 = vrot.slane %v5446, 4
    %v5471 = vrot.slane %v5448, 4
    %v5472 = vrot.slane %v5450, 4
    %v5473 = vrot.slane %v5452, 4
    %v5474 = vrot.slane %v5454, 4
    %v5475 = vrot.slane %v5456, 4
    %v5476 = vrot.slane %v5458, 4
    %v5477 = vrot.slane %v5460, 4
    %v5478 = vrot.slane %v5462, 4
    %vm5479 = vcmask 785408
    %v5480 = vsel %vm5479, %v5463, %v5432
    %v5481 = vsel %vm5479, %v5464, %v5434
    %v5482 = vsel %vm5479, %v5465, %v5436
    %v5483 = vsel %vm5479, %v5466, %v5438
    %v5484 = vsel %vm5479, %v5467, %v5440
    %v5485 = vsel %vm5479, %v5468, %v5442
    %v5486 = vsel %vm5479, %v5469, %v5444
    %v5487 = vsel %vm5479, %v5470, %v5446
    %v5488 = vsel %vm5479, %v5471, %v5448
    %v5489 = vsel %vm5479, %v5472, %v5450
    %v5490 = vsel %vm5479, %v5473, %v5452
    %v5491 = vsel %vm5479, %v5474, %v5454
    %v5492 = vsel %vm5479, %v5475, %v5456
    %v5493 = vsel %vm5479, %v5476, %v5458
    %v5494 = vsel %vm5479, %v5477, %v5460
    %v5495 = vsel %vm5479, %v5478, %v5462
    %vm5512 = vcmask 130052
    %vm5513 = vmor %vm5512, %vm2031
    %5514 = vst.msk [vmem:[#allocation6] sm:$0xff] %vm5513, %v5480
    %5515 = vst.msk [vmem:[#allocation6 + $0x10] sm:$0xff] %vm5513, %v5481
    %5516 = vst.msk [vmem:[#allocation6 + $0x20] sm:$0xff] %vm5513, %v5482
    %5517 = vst.msk [vmem:[#allocation6 + $0x30] sm:$0xff] %vm5513, %v5483
    %5518 = vst.msk [vmem:[#allocation6 + $0x40] sm:$0xff] %vm5513, %v5484
    %5519 = vst.msk [vmem:[#allocation6 + $0x50] sm:$0xff] %vm5513, %v5485
    %5520 = vst.msk [vmem:[#allocation6 + $0x60] sm:$0xff] %vm5513, %v5486
    %5521 = vst.msk [vmem:[#allocation6 + $0x70] sm:$0xff] %vm5513, %v5487
    %5522 = vst.msk [vmem:[#allocation6 + $0x80] sm:$0xff] %vm5513, %v5488
    %5523 = vst.msk [vmem:[#allocation6 + $0x90] sm:$0xff] %vm5513, %v5489
    %5524 = vst.msk [vmem:[#allocation6 + $0xa0] sm:$0xff] %vm5513, %v5490
    %5525 = vst.msk [vmem:[#allocation6 + $0xb0] sm:$0xff] %vm5513, %v5491
    %5526 = vst.msk [vmem:[#allocation6 + $0xc0] sm:$0xff] %vm5513, %v5492
    %5527 = vst.msk [vmem:[#allocation6 + $0xd0] sm:$0xff] %vm5513, %v5493
    %5528 = vst.msk [vmem:[#allocation6 + $0xe0] sm:$0xff] %vm5513, %v5494
    %5529 = vst.msk [vmem:[#allocation6 + $0xf0] sm:$0xff] %vm5513, %v5495
    %v5530 = vld [vmem:[%s801] sm:$0xf]
    %v5531 = vld [vmem:[%s801 + $0x8] sm:$0xf]
    %v5532 = vld [vmem:[%s801 + $0x10] sm:$0xf]
    %v5533 = vld [vmem:[%s801 + $0x18] sm:$0xf]
    %v5534 = vld [vmem:[%s801 + $0x20] sm:$0xf]
    %v5535 = vld [vmem:[%s801 + $0x28] sm:$0xf]
    %v5536 = vld [vmem:[%s801 + $0x30] sm:$0xf]
    %v5537 = vld [vmem:[%s801 + $0x38] sm:$0xf]
    %v5538 = vld [vmem:[%s801 + $0x50] sm:$0xf]
    %v5539 = vld [vmem:[%s801 + $0x58] sm:$0xf]
    %v5540 = vld [vmem:[%s801 + $0x60] sm:$0xf]
    %v5541 = vld [vmem:[%s801 + $0x68] sm:$0xf]
    %v5542 = vld [vmem:[%s801 + $0x70] sm:$0xf]
    %v5543 = vld [vmem:[%s801 + $0x78] sm:$0xf]
    %v5544 = vld [vmem:[%s801 + $0x80] sm:$0xf]
    %v5545 = vld [vmem:[%s801 + $0x88] sm:$0xf]
    %5562 = vrot.lane.b32.xlu0 %v5530, 16
    %v5563 = vpop.permute.xlu0 %5562
    %5564 = vrot.lane.b32.xlu0 %v5531, 16
    %v5565 = vpop.permute.xlu0 %5564
    %5566 = vrot.lane.b32.xlu0 %v5532, 16
    %v5567 = vpop.permute.xlu0 %5566
    %5568 = vrot.lane.b32.xlu0 %v5533, 16
    %v5569 = vpop.permute.xlu0 %5568
    %5570 = vrot.lane.b32.xlu0 %v5534, 16
    %v5571 = vpop.permute.xlu0 %5570
    %5572 = vrot.lane.b32.xlu0 %v5535, 16
    %v5573 = vpop.permute.xlu0 %5572
    %5574 = vrot.lane.b32.xlu0 %v5536, 16
    %v5575 = vpop.permute.xlu0 %5574
    %5576 = vrot.lane.b32.xlu0 %v5537, 16
    %v5577 = vpop.permute.xlu0 %5576
    %5578 = vrot.lane.b32.xlu0 %v5538, 16
    %v5579 = vpop.permute.xlu0 %5578
    %5580 = vrot.lane.b32.xlu0 %v5539, 16
    %v5581 = vpop.permute.xlu0 %5580
    %5582 = vrot.lane.b32.xlu0 %v5540, 16
    %v5583 = vpop.permute.xlu0 %5582
    %5584 = vrot.lane.b32.xlu0 %v5541, 16
    %v5585 = vpop.permute.xlu0 %5584
    %5586 = vrot.lane.b32.xlu0 %v5542, 16
    %v5587 = vpop.permute.xlu0 %5586
    %5588 = vrot.lane.b32.xlu0 %v5543, 16
    %v5589 = vpop.permute.xlu0 %5588
    %5590 = vrot.lane.b32.xlu0 %v5544, 16
    %v5591 = vpop.permute.xlu0 %5590
    %5592 = vrot.lane.b32.xlu0 %v5545, 16
    %v5593 = vpop.permute.xlu0 %5592
    %vm5610 = vcmask 519296
    %5611 = vst.msk [vmem:[#allocation6 + $0x4] sm:$0xf] %vm5610, %v5563
    %5612 = vst.msk [vmem:[#allocation6 + $0x14] sm:$0xf] %vm5610, %v5565
    %5613 = vst.msk [vmem:[#allocation6 + $0x24] sm:$0xf] %vm5610, %v5567
    %5614 = vst.msk [vmem:[#allocation6 + $0x34] sm:$0xf] %vm5610, %v5569
    %5615 = vst.msk [vmem:[#allocation6 + $0x44] sm:$0xf] %vm5610, %v5571
    %5616 = vst.msk [vmem:[#allocation6 + $0x54] sm:$0xf] %vm5610, %v5573
    %5617 = vst.msk [vmem:[#allocation6 + $0x64] sm:$0xf] %vm5610, %v5575
    %5618 = vst.msk [vmem:[#allocation6 + $0x74] sm:$0xf] %vm5610, %v5577
    %5619 = vst.msk [vmem:[#allocation6 + $0x84] sm:$0xf] %vm5610, %v5579
    %5620 = vst.msk [vmem:[#allocation6 + $0x94] sm:$0xf] %vm5610, %v5581
    %5621 = vst.msk [vmem:[#allocation6 + $0xa4] sm:$0xf] %vm5610, %v5583
    %5622 = vst.msk [vmem:[#allocation6 + $0xb4] sm:$0xf] %vm5610, %v5585
    %5623 = vst.msk [vmem:[#allocation6 + $0xc4] sm:$0xf] %vm5610, %v5587
    %5624 = vst.msk [vmem:[#allocation6 + $0xd4] sm:$0xf] %vm5610, %v5589
    %5625 = vst.msk [vmem:[#allocation6 + $0xe4] sm:$0xf] %vm5610, %v5591
    %5626 = vst.msk [vmem:[#allocation6 + $0xf4] sm:$0xf] %vm5610, %v5593
    %v5627 = vld [vmem:[%s801] sm:$0xf]
    %v5628 = vld [vmem:[%s801 + $0x4] sm:$0x1]
    %v5629 = vld [vmem:[%s801 + $0x8] sm:$0xf]
    %v5630 = vld [vmem:[%s801 + $0xc] sm:$0x1]
    %v5631 = vld [vmem:[%s801 + $0x10] sm:$0xf]
    %v5632 = vld [vmem:[%s801 + $0x14] sm:$0x1]
    %v5633 = vld [vmem:[%s801 + $0x18] sm:$0xf]
    %v5634 = vld [vmem:[%s801 + $0x1c] sm:$0x1]
    %v5635 = vld [vmem:[%s801 + $0x20] sm:$0xf]
    %v5636 = vld [vmem:[%s801 + $0x24] sm:$0x1]
    %v5637 = vld [vmem:[%s801 + $0x28] sm:$0xf]
    %v5638 = vld [vmem:[%s801 + $0x2c] sm:$0x1]
    %v5639 = vld [vmem:[%s801 + $0x30] sm:$0xf]
    %v5640 = vld [vmem:[%s801 + $0x34] sm:$0x1]
    %v5641 = vld [vmem:[%s801 + $0x38] sm:$0xf]
    %v5642 = vld [vmem:[%s801 + $0x3c] sm:$0x1]
    %v5643 = vld [vmem:[%s801 + $0x50] sm:$0xf]
    %v5644 = vld [vmem:[%s801 + $0x54] sm:$0x1]
    %v5645 = vld [vmem:[%s801 + $0x58] sm:$0xf]
    %v5646 = vld [vmem:[%s801 + $0x5c] sm:$0x1]
    %v5647 = vld [vmem:[%s801 + $0x60] sm:$0xf]
    %v5648 = vld [vmem:[%s801 + $0x64] sm:$0x1]
    %v5649 = vld [vmem:[%s801 + $0x68] sm:$0xf]
    %v5650 = vld [vmem:[%s801 + $0x6c] sm:$0x1]
    %v5651 = vld [vmem:[%s801 + $0x70] sm:$0xf]
    %v5652 = vld [vmem:[%s801 + $0x74] sm:$0x1]
    %v5653 = vld [vmem:[%s801 + $0x78] sm:$0xf]
    %v5654 = vld [vmem:[%s801 + $0x7c] sm:$0x1]
    %v5655 = vld [vmem:[%s801 + $0x80] sm:$0xf]
    %v5656 = vld [vmem:[%s801 + $0x84] sm:$0x1]
    %v5657 = vld [vmem:[%s801 + $0x88] sm:$0xf]
    %v5658 = vld [vmem:[%s801 + $0x8c] sm:$0x1]
    %v5660 = vshrl.u32 %v5627, 16
    %v5662 = vrot.slane %v5660, 4
    %v5663 = vshll.u32 %v5627, 16
    %v5665 = vrot.slane %v5663, 5
    %v5666 = vor.u32 %v5662, %v5665
    %v5667 = vrot.slane %v5666, 4
    %v5669 = vshll.u32 %v5628, 16
    %v5671 = vrot.slane %v5669, 5
    %v5672 = vsel %vm1369, %v5667, %v5671
    %v5674 = vshrl.u32 %v5629, 16
    %v5676 = vrot.slane %v5674, 4
    %v5677 = vshll.u32 %v5629, 16
    %v5679 = vrot.slane %v5677, 5
    %v5680 = vor.u32 %v5676, %v5679
    %v5681 = vrot.slane %v5680, 4
    %v5683 = vshll.u32 %v5630, 16
    %v5685 = vrot.slane %v5683, 5
    %v5686 = vsel %vm1369, %v5681, %v5685
    %v5688 = vshrl.u32 %v5631, 16
    %v5690 = vrot.slane %v5688, 4
    %v5691 = vshll.u32 %v5631, 16
    %v5693 = vrot.slane %v5691, 5
    %v5694 = vor.u32 %v5690, %v5693
    %v5695 = vrot.slane %v5694, 4
    %v5697 = vshll.u32 %v5632, 16
    %v5699 = vrot.slane %v5697, 5
    %v5700 = vsel %vm1369, %v5695, %v5699
    %v5702 = vshrl.u32 %v5633, 16
    %v5704 = vrot.slane %v5702, 4
    %v5705 = vshll.u32 %v5633, 16
    %v5707 = vrot.slane %v5705, 5
    %v5708 = vor.u32 %v5704, %v5707
    %v5709 = vrot.slane %v5708, 4
    %v5711 = vshll.u32 %v5634, 16
    %v5713 = vrot.slane %v5711, 5
    %v5714 = vsel %vm1369, %v5709, %v5713
    %v5716 = vshrl.u32 %v5635, 16
    %v5718 = vrot.slane %v5716, 4
    %v5719 = vshll.u32 %v5635, 16
    %v5721 = vrot.slane %v5719, 5
    %v5722 = vor.u32 %v5718, %v5721
    %v5723 = vrot.slane %v5722, 4
    %v5725 = vshll.u32 %v5636, 16
    %v5727 = vrot.slane %v5725, 5
    %v5728 = vsel %vm1369, %v5723, %v5727
    %v5730 = vshrl.u32 %v5637, 16
    %v5732 = vrot.slane %v5730, 4
    %v5733 = vshll.u32 %v5637, 16
    %v5735 = vrot.slane %v5733, 5
    %v5736 = vor.u32 %v5732, %v5735
    %v5737 = vrot.slane %v5736, 4
    %v5739 = vshll.u32 %v5638, 16
    %v5741 = vrot.slane %v5739, 5
    %v5742 = vsel %vm1369, %v5737, %v5741
    %v5744 = vshrl.u32 %v5639, 16
    %v5746 = vrot.slane %v5744, 4
    %v5747 = vshll.u32 %v5639, 16
    %v5749 = vrot.slane %v5747, 5
    %v5750 = vor.u32 %v5746, %v5749
    %v5751 = vrot.slane %v5750, 4
    %v5753 = vshll.u32 %v5640, 16
    %v5755 = vrot.slane %v5753, 5
    %v5756 = vsel %vm1369, %v5751, %v5755
    %v5758 = vshrl.u32 %v5641, 16
    %v5760 = vrot.slane %v5758, 4
    %v5761 = vshll.u32 %v5641, 16
    %v5763 = vrot.slane %v5761, 5
    %v5764 = vor.u32 %v5760, %v5763
    %v5765 = vrot.slane %v5764, 4
    %v5767 = vshll.u32 %v5642, 16
    %v5769 = vrot.slane %v5767, 5
    %v5770 = vsel %vm1369, %v5765, %v5769
    %v5772 = vshrl.u32 %v5643, 16
    %v5774 = vrot.slane %v5772, 4
    %v5775 = vshll.u32 %v5643, 16
    %v5777 = vrot.slane %v5775, 5
    %v5778 = vor.u32 %v5774, %v5777
    %v5779 = vrot.slane %v5778, 4
    %v5781 = vshll.u32 %v5644, 16
    %v5783 = vrot.slane %v5781, 5
    %v5784 = vsel %vm1369, %v5779, %v5783
    %v5786 = vshrl.u32 %v5645, 16
    %v5788 = vrot.slane %v5786, 4
    %v5789 = vshll.u32 %v5645, 16
    %v5791 = vrot.slane %v5789, 5
    %v5792 = vor.u32 %v5788, %v5791
    %v5793 = vrot.slane %v5792, 4
    %v5795 = vshll.u32 %v5646, 16
    %v5797 = vrot.slane %v5795, 5
    %v5798 = vsel %vm1369, %v5793, %v5797
    %v5800 = vshrl.u32 %v5647, 16
    %v5802 = vrot.slane %v5800, 4
    %v5803 = vshll.u32 %v5647, 16
    %v5805 = vrot.slane %v5803, 5
    %v5806 = vor.u32 %v5802, %v5805
    %v5807 = vrot.slane %v5806, 4
    %v5809 = vshll.u32 %v5648, 16
    %v5811 = vrot.slane %v5809, 5
    %v5812 = vsel %vm1369, %v5807, %v5811
    %v5814 = vshrl.u32 %v5649, 16
    %v5816 = vrot.slane %v5814, 4
    %v5817 = vshll.u32 %v5649, 16
    %v5819 = vrot.slane %v5817, 5
    %v5820 = vor.u32 %v5816, %v5819
    %v5821 = vrot.slane %v5820, 4
    %v5823 = vshll.u32 %v5650, 16
    %v5825 = vrot.slane %v5823, 5
    %v5826 = vsel %vm1369, %v5821, %v5825
    %v5828 = vshrl.u32 %v5651, 16
    %v5830 = vrot.slane %v5828, 4
    %v5831 = vshll.u32 %v5651, 16
    %v5833 = vrot.slane %v5831, 5
    %v5834 = vor.u32 %v5830, %v5833
    %v5835 = vrot.slane %v5834, 4
    %v5837 = vshll.u32 %v5652, 16
    %v5839 = vrot.slane %v5837, 5
    %v5840 = vsel %vm1369, %v5835, %v5839
    %v5842 = vshrl.u32 %v5653, 16
    %v5844 = vrot.slane %v5842, 4
    %v5845 = vshll.u32 %v5653, 16
    %v5847 = vrot.slane %v5845, 5
    %v5848 = vor.u32 %v5844, %v5847
    %v5849 = vrot.slane %v5848, 4
    %v5851 = vshll.u32 %v5654, 16
    %v5853 = vrot.slane %v5851, 5
    %v5854 = vsel %vm1369, %v5849, %v5853
    %v5856 = vshrl.u32 %v5655, 16
    %v5858 = vrot.slane %v5856, 4
    %v5859 = vshll.u32 %v5655, 16
    %v5861 = vrot.slane %v5859, 5
    %v5862 = vor.u32 %v5858, %v5861
    %v5863 = vrot.slane %v5862, 4
    %v5865 = vshll.u32 %v5656, 16
    %v5867 = vrot.slane %v5865, 5
    %v5868 = vsel %vm1369, %v5863, %v5867
    %v5870 = vshrl.u32 %v5657, 16
    %v5872 = vrot.slane %v5870, 4
    %v5873 = vshll.u32 %v5657, 16
    %v5875 = vrot.slane %v5873, 5
    %v5876 = vor.u32 %v5872, %v5875
    %v5877 = vrot.slane %v5876, 4
    %v5879 = vshll.u32 %v5658, 16
    %v5881 = vrot.slane %v5879, 5
    %v5882 = vsel %vm1369, %v5877, %v5881
    %5883 = vrot.lane.b32.xlu0 %v5672, 64
    %v5884 = vpop.permute.xlu0 %5883
    %5885 = vrot.lane.b32.xlu0 %v5686, 64
    %v5886 = vpop.permute.xlu0 %5885
    %5887 = vrot.lane.b32.xlu0 %v5700, 64
    %v5888 = vpop.permute.xlu0 %5887
    %5889 = vrot.lane.b32.xlu0 %v5714, 64
    %v5890 = vpop.permute.xlu0 %5889
    %5891 = vrot.lane.b32.xlu0 %v5728, 64
    %v5892 = vpop.permute.xlu0 %5891
    %5893 = vrot.lane.b32.xlu0 %v5742, 64
    %v5894 = vpop.permute.xlu0 %5893
    %5895 = vrot.lane.b32.xlu0 %v5756, 64
    %v5896 = vpop.permute.xlu0 %5895
    %5897 = vrot.lane.b32.xlu0 %v5770, 64
    %v5898 = vpop.permute.xlu0 %5897
    %5899 = vrot.lane.b32.xlu0 %v5784, 64
    %v5900 = vpop.permute.xlu0 %5899
    %5901 = vrot.lane.b32.xlu0 %v5798, 64
    %v5902 = vpop.permute.xlu0 %5901
    %5903 = vrot.lane.b32.xlu0 %v5812, 64
    %v5904 = vpop.permute.xlu0 %5903
    %5905 = vrot.lane.b32.xlu0 %v5826, 64
    %v5906 = vpop.permute.xlu0 %5905
    %5907 = vrot.lane.b32.xlu0 %v5840, 64
    %v5908 = vpop.permute.xlu0 %5907
    %5909 = vrot.lane.b32.xlu0 %v5854, 64
    %v5910 = vpop.permute.xlu0 %5909
    %5911 = vrot.lane.b32.xlu0 %v5868, 64
    %v5912 = vpop.permute.xlu0 %5911
    %5913 = vrot.lane.b32.xlu0 %v5882, 64
    %v5914 = vpop.permute.xlu0 %5913
    %vm5931 = vcmask 912896
    %5932 = vst.msk [vmem:[#allocation6 + $0x4] sm:$0xf] %vm5931, %v5884
    %5933 = vst.msk [vmem:[#allocation6 + $0x14] sm:$0xf] %vm5931, %v5886
    %5934 = vst.msk [vmem:[#allocation6 + $0x24] sm:$0xf] %vm5931, %v5888
    %5935 = vst.msk [vmem:[#allocation6 + $0x34] sm:$0xf] %vm5931, %v5890
    %5936 = vst.msk [vmem:[#allocation6 + $0x44] sm:$0xf] %vm5931, %v5892
    %5937 = vst.msk [vmem:[#allocation6 + $0x54] sm:$0xf] %vm5931, %v5894
    %5938 = vst.msk [vmem:[#allocation6 + $0x64] sm:$0xf] %vm5931, %v5896
    %5939 = vst.msk [vmem:[#allocation6 + $0x74] sm:$0xf] %vm5931, %v5898
    %5940 = vst.msk [vmem:[#allocation6 + $0x84] sm:$0xf] %vm5931, %v5900
    %5941 = vst.msk [vmem:[#allocation6 + $0x94] sm:$0xf] %vm5931, %v5902
    %5942 = vst.msk [vmem:[#allocation6 + $0xa4] sm:$0xf] %vm5931, %v5904
    %5943 = vst.msk [vmem:[#allocation6 + $0xb4] sm:$0xf] %vm5931, %v5906
    %5944 = vst.msk [vmem:[#allocation6 + $0xc4] sm:$0xf] %vm5931, %v5908
    %5945 = vst.msk [vmem:[#allocation6 + $0xd4] sm:$0xf] %vm5931, %v5910
    %5946 = vst.msk [vmem:[#allocation6 + $0xe4] sm:$0xf] %vm5931, %v5912
    %5947 = vst.msk [vmem:[#allocation6 + $0xf4] sm:$0xf] %vm5931, %v5914
    %v5948 = vld [vmem:[%s801] sm:$0xe]
    %v5949 = vld [vmem:[%s801 + $0x4] sm:$0x1]
    %v5950 = vld [vmem:[%s801 + $0x8] sm:$0xe]
    %v5951 = vld [vmem:[%s801 + $0xc] sm:$0x1]
    %v5952 = vld [vmem:[%s801 + $0x10] sm:$0xe]
    %v5953 = vld [vmem:[%s801 + $0x14] sm:$0x1]
    %v5954 = vld [vmem:[%s801 + $0x18] sm:$0xe]
    %v5955 = vld [vmem:[%s801 + $0x1c] sm:$0x1]
    %v5956 = vld [vmem:[%s801 + $0x20] sm:$0xe]
    %v5957 = vld [vmem:[%s801 + $0x24] sm:$0x1]
    %v5958 = vld [vmem:[%s801 + $0x28] sm:$0xe]
    %v5959 = vld [vmem:[%s801 + $0x2c] sm:$0x1]
    %v5960 = vld [vmem:[%s801 + $0x30] sm:$0xe]
    %v5961 = vld [vmem:[%s801 + $0x34] sm:$0x1]
    %v5962 = vld [vmem:[%s801 + $0x38] sm:$0xe]
    %v5963 = vld [vmem:[%s801 + $0x3c] sm:$0x1]
    %v5964 = vld [vmem:[%s801 + $0x50] sm:$0xe]
    %v5965 = vld [vmem:[%s801 + $0x54] sm:$0x1]
    %v5966 = vld [vmem:[%s801 + $0x58] sm:$0xe]
    %v5967 = vld [vmem:[%s801 + $0x5c] sm:$0x1]
    %v5968 = vld [vmem:[%s801 + $0x60] sm:$0xe]
    %v5969 = vld [vmem:[%s801 + $0x64] sm:$0x1]
    %v5970 = vld [vmem:[%s801 + $0x68] sm:$0xe]
    %v5971 = vld [vmem:[%s801 + $0x6c] sm:$0x1]
    %v5972 = vld [vmem:[%s801 + $0x70] sm:$0xe]
    %v5973 = vld [vmem:[%s801 + $0x74] sm:$0x1]
    %v5974 = vld [vmem:[%s801 + $0x78] sm:$0xe]
    %v5975 = vld [vmem:[%s801 + $0x7c] sm:$0x1]
    %v5976 = vld [vmem:[%s801 + $0x80] sm:$0xe]
    %v5977 = vld [vmem:[%s801 + $0x84] sm:$0x1]
    %v5978 = vld [vmem:[%s801 + $0x88] sm:$0xe]
    %v5979 = vld [vmem:[%s801 + $0x8c] sm:$0x1]
    %v6012 = vrot.slane %v5948, 5
    %v6013 = vrot.slane %v6012, 4
    %v6014 = vrot.slane %v5949, 5
    %v6015 = vsel %vm1757, %v6013, %v6014
    %v6016 = vrot.slane %v5950, 5
    %v6017 = vrot.slane %v6016, 4
    %v6018 = vrot.slane %v5951, 5
    %v6019 = vsel %vm1757, %v6017, %v6018
    %v6020 = vrot.slane %v5952, 5
    %v6021 = vrot.slane %v6020, 4
    %v6022 = vrot.slane %v5953, 5
    %v6023 = vsel %vm1757, %v6021, %v6022
    %v6024 = vrot.slane %v5954, 5
    %v6025 = vrot.slane %v6024, 4
    %v6026 = vrot.slane %v5955, 5
    %v6027 = vsel %vm1757, %v6025, %v6026
    %v6028 = vrot.slane %v5956, 5
    %v6029 = vrot.slane %v6028, 4
    %v6030 = vrot.slane %v5957, 5
    %v6031 = vsel %vm1757, %v6029, %v6030
    %v6032 = vrot.slane %v5958, 5
    %v6033 = vrot.slane %v6032, 4
    %v6034 = vrot.slane %v5959, 5
    %v6035 = vsel %vm1757, %v6033, %v6034
    %v6036 = vrot.slane %v5960, 5
    %v6037 = vrot.slane %v6036, 4
    %v6038 = vrot.slane %v5961, 5
    %v6039 = vsel %vm1757, %v6037, %v6038
    %v6040 = vrot.slane %v5962, 5
    %v6041 = vrot.slane %v6040, 4
    %v6042 = vrot.slane %v5963, 5
    %v6043 = vsel %vm1757, %v6041, %v6042
    %v6044 = vrot.slane %v5964, 5
    %v6045 = vrot.slane %v6044, 4
    %v6046 = vrot.slane %v5965, 5
    %v6047 = vsel %vm1757, %v6045, %v6046
    %v6048 = vrot.slane %v5966, 5
    %v6049 = vrot.slane %v6048, 4
    %v6050 = vrot.slane %v5967, 5
    %v6051 = vsel %vm1757, %v6049, %v6050
    %v6052 = vrot.slane %v5968, 5
    %v6053 = vrot.slane %v6052, 4
    %v6054 = vrot.slane %v5969, 5
    %v6055 = vsel %vm1757, %v6053, %v6054
    %v6056 = vrot.slane %v5970, 5
    %v6057 = vrot.slane %v6056, 4
    %v6058 = vrot.slane %v5971, 5
    %v6059 = vsel %vm1757, %v6057, %v6058
    %v6060 = vrot.slane %v5972, 5
    %v6061 = vrot.slane %v6060, 4
    %v6062 = vrot.slane %v5973, 5
    %v6063 = vsel %vm1757, %v6061, %v6062
    %v6064 = vrot.slane %v5974, 5
    %v6065 = vrot.slane %v6064, 4
    %v6066 = vrot.slane %v5975, 5
    %v6067 = vsel %vm1757, %v6065, %v6066
    %v6068 = vrot.slane %v5976, 5
    %v6069 = vrot.slane %v6068, 4
    %v6070 = vrot.slane %v5977, 5
    %v6071 = vsel %vm1757, %v6069, %v6070
    %v6072 = vrot.slane %v5978, 5
    %v6073 = vrot.slane %v6072, 4
    %v6074 = vrot.slane %v5979, 5
    %v6075 = vsel %vm1757, %v6073, %v6074
    %6076 = vrot.lane.b32.xlu0 %v6015, 112
    %v6077 = vpop.permute.xlu0 %6076
    %6078 = vrot.lane.b32.xlu0 %v6019, 112
    %v6079 = vpop.permute.xlu0 %6078
    %6080 = vrot.lane.b32.xlu0 %v6023, 112
    %v6081 = vpop.permute.xlu0 %6080
    %6082 = vrot.lane.b32.xlu0 %v6027, 112
    %v6083 = vpop.permute.xlu0 %6082
    %6084 = vrot.lane.b32.xlu0 %v6031, 112
    %v6085 = vpop.permute.xlu0 %6084
    %6086 = vrot.lane.b32.xlu0 %v6035, 112
    %v6087 = vpop.permute.xlu0 %6086
    %6088 = vrot.lane.b32.xlu0 %v6039, 112
    %v6089 = vpop.permute.xlu0 %6088
    %6090 = vrot.lane.b32.xlu0 %v6043, 112
    %v6091 = vpop.permute.xlu0 %6090
    %6092 = vrot.lane.b32.xlu0 %v6047, 112
    %v6093 = vpop.permute.xlu0 %6092
    %6094 = vrot.lane.b32.xlu0 %v6051, 112
    %v6095 = vpop.permute.xlu0 %6094
    %6096 = vrot.lane.b32.xlu0 %v6055, 112
    %v6097 = vpop.permute.xlu0 %6096
    %6098 = vrot.lane.b32.xlu0 %v6059, 112
    %v6099 = vpop.permute.xlu0 %6098
    %6100 = vrot.lane.b32.xlu0 %v6063, 112
    %v6101 = vpop.permute.xlu0 %6100
    %6102 = vrot.lane.b32.xlu0 %v6067, 112
    %v6103 = vpop.permute.xlu0 %6102
    %6104 = vrot.lane.b32.xlu0 %v6071, 112
    %v6105 = vpop.permute.xlu0 %6104
    %6106 = vrot.lane.b32.xlu0 %v6075, 112
    %v6107 = vpop.permute.xlu0 %6106
    %v6108 = vrot.slane %v6077, 4
    %v6109 = vrot.slane %v6079, 4
    %v6110 = vrot.slane %v6081, 4
    %v6111 = vrot.slane %v6083, 4
    %v6112 = vrot.slane %v6085, 4
    %v6113 = vrot.slane %v6087, 4
    %v6114 = vrot.slane %v6089, 4
    %v6115 = vrot.slane %v6091, 4
    %v6116 = vrot.slane %v6093, 4
    %v6117 = vrot.slane %v6095, 4
    %v6118 = vrot.slane %v6097, 4
    %v6119 = vrot.slane %v6099, 4
    %v6120 = vrot.slane %v6101, 4
    %v6121 = vrot.slane %v6103, 4
    %v6122 = vrot.slane %v6105, 4
    %v6123 = vrot.slane %v6107, 4
    %vm6124 = vcmask 916480
    %v6125 = vsel %vm6124, %v6108, %v6077
    %v6126 = vsel %vm6124, %v6109, %v6079
    %v6127 = vsel %vm6124, %v6110, %v6081
    %v6128 = vsel %vm6124, %v6111, %v6083
    %v6129 = vsel %vm6124, %v6112, %v6085
    %v6130 = vsel %vm6124, %v6113, %v6087
    %v6131 = vsel %vm6124, %v6114, %v6089
    %v6132 = vsel %vm6124, %v6115, %v6091
    %v6133 = vsel %vm6124, %v6116, %v6093
    %v6134 = vsel %vm6124, %v6117, %v6095
    %v6135 = vsel %vm6124, %v6118, %v6097
    %v6136 = vsel %vm6124, %v6119, %v6099
    %v6137 = vsel %vm6124, %v6120, %v6101
    %v6138 = vsel %vm6124, %v6121, %v6103
    %v6139 = vsel %vm6124, %v6122, %v6105
    %v6140 = vsel %vm6124, %v6123, %v6107
    %vm6157 = vcmask 1044352
    %vm6158 = vcmask 261124
    %vm6159 = vmor %vm6158, %vm6157
    %6160 = vst.msk [vmem:[#allocation6 + $0x4] sm:$0xff] %vm6159, %v6125
    %6161 = vst.msk [vmem:[#allocation6 + $0x14] sm:$0xff] %vm6159, %v6126
    %6162 = vst.msk [vmem:[#allocation6 + $0x24] sm:$0xff] %vm6159, %v6127
    %6163 = vst.msk [vmem:[#allocation6 + $0x34] sm:$0xff] %vm6159, %v6128
    %6164 = vst.msk [vmem:[#allocation6 + $0x44] sm:$0xff] %vm6159, %v6129
    %6165 = vst.msk [vmem:[#allocation6 + $0x54] sm:$0xff] %vm6159, %v6130
    %6166 = vst.msk [vmem:[#allocation6 + $0x64] sm:$0xff] %vm6159, %v6131
    %6167 = vst.msk [vmem:[#allocation6 + $0x74] sm:$0xff] %vm6159, %v6132
    %6168 = vst.msk [vmem:[#allocation6 + $0x84] sm:$0xff] %vm6159, %v6133
    %6169 = vst.msk [vmem:[#allocation6 + $0x94] sm:$0xff] %vm6159, %v6134
    %6170 = vst.msk [vmem:[#allocation6 + $0xa4] sm:$0xff] %vm6159, %v6135
    %6171 = vst.msk [vmem:[#allocation6 + $0xb4] sm:$0xff] %vm6159, %v6136
    %6172 = vst.msk [vmem:[#allocation6 + $0xc4] sm:$0xff] %vm6159, %v6137
    %6173 = vst.msk [vmem:[#allocation6 + $0xd4] sm:$0xff] %vm6159, %v6138
    %6174 = vst.msk [vmem:[#allocation6 + $0xe4] sm:$0xff] %vm6159, %v6139
    %6175 = vst.msk [vmem:[#allocation6 + $0xf4] sm:$0xff] %vm6159, %v6140
    %s6176 = scalar_lea.vmem [#allocation3], 16
    %v6177 = vld [vmem:[%s6176] sm:$0xf]
    %v6178 = vld [vmem:[%s6176 + $0x8] sm:$0xf]
    %v6179 = vld [vmem:[%s6176 + $0x10] sm:$0xf]
    %v6180 = vld [vmem:[%s6176 + $0x18] sm:$0xf]
    %v6181 = vld [vmem:[%s6176 + $0x20] sm:$0xf]
    %v6182 = vld [vmem:[%s6176 + $0x28] sm:$0xf]
    %v6183 = vld [vmem:[%s6176 + $0x30] sm:$0xf]
    %v6184 = vld [vmem:[%s6176 + $0x38] sm:$0xf]
    %v6185 = vld [vmem:[%s6176 + $0x50] sm:$0xf]
    %v6186 = vld [vmem:[%s6176 + $0x58] sm:$0xf]
    %v6187 = vld [vmem:[%s6176 + $0x60] sm:$0xf]
    %v6188 = vld [vmem:[%s6176 + $0x68] sm:$0xf]
    %v6189 = vld [vmem:[%s6176 + $0x70] sm:$0xf]
    %v6190 = vld [vmem:[%s6176 + $0x78] sm:$0xf]
    %v6191 = vld [vmem:[%s6176 + $0x80] sm:$0xf]
    %v6192 = vld [vmem:[%s6176 + $0x88] sm:$0xf]
    %6209 = vrot.lane.b32.xlu0 %v6177, 32
    %v6210 = vpop.permute.xlu0 %6209
    %6211 = vrot.lane.b32.xlu0 %v6178, 32
    %v6212 = vpop.permute.xlu0 %6211
    %6213 = vrot.lane.b32.xlu0 %v6179, 32
    %v6214 = vpop.permute.xlu0 %6213
    %6215 = vrot.lane.b32.xlu0 %v6180, 32
    %v6216 = vpop.permute.xlu0 %6215
    %6217 = vrot.lane.b32.xlu0 %v6181, 32
    %v6218 = vpop.permute.xlu0 %6217
    %6219 = vrot.lane.b32.xlu0 %v6182, 32
    %v6220 = vpop.permute.xlu0 %6219
    %6221 = vrot.lane.b32.xlu0 %v6183, 32
    %v6222 = vpop.permute.xlu0 %6221
    %6223 = vrot.lane.b32.xlu0 %v6184, 32
    %v6224 = vpop.permute.xlu0 %6223
    %6225 = vrot.lane.b32.xlu0 %v6185, 32
    %v6226 = vpop.permute.xlu0 %6225
    %6227 = vrot.lane.b32.xlu0 %v6186, 32
    %v6228 = vpop.permute.xlu0 %6227
    %6229 = vrot.lane.b32.xlu0 %v6187, 32
    %v6230 = vpop.permute.xlu0 %6229
    %6231 = vrot.lane.b32.xlu0 %v6188, 32
    %v6232 = vpop.permute.xlu0 %6231
    %6233 = vrot.lane.b32.xlu0 %v6189, 32
    %v6234 = vpop.permute.xlu0 %6233
    %6235 = vrot.lane.b32.xlu0 %v6190, 32
    %v6236 = vpop.permute.xlu0 %6235
    %6237 = vrot.lane.b32.xlu0 %v6191, 32
    %v6238 = vpop.permute.xlu0 %6237
    %6239 = vrot.lane.b32.xlu0 %v6192, 32
    %v6240 = vpop.permute.xlu0 %6239
    %vm6257 = vcmask 650496
    %6258 = vst.msk [vmem:[#allocation6 + $0x8] sm:$0xf] %vm6257, %v6210
    %6259 = vst.msk [vmem:[#allocation6 + $0x18] sm:$0xf] %vm6257, %v6212
    %6260 = vst.msk [vmem:[#allocation6 + $0x28] sm:$0xf] %vm6257, %v6214
    %6261 = vst.msk [vmem:[#allocation6 + $0x38] sm:$0xf] %vm6257, %v6216
    %6262 = vst.msk [vmem:[#allocation6 + $0x48] sm:$0xf] %vm6257, %v6218
    %6263 = vst.msk [vmem:[#allocation6 + $0x58] sm:$0xf] %vm6257, %v6220
    %6264 = vst.msk [vmem:[#allocation6 + $0x68] sm:$0xf] %vm6257, %v6222
    %6265 = vst.msk [vmem:[#allocation6 + $0x78] sm:$0xf] %vm6257, %v6224
    %6266 = vst.msk [vmem:[#allocation6 + $0x88] sm:$0xf] %vm6257, %v6226
    %6267 = vst.msk [vmem:[#allocation6 + $0x98] sm:$0xf] %vm6257, %v6228
    %6268 = vst.msk [vmem:[#allocation6 + $0xa8] sm:$0xf] %vm6257, %v6230
    %6269 = vst.msk [vmem:[#allocation6 + $0xb8] sm:$0xf] %vm6257, %v6232
    %6270 = vst.msk [vmem:[#allocation6 + $0xc8] sm:$0xf] %vm6257, %v6234
    %6271 = vst.msk [vmem:[#allocation6 + $0xd8] sm:$0xf] %vm6257, %v6236
    %6272 = vst.msk [vmem:[#allocation6 + $0xe8] sm:$0xf] %vm6257, %v6238
    %6273 = vst.msk [vmem:[#allocation6 + $0xf8] sm:$0xf] %vm6257, %v6240
    %v6274 = vld [vmem:[%s6176] sm:$0xf]
    %v6275 = vld [vmem:[%s6176 + $0x4] sm:$0x1]
    %v6276 = vld [vmem:[%s6176 + $0x8] sm:$0xf]
    %v6277 = vld [vmem:[%s6176 + $0xc] sm:$0x1]
    %v6278 = vld [vmem:[%s6176 + $0x10] sm:$0xf]
    %v6279 = vld [vmem:[%s6176 + $0x14] sm:$0x1]
    %v6280 = vld [vmem:[%s6176 + $0x18] sm:$0xf]
    %v6281 = vld [vmem:[%s6176 + $0x1c] sm:$0x1]
    %v6282 = vld [vmem:[%s6176 + $0x20] sm:$0xf]
    %v6283 = vld [vmem:[%s6176 + $0x24] sm:$0x1]
    %v6284 = vld [vmem:[%s6176 + $0x28] sm:$0xf]
    %v6285 = vld [vmem:[%s6176 + $0x2c] sm:$0x1]
    %v6286 = vld [vmem:[%s6176 + $0x30] sm:$0xf]
    %v6287 = vld [vmem:[%s6176 + $0x34] sm:$0x1]
    %v6288 = vld [vmem:[%s6176 + $0x38] sm:$0xf]
    %v6289 = vld [vmem:[%s6176 + $0x3c] sm:$0x1]
    %v6290 = vld [vmem:[%s6176 + $0x50] sm:$0xf]
    %v6291 = vld [vmem:[%s6176 + $0x54] sm:$0x1]
    %v6292 = vld [vmem:[%s6176 + $0x58] sm:$0xf]
    %v6293 = vld [vmem:[%s6176 + $0x5c] sm:$0x1]
    %v6294 = vld [vmem:[%s6176 + $0x60] sm:$0xf]
    %v6295 = vld [vmem:[%s6176 + $0x64] sm:$0x1]
    %v6296 = vld [vmem:[%s6176 + $0x68] sm:$0xf]
    %v6297 = vld [vmem:[%s6176 + $0x6c] sm:$0x1]
    %v6298 = vld [vmem:[%s6176 + $0x70] sm:$0xf]
    %v6299 = vld [vmem:[%s6176 + $0x74] sm:$0x1]
    %v6300 = vld [vmem:[%s6176 + $0x78] sm:$0xf]
    %v6301 = vld [vmem:[%s6176 + $0x7c] sm:$0x1]
    %v6302 = vld [vmem:[%s6176 + $0x80] sm:$0xf]
    %v6303 = vld [vmem:[%s6176 + $0x84] sm:$0x1]
    %v6304 = vld [vmem:[%s6176 + $0x88] sm:$0xf]
    %v6305 = vld [vmem:[%s6176 + $0x8c] sm:$0x1]
    %v6307 = vshrl.u32 %v6274, 16
    %v6309 = vrot.slane %v6307, 4
    %v6310 = vshll.u32 %v6274, 16
    %v6312 = vrot.slane %v6310, 5
    %v6313 = vor.u32 %v6309, %v6312
    %v6314 = vrot.slane %v6313, 4
    %v6316 = vshll.u32 %v6275, 16
    %v6318 = vrot.slane %v6316, 5
    %v6319 = vsel %vm1369, %v6314, %v6318
    %v6321 = vshrl.u32 %v6276, 16
    %v6323 = vrot.slane %v6321, 4
    %v6324 = vshll.u32 %v6276, 16
    %v6326 = vrot.slane %v6324, 5
    %v6327 = vor.u32 %v6323, %v6326
    %v6328 = vrot.slane %v6327, 4
    %v6330 = vshll.u32 %v6277, 16
    %v6332 = vrot.slane %v6330, 5
    %v6333 = vsel %vm1369, %v6328, %v6332
    %v6335 = vshrl.u32 %v6278, 16
    %v6337 = vrot.slane %v6335, 4
    %v6338 = vshll.u32 %v6278, 16
    %v6340 = vrot.slane %v6338, 5
    %v6341 = vor.u32 %v6337, %v6340
    %v6342 = vrot.slane %v6341, 4
    %v6344 = vshll.u32 %v6279, 16
    %v6346 = vrot.slane %v6344, 5
    %v6347 = vsel %vm1369, %v6342, %v6346
    %v6349 = vshrl.u32 %v6280, 16
    %v6351 = vrot.slane %v6349, 4
    %v6352 = vshll.u32 %v6280, 16
    %v6354 = vrot.slane %v6352, 5
    %v6355 = vor.u32 %v6351, %v6354
    %v6356 = vrot.slane %v6355, 4
    %v6358 = vshll.u32 %v6281, 16
    %v6360 = vrot.slane %v6358, 5
    %v6361 = vsel %vm1369, %v6356, %v6360
    %v6363 = vshrl.u32 %v6282, 16
    %v6365 = vrot.slane %v6363, 4
    %v6366 = vshll.u32 %v6282, 16
    %v6368 = vrot.slane %v6366, 5
    %v6369 = vor.u32 %v6365, %v6368
    %v6370 = vrot.slane %v6369, 4
    %v6372 = vshll.u32 %v6283, 16
    %v6374 = vrot.slane %v6372, 5
    %v6375 = vsel %vm1369, %v6370, %v6374
    %v6377 = vshrl.u32 %v6284, 16
    %v6379 = vrot.slane %v6377, 4
    %v6380 = vshll.u32 %v6284, 16
    %v6382 = vrot.slane %v6380, 5
    %v6383 = vor.u32 %v6379, %v6382
    %v6384 = vrot.slane %v6383, 4
    %v6386 = vshll.u32 %v6285, 16
    %v6388 = vrot.slane %v6386, 5
    %v6389 = vsel %vm1369, %v6384, %v6388
    %v6391 = vshrl.u32 %v6286, 16
    %v6393 = vrot.slane %v6391, 4
    %v6394 = vshll.u32 %v6286, 16
    %v6396 = vrot.slane %v6394, 5
    %v6397 = vor.u32 %v6393, %v6396
    %v6398 = vrot.slane %v6397, 4
    %v6400 = vshll.u32 %v6287, 16
    %v6402 = vrot.slane %v6400, 5
    %v6403 = vsel %vm1369, %v6398, %v6402
    %v6405 = vshrl.u32 %v6288, 16
    %v6407 = vrot.slane %v6405, 4
    %v6408 = vshll.u32 %v6288, 16
    %v6410 = vrot.slane %v6408, 5
    %v6411 = vor.u32 %v6407, %v6410
    %v6412 = vrot.slane %v6411, 4
    %v6414 = vshll.u32 %v6289, 16
    %v6416 = vrot.slane %v6414, 5
    %v6417 = vsel %vm1369, %v6412, %v6416
    %v6419 = vshrl.u32 %v6290, 16
    %v6421 = vrot.slane %v6419, 4
    %v6422 = vshll.u32 %v6290, 16
    %v6424 = vrot.slane %v6422, 5
    %v6425 = vor.u32 %v6421, %v6424
    %v6426 = vrot.slane %v6425, 4
    %v6428 = vshll.u32 %v6291, 16
    %v6430 = vrot.slane %v6428, 5
    %v6431 = vsel %vm1369, %v6426, %v6430
    %v6433 = vshrl.u32 %v6292, 16
    %v6435 = vrot.slane %v6433, 4
    %v6436 = vshll.u32 %v6292, 16
    %v6438 = vrot.slane %v6436, 5
    %v6439 = vor.u32 %v6435, %v6438
    %v6440 = vrot.slane %v6439, 4
    %v6442 = vshll.u32 %v6293, 16
    %v6444 = vrot.slane %v6442, 5
    %v6445 = vsel %vm1369, %v6440, %v6444
    %v6447 = vshrl.u32 %v6294, 16
    %v6449 = vrot.slane %v6447, 4
    %v6450 = vshll.u32 %v6294, 16
    %v6452 = vrot.slane %v6450, 5
    %v6453 = vor.u32 %v6449, %v6452
    %v6454 = vrot.slane %v6453, 4
    %v6456 = vshll.u32 %v6295, 16
    %v6458 = vrot.slane %v6456, 5
    %v6459 = vsel %vm1369, %v6454, %v6458
    %v6461 = vshrl.u32 %v6296, 16
    %v6463 = vrot.slane %v6461, 4
    %v6464 = vshll.u32 %v6296, 16
    %v6466 = vrot.slane %v6464, 5
    %v6467 = vor.u32 %v6463, %v6466
    %v6468 = vrot.slane %v6467, 4
    %v6470 = vshll.u32 %v6297, 16
    %v6472 = vrot.slane %v6470, 5
    %v6473 = vsel %vm1369, %v6468, %v6472
    %v6475 = vshrl.u32 %v6298, 16
    %v6477 = vrot.slane %v6475, 4
    %v6478 = vshll.u32 %v6298, 16
    %v6480 = vrot.slane %v6478, 5
    %v6481 = vor.u32 %v6477, %v6480
    %v6482 = vrot.slane %v6481, 4
    %v6484 = vshll.u32 %v6299, 16
    %v6486 = vrot.slane %v6484, 5
    %v6487 = vsel %vm1369, %v6482, %v6486
    %v6489 = vshrl.u32 %v6300, 16
    %v6491 = vrot.slane %v6489, 4
    %v6492 = vshll.u32 %v6300, 16
    %v6494 = vrot.slane %v6492, 5
    %v6495 = vor.u32 %v6491, %v6494
    %v6496 = vrot.slane %v6495, 4
    %v6498 = vshll.u32 %v6301, 16
    %v6500 = vrot.slane %v6498, 5
    %v6501 = vsel %vm1369, %v6496, %v6500
    %v6503 = vshrl.u32 %v6302, 16
    %v6505 = vrot.slane %v6503, 4
    %v6506 = vshll.u32 %v6302, 16
    %v6508 = vrot.slane %v6506, 5
    %v6509 = vor.u32 %v6505, %v6508
    %v6510 = vrot.slane %v6509, 4
    %v6512 = vshll.u32 %v6303, 16
    %v6514 = vrot.slane %v6512, 5
    %v6515 = vsel %vm1369, %v6510, %v6514
    %v6517 = vshrl.u32 %v6304, 16
    %v6519 = vrot.slane %v6517, 4
    %v6520 = vshll.u32 %v6304, 16
    %v6522 = vrot.slane %v6520, 5
    %v6523 = vor.u32 %v6519, %v6522
    %v6524 = vrot.slane %v6523, 4
    %v6526 = vshll.u32 %v6305, 16
    %v6528 = vrot.slane %v6526, 5
    %v6529 = vsel %vm1369, %v6524, %v6528
    %6530 = vrot.lane.b32.xlu0 %v6319, 80
    %v6531 = vpop.permute.xlu0 %6530
    %6532 = vrot.lane.b32.xlu0 %v6333, 80
    %v6533 = vpop.permute.xlu0 %6532
    %6534 = vrot.lane.b32.xlu0 %v6347, 80
    %v6535 = vpop.permute.xlu0 %6534
    %6536 = vrot.lane.b32.xlu0 %v6361, 80
    %v6537 = vpop.permute.xlu0 %6536
    %6538 = vrot.lane.b32.xlu0 %v6375, 80
    %v6539 = vpop.permute.xlu0 %6538
    %6540 = vrot.lane.b32.xlu0 %v6389, 80
    %v6541 = vpop.permute.xlu0 %6540
    %6542 = vrot.lane.b32.xlu0 %v6403, 80
    %v6543 = vpop.permute.xlu0 %6542
    %6544 = vrot.lane.b32.xlu0 %v6417, 80
    %v6545 = vpop.permute.xlu0 %6544
    %6546 = vrot.lane.b32.xlu0 %v6431, 80
    %v6547 = vpop.permute.xlu0 %6546
    %6548 = vrot.lane.b32.xlu0 %v6445, 80
    %v6549 = vpop.permute.xlu0 %6548
    %6550 = vrot.lane.b32.xlu0 %v6459, 80
    %v6551 = vpop.permute.xlu0 %6550
    %6552 = vrot.lane.b32.xlu0 %v6473, 80
    %v6553 = vpop.permute.xlu0 %6552
    %6554 = vrot.lane.b32.xlu0 %v6487, 80
    %v6555 = vpop.permute.xlu0 %6554
    %6556 = vrot.lane.b32.xlu0 %v6501, 80
    %v6557 = vpop.permute.xlu0 %6556
    %6558 = vrot.lane.b32.xlu0 %v6515, 80
    %v6559 = vpop.permute.xlu0 %6558
    %6560 = vrot.lane.b32.xlu0 %v6529, 80
    %v6561 = vpop.permute.xlu0 %6560
    %vm6578 = vcmask 1044096
    %6579 = vst.msk [vmem:[#allocation6 + $0x8] sm:$0xf] %vm6578, %v6531
    %6580 = vst.msk [vmem:[#allocation6 + $0x18] sm:$0xf] %vm6578, %v6533
    %6581 = vst.msk [vmem:[#allocation6 + $0x28] sm:$0xf] %vm6578, %v6535
    %6582 = vst.msk [vmem:[#allocation6 + $0x38] sm:$0xf] %vm6578, %v6537
    %6583 = vst.msk [vmem:[#allocation6 + $0x48] sm:$0xf] %vm6578, %v6539
    %6584 = vst.msk [vmem:[#allocation6 + $0x58] sm:$0xf] %vm6578, %v6541
    %6585 = vst.msk [vmem:[#allocation6 + $0x68] sm:$0xf] %vm6578, %v6543
    %6586 = vst.msk [vmem:[#allocation6 + $0x78] sm:$0xf] %vm6578, %v6545
    %6587 = vst.msk [vmem:[#allocation6 + $0x88] sm:$0xf] %vm6578, %v6547
    %6588 = vst.msk [vmem:[#allocation6 + $0x98] sm:$0xf] %vm6578, %v6549
    %6589 = vst.msk [vmem:[#allocation6 + $0xa8] sm:$0xf] %vm6578, %v6551
    %6590 = vst.msk [vmem:[#allocation6 + $0xb8] sm:$0xf] %vm6578, %v6553
    %6591 = vst.msk [vmem:[#allocation6 + $0xc8] sm:$0xf] %vm6578, %v6555
    %6592 = vst.msk [vmem:[#allocation6 + $0xd8] sm:$0xf] %vm6578, %v6557
    %6593 = vst.msk [vmem:[#allocation6 + $0xe8] sm:$0xf] %vm6578, %v6559
    %6594 = vst.msk [vmem:[#allocation6 + $0xf8] sm:$0xf] %vm6578, %v6561
    %v6595 = vld [vmem:[%s6176] sm:$0xe]
    %v6596 = vld [vmem:[%s6176 + $0x4] sm:$0x1]
    %v6597 = vld [vmem:[%s6176 + $0x8] sm:$0xe]
    %v6598 = vld [vmem:[%s6176 + $0xc] sm:$0x1]
    %v6599 = vld [vmem:[%s6176 + $0x10] sm:$0xe]
    %v6600 = vld [vmem:[%s6176 + $0x14] sm:$0x1]
    %v6601 = vld [vmem:[%s6176 + $0x18] sm:$0xe]
    %v6602 = vld [vmem:[%s6176 + $0x1c] sm:$0x1]
    %v6603 = vld [vmem:[%s6176 + $0x20] sm:$0xe]
    %v6604 = vld [vmem:[%s6176 + $0x24] sm:$0x1]
    %v6605 = vld [vmem:[%s6176 + $0x28] sm:$0xe]
    %v6606 = vld [vmem:[%s6176 + $0x2c] sm:$0x1]
    %v6607 = vld [vmem:[%s6176 + $0x30] sm:$0xe]
    %v6608 = vld [vmem:[%s6176 + $0x34] sm:$0x1]
    %v6609 = vld [vmem:[%s6176 + $0x38] sm:$0xe]
    %v6610 = vld [vmem:[%s6176 + $0x3c] sm:$0x1]
    %v6611 = vld [vmem:[%s6176 + $0x50] sm:$0xe]
    %v6612 = vld [vmem:[%s6176 + $0x54] sm:$0x1]
    %v6613 = vld [vmem:[%s6176 + $0x58] sm:$0xe]
    %v6614 = vld [vmem:[%s6176 + $0x5c] sm:$0x1]
    %v6615 = vld [vmem:[%s6176 + $0x60] sm:$0xe]
    %v6616 = vld [vmem:[%s6176 + $0x64] sm:$0x1]
    %v6617 = vld [vmem:[%s6176 + $0x68] sm:$0xe]
    %v6618 = vld [vmem:[%s6176 + $0x6c] sm:$0x1]
    %v6619 = vld [vmem:[%s6176 + $0x70] sm:$0xe]
    %v6620 = vld [vmem:[%s6176 + $0x74] sm:$0x1]
    %v6621 = vld [vmem:[%s6176 + $0x78] sm:$0xe]
    %v6622 = vld [vmem:[%s6176 + $0x7c] sm:$0x1]
    %v6623 = vld [vmem:[%s6176 + $0x80] sm:$0xe]
    %v6624 = vld [vmem:[%s6176 + $0x84] sm:$0x1]
    %v6625 = vld [vmem:[%s6176 + $0x88] sm:$0xe]
    %v6626 = vld [vmem:[%s6176 + $0x8c] sm:$0x1]
    %v6659 = vrot.slane %v6595, 5
    %v6660 = vrot.slane %v6659, 4
    %v6661 = vrot.slane %v6596, 5
    %v6662 = vsel %vm1757, %v6660, %v6661
    %v6663 = vrot.slane %v6597, 5
    %v6664 = vrot.slane %v6663, 4
    %v6665 = vrot.slane %v6598, 5
    %v6666 = vsel %vm1757, %v6664, %v6665
    %v6667 = vrot.slane %v6599, 5
    %v6668 = vrot.slane %v6667, 4
    %v6669 = vrot.slane %v6600, 5
    %v6670 = vsel %vm1757, %v6668, %v6669
    %v6671 = vrot.slane %v6601, 5
    %v6672 = vrot.slane %v6671, 4
    %v6673 = vrot.slane %v6602, 5
    %v6674 = vsel %vm1757, %v6672, %v6673
    %v6675 = vrot.slane %v6603, 5
    %v6676 = vrot.slane %v6675, 4
    %v6677 = vrot.slane %v6604, 5
    %v6678 = vsel %vm1757, %v6676, %v6677
    %v6679 = vrot.slane %v6605, 5
    %v6680 = vrot.slane %v6679, 4
    %v6681 = vrot.slane %v6606, 5
    %v6682 = vsel %vm1757, %v6680, %v6681
    %v6683 = vrot.slane %v6607, 5
    %v6684 = vrot.slane %v6683, 4
    %v6685 = vrot.slane %v6608, 5
    %v6686 = vsel %vm1757, %v6684, %v6685
    %v6687 = vrot.slane %v6609, 5
    %v6688 = vrot.slane %v6687, 4
    %v6689 = vrot.slane %v6610, 5
    %v6690 = vsel %vm1757, %v6688, %v6689
    %v6691 = vrot.slane %v6611, 5
    %v6692 = vrot.slane %v6691, 4
    %v6693 = vrot.slane %v6612, 5
    %v6694 = vsel %vm1757, %v6692, %v6693
    %v6695 = vrot.slane %v6613, 5
    %v6696 = vrot.slane %v6695, 4
    %v6697 = vrot.slane %v6614, 5
    %v6698 = vsel %vm1757, %v6696, %v6697
    %v6699 = vrot.slane %v6615, 5
    %v6700 = vrot.slane %v6699, 4
    %v6701 = vrot.slane %v6616, 5
    %v6702 = vsel %vm1757, %v6700, %v6701
    %v6703 = vrot.slane %v6617, 5
    %v6704 = vrot.slane %v6703, 4
    %v6705 = vrot.slane %v6618, 5
    %v6706 = vsel %vm1757, %v6704, %v6705
    %v6707 = vrot.slane %v6619, 5
    %v6708 = vrot.slane %v6707, 4
    %v6709 = vrot.slane %v6620, 5
    %v6710 = vsel %vm1757, %v6708, %v6709
    %v6711 = vrot.slane %v6621, 5
    %v6712 = vrot.slane %v6711, 4
    %v6713 = vrot.slane %v6622, 5
    %v6714 = vsel %vm1757, %v6712, %v6713
    %v6715 = vrot.slane %v6623, 5
    %v6716 = vrot.slane %v6715, 4
    %v6717 = vrot.slane %v6624, 5
    %v6718 = vsel %vm1757, %v6716, %v6717
    %v6719 = vrot.slane %v6625, 5
    %v6720 = vrot.slane %v6719, 4
    %v6721 = vrot.slane %v6626, 5
    %v6722 = vsel %vm1757, %v6720, %v6721
    %6739 = vst.msk [vmem:[#allocation6 + $0xc] sm:$0xf] %vm790, %v6662
    %6740 = vst.msk [vmem:[#allocation6 + $0x1c] sm:$0xf] %vm790, %v6666
    %6741 = vst.msk [vmem:[#allocation6 + $0x2c] sm:$0xf] %vm790, %v6670
    %6742 = vst.msk [vmem:[#allocation6 + $0x3c] sm:$0xf] %vm790, %v6674
    %6743 = vst.msk [vmem:[#allocation6 + $0x4c] sm:$0xf] %vm790, %v6678
    %6744 = vst.msk [vmem:[#allocation6 + $0x5c] sm:$0xf] %vm790, %v6682
    %6745 = vst.msk [vmem:[#allocation6 + $0x6c] sm:$0xf] %vm790, %v6686
    %6746 = vst.msk [vmem:[#allocation6 + $0x7c] sm:$0xf] %vm790, %v6690
    %6747 = vst.msk [vmem:[#allocation6 + $0x8c] sm:$0xf] %vm790, %v6694
    %6748 = vst.msk [vmem:[#allocation6 + $0x9c] sm:$0xf] %vm790, %v6698
    %6749 = vst.msk [vmem:[#allocation6 + $0xac] sm:$0xf] %vm790, %v6702
    %6750 = vst.msk [vmem:[#allocation6 + $0xbc] sm:$0xf] %vm790, %v6706
    %6751 = vst.msk [vmem:[#allocation6 + $0xcc] sm:$0xf] %vm790, %v6710
    %6752 = vst.msk [vmem:[#allocation6 + $0xdc] sm:$0xf] %vm790, %v6714
    %6753 = vst.msk [vmem:[#allocation6 + $0xec] sm:$0xf] %vm790, %v6718
    %6754 = vst.msk [vmem:[#allocation6 + $0xfc] sm:$0xf] %vm790, %v6722
    %v6755 = vld [vmem:[#allocation6] sm:$0xff]
    %v6756 = vld [vmem:[#allocation6 + $0x8] sm:$0xff]
    %v6757 = vld [vmem:[#allocation6 + $0x10] sm:$0xff]
    %v6758 = vld [vmem:[#allocation6 + $0x18] sm:$0xff]
    %v6759 = vld [vmem:[#allocation6 + $0x20] sm:$0xff]
    %v6760 = vld [vmem:[#allocation6 + $0x28] sm:$0xff]
    %v6761 = vld [vmem:[#allocation6 + $0x30] sm:$0xff]
    %v6762 = vld [vmem:[#allocation6 + $0x38] sm:$0xff]
    %v6763 = vld [vmem:[#allocation6 + $0x40] sm:$0xff]
    %v6764 = vld [vmem:[#allocation6 + $0x48] sm:$0xff]
    %v6765 = vld [vmem:[#allocation6 + $0x50] sm:$0xff]
    %v6766 = vld [vmem:[#allocation6 + $0x58] sm:$0xff]
    %v6767 = vld [vmem:[#allocation6 + $0x60] sm:$0xff]
    %v6768 = vld [vmem:[#allocation6 + $0x68] sm:$0xff]
    %v6769 = vld [vmem:[#allocation6 + $0x70] sm:$0xff]
    %v6770 = vld [vmem:[#allocation6 + $0x78] sm:$0xff]
    %v6771 = vld [vmem:[#allocation6 + $0x80] sm:$0xff]
    %v6772 = vld [vmem:[#allocation6 + $0x88] sm:$0xff]
    %v6773 = vld [vmem:[#allocation6 + $0x90] sm:$0xff]
    %v6774 = vld [vmem:[#allocation6 + $0x98] sm:$0xff]
    %v6775 = vld [vmem:[#allocation6 + $0xa0] sm:$0xff]
    %v6776 = vld [vmem:[#allocation6 + $0xa8] sm:$0xff]
    %v6777 = vld [vmem:[#allocation6 + $0xb0] sm:$0xff]
    %v6778 = vld [vmem:[#allocation6 + $0xb8] sm:$0xff]
    %v6779 = vld [vmem:[#allocation6 + $0xc0] sm:$0xff]
    %v6780 = vld [vmem:[#allocation6 + $0xc8] sm:$0xff]
    %v6781 = vld [vmem:[#allocation6 + $0xd0] sm:$0xff]
    %v6782 = vld [vmem:[#allocation6 + $0xd8] sm:$0xff]
    %v6783 = vld [vmem:[#allocation6 + $0xe0] sm:$0xff]
    %v6784 = vld [vmem:[#allocation6 + $0xe8] sm:$0xff]
    %v6785 = vld [vmem:[#allocation6 + $0xf0] sm:$0xff]
    %v6786 = vld [vmem:[#allocation6 + $0xf8] sm:$0xff]
    %v6787 = vld [vmem:[#allocation16] sm:$0xf]
    %v6788 = vld [vmem:[#allocation16 + $0x4] sm:$0xf]
    %v6789 = vld [vmem:[#allocation16 + $0x8] sm:$0xf]
    %v6790 = vld [vmem:[#allocation16 + $0xc] sm:$0xf]
    %v6791 = vld [vmem:[#allocation16 + $0x10] sm:$0xf]
    %v6792 = vld [vmem:[#allocation16 + $0x14] sm:$0xf]
    %v6793 = vld [vmem:[#allocation16 + $0x18] sm:$0xf]
    %v6794 = vld [vmem:[#allocation16 + $0x1c] sm:$0xf]
    %v6795 = vld [vmem:[#allocation16 + $0x20] sm:$0xf]
    %v6796 = vld [vmem:[#allocation16 + $0x24] sm:$0xf]
    %v6797 = vld [vmem:[#allocation16 + $0x28] sm:$0xf]
    %v6798 = vld [vmem:[#allocation16 + $0x2c] sm:$0xf]
    %v6799 = vld [vmem:[#allocation16 + $0x30] sm:$0xf]
    %v6800 = vld [vmem:[#allocation16 + $0x34] sm:$0xf]
    %v6801 = vld [vmem:[#allocation16 + $0x38] sm:$0xf]
    %v6802 = vld [vmem:[#allocation16 + $0x3c] sm:$0xf]
    %v6803 = vld [vmem:[#allocation16 + $0x40] sm:$0xf]
    %v6804 = vld [vmem:[#allocation16 + $0x44] sm:$0xf]
    %v6805 = vld [vmem:[#allocation16 + $0x48] sm:$0xf]
    %v6806 = vld [vmem:[#allocation16 + $0x4c] sm:$0xf]
    %v6807 = vld [vmem:[#allocation16 + $0x50] sm:$0xf]
    %v6808 = vld [vmem:[#allocation16 + $0x54] sm:$0xf]
    %v6809 = vld [vmem:[#allocation16 + $0x58] sm:$0xf]
    %v6810 = vld [vmem:[#allocation16 + $0x5c] sm:$0xf]
    %v6811 = vld [vmem:[#allocation16 + $0x60] sm:$0xf]
    %v6812 = vld [vmem:[#allocation16 + $0x64] sm:$0xf]
    %v6813 = vld [vmem:[#allocation16 + $0x68] sm:$0xf]
    %v6814 = vld [vmem:[#allocation16 + $0x6c] sm:$0xf]
    %v6815 = vld [vmem:[#allocation16 + $0x70] sm:$0xf]
    %v6816 = vld [vmem:[#allocation16 + $0x74] sm:$0xf]
    %v6817 = vld [vmem:[#allocation16 + $0x78] sm:$0xf]
    %v6818 = vld [vmem:[#allocation16 + $0x7c] sm:$0xf]
    %v6819 = vld [vmem:[#allocation16 + $0x80] sm:$0xf]
    %v6820 = vld [vmem:[#allocation16 + $0x84] sm:$0xf]
    %v6821 = vld [vmem:[#allocation16 + $0x88] sm:$0xf]
    %v6822 = vld [vmem:[#allocation16 + $0x8c] sm:$0xf]
    %v6823 = vld [vmem:[#allocation16 + $0x90] sm:$0xf]
    %v6824 = vld [vmem:[#allocation16 + $0x94] sm:$0xf]
    %v6825 = vld [vmem:[#allocation16 + $0x98] sm:$0xf]
    %v6826 = vld [vmem:[#allocation16 + $0x9c] sm:$0xf]
    %v6827 = vld [vmem:[#allocation16 + $0xa0] sm:$0xf]
    %v6828 = vld [vmem:[#allocation16 + $0xa4] sm:$0xf]
    %v6829 = vld [vmem:[#allocation16 + $0xa8] sm:$0xf]
    %v6830 = vld [vmem:[#allocation16 + $0xac] sm:$0xf]
    %v6831 = vld [vmem:[#allocation16 + $0xb0] sm:$0xf]
    %v6832 = vld [vmem:[#allocation16 + $0xb4] sm:$0xf]
    %v6833 = vld [vmem:[#allocation16 + $0xb8] sm:$0xf]
    %v6834 = vld [vmem:[#allocation16 + $0xbc] sm:$0xf]
    %v6835 = vld [vmem:[#allocation16 + $0xc0] sm:$0xf]
    %v6836 = vld [vmem:[#allocation16 + $0xc4] sm:$0xf]
    %v6837 = vld [vmem:[#allocation16 + $0xc8] sm:$0xf]
    %v6838 = vld [vmem:[#allocation16 + $0xcc] sm:$0xf]
    %v6839 = vld [vmem:[#allocation16 + $0xd0] sm:$0xf]
    %v6840 = vld [vmem:[#allocation16 + $0xd4] sm:$0xf]
    %v6841 = vld [vmem:[%s8] sm:$0x1]
    %v6843 = vlaneseq
    %v6844 = vshrl.u32 %v6843, 7
    %v6845 = vsub.s32 0, %v6844
    %v6846 = vrot.slane %v6841, %v6845
    %v6880 = vunpack.c.l.b16 %v6755
    %v6881 = vunpack.c.h.b16 %v6755
    %v6882 = vunpack.c.l.b16 %v6756
    %v6883 = vunpack.c.h.b16 %v6756
    %v6884 = vunpack.c.l.b16 %v6757
    %v6885 = vunpack.c.h.b16 %v6757
    %v6886 = vunpack.c.l.b16 %v6758
    %v6887 = vunpack.c.h.b16 %v6758
    %v6888 = vunpack.c.l.b16 %v6759
    %v6889 = vunpack.c.h.b16 %v6759
    %v6890 = vunpack.c.l.b16 %v6760
    %v6891 = vunpack.c.h.b16 %v6760
    %v6892 = vunpack.c.l.b16 %v6761
    %v6893 = vunpack.c.h.b16 %v6761
    %v6894 = vunpack.c.l.b16 %v6762
    %v6895 = vunpack.c.h.b16 %v6762
    %v6896 = vunpack.c.l.b16 %v6763
    %v6897 = vunpack.c.h.b16 %v6763
    %v6898 = vunpack.c.l.b16 %v6764
    %v6899 = vunpack.c.h.b16 %v6764
    %v6900 = vunpack.c.l.b16 %v6765
    %v6901 = vunpack.c.h.b16 %v6765
    %v6902 = vunpack.c.l.b16 %v6766
    %v6903 = vunpack.c.h.b16 %v6766
    %v6904 = vunpack.c.l.b16 %v6767
    %v6905 = vunpack.c.h.b16 %v6767
    %v6906 = vunpack.c.l.b16 %v6768
    %v6907 = vunpack.c.h.b16 %v6768
    %v6908 = vunpack.c.l.b16 %v6769
    %v6909 = vunpack.c.h.b16 %v6769
    %v6910 = vunpack.c.l.b16 %v6770
    %v6911 = vunpack.c.h.b16 %v6770
    %v6912 = vunpack.c.l.b16 %v6771
    %v6913 = vunpack.c.h.b16 %v6771
    %v6914 = vunpack.c.l.b16 %v6772
    %v6915 = vunpack.c.h.b16 %v6772
    %v6916 = vunpack.c.l.b16 %v6773
    %v6917 = vunpack.c.h.b16 %v6773
    %v6918 = vunpack.c.l.b16 %v6774
    %v6919 = vunpack.c.h.b16 %v6774
    %v6920 = vunpack.c.l.b16 %v6775
    %v6921 = vunpack.c.h.b16 %v6775
    %v6922 = vunpack.c.l.b16 %v6776
    %v6923 = vunpack.c.h.b16 %v6776
    %v6924 = vunpack.c.l.b16 %v6777
    %v6925 = vunpack.c.h.b16 %v6777
    %v6926 = vunpack.c.l.b16 %v6778
    %v6927 = vunpack.c.h.b16 %v6778
    %v6928 = vunpack.c.l.b16 %v6779
    %v6929 = vunpack.c.h.b16 %v6779
    %v6930 = vunpack.c.l.b16 %v6780
    %v6931 = vunpack.c.h.b16 %v6780
    %v6932 = vunpack.c.l.b16 %v6781
    %v6933 = vunpack.c.h.b16 %v6781
    %v6934 = vunpack.c.l.b16 %v6782
    %v6935 = vunpack.c.h.b16 %v6782
    %v6936 = vunpack.c.l.b16 %v6783
    %v6937 = vunpack.c.h.b16 %v6783
    %v6938 = vunpack.c.l.b16 %v6784
    %v6939 = vunpack.c.h.b16 %v6784
    %v6940 = vunpack.c.l.b16 %v6785
    %v6941 = vunpack.c.h.b16 %v6785
    %v6942 = vunpack.c.l.b16 %v6786
    %v6943 = vunpack.c.h.b16 %v6786
    %v6944 = vpack.c.b16 %v6884, %v6880
    %v6945 = vpack.c.b16 %v6885, %v6881
    %v6946 = vpack.c.b16 %v6886, %v6882
    %v6947 = vpack.c.b16 %v6887, %v6883
    %v6948 = vpack.c.b16 %v6892, %v6888
    %v6949 = vpack.c.b16 %v6893, %v6889
    %v6950 = vpack.c.b16 %v6894, %v6890
    %v6951 = vpack.c.b16 %v6895, %v6891
    %v6952 = vpack.c.b16 %v6900, %v6896
    %v6953 = vpack.c.b16 %v6901, %v6897
    %v6954 = vpack.c.b16 %v6902, %v6898
    %v6955 = vpack.c.b16 %v6903, %v6899
    %v6956 = vpack.c.b16 %v6908, %v6904
    %v6957 = vpack.c.b16 %v6909, %v6905
    %v6958 = vpack.c.b16 %v6910, %v6906
    %v6959 = vpack.c.b16 %v6911, %v6907
    %v6960 = vpack.c.b16 %v6916, %v6912
    %v6961 = vpack.c.b16 %v6917, %v6913
    %v6962 = vpack.c.b16 %v6918, %v6914
    %v6963 = vpack.c.b16 %v6919, %v6915
    %v6964 = vpack.c.b16 %v6924, %v6920
    %v6965 = vpack.c.b16 %v6925, %v6921
    %v6966 = vpack.c.b16 %v6926, %v6922
    %v6967 = vpack.c.b16 %v6927, %v6923
    %v6968 = vpack.c.b16 %v6932, %v6928
    %v6969 = vpack.c.b16 %v6933, %v6929
    %v6970 = vpack.c.b16 %v6934, %v6930
    %v6971 = vpack.c.b16 %v6935, %v6931
    %v6972 = vpack.c.b16 %v6940, %v6936
    %v6973 = vpack.c.b16 %v6941, %v6937
    %v6974 = vpack.c.b16 %v6942, %v6938
    %v6975 = vpack.c.b16 %v6943, %v6939
    %v7054 = vunpack.c.l.b16 %v6787
    %v7055 = vunpack.c.l.b16 %v6788
    %v7056 = vunpack.c.l.b16 %v6789
    %v7057 = vunpack.c.l.b16 %v6790
    %v7058 = vunpack.c.l.b16 %v6791
    %v7059 = vunpack.c.l.b16 %v6792
    %v7060 = vunpack.c.l.b16 %v6793
    %v7061 = vunpack.c.l.b16 %v6794
    %v7062 = vunpack.c.l.b16 %v6795
    %v7063 = vunpack.c.l.b16 %v6796
    %v7064 = vunpack.c.l.b16 %v6797
    %v7065 = vunpack.c.l.b16 %v6798
    %v7066 = vunpack.c.l.b16 %v6799
    %v7067 = vunpack.c.l.b16 %v6800
    %v7068 = vunpack.c.l.b16 %v6801
    %v7069 = vunpack.c.l.b16 %v6802
    %v7070 = vunpack.c.l.b16 %v6803
    %v7071 = vunpack.c.l.b16 %v6804
    %v7072 = vunpack.c.l.b16 %v6805
    %v7073 = vunpack.c.l.b16 %v6806
    %v7074 = vunpack.c.l.b16 %v6807
    %v7075 = vunpack.c.l.b16 %v6808
    %v7076 = vunpack.c.l.b16 %v6809
    %v7077 = vunpack.c.l.b16 %v6810
    %v7078 = vunpack.c.l.b16 %v6811
    %v7079 = vunpack.c.l.b16 %v6812
    %v7080 = vunpack.c.l.b16 %v6813
    %v7081 = vunpack.c.l.b16 %v6814
    %v7082 = vunpack.c.l.b16 %v6815
    %v7083 = vunpack.c.l.b16 %v6816
    %v7084 = vunpack.c.l.b16 %v6817
    %v7085 = vunpack.c.l.b16 %v6818
    %v7086 = vunpack.c.l.b16 %v6819
    %v7087 = vunpack.c.l.b16 %v6820
    %v7088 = vunpack.c.l.b16 %v6821
    %v7089 = vunpack.c.l.b16 %v6822
    %v7090 = vunpack.c.l.b16 %v6823
    %v7091 = vunpack.c.l.b16 %v6824
    %v7092 = vunpack.c.l.b16 %v6825
    %v7093 = vunpack.c.l.b16 %v6826
    %v7094 = vunpack.c.l.b16 %v6827
    %v7095 = vunpack.c.l.b16 %v6828
    %v7096 = vunpack.c.l.b16 %v6829
    %v7097 = vunpack.c.l.b16 %v6830
    %v7098 = vunpack.c.l.b16 %v6831
    %v7099 = vunpack.c.l.b16 %v6832
    %v7100 = vunpack.c.l.b16 %v6833
    %v7101 = vunpack.c.l.b16 %v6834
    %v7102 = vunpack.c.l.b16 %v6835
    %v7103 = vunpack.c.l.b16 %v6836
    %v7104 = vunpack.c.l.b16 %v6837
    %v7105 = vunpack.c.l.b16 %v6838
    %v7106 = vunpack.c.l.b16 %v6839
    %v7107 = vunpack.c.l.b16 %v6840
    %v7108 = vpack.c.b16 %v7055, %v7054
    %v7109 = vpack.c.b16 %v7057, %v7056
    %v7110 = vpack.c.b16 %v7059, %v7058
    %v7111 = vpack.c.b16 %v7061, %v7060
    %v7112 = vpack.c.b16 %v7063, %v7062
    %v7113 = vpack.c.b16 %v7065, %v7064
    %v7114 = vpack.c.b16 %v7067, %v7066
    %v7115 = vpack.c.b16 %v7069, %v7068
    %v7116 = vpack.c.b16 %v7071, %v7070
    %v7117 = vpack.c.b16 %v7073, %v7072
    %v7118 = vpack.c.b16 %v7075, %v7074
    %v7119 = vpack.c.b16 %v7077, %v7076
    %v7120 = vpack.c.b16 %v7079, %v7078
    %v7121 = vpack.c.b16 %v7081, %v7080
    %v7122 = vpack.c.b16 %v7083, %v7082
    %v7123 = vpack.c.b16 %v7085, %v7084
    %v7124 = vpack.c.b16 %v7087, %v7086
    %v7125 = vpack.c.b16 %v7089, %v7088
    %v7126 = vpack.c.b16 %v7091, %v7090
    %v7127 = vpack.c.b16 %v7093, %v7092
    %v7128 = vpack.c.b16 %v7095, %v7094
    %v7129 = vpack.c.b16 %v7097, %v7096
    %v7130 = vpack.c.b16 %v7099, %v7098
    %v7131 = vpack.c.b16 %v7101, %v7100
    %v7132 = vpack.c.b16 %v7103, %v7102
    %v7133 = vpack.c.b16 %v7105, %v7104
    %v7134 = vpack.c.b16 %v7107, %v7106
    %vm7162 = vcmask 392192
    %v7164 = vsel %vm7162, %v6947, 0
    %v7167 = vsel %vm7162, %v6951, 0
    %v7170 = vsel %vm7162, %v6955, 0
    %v7173 = vsel %vm7162, %v6959, 0
    %v7176 = vsel %vm7162, %v6963, 0
    %v7179 = vsel %vm7162, %v6967, 0
    %v7182 = vsel %vm7162, %v6971, 0
    %v7185 = vsel %vm7162, %v6975, 0
    %7187 = vmatprep.subr.bf16.mxu0 0
    %7188 = vmatpush1.bf16.msra.mxu0 %v7115
    %7189 = vmatprep.subr.bf16.mxu0 0
    %7190 = vmatpush1.bf16.msra.mxu0 %v7114
    %7191 = vmatprep.subr.bf16.mxu0 0
    %7192 = vmatpush1.bf16.msra.mxu0 %v7113
    %7193 = vmatprep.subr.bf16.mxu0 0
    %7194 = vmatpush1.bf16.msra.mxu0 %v7112
    %7195 = vmatprep.subr.bf16.mxu0 0
    %7196 = vmatpush1.bf16.msra.mxu0 %v7111
    %7197 = vmatprep.subr.bf16.mxu0 0
    %7198 = vmatpush1.bf16.msra.mxu0 %v7110
    %7199 = vmatprep.subr.bf16.mxu0 0
    %7200 = vmatpush1.bf16.msra.mxu0 %v7109
    %7201 = vmatprep.subr.bf16.mxu0 0
    %7202 = vmatpush1.bf16.msra.mxu0 %v7108
    %7203 = vmatprep.subr.bf16.mxu0 0
    %7204 = vmatpush2.bf16.msra.mxu0 %v7123
    %7205 = vmatprep.subr.bf16.mxu0 0
    %7206 = vmatpush2.bf16.msra.mxu0 %v7122
    %7207 = vmatprep.subr.bf16.mxu0 0
    %7208 = vmatpush2.bf16.msra.mxu0 %v7121
    %7209 = vmatprep.subr.bf16.mxu0 0
    %7210 = vmatpush2.bf16.msra.mxu0 %v7120
    %7211 = vmatprep.subr.bf16.mxu0 0
    %7212 = vmatpush2.bf16.msra.mxu0 %v7119
    %7213 = vmatprep.subr.bf16.mxu0 0
    %7214 = vmatpush2.bf16.msra.mxu0 %v7118
    %7215 = vmatprep.subr.bf16.mxu0 0
    %7216 = vmatpush2.bf16.msra.mxu0 %v7117
    %7217 = vmatprep.subr.bf16.mxu0 0
    %7218 = vmatpush2.bf16.msra.mxu0 %v7116
    %7219 = vmatprep.mubr.bf16.mxu0 %v6945
    %7220 = vmatmul.mubr.bf16.gmra.mxu0 %v6944
    %v7221 = vpop.f32.mrf.mxu0
    %v7222 = vadd.f32 %v6846, %v7221
    %v7223 = vpop.f32.mrf.mxu0
    %v7224 = vpop.f32.mrf.mxu0
    %v7225 = vadd.f32 %v6846, %v7224
    %v7226 = vpop.f32.mrf.mxu0
    %7227 = vmatprep.mubr.bf16.mxu0 %v6949
    %7228 = vmatmul.mubr.bf16.gmra.mxu0 %v6948
    %v7229 = vpop.f32.mrf.mxu0
    %v7230 = vadd.f32 %v6846, %v7229
    %v7231 = vpop.f32.mrf.mxu0
    %v7232 = vpop.f32.mrf.mxu0
    %v7233 = vadd.f32 %v6846, %v7232
    %v7234 = vpop.f32.mrf.mxu0
    %7235 = vmatprep.mubr.bf16.mxu0 %v6953
    %7236 = vmatmul.mubr.bf16.gmra.mxu0 %v6952
    %v7237 = vpop.f32.mrf.mxu0
    %v7238 = vadd.f32 %v6846, %v7237
    %v7239 = vpop.f32.mrf.mxu0
    %v7240 = vpop.f32.mrf.mxu0
    %v7241 = vadd.f32 %v6846, %v7240
    %v7242 = vpop.f32.mrf.mxu0
    %7243 = vmatprep.mubr.bf16.mxu0 %v6957
    %7244 = vmatmul.mubr.bf16.gmra.mxu0 %v6956
    %v7245 = vpop.f32.mrf.mxu0
    %v7246 = vadd.f32 %v6846, %v7245
    %v7247 = vpop.f32.mrf.mxu0
    %v7248 = vpop.f32.mrf.mxu0
    %v7249 = vadd.f32 %v6846, %v7248
    %v7250 = vpop.f32.mrf.mxu0
    %7251 = vmatprep.mubr.bf16.mxu0 %v6961
    %7252 = vmatmul.mubr.bf16.gmra.mxu0 %v6960
    %v7253 = vpop.f32.mrf.mxu0
    %v7254 = vadd.f32 %v6846, %v7253
    %v7255 = vpop.f32.mrf.mxu0
    %v7256 = vpop.f32.mrf.mxu0
    %v7257 = vadd.f32 %v6846, %v7256
    %v7258 = vpop.f32.mrf.mxu0
    %7259 = vmatprep.mubr.bf16.mxu0 %v6965
    %7260 = vmatmul.mubr.bf16.gmra.mxu0 %v6964
    %v7261 = vpop.f32.mrf.mxu0
    %v7262 = vadd.f32 %v6846, %v7261
    %v7263 = vpop.f32.mrf.mxu0
    %v7264 = vpop.f32.mrf.mxu0
    %v7265 = vadd.f32 %v6846, %v7264
    %v7266 = vpop.f32.mrf.mxu0
    %7267 = vmatprep.mubr.bf16.mxu0 %v6969
    %7268 = vmatmul.mubr.bf16.gmra.mxu0 %v6968
    %v7269 = vpop.f32.mrf.mxu0
    %v7270 = vadd.f32 %v6846, %v7269
    %v7271 = vpop.f32.mrf.mxu0
    %v7272 = vpop.f32.mrf.mxu0
    %v7273 = vadd.f32 %v6846, %v7272
    %v7274 = vpop.f32.mrf.mxu0
    %7275 = vmatprep.mubr.bf16.mxu0 %v6973
    %7276 = vmatmul.mubr.bf16.gmra.mxu0 %v6972
    %v7277 = vpop.f32.mrf.mxu0
    %v7278 = vadd.f32 %v6846, %v7277
    %v7279 = vpop.f32.mrf.mxu0
    %v7280 = vpop.f32.mrf.mxu0
    %v7281 = vadd.f32 %v6846, %v7280
    %v7282 = vpop.f32.mrf.mxu0
    %7283 = vdwg.mxu0
    %7284 = vmatprep.subr.bf16.mxu0 0
    %7285 = vmatpush1.bf16.msra.mxu0 %v7131
    %7286 = vmatprep.subr.bf16.mxu0 0
    %7287 = vmatpush1.bf16.msra.mxu0 %v7130
    %7288 = vmatprep.subr.bf16.mxu0 0
    %7289 = vmatpush1.bf16.msra.mxu0 %v7129
    %7290 = vmatprep.subr.bf16.mxu0 0
    %7291 = vmatpush1.bf16.msra.mxu0 %v7128
    %7292 = vmatprep.subr.bf16.mxu0 0
    %7293 = vmatpush1.bf16.msra.mxu0 %v7127
    %7294 = vmatprep.subr.bf16.mxu0 0
    %7295 = vmatpush1.bf16.msra.mxu0 %v7126
    %7296 = vmatprep.subr.bf16.mxu0 0
    %7297 = vmatpush1.bf16.msra.mxu0 %v7125
    %7298 = vmatprep.subr.bf16.mxu0 0
    %7299 = vmatpush1.bf16.msra.mxu0 %v7124
    %7300 = vmatprep.subr.bf16.mxu0 0
    %7301 = vmatpush2.bf16.msra.mxu0 0
    %7302 = vmatprep.subr.bf16.mxu0 0
    %7303 = vmatpush2.bf16.msra.mxu0 0
    %7304 = vmatprep.subr.bf16.mxu0 0
    %7305 = vmatpush2.bf16.msra.mxu0 0
    %7306 = vmatprep.subr.bf16.mxu0 0
    %7307 = vmatpush2.bf16.msra.mxu0 0
    %7308 = vmatprep.subr.bf16.mxu0 0
    %7309 = vmatpush2.bf16.msra.mxu0 0
    %7310 = vmatprep.subr.bf16.mxu0 0
    %7311 = vmatpush2.bf16.msra.mxu0 %v7134
    %7312 = vmatprep.subr.bf16.mxu0 0
    %7313 = vmatpush2.bf16.msra.mxu0 %v7133
    %7314 = vmatprep.subr.bf16.mxu0 0
    %7315 = vmatpush2.bf16.msra.mxu0 %v7132
    %7316 = vmatprep.mubr.bf16.mxu0 %v7164
    %7317 = vmatmul.mubr.bf16.gmra.mxu0 %v6946
    %v7318 = vpop.f32.mrf.mxu0
    %v7319 = vadd.f32 %v7222, %v7318
    %v7320 = vpop.f32.mrf.mxu0
    %v7321 = vpop.f32.mrf.mxu0
    %v7322 = vadd.f32 %v7225, %v7321
    %v7323 = vpop.f32.mrf.mxu0
    %7324 = vmatprep.mubr.bf16.mxu0 %v7167
    %7325 = vmatmul.mubr.bf16.gmra.mxu0 %v6950
    %v7326 = vpop.f32.mrf.mxu0
    %v7327 = vadd.f32 %v7230, %v7326
    %v7328 = vpop.f32.mrf.mxu0
    %v7329 = vpop.f32.mrf.mxu0
    %v7330 = vadd.f32 %v7233, %v7329
    %v7331 = vpop.f32.mrf.mxu0
    %7332 = vmatprep.mubr.bf16.mxu0 %v7170
    %7333 = vmatmul.mubr.bf16.gmra.mxu0 %v6954
    %v7334 = vpop.f32.mrf.mxu0
    %v7335 = vadd.f32 %v7238, %v7334
    %v7336 = vpop.f32.mrf.mxu0
    %v7337 = vpop.f32.mrf.mxu0
    %v7338 = vadd.f32 %v7241, %v7337
    %v7339 = vpop.f32.mrf.mxu0
    %7340 = vmatprep.mubr.bf16.mxu0 %v7173
    %7341 = vmatmul.mubr.bf16.gmra.mxu0 %v6958
    %v7342 = vpop.f32.mrf.mxu0
    %v7343 = vadd.f32 %v7246, %v7342
    %v7344 = vpop.f32.mrf.mxu0
    %v7345 = vpop.f32.mrf.mxu0
    %v7346 = vadd.f32 %v7249, %v7345
    %v7347 = vpop.f32.mrf.mxu0
    %7348 = vmatprep.mubr.bf16.mxu0 %v7176
    %7349 = vmatmul.mubr.bf16.gmra.mxu0 %v6962
    %v7350 = vpop.f32.mrf.mxu0
    %v7351 = vadd.f32 %v7254, %v7350
    %v7352 = vpop.f32.mrf.mxu0
    %v7353 = vpop.f32.mrf.mxu0
    %v7354 = vadd.f32 %v7257, %v7353
    %v7355 = vpop.f32.mrf.mxu0
    %7356 = vmatprep.mubr.bf16.mxu0 %v7179
    %7357 = vmatmul.mubr.bf16.gmra.mxu0 %v6966
    %v7358 = vpop.f32.mrf.mxu0
    %v7359 = vadd.f32 %v7262, %v7358
    %v7360 = vpop.f32.mrf.mxu0
    %v7361 = vpop.f32.mrf.mxu0
    %v7362 = vadd.f32 %v7265, %v7361
    %v7363 = vpop.f32.mrf.mxu0
    %7364 = vmatprep.mubr.bf16.mxu0 %v7182
    %7365 = vmatmul.mubr.bf16.gmra.mxu0 %v6970
    %v7366 = vpop.f32.mrf.mxu0
    %v7367 = vadd.f32 %v7270, %v7366
    %v7368 = vpop.f32.mrf.mxu0
    %v7369 = vpop.f32.mrf.mxu0
    %v7370 = vadd.f32 %v7273, %v7369
    %v7371 = vpop.f32.mrf.mxu0
    %7372 = vmatprep.mubr.bf16.mxu0 %v7185
    %7373 = vmatmul.mubr.bf16.gmra.mxu0 %v6974
    %v7374 = vpop.f32.mrf.mxu0
    %v7375 = vadd.f32 %v7278, %v7374
    %v7376 = vpop.f32.mrf.mxu0
    %v7377 = vpop.f32.mrf.mxu0
    %v7378 = vadd.f32 %v7281, %v7377
    %v7379 = vpop.f32.mrf.mxu0
    %7380 = vdwg.mxu0
    %v7381 = vmax.f32 %v7319, 0.0
    %v7382 = vmax.f32 %v7322, 0.0
    %v7383 = vmax.f32 %v7327, 0.0
    %v7384 = vmax.f32 %v7330, 0.0
    %v7385 = vmax.f32 %v7335, 0.0
    %v7386 = vmax.f32 %v7338, 0.0
    %v7387 = vmax.f32 %v7343, 0.0
    %v7388 = vmax.f32 %v7346, 0.0
    %v7389 = vmax.f32 %v7351, 0.0
    %v7390 = vmax.f32 %v7354, 0.0
    %v7391 = vmax.f32 %v7359, 0.0
    %v7392 = vmax.f32 %v7362, 0.0
    %v7393 = vmax.f32 %v7367, 0.0
    %v7394 = vmax.f32 %v7370, 0.0
    %v7395 = vmax.f32 %v7375, 0.0
    %v7396 = vmax.f32 %v7378, 0.0
    %v7397 = vpack.c.bf16 %v7382, %v7381
    %v7398 = vpack.c.bf16 %v7384, %v7383
    %v7399 = vpack.c.bf16 %v7386, %v7385
    %v7400 = vpack.c.bf16 %v7388, %v7387
    %v7401 = vpack.c.bf16 %v7390, %v7389
    %v7402 = vpack.c.bf16 %v7392, %v7391
    %v7403 = vpack.c.bf16 %v7394, %v7393
    %v7404 = vpack.c.bf16 %v7396, %v7395
    %v7413 = vunpack.c.l.b16 %v7397
    %v7414 = vunpack.c.h.b16 %v7397
    %v7415 = vunpack.c.l.b16 %v7398
    %v7416 = vunpack.c.h.b16 %v7398
    %v7417 = vunpack.c.l.b16 %v7399
    %v7418 = vunpack.c.h.b16 %v7399
    %v7419 = vunpack.c.l.b16 %v7400
    %v7420 = vunpack.c.h.b16 %v7400
    %v7421 = vunpack.c.l.b16 %v7401
    %v7422 = vunpack.c.h.b16 %v7401
    %v7423 = vunpack.c.l.b16 %v7402
    %v7424 = vunpack.c.h.b16 %v7402
    %v7425 = vunpack.c.l.b16 %v7403
    %v7426 = vunpack.c.h.b16 %v7403
    %v7427 = vunpack.c.l.b16 %v7404
    %v7428 = vunpack.c.h.b16 %v7404
    %v7429 = vpack.c.b16 %v7413, %v7413
    %v7430 = vpack.c.b16 %v7414, %v7414
    %v7431 = vpack.c.b16 %v7415, %v7415
    %v7432 = vpack.c.b16 %v7416, %v7416
    %v7433 = vpack.c.b16 %v7417, %v7417
    %v7434 = vpack.c.b16 %v7418, %v7418
    %v7435 = vpack.c.b16 %v7419, %v7419
    %v7436 = vpack.c.b16 %v7420, %v7420
    %v7437 = vpack.c.b16 %v7421, %v7421
    %v7438 = vpack.c.b16 %v7422, %v7422
    %v7439 = vpack.c.b16 %v7423, %v7423
    %v7440 = vpack.c.b16 %v7424, %v7424
    %v7441 = vpack.c.b16 %v7425, %v7425
    %v7442 = vpack.c.b16 %v7426, %v7426
    %v7443 = vpack.c.b16 %v7427, %v7427
    %v7444 = vpack.c.b16 %v7428, %v7428
    %7445 = vrot.lane.b32.xlu0 %v7429, 64
    %v7446 = vpop.permute.xlu0 %7445
    %7447 = vrot.lane.b32.xlu0 %v7430, 64
    %v7448 = vpop.permute.xlu0 %7447
    %7449 = vrot.lane.b32.xlu0 %v7431, 64
    %v7450 = vpop.permute.xlu0 %7449
    %7451 = vrot.lane.b32.xlu0 %v7432, 64
    %v7452 = vpop.permute.xlu0 %7451
    %7453 = vrot.lane.b32.xlu0 %v7433, 64
    %v7454 = vpop.permute.xlu0 %7453
    %7455 = vrot.lane.b32.xlu0 %v7434, 64
    %v7456 = vpop.permute.xlu0 %7455
    %7457 = vrot.lane.b32.xlu0 %v7435, 64
    %v7458 = vpop.permute.xlu0 %7457
    %7459 = vrot.lane.b32.xlu0 %v7436, 64
    %v7460 = vpop.permute.xlu0 %7459
    %7461 = vrot.lane.b32.xlu0 %v7437, 64
    %v7462 = vpop.permute.xlu0 %7461
    %7463 = vrot.lane.b32.xlu0 %v7438, 64
    %v7464 = vpop.permute.xlu0 %7463
    %7465 = vrot.lane.b32.xlu0 %v7439, 64
    %v7466 = vpop.permute.xlu0 %7465
    %7467 = vrot.lane.b32.xlu0 %v7440, 64
    %v7468 = vpop.permute.xlu0 %7467
    %7469 = vrot.lane.b32.xlu0 %v7441, 64
    %v7470 = vpop.permute.xlu0 %7469
    %7471 = vrot.lane.b32.xlu0 %v7442, 64
    %v7472 = vpop.permute.xlu0 %7471
    %7473 = vrot.lane.b32.xlu0 %v7443, 64
    %v7474 = vpop.permute.xlu0 %7473
    %7475 = vrot.lane.b32.xlu0 %v7444, 64
    %v7476 = vpop.permute.xlu0 %7475
    %vm7493 = vcmask 1043968
    %7494 = vst.msk [vmem:[#allocation7] sm:$0xf] %vm7493, %v7446
    %7495 = vst.msk [vmem:[#allocation7 + $0x4] sm:$0xf] %vm7493, %v7448
    %7496 = vst.msk [vmem:[#allocation7 + $0x8] sm:$0xf] %vm7493, %v7450
    %7497 = vst.msk [vmem:[#allocation7 + $0xc] sm:$0xf] %vm7493, %v7452
    %7498 = vst.msk [vmem:[#allocation7 + $0x10] sm:$0xf] %vm7493, %v7454
    %7499 = vst.msk [vmem:[#allocation7 + $0x14] sm:$0xf] %vm7493, %v7456
    %7500 = vst.msk [vmem:[#allocation7 + $0x18] sm:$0xf] %vm7493, %v7458
    %7501 = vst.msk [vmem:[#allocation7 + $0x1c] sm:$0xf] %vm7493, %v7460
    %7502 = vst.msk [vmem:[#allocation7 + $0x20] sm:$0xf] %vm7493, %v7462
    %7503 = vst.msk [vmem:[#allocation7 + $0x24] sm:$0xf] %vm7493, %v7464
    %7504 = vst.msk [vmem:[#allocation7 + $0x28] sm:$0xf] %vm7493, %v7466
    %7505 = vst.msk [vmem:[#allocation7 + $0x2c] sm:$0xf] %vm7493, %v7468
    %7506 = vst.msk [vmem:[#allocation7 + $0x30] sm:$0xf] %vm7493, %v7470
    %7507 = vst.msk [vmem:[#allocation7 + $0x34] sm:$0xf] %vm7493, %v7472
    %7508 = vst.msk [vmem:[#allocation7 + $0x38] sm:$0xf] %vm7493, %v7474
    %7509 = vst.msk [vmem:[#allocation7 + $0x3c] sm:$0xf] %vm7493, %v7476
    %v7510 = vld [vmem:[#allocation7] sm:$0xf]
    %v7511 = vld [vmem:[#allocation7 + $0x4] sm:$0xf]
    %v7512 = vld [vmem:[#allocation7 + $0x8] sm:$0xf]
    %v7513 = vld [vmem:[#allocation7 + $0xc] sm:$0xf]
    %v7514 = vld [vmem:[#allocation7 + $0x10] sm:$0xf]
    %v7515 = vld [vmem:[#allocation7 + $0x14] sm:$0xf]
    %v7516 = vld [vmem:[#allocation7 + $0x18] sm:$0xf]
    %v7517 = vld [vmem:[#allocation7 + $0x1c] sm:$0xf]
    %v7518 = vld [vmem:[#allocation7 + $0x20] sm:$0xf]
    %v7519 = vld [vmem:[#allocation7 + $0x24] sm:$0xf]
    %v7520 = vld [vmem:[#allocation7 + $0x28] sm:$0xf]
    %v7521 = vld [vmem:[#allocation7 + $0x2c] sm:$0xf]
    %v7522 = vld [vmem:[#allocation7 + $0x30] sm:$0xf]
    %v7523 = vld [vmem:[#allocation7 + $0x34] sm:$0xf]
    %v7524 = vld [vmem:[#allocation7 + $0x38] sm:$0xf]
    %v7525 = vld [vmem:[#allocation7 + $0x3c] sm:$0xf]
    %v7526 = vld [vmem:[#allocation17] sm:$0xff]
    %v7527 = vld [vmem:[#allocation17 + $0x8] sm:$0xf]
    %v7528 = vld [vmem:[#allocation17 + $0xc] sm:$0xff]
    %v7529 = vld [vmem:[#allocation17 + $0x14] sm:$0xf]
    %v7530 = vld [vmem:[#allocation17 + $0x18] sm:$0xff]
    %v7531 = vld [vmem:[#allocation17 + $0x20] sm:$0xf]
    %v7532 = vld [vmem:[#allocation17 + $0x24] sm:$0xff]
    %v7533 = vld [vmem:[#allocation17 + $0x2c] sm:$0xf]
    %v7534 = vld [vmem:[#allocation17 + $0x30] sm:$0xff]
    %v7535 = vld [vmem:[#allocation17 + $0x38] sm:$0xf]
    %v7536 = vld [vmem:[#allocation17 + $0x3c] sm:$0xff]
    %v7537 = vld [vmem:[#allocation17 + $0x44] sm:$0xf]
    %v7538 = vld [vmem:[#allocation17 + $0x48] sm:$0xff]
    %v7539 = vld [vmem:[#allocation17 + $0x50] sm:$0xf]
    %v7540 = vld [vmem:[#allocation17 + $0x54] sm:$0xff]
    %v7541 = vld [vmem:[#allocation17 + $0x5c] sm:$0xf]
    %v7542 = vld [vmem:[#allocation17 + $0x60] sm:$0xff]
    %v7543 = vld [vmem:[#allocation17 + $0x68] sm:$0xf]
    %v7544 = vld [vmem:[#allocation17 + $0x6c] sm:$0xff]
    %v7545 = vld [vmem:[#allocation17 + $0x74] sm:$0xf]
    %v7546 = vld [vmem:[#allocation17 + $0x78] sm:$0xff]
    %v7547 = vld [vmem:[#allocation17 + $0x80] sm:$0xf]
    %v7548 = vld [vmem:[#allocation17 + $0x84] sm:$0xff]
    %v7549 = vld [vmem:[#allocation17 + $0x8c] sm:$0xf]
    %v7550 = vld [vmem:[#allocation17 + $0x90] sm:$0xff]
    %v7551 = vld [vmem:[#allocation17 + $0x98] sm:$0xf]
    %v7552 = vld [vmem:[#allocation17 + $0x9c] sm:$0xff]
    %v7553 = vld [vmem:[#allocation17 + $0xa4] sm:$0xf]
    %v7554 = vld [vmem:[#allocation17 + $0xa8] sm:$0xff]
    %v7555 = vld [vmem:[#allocation17 + $0xb0] sm:$0xf]
    %v7556 = vld [vmem:[#allocation17 + $0xb4] sm:$0xff]
    %v7557 = vld [vmem:[#allocation17 + $0xbc] sm:$0xf]
    %v7558 = vld [vmem:[%s10] sm:$0x7]
    %v7560 = vlaneseq
    %v7561 = vshrl.u32 %v7560, 7
    %v7562 = vsub.s32 0, %v7561
    %v7563 = vrot.slane %v7558, %v7562
    %v7564 = vlaneseq
    %v7565 = vshrl.u32 %v7564, 7
    %v7566 = vsub.s32 1, %v7565
    %v7567 = vrot.slane %v7558, %v7566
    %v7568 = vlaneseq
    %v7569 = vshrl.u32 %v7568, 7
    %v7570 = vsub.s32 2, %v7569
    %v7571 = vrot.slane %v7558, %v7570
    %v7591 = vunpack.c.l.b16 %v7510
    %v7592 = vunpack.c.l.b16 %v7511
    %v7593 = vunpack.c.l.b16 %v7512
    %v7594 = vunpack.c.l.b16 %v7513
    %v7595 = vunpack.c.l.b16 %v7514
    %v7596 = vunpack.c.l.b16 %v7515
    %v7597 = vunpack.c.l.b16 %v7516
    %v7598 = vunpack.c.l.b16 %v7517
    %v7599 = vunpack.c.l.b16 %v7518
    %v7600 = vunpack.c.l.b16 %v7519
    %v7601 = vunpack.c.l.b16 %v7520
    %v7602 = vunpack.c.l.b16 %v7521
    %v7603 = vunpack.c.l.b16 %v7522
    %v7604 = vunpack.c.l.b16 %v7523
    %v7605 = vunpack.c.l.b16 %v7524
    %v7606 = vunpack.c.l.b16 %v7525
    %v7607 = vpack.c.b16 %v7592, %v7591
    %v7608 = vpack.c.b16 %v7594, %v7593
    %v7609 = vpack.c.b16 %v7596, %v7595
    %v7610 = vpack.c.b16 %v7598, %v7597
    %v7611 = vpack.c.b16 %v7600, %v7599
    %v7612 = vpack.c.b16 %v7602, %v7601
    %v7613 = vpack.c.b16 %v7604, %v7603
    %v7614 = vpack.c.b16 %v7606, %v7605
    %v7655 = vunpack.c.l.b16 %v7526
    %v7656 = vunpack.c.h.b16 %v7526
    %v7657 = vunpack.c.l.b16 %v7527
    %v7658 = vunpack.c.l.b16 %v7528
    %v7659 = vunpack.c.h.b16 %v7528
    %v7660 = vunpack.c.l.b16 %v7529
    %v7661 = vunpack.c.l.b16 %v7530
    %v7662 = vunpack.c.h.b16 %v7530
    %v7663 = vunpack.c.l.b16 %v7531
    %v7664 = vunpack.c.l.b16 %v7532
    %v7665 = vunpack.c.h.b16 %v7532
    %v7666 = vunpack.c.l.b16 %v7533
    %v7667 = vunpack.c.l.b16 %v7534
    %v7668 = vunpack.c.h.b16 %v7534
    %v7669 = vunpack.c.l.b16 %v7535
    %v7670 = vunpack.c.l.b16 %v7536
    %v7671 = vunpack.c.h.b16 %v7536
    %v7672 = vunpack.c.l.b16 %v7537
    %v7673 = vunpack.c.l.b16 %v7538
    %v7674 = vunpack.c.h.b16 %v7538
    %v7675 = vunpack.c.l.b16 %v7539
    %v7676 = vunpack.c.l.b16 %v7540
    %v7677 = vunpack.c.h.b16 %v7540
    %v7678 = vunpack.c.l.b16 %v7541
    %v7679 = vunpack.c.l.b16 %v7542
    %v7680 = vunpack.c.h.b16 %v7542
    %v7681 = vunpack.c.l.b16 %v7543
    %v7682 = vunpack.c.l.b16 %v7544
    %v7683 = vunpack.c.h.b16 %v7544
    %v7684 = vunpack.c.l.b16 %v7545
    %v7685 = vunpack.c.l.b16 %v7546
    %v7686 = vunpack.c.h.b16 %v7546
    %v7687 = vunpack.c.l.b16 %v7547
    %v7688 = vunpack.c.l.b16 %v7548
    %v7689 = vunpack.c.h.b16 %v7548
    %v7690 = vunpack.c.l.b16 %v7549
    %v7691 = vunpack.c.l.b16 %v7550
    %v7692 = vunpack.c.h.b16 %v7550
    %v7693 = vunpack.c.l.b16 %v7551
    %v7694 = vunpack.c.l.b16 %v7552
    %v7695 = vunpack.c.h.b16 %v7552
    %v7696 = vunpack.c.l.b16 %v7553
    %v7697 = vunpack.c.l.b16 %v7554
    %v7698 = vunpack.c.h.b16 %v7554
    %v7699 = vunpack.c.l.b16 %v7555
    %v7700 = vunpack.c.l.b16 %v7556
    %v7701 = vunpack.c.h.b16 %v7556
    %v7702 = vunpack.c.l.b16 %v7557
    %v7703 = vpack.c.b16 %v7658, %v7655
    %v7704 = vpack.c.b16 %v7659, %v7656
    %v7705 = vpack.c.b16 %v7660, %v7657
    %v7706 = vpack.c.b16 %v7664, %v7661
    %v7707 = vpack.c.b16 %v7665, %v7662
    %v7708 = vpack.c.b16 %v7666, %v7663
    %v7709 = vpack.c.b16 %v7670, %v7667
    %v7710 = vpack.c.b16 %v7671, %v7668
    %v7711 = vpack.c.b16 %v7672, %v7669
    %v7712 = vpack.c.b16 %v7676, %v7673
    %v7713 = vpack.c.b16 %v7677, %v7674
    %v7714 = vpack.c.b16 %v7678, %v7675
    %v7715 = vpack.c.b16 %v7682, %v7679
    %v7716 = vpack.c.b16 %v7683, %v7680
    %v7717 = vpack.c.b16 %v7684, %v7681
    %v7718 = vpack.c.b16 %v7688, %v7685
    %v7719 = vpack.c.b16 %v7689, %v7686
    %v7720 = vpack.c.b16 %v7690, %v7687
    %v7721 = vpack.c.b16 %v7694, %v7691
    %v7722 = vpack.c.b16 %v7695, %v7692
    %v7723 = vpack.c.b16 %v7696, %v7693
    %v7724 = vpack.c.b16 %v7700, %v7697
    %v7725 = vpack.c.b16 %v7701, %v7698
    %v7726 = vpack.c.b16 %v7702, %v7699
    %7751 = vmatprep.subr.bf16.mxu0 %v7725
    %7752 = vmatpush1.bf16.msra.mxu0 %v7724
    %7753 = vmatprep.subr.bf16.mxu0 %v7722
    %7754 = vmatpush1.bf16.msra.mxu0 %v7721
    %7755 = vmatprep.subr.bf16.mxu0 %v7719
    %7756 = vmatpush1.bf16.msra.mxu0 %v7718
    %7757 = vmatprep.subr.bf16.mxu0 %v7716
    %7758 = vmatpush1.bf16.msra.mxu0 %v7715
    %7759 = vmatprep.subr.bf16.mxu0 %v7713
    %7760 = vmatpush1.bf16.msra.mxu0 %v7712
    %7761 = vmatprep.subr.bf16.mxu0 %v7710
    %7762 = vmatpush1.bf16.msra.mxu0 %v7709
    %7763 = vmatprep.subr.bf16.mxu0 %v7707
    %7764 = vmatpush1.bf16.msra.mxu0 %v7706
    %7765 = vmatprep.subr.bf16.mxu0 %v7704
    %7766 = vmatpush1.bf16.msra.mxu0 %v7703
    %7767 = vmatprep.subr.bf16.mxu0 0
    %7768 = vmatpush2.bf16.msra.mxu0 0
    %7769 = vmatprep.subr.bf16.mxu0 0
    %7770 = vmatpush2.bf16.msra.mxu0 0
    %7771 = vmatprep.subr.bf16.mxu0 0
    %7772 = vmatpush2.bf16.msra.mxu0 0
    %7773 = vmatprep.subr.bf16.mxu0 0
    %7774 = vmatpush2.bf16.msra.mxu0 0
    %7775 = vmatprep.subr.bf16.mxu0 0
    %7776 = vmatpush2.bf16.msra.mxu0 0
    %7777 = vmatprep.subr.bf16.mxu0 0
    %7778 = vmatpush2.bf16.msra.mxu0 0
    %7779 = vmatprep.subr.bf16.mxu0 0
    %7780 = vmatpush2.bf16.msra.mxu0 0
    %7781 = vmatprep.subr.bf16.mxu0 0
    %7782 = vmatpush2.bf16.msra.mxu0 0
    %7783 = vmatprep.mubr.bf16.mxu0 0
    %7784 = vmatmul.mubr.bf16.gmra.mxu0 %v7607
    %v7785 = vpop.f32.mrf.mxu0
    %v7786 = vadd.f32 %v7563, %v7785
    %v7787 = vpop.f32.mrf.mxu0
    %v7788 = vadd.f32 %v7567, %v7787
    %v7789 = vpop.f32.mrf.mxu0
    %v7790 = vadd.f32 %v7563, %v7789
    %v7791 = vpop.f32.mrf.mxu0
    %v7792 = vadd.f32 %v7567, %v7791
    %7793 = vmatprep.mubr.bf16.mxu0 0
    %7794 = vmatmul.mubr.bf16.gmra.mxu0 %v7608
    %v7795 = vpop.f32.mrf.mxu0
    %v7796 = vadd.f32 %v7563, %v7795
    %v7797 = vpop.f32.mrf.mxu0
    %v7798 = vadd.f32 %v7567, %v7797
    %v7799 = vpop.f32.mrf.mxu0
    %v7800 = vadd.f32 %v7563, %v7799
    %v7801 = vpop.f32.mrf.mxu0
    %v7802 = vadd.f32 %v7567, %v7801
    %7803 = vmatprep.mubr.bf16.mxu0 0
    %7804 = vmatmul.mubr.bf16.gmra.mxu0 %v7609
    %v7805 = vpop.f32.mrf.mxu0
    %v7806 = vadd.f32 %v7563, %v7805
    %v7807 = vpop.f32.mrf.mxu0
    %v7808 = vadd.f32 %v7567, %v7807
    %v7809 = vpop.f32.mrf.mxu0
    %v7810 = vadd.f32 %v7563, %v7809
    %v7811 = vpop.f32.mrf.mxu0
    %v7812 = vadd.f32 %v7567, %v7811
    %7813 = vmatprep.mubr.bf16.mxu0 0
    %7814 = vmatmul.mubr.bf16.gmra.mxu0 %v7610
    %v7815 = vpop.f32.mrf.mxu0
    %v7816 = vadd.f32 %v7563, %v7815
    %v7817 = vpop.f32.mrf.mxu0
    %v7818 = vadd.f32 %v7567, %v7817
    %v7819 = vpop.f32.mrf.mxu0
    %v7820 = vadd.f32 %v7563, %v7819
    %v7821 = vpop.f32.mrf.mxu0
    %v7822 = vadd.f32 %v7567, %v7821
    %7823 = vmatprep.mubr.bf16.mxu0 0
    %7824 = vmatmul.mubr.bf16.gmra.mxu0 %v7611
    %v7825 = vpop.f32.mrf.mxu0
    %v7826 = vadd.f32 %v7563, %v7825
    %v7827 = vpop.f32.mrf.mxu0
    %v7828 = vadd.f32 %v7567, %v7827
    %v7829 = vpop.f32.mrf.mxu0
    %v7830 = vadd.f32 %v7563, %v7829
    %v7831 = vpop.f32.mrf.mxu0
    %v7832 = vadd.f32 %v7567, %v7831
    %7833 = vmatprep.mubr.bf16.mxu0 0
    %7834 = vmatmul.mubr.bf16.gmra.mxu0 %v7612
    %v7835 = vpop.f32.mrf.mxu0
    %v7836 = vadd.f32 %v7563, %v7835
    %v7837 = vpop.f32.mrf.mxu0
    %v7838 = vadd.f32 %v7567, %v7837
    %v7839 = vpop.f32.mrf.mxu0
    %v7840 = vadd.f32 %v7563, %v7839
    %v7841 = vpop.f32.mrf.mxu0
    %v7842 = vadd.f32 %v7567, %v7841
    %7843 = vmatprep.mubr.bf16.mxu0 0
    %7844 = vmatmul.mubr.bf16.gmra.mxu0 %v7613
    %v7845 = vpop.f32.mrf.mxu0
    %v7846 = vadd.f32 %v7563, %v7845
    %v7847 = vpop.f32.mrf.mxu0
    %v7848 = vadd.f32 %v7567, %v7847
    %v7849 = vpop.f32.mrf.mxu0
    %v7850 = vadd.f32 %v7563, %v7849
    %v7851 = vpop.f32.mrf.mxu0
    %v7852 = vadd.f32 %v7567, %v7851
    %7853 = vmatprep.mubr.bf16.mxu0 0
    %7854 = vmatmul.mubr.bf16.gmra.mxu0 %v7614
    %v7855 = vpop.f32.mrf.mxu0
    %v7856 = vadd.f32 %v7563, %v7855
    %v7857 = vpop.f32.mrf.mxu0
    %v7858 = vadd.f32 %v7567, %v7857
    %v7859 = vpop.f32.mrf.mxu0
    %v7860 = vadd.f32 %v7563, %v7859
    %v7861 = vpop.f32.mrf.mxu0
    %v7862 = vadd.f32 %v7567, %v7861
    %7863 = vdwg.mxu0
    %7864 = vmatprep.subr.bf16.mxu0 0
    %7865 = vmatpush1.bf16.msra.mxu0 %v7726
    %7866 = vmatprep.subr.bf16.mxu0 0
    %7867 = vmatpush1.bf16.msra.mxu0 %v7723
    %7868 = vmatprep.subr.bf16.mxu0 0
    %7869 = vmatpush1.bf16.msra.mxu0 %v7720
    %7870 = vmatprep.subr.bf16.mxu0 0
    %7871 = vmatpush1.bf16.msra.mxu0 %v7717
    %7872 = vmatprep.subr.bf16.mxu0 0
    %7873 = vmatpush1.bf16.msra.mxu0 %v7714
    %7874 = vmatprep.subr.bf16.mxu0 0
    %7875 = vmatpush1.bf16.msra.mxu0 %v7711
    %7876 = vmatprep.subr.bf16.mxu0 0
    %7877 = vmatpush1.bf16.msra.mxu0 %v7708
    %7878 = vmatprep.subr.bf16.mxu0 0
    %7879 = vmatpush1.bf16.msra.mxu0 %v7705
    %7880 = vmatprep.subr.bf16.mxu0 0
    %7881 = vmatpush2.bf16.msra.mxu0 0
    %7882 = vmatprep.subr.bf16.mxu0 0
    %7883 = vmatpush2.bf16.msra.mxu0 0
    %7884 = vmatprep.subr.bf16.mxu0 0
    %7885 = vmatpush2.bf16.msra.mxu0 0
    %7886 = vmatprep.subr.bf16.mxu0 0
    %7887 = vmatpush2.bf16.msra.mxu0 0
    %7888 = vmatprep.subr.bf16.mxu0 0
    %7889 = vmatpush2.bf16.msra.mxu0 0
    %7890 = vmatprep.subr.bf16.mxu0 0
    %7891 = vmatpush2.bf16.msra.mxu0 0
    %7892 = vmatprep.subr.bf16.mxu0 0
    %7893 = vmatpush2.bf16.msra.mxu0 0
    %7894 = vmatprep.subr.bf16.mxu0 0
    %7895 = vmatpush2.bf16.msra.mxu0 0
    %7896 = vmatprep.mubr.bf16.mxu0 0
    %7897 = vmatmul.mubr.bf16.gmra.mxu0 %v7607
    %v7898 = vpop.f32.mrf.mxu0
    %v7899 = vadd.f32 %v7571, %v7898
    %v7900 = vpop.f32.mrf.mxu0
    %v7901 = vpop.f32.mrf.mxu0
    %v7902 = vadd.f32 %v7571, %v7901
    %v7903 = vpop.f32.mrf.mxu0
    %7904 = vmatprep.mubr.bf16.mxu0 0
    %7905 = vmatmul.mubr.bf16.gmra.mxu0 %v7608
    %v7906 = vpop.f32.mrf.mxu0
    %v7907 = vadd.f32 %v7571, %v7906
    %v7908 = vpop.f32.mrf.mxu0
    %v7909 = vpop.f32.mrf.mxu0
    %v7910 = vadd.f32 %v7571, %v7909
    %v7911 = vpop.f32.mrf.mxu0
    %7912 = vmatprep.mubr.bf16.mxu0 0
    %7913 = vmatmul.mubr.bf16.gmra.mxu0 %v7609
    %v7914 = vpop.f32.mrf.mxu0
    %v7915 = vadd.f32 %v7571, %v7914
    %v7916 = vpop.f32.mrf.mxu0
    %v7917 = vpop.f32.mrf.mxu0
    %v7918 = vadd.f32 %v7571, %v7917
    %v7919 = vpop.f32.mrf.mxu0
    %7920 = vmatprep.mubr.bf16.mxu0 0
    %7921 = vmatmul.mubr.bf16.gmra.mxu0 %v7610
    %v7922 = vpop.f32.mrf.mxu0
    %v7923 = vadd.f32 %v7571, %v7922
    %v7924 = vpop.f32.mrf.mxu0
    %v7925 = vpop.f32.mrf.mxu0
    %v7926 = vadd.f32 %v7571, %v7925
    %v7927 = vpop.f32.mrf.mxu0
    %7928 = vmatprep.mubr.bf16.mxu0 0
    %7929 = vmatmul.mubr.bf16.gmra.mxu0 %v7611
    %v7930 = vpop.f32.mrf.mxu0
    %v7931 = vadd.f32 %v7571, %v7930
    %v7932 = vpop.f32.mrf.mxu0
    %v7933 = vpop.f32.mrf.mxu0
    %v7934 = vadd.f32 %v7571, %v7933
    %v7935 = vpop.f32.mrf.mxu0
    %7936 = vmatprep.mubr.bf16.mxu0 0
    %7937 = vmatmul.mubr.bf16.gmra.mxu0 %v7612
    %v7938 = vpop.f32.mrf.mxu0
    %v7939 = vadd.f32 %v7571, %v7938
    %v7940 = vpop.f32.mrf.mxu0
    %v7941 = vpop.f32.mrf.mxu0
    %v7942 = vadd.f32 %v7571, %v7941
    %v7943 = vpop.f32.mrf.mxu0
    %7944 = vmatprep.mubr.bf16.mxu0 0
    %7945 = vmatmul.mubr.bf16.gmra.mxu0 %v7613
    %v7946 = vpop.f32.mrf.mxu0
    %v7947 = vadd.f32 %v7571, %v7946
    %v7948 = vpop.f32.mrf.mxu0
    %v7949 = vpop.f32.mrf.mxu0
    %v7950 = vadd.f32 %v7571, %v7949
    %v7951 = vpop.f32.mrf.mxu0
    %7952 = vmatprep.mubr.bf16.mxu0 0
    %7953 = vmatmul.mubr.bf16.gmra.mxu0 %v7614
    %v7954 = vpop.f32.mrf.mxu0
    %v7955 = vadd.f32 %v7571, %v7954
    %v7956 = vpop.f32.mrf.mxu0
    %v7957 = vpop.f32.mrf.mxu0
    %v7958 = vadd.f32 %v7571, %v7957
    %v7959 = vpop.f32.mrf.mxu0
    %7960 = vdwg.mxu0
    %v7961 = vmul.f32 %v7786, 0.17
    %v7962 = vmul.f32 %v7788, 0.17
    %v7963 = vmul.f32 %v7899, 0.17
    %v7964 = vmul.f32 %v7790, 0.17
    %v7965 = vmul.f32 %v7792, 0.17
    %v7966 = vmul.f32 %v7902, 0.17
    %v7967 = vmul.f32 %v7796, 0.17
    %v7968 = vmul.f32 %v7798, 0.17
    %v7969 = vmul.f32 %v7907, 0.17
    %v7970 = vmul.f32 %v7800, 0.17
    %v7971 = vmul.f32 %v7802, 0.17
    %v7972 = vmul.f32 %v7910, 0.17
    %v7973 = vmul.f32 %v7806, 0.17
    %v7974 = vmul.f32 %v7808, 0.17
    %v7975 = vmul.f32 %v7915, 0.17
    %v7976 = vmul.f32 %v7810, 0.17
    %v7977 = vmul.f32 %v7812, 0.17
    %v7978 = vmul.f32 %v7918, 0.17
    %v7979 = vmul.f32 %v7816, 0.17
    %v7980 = vmul.f32 %v7818, 0.17
    %v7981 = vmul.f32 %v7923, 0.17
    %v7982 = vmul.f32 %v7820, 0.17
    %v7983 = vmul.f32 %v7822, 0.17
    %v7984 = vmul.f32 %v7926, 0.17
    %v7985 = vmul.f32 %v7826, 0.17
    %v7986 = vmul.f32 %v7828, 0.17
    %v7987 = vmul.f32 %v7931, 0.17
    %v7988 = vmul.f32 %v7830, 0.17
    %v7989 = vmul.f32 %v7832, 0.17
    %v7990 = vmul.f32 %v7934, 0.17
    %v7991 = vmul.f32 %v7836, 0.17
    %v7992 = vmul.f32 %v7838, 0.17
    %v7993 = vmul.f32 %v7939, 0.17
    %v7994 = vmul.f32 %v7840, 0.17
    %v7995 = vmul.f32 %v7842, 0.17
    %v7996 = vmul.f32 %v7942, 0.17
    %v7997 = vmul.f32 %v7846, 0.17
    %v7998 = vmul.f32 %v7848, 0.17
    %v7999 = vmul.f32 %v7947, 0.17
    %v8000 = vmul.f32 %v7850, 0.17
    %v8001 = vmul.f32 %v7852, 0.17
    %v8002 = vmul.f32 %v7950, 0.17
    %v8003 = vmul.f32 %v7856, 0.17
    %v8004 = vmul.f32 %v7858, 0.17
    %v8005 = vmul.f32 %v7955, 0.17
    %v8006 = vmul.f32 %v7860, 0.17
    %v8007 = vmul.f32 %v7862, 0.17
    %v8008 = vmul.f32 %v7958, 0.17
    %v8009 = vadd.f32 %v122, %v7961
    %v8010 = vadd.f32 %v123, %v7962
    %v8011 = vadd.f32 %v124, %v7963
    %v8012 = vadd.f32 %v125, %v7964
    %v8013 = vadd.f32 %v126, %v7965
    %v8014 = vadd.f32 %v127, %v7966
    %v8015 = vadd.f32 %v128, %v7967
    %v8016 = vadd.f32 %v129, %v7968
    %v8017 = vadd.f32 %v130, %v7969
    %v8018 = vadd.f32 %v131, %v7970
    %v8019 = vadd.f32 %v132, %v7971
    %v8020 = vadd.f32 %v133, %v7972
    %v8021 = vadd.f32 %v134, %v7973
    %v8022 = vadd.f32 %v135, %v7974
    %v8023 = vadd.f32 %v136, %v7975
    %v8024 = vadd.f32 %v137, %v7976
    %v8025 = vadd.f32 %v138, %v7977
    %v8026 = vadd.f32 %v139, %v7978
    %v8027 = vadd.f32 %v140, %v7979
    %v8028 = vadd.f32 %v141, %v7980
    %v8029 = vadd.f32 %v142, %v7981
    %v8030 = vadd.f32 %v143, %v7982
    %v8031 = vadd.f32 %v144, %v7983
    %v8032 = vadd.f32 %v145, %v7984
    %v8033 = vadd.f32 %v146, %v7985
    %v8034 = vadd.f32 %v147, %v7986
    %v8035 = vadd.f32 %v148, %v7987
    %v8036 = vadd.f32 %v149, %v7988
    %v8037 = vadd.f32 %v150, %v7989
    %v8038 = vadd.f32 %v151, %v7990
    %v8039 = vadd.f32 %v152, %v7991
    %v8040 = vadd.f32 %v153, %v7992
    %v8041 = vadd.f32 %v154, %v7993
    %v8042 = vadd.f32 %v155, %v7994
    %v8043 = vadd.f32 %v156, %v7995
    %v8044 = vadd.f32 %v157, %v7996
    %v8045 = vadd.f32 %v158, %v7997
    %v8046 = vadd.f32 %v159, %v7998
    %v8047 = vadd.f32 %v160, %v7999
    %v8048 = vadd.f32 %v161, %v8000
    %v8049 = vadd.f32 %v162, %v8001
    %v8050 = vadd.f32 %v163, %v8002
    %v8051 = vadd.f32 %v164, %v8003
    %v8052 = vadd.f32 %v165, %v8004
    %v8053 = vadd.f32 %v166, %v8005
    %v8054 = vadd.f32 %v167, %v8006
    %v8055 = vadd.f32 %v168, %v8007
    %v8056 = vadd.f32 %v169, %v8008
    %8057 = vst [vmem:[#allocation19] sm:$0xff] %v8009
    %8058 = vst [vmem:[#allocation19 + $0x8] sm:$0xff] %v8010
    %8059 = vst.msk [vmem:[#allocation19 + $0x10] sm:$0xff] %vm361, %v8011
    %8060 = vst [vmem:[#allocation19 + $0x18] sm:$0xff] %v8012
    %8061 = vst [vmem:[#allocation19 + $0x20] sm:$0xff] %v8013
    %8062 = vst.msk [vmem:[#allocation19 + $0x28] sm:$0xff] %vm361, %v8014
    %8063 = vst [vmem:[#allocation19 + $0x30] sm:$0xff] %v8015
    %8064 = vst [vmem:[#allocation19 + $0x38] sm:$0xff] %v8016
    %8065 = vst.msk [vmem:[#allocation19 + $0x40] sm:$0xff] %vm361, %v8017
    %8066 = vst [vmem:[#allocation19 + $0x48] sm:$0xff] %v8018
    %8067 = vst [vmem:[#allocation19 + $0x50] sm:$0xff] %v8019
    %8068 = vst.msk [vmem:[#allocation19 + $0x58] sm:$0xff] %vm361, %v8020
    %8069 = vst [vmem:[#allocation19 + $0x60] sm:$0xff] %v8021
    %8070 = vst [vmem:[#allocation19 + $0x68] sm:$0xff] %v8022
    %8071 = vst.msk [vmem:[#allocation19 + $0x70] sm:$0xff] %vm361, %v8023
    %8072 = vst [vmem:[#allocation19 + $0x78] sm:$0xff] %v8024
    %8073 = vst [vmem:[#allocation19 + $0x80] sm:$0xff] %v8025
    %8074 = vst.msk [vmem:[#allocation19 + $0x88] sm:$0xff] %vm361, %v8026
    %8075 = vst [vmem:[#allocation19 + $0x90] sm:$0xff] %v8027
    %8076 = vst [vmem:[#allocation19 + $0x98] sm:$0xff] %v8028
    %8077 = vst.msk [vmem:[#allocation19 + $0xa0] sm:$0xff] %vm361, %v8029
    %8078 = vst [vmem:[#allocation19 + $0xa8] sm:$0xff] %v8030
    %8079 = vst [vmem:[#allocation19 + $0xb0] sm:$0xff] %v8031
    %8080 = vst.msk [vmem:[#allocation19 + $0xb8] sm:$0xff] %vm361, %v8032
    %8081 = vst [vmem:[#allocation19 + $0xc0] sm:$0xff] %v8033
    %8082 = vst [vmem:[#allocation19 + $0xc8] sm:$0xff] %v8034
    %8083 = vst.msk [vmem:[#allocation19 + $0xd0] sm:$0xff] %vm361, %v8035
    %8084 = vst [vmem:[#allocation19 + $0xd8] sm:$0xff] %v8036
    %8085 = vst [vmem:[#allocation19 + $0xe0] sm:$0xff] %v8037
    %8086 = vst.msk [vmem:[#allocation19 + $0xe8] sm:$0xff] %vm361, %v8038
    %8087 = vst [vmem:[#allocation19 + $0xf0] sm:$0xff] %v8039
    %8088 = vst [vmem:[#allocation19 + $0xf8] sm:$0xff] %v8040
    %8089 = vst.msk [vmem:[#allocation19 + $0x100] sm:$0xff] %vm361, %v8041
    %8090 = vst [vmem:[#allocation19 + $0x108] sm:$0xff] %v8042
    %8091 = vst [vmem:[#allocation19 + $0x110] sm:$0xff] %v8043
    %8092 = vst.msk [vmem:[#allocation19 + $0x118] sm:$0xff] %vm361, %v8044
    %8093 = vst [vmem:[#allocation19 + $0x120] sm:$0xff] %v8045
    %8094 = vst [vmem:[#allocation19 + $0x128] sm:$0xff] %v8046
    %8095 = vst.msk [vmem:[#allocation19 + $0x130] sm:$0xff] %vm361, %v8047
    %8096 = vst [vmem:[#allocation19 + $0x138] sm:$0xff] %v8048
    %8097 = vst [vmem:[#allocation19 + $0x140] sm:$0xff] %v8049
    %8098 = vst.msk [vmem:[#allocation19 + $0x148] sm:$0xff] %vm361, %v8050
    %8099 = vst [vmem:[#allocation19 + $0x150] sm:$0xff] %v8051
    %8100 = vst [vmem:[#allocation19 + $0x158] sm:$0xff] %v8052
    %8101 = vst.msk [vmem:[#allocation19 + $0x160] sm:$0xff] %vm361, %v8053
    %8102 = vst [vmem:[#allocation19 + $0x168] sm:$0xff] %v8054
    %8103 = vst [vmem:[#allocation19 + $0x170] sm:$0xff] %v8055
    %8104 = vst.msk [vmem:[#allocation19 + $0x178] sm:$0xff] %vm361, %v8056
    // Predicated region
    $region70: #{_lambda_.1} parent=1 // pred_check
      _
    $region71: #{_lambda_.1} parent=1 // pred_check_branch
      %8106 = sbr.rel (0) target = $region73
    $region72: #{_lambda_.1} parent=1 // pred_region
      %s8108 = ssub.s32 6144, 6144
      %8109 = vsyncadd [#allocation10], %s8108
      %s8110 = sshll.u32 [#allocation19], 4
      %s8111 = int_to_ptr.vmem [resolvable:$true] %s8110
      %8116 = dma.vmem_to_hbm [thread:$0]  %s8111, 6144, %s11, [#allocation10], 384, 384, 24
    $region73: #{_lambda_.1} parent=1 // pred_fallthru
      _
    // Predicated region
    $region74: #{_lambda_.1} parent=1 // pred_check
      _
    $region75: #{_lambda_.1} parent=1 // pred_check_branch
      %8118 = sbr.rel (0) target = $region77
    $region76: #{_lambda_.1} parent=1 // pred_region
      %8119 = dma.done [#allocation10], 6144
    $region77: #{_lambda_.1} parent=1 // pred_fallthru
      _
    %8120 = vsyncpa [#allocation9], 1
    %8121 = vsyncpa [#allocation12], 1
    %8122 = vsyncpa [#allocation15], 1
    %8123 = vsyncpa [#allocation18], 1
    %8124 = vsyncpa [#allocation10], 1

</llo_original>
